<compile_context>
chip_gen: v7x
topology: tpu7x:2x2x1
jax: 0.10.0
libtpu: 0.0.40
codegen_flags: <defaults>
</compile_context>

<pallas_src>
import functools

import jax
import jax.numpy as jnp
from jax import lax
from jax.experimental import pallas as pl
from jax.experimental.pallas import tpu as pltpu


def _resblock_kernel(xs_ref, xr_ref, w1_ref, w2_ref, b_ref, o_ref,
                     hpad_ref, *col_scratch,
                     ksize: int, res_scale: float, n_strips: int,
                     use_im2col: bool, c_pad: int):
    """One (batch, H-strip) tile of  out = conv2(relu(conv1(x))) * s + x.

    xs_ref  : (1, 1, Hs+4p, W+2p, C) bf16  pre-padded input strip + 2p-row halo
    xr_ref  : (1, Hs, W, C)          f32   residual strip (exact identity path)
    w*_ref  : (K*K*Cw, C)            bf16  weight slab (Cw = C, or lane-padded Cp)
    b_ref   : (2, C)                 f32   biases (row 0 = conv1, row 1 = conv2)
    o_ref   : (1, Hs, W, C)                output strip
    hpad_ref: (Hs+2p, W+2p, C)       bf16  zero-ringed ReLU(conv1), conv2's input
    col_*   : (Hs+2p, W, K*Cp)       bf16  per-kh im2col slab (only when C < 128)
    """
    K = ksize
    p = K // 2
    _, Hs, W, C = xr_ref.shape
    R1 = Hs + 2 * p                      # conv1 rows computed: strip + p-row halo
    s = pl.program_id(1)

    def tap_x(kh, kw, rows):             # conv1 taps, straight from the halo window
        return xs_ref[0, 0, kh:kh + rows, kw:kw + W, :]

    def tap_h(kh, kw, rows):             # conv2 taps, from the zero-ringed buffer
        return hpad_ref[kh:kh + rows, kw:kw + W, :]

    if use_im2col:
        # C < 128: per-kh im2col, each tap lane-padded to Cp (multiple of 128) so
        # slab stores are tile-aligned and the contraction depth is K*Cp.
        col_ref = col_scratch[0]
        Cp = c_pad
        # One full (unmasked) memset per strip keeps the [C:Cp) pad lanes zero;
        # the matching weight-slab rows are zero, so they contribute nothing.
        col_ref[...] = jnp.zeros(col_ref.shape, col_ref.dtype)

        def conv(tap_fn, rows, w_ref, bias_row):
            acc = jnp.zeros((rows * W, C), jnp.float32)
            for kh in range(K):
                for kw in range(K):
                    col_ref[0:rows, :, kw * Cp:kw * Cp + C] = tap_fn(kh, kw, rows)
                slab = col_ref[0:rows, :, :].reshape(rows * W, K * Cp)
                wk = w_ref[kh * K * Cp:(kh + 1) * K * Cp, :]
                acc = acc + jnp.dot(slab, wk, preferred_element_type=jnp.float32)
            return acc + b_ref[bias_row:bias_row + 1, :]
    else:
        # C >= 128: contraction depth C already fills the MXU -> skip im2col (and
        # its 9x bf16 store amplification) and accumulate K*K per-tap matmuls.
        def conv(tap_fn, rows, w_ref, bias_row):
            acc = jnp.zeros((rows * W, C), jnp.float32)
            for kh in range(K):
                for kw in range(K):
                    t = kh * K + kw
                    tap = tap_fn(kh, kw, rows).reshape(rows * W, C)
                    acc = acc + jnp.dot(tap, w_ref[t * C:(t + 1) * C, :],
                                        preferred_element_type=jnp.float32)
            return acc + b_ref[bias_row:bias_row + 1, :]

    # ---- conv1 + bias + ReLU over the strip plus the p-row halo conv2 needs.
    h1 = jnp.maximum(conv(tap_x, R1, w1_ref, 0), 0.0)               # f32 (R1*W, C)
    hpad_ref[:, p:p + W, :] = h1.reshape(R1, W, C).astype(hpad_ref.dtype)

    if p > 0:
        # conv2 zero padding: left/right image-boundary columns every strip;
        # top/bottom rows only on the first/last strip (interior strips keep the
        # real ReLU(conv1) halo values written just above).
        zc = jnp.zeros((R1, p, C), hpad_ref.dtype)
        hpad_ref[:, 0:p, :] = zc
        hpad_ref[:, p + W:p + W + p, :] = zc
        zr = jnp.zeros((p, W + 2 * p, C), hpad_ref.dtype)

        @pl.when(s == 0)
        def _():                                                     # image top
            hpad_ref[0:p, :, :] = zr

        @pl.when(s == n_strips - 1)
        def _():                                                     # image bottom
            hpad_ref[R1 - p:R1, :, :] = zr

    # ---- conv2 + bias, optional res_scale, f32 residual add.
    res = conv(tap_h, Hs, w2_ref, 1)                                 # f32 (Hs*W, C)
    if res_scale != 1.0:                                             # statically elided
        res = res * res_scale
    out = res + xr_ref[0].reshape(Hs * W, C).astype(jnp.float32)
    # TODO(synk): for n_feats < 128 this store is not lane-dense; a (W/2, 2C)
    # lane-packing of the whole pipeline would fix it (wrapper-side relayout).
    o_ref[0] = out.reshape(Hs, W, C).astype(o_ref.dtype)


def _vmem_caps():
    """(physical per-core VMEM, scoped limit to request), with a safe fallback."""
    try:
        cap = int(pltpu.get_tpu_info().vmem_capacity_bytes)
    except Exception:
        cap = 64 * 1024 * 1024               # assume the smallest (v7x per-TC) VMEM
    return cap, (cap * 3) // 4               # leave ~25% headroom for internals


def _choose_strip_rows(H, W, C, K, cp, use_im2col, vmem_cap):
    """Largest H-strip whose per-step footprint fits ~40% of VMEM and divides H."""
    p = K // 2
    per_row = (2 * (W + 2 * p) * C * 2       # bf16 halo window, double-buffered
               + 2 * W * C * 4               # f32 residual strip, double-buffered
               + 2 * W * C * 4               # f32 output strip, double-buffered
               + (W + 2 * p) * C * 2         # bf16 ReLU(conv1) pad buffer
               + 2 * W * C * 4)              # f32 matmul accumulator + headroom
    if use_im2col:
        per_row += W * K * cp * 2            # bf16 per-kh im2col slab
    hs = int((vmem_cap * 2) // (5 * per_row))
    hs = max(1, min(hs, H, 512))
    while hs > 1 and H % hs:                 # TODO(synk): pad H instead of shrinking
        hs -= 1
    return hs


def resblock_forward(x_nchw, w1, b1, w2, b2, *, ksize=3, res_scale=1.0,
                     strip_rows=None):
    """x_nchw: (N, C, H, W) like PyTorch.  w*: (K, K, Cin, Cout);  b*: (C,)."""
    N, C, H, W = x_nchw.shape
    K = ksize
    p = K // 2

    use_im2col = C < 128                                 # see kernel docstring
    cp = (-(-C // 128) * 128) if use_im2col else C       # per-tap lane padding

    vmem_cap, vmem_limit = _vmem_caps()
    Hs = strip_rows if strip_rows is not None else _choose_strip_rows(
        H, W, C, K, cp, use_im2col, vmem_cap)
    assert H % Hs == 0, f"strip_rows={Hs} must divide H={H}"
    S = H // Hs

    # TODO(synk): drop these transposes when the surrounding model runs NHWC.
    x_nhwc = jnp.transpose(x_nchw, (0, 2, 3, 1)).astype(jnp.float32)

    # Pre-padded bf16 overlapping H-strips (2p-row halo so conv1 can be
    # recomputed on the rows conv2 needs).  Materializing the overlap keeps the
    # kernel on plain blocked (auto-pipelined) specs; extra traffic ~4p/Hs of
    # one bf16 activation pass.
    x_pad = jnp.pad(x_nhwc, ((0, 0), (2 * p, 2 * p), (p, p), (0, 0)))
    row_idx = jnp.arange(S)[:, None] * Hs + jnp.arange(Hs + 4 * p)[None, :]
    x_strips = x_pad[:, row_idx].astype(jnp.bfloat16)    # (N, S, Hs+4p, W+2p, C)

    # Weight slabs in im2col order; lane-pad each tap to cp when C < 128 (the
    # padded rows are zero, matching the zeroed pad lanes of the col buffer).
    if use_im2col:
        w1s = jnp.pad(w1, ((0, 0), (0, 0), (0, cp - C), (0, 0)))
        w2s = jnp.pad(w2, ((0, 0), (0, 0), (0, cp - C), (0, 0)))
    else:
        w1s, w2s = w1, w2
    w1s = w1s.reshape(K * K * cp, C).astype(jnp.bfloat16)
    w2s = w2s.reshape(K * K * cp, C).astype(jnp.bfloat16)
    biases = jnp.stack([b1, b2]).astype(jnp.float32)     # (2, C)

    kernel = functools.partial(_resblock_kernel, ksize=K,
                               res_scale=float(res_scale), n_strips=S,
                               use_im2col=use_im2col, c_pad=cp)

    scratch = [pltpu.VMEM((Hs + 2 * p, W + 2 * p, C), jnp.bfloat16)]
    if use_im2col:
        scratch.append(pltpu.VMEM((Hs + 2 * p, W, K * cp), jnp.bfloat16))

    def build(single_buffer_weights):
        # Weights / biases are grid-invariant -> single-buffer them to save VMEM.
        wkw = dict(pipeline_mode=pl.Buffered(1)) if single_buffer_weights else {}
        grid_spec = pltpu.PrefetchScalarGridSpec(
            num_scalar_prefetch=0,
            grid=(N, S),
            in_specs=[
                pl.BlockSpec((1, 1, Hs + 4 * p, W + 2 * p, C),
                             lambda n, s: (n, s, 0, 0, 0)),
                pl.BlockSpec((1, Hs, W, C), lambda n, s: (n, s, 0, 0)),
                pl.BlockSpec((K * K * cp, C), lambda n, s: (0, 0), **wkw),
                pl.BlockSpec((K * K * cp, C), lambda n, s: (0, 0), **wkw),
                pl.BlockSpec((2, C), lambda n, s: (0, 0), **wkw),
            ],
            out_specs=pl.BlockSpec((1, Hs, W, C), lambda n, s: (n, s, 0, 0)),
            scratch_shapes=scratch,
        )
        return pl.pallas_call(
            kernel,
            out_shape=jax.ShapeDtypeStruct((N, H, W, C), x_nhwc.dtype),
            grid_spec=grid_spec,
            compiler_params=pltpu.CompilerParams(
                # Both axes independent: megacore gets work even at N == 1.
                dimension_semantics=("parallel", "parallel"),
                vmem_limit_bytes=vmem_limit,
            ),
        )

    args = (x_strips, x_nhwc, w1s, w2s, biases)
    try:
        out_nhwc = jax.block_until_ready(build(True)(*args))
    except Exception:
        # Fallback if this JAX version rejects pl.Buffered(1) for weight specs.
        out_nhwc = build(False)(*args)

    return jnp.transpose(out_nhwc, (0, 3, 1, 2))         # NHWC -> NCHW


def _reference(x_nchw, w1, b1, w2, b2, *, res_scale=1.0):
    """Pure-JAX reference with the same mixed precision as the kernel:
    bf16 conv operands, f32 accumulation, f32 bias / ReLU / residual."""
    x = jnp.transpose(x_nchw, (0, 2, 3, 1)).astype(jnp.float32)
    dn = ("NHWC", "HWIO", "NHWC")

    def conv(inp_bf16, w, b):
        y = lax.conv_general_dilated(inp_bf16, w.astype(jnp.bfloat16),
                                     window_strides=(1, 1), padding="SAME",
                                     dimension_numbers=dn,
                                     preferred_element_type=jnp.float32)
        return y + b[None, None, None, :].astype(jnp.float32)

    h = jnp.maximum(conv(x.astype(jnp.bfloat16), w1, b1), 0.0)
    res = conv(h.astype(jnp.bfloat16), w2, b2) * res_scale + x
    return jnp.transpose(res, (0, 3, 1, 2)).astype(x_nchw.dtype)


if __name__ == "__main__":
    def run_case(N, C, H, W, K, strip_rows):
        key = jax.random.PRNGKey(0)
        kx, kw1, kb1, kw2, kb2 = jax.random.split(key, 5)
        x = jax.random.normal(kx, (N, C, H, W), dtype=jnp.float32)
        fan_in = C * K * K
        w1 = jax.random.normal(kw1, (K, K, C, C), jnp.float32) / jnp.sqrt(fan_in)
        b1 = jax.random.normal(kb1, (C,), jnp.float32) * 0.01
        w2 = jax.random.normal(kw2, (K, K, C, C), jnp.float32) / jnp.sqrt(fan_in)
        b2 = jax.random.normal(kb2, (C,), jnp.float32) * 0.01

        out = resblock_forward(x, w1, b1, w2, b2, ksize=K, res_scale=1.0,
                               strip_rows=strip_rows)
        out = jax.block_until_ready(out)
        ref = _reference(x, w1, b1, w2, b2, res_scale=1.0)
        assert out.shape == (N, C, H, W)
        err = float(jnp.max(jnp.abs(out - ref)))
        # Tolerance covers bf16 rounding of the intermediate activation; the
        # f32 accumulation keeps the residual error well below this bound.
        assert jnp.allclose(out, ref, atol=2e-2, rtol=2e-2), (
            f"mismatch vs reference (N={N},C={C},H={H},W={W}), max|diff|={err}")

    # Small-C path (per-kh lane-padded im2col), two 8-row strips -> exercises
    # the interior halo exchange between strips.
    run_case(N=2, C=4, H=16, W=16, K=3, strip_rows=8)
    # Wide-C path (per-tap accumulation, no im2col buffer), two 4-row strips.
    run_case(N=1, C=128, H=8, W=16, K=3, strip_rows=4)

    print("KERNEL_OK")
</pallas_src>

<mosaic_0001>
module attributes {stable_mosaic.version = 11 : i64} {
  func.func @_resblock_kernel(%arg0: i32, %arg1: i32, %arg2: memref<1x1x12x18x4xbf16, #tpu.memory_space<vmem>>, %arg3: memref<1x8x16x4xf32, #tpu.memory_space<vmem>>, %arg4: memref<1152x4xbf16, #tpu.memory_space<vmem>>, %arg5: memref<1152x4xbf16, #tpu.memory_space<vmem>>, %arg6: memref<2x4xf32, #tpu.memory_space<vmem>>, %arg7: memref<1x8x16x4xf32, #tpu.memory_space<vmem>>, %arg8: memref<10x18x4xbf16, #tpu.memory_space<vmem>>, %arg9: memref<10x16x384xbf16, #tpu.memory_space<vmem>>) attributes {dimension_semantics = [#tpu.dimension_semantics<parallel>, #tpu.dimension_semantics<parallel>], iteration_bounds = array<i64: 2, 2>, scalar_prefetch = 0 : i64, scratch_operands = 2 : i64, tpu.core_type = #tpu.core_type<tc>, window_params = [{transform_indices = @transform_0, window_bounds = array<i64: 1, 1, 12, 18, 4>}, {transform_indices = @transform_1, window_bounds = array<i64: 1, 8, 16, 4>}, {pipeline_mode = #tpu.pipeline_mode<synchronous>, transform_indices = @transform_2, window_bounds = array<i64: 1152, 4>}, {pipeline_mode = #tpu.pipeline_mode<synchronous>, transform_indices = @transform_3, window_bounds = array<i64: 1152, 4>}, {pipeline_mode = #tpu.pipeline_mode<synchronous>, transform_indices = @transform_4, window_bounds = array<i64: 2, 4>}, {transform_indices = @transform_5, window_bounds = array<i64: 1, 8, 16, 4>}]} {
    %cst = arith.constant 0.000000e+00 : bf16
    %0 = vector.broadcast %cst : bf16 to vector<10x16x384xbf16>
    %c0 = arith.constant 0 : index
    %c0_0 = arith.constant 0 : index
    %c0_1 = arith.constant 0 : index
    %1 = vector.load %arg9[%c0, %c0_0, %c0_1] : memref<10x16x384xbf16, #tpu.memory_space<vmem>>, vector<10x16x384xbf16>
    tpu.vector_store %arg9[%c0, %c0_0, %c0_1], %0 {strides = array<i32>} : memref<10x16x384xbf16, #tpu.memory_space<vmem>>, vector<10x16x384xbf16>,
    %cst_2 = arith.constant 0.000000e+00 : f32
    %2 = vector.broadcast %cst_2 : f32 to vector<160x4xf32>
    %c0_3 = arith.constant 0 : index
    %c0_4 = arith.constant 0 : index
    %c0_5 = arith.constant 0 : index
    %c0_6 = arith.constant 0 : index
    %c0_7 = arith.constant 0 : index
    %3 = vector.load %arg2[%c0_3, %c0_4, %c0_5, %c0_6, %c0_7] : memref<1x1x12x18x4xbf16, #tpu.memory_space<vmem>>, vector<1x1x10x16x4xbf16>
    %4 = vector.shape_cast %3 : vector<1x1x10x16x4xbf16> to vector<10x16x4xbf16>
    %c0_8 = arith.constant 0 : index
    %c0_9 = arith.constant 0 : index
    %c0_10 = arith.constant 0 : index
    %5 = vector.load %arg9[%c0_8, %c0_9, %c0_10] : memref<10x16x384xbf16, #tpu.memory_space<vmem>>, vector<10x16x4xbf16>
    tpu.vector_store %arg9[%c0_8, %c0_9, %c0_10], %4 {strides = array<i32>} : memref<10x16x384xbf16, #tpu.memory_space<vmem>>, vector<10x16x4xbf16>,
    %c0_11 = arith.constant 0 : index
    %c0_12 = arith.constant 0 : index
    %c0_13 = arith.constant 0 : index
    %c1 = arith.constant 1 : index
    %c0_14 = arith.constant 0 : index
    %6 = vector.load %arg2[%c0_11, %c0_12, %c0_13, %c1, %c0_14] : memref<1x1x12x18x4xbf16, #tpu.memory_space<vmem>>, vector<1x1x10x16x4xbf16>
    %7 = vector.shape_cast %6 : vector<1x1x10x16x4xbf16> to vector<10x16x4xbf16>
    %c0_15 = arith.constant 0 : index
    %c0_16 = arith.constant 0 : index
    %c128 = arith.constant 128 : index
    %8 = vector.load %arg9[%c0_15, %c0_16, %c128] : memref<10x16x384xbf16, #tpu.memory_space<vmem>>, vector<10x16x4xbf16>
    tpu.vector_store %arg9[%c0_15, %c0_16, %c128], %7 {strides = array<i32>} : memref<10x16x384xbf16, #tpu.memory_space<vmem>>, vector<10x16x4xbf16>,
    %c0_17 = arith.constant 0 : index
    %c0_18 = arith.constant 0 : index
    %c0_19 = arith.constant 0 : index
    %c2 = arith.constant 2 : index
    %c0_20 = arith.constant 0 : index
    %9 = vector.load %arg2[%c0_17, %c0_18, %c0_19, %c2, %c0_20] : memref<1x1x12x18x4xbf16, #tpu.memory_space<vmem>>, vector<1x1x10x16x4xbf16>
    %10 = vector.shape_cast %9 : vector<1x1x10x16x4xbf16> to vector<10x16x4xbf16>
    %c0_21 = arith.constant 0 : index
    %c0_22 = arith.constant 0 : index
    %c256 = arith.constant 256 : index
    %11 = vector.load %arg9[%c0_21, %c0_22, %c256] : memref<10x16x384xbf16, #tpu.memory_space<vmem>>, vector<10x16x4xbf16>
    tpu.vector_store %arg9[%c0_21, %c0_22, %c256], %10 {strides = array<i32>} : memref<10x16x384xbf16, #tpu.memory_space<vmem>>, vector<10x16x4xbf16>,
    %c0_23 = arith.constant 0 : index
    %c0_24 = arith.constant 0 : index
    %c0_25 = arith.constant 0 : index
    %12 = vector.load %arg9[%c0_23, %c0_24, %c0_25] : memref<10x16x384xbf16, #tpu.memory_space<vmem>>, vector<10x16x384xbf16>
    %13 = vector.shape_cast %12 : vector<10x16x384xbf16> to vector<160x384xbf16>
    %c0_26 = arith.constant 0 : index
    %c0_27 = arith.constant 0 : index
    %14 = vector.load %arg4[%c0_26, %c0_27] : memref<1152x4xbf16, #tpu.memory_space<vmem>>, vector<384x4xbf16>
    %cst_28 = arith.constant dense<0.000000e+00> : vector<160x4xf32>
    %15 = tpu.matmul %13, %14, %cst_28 {dimension_numbers = #tpu.dot_dimension_numbers<[1], [0], [0], [1], [0, 0, 1, 1], [], []>} : vector<160x384xbf16>, vector<384x4xbf16>, vector<160x4xf32> -> vector<160x4xf32>
    %16 = arith.addf %2, %15 : vector<160x4xf32>
    %c0_29 = arith.constant 0 : index
    %c0_30 = arith.constant 0 : index
    %c1_31 = arith.constant 1 : index
    %c0_32 = arith.constant 0 : index
    %c0_33 = arith.constant 0 : index
    %17 = vector.load %arg2[%c0_29, %c0_30, %c1_31, %c0_32, %c0_33] : memref<1x1x12x18x4xbf16, #tpu.memory_space<vmem>>, vector<1x1x10x16x4xbf16>
    %18 = vector.shape_cast %17 : vector<1x1x10x16x4xbf16> to vector<10x16x4xbf16>
    %c0_34 = arith.constant 0 : index
    %c0_35 = arith.constant 0 : index
    %c0_36 = arith.constant 0 : index
    %19 = vector.load %arg9[%c0_34, %c0_35, %c0_36] : memref<10x16x384xbf16, #tpu.memory_space<vmem>>, vector<10x16x4xbf16>
    tpu.vector_store %arg9[%c0_34, %c0_35, %c0_36], %18 {strides = array<i32>} : memref<10x16x384xbf16, #tpu.memory_space<vmem>>, vector<10x16x4xbf16>,
    %c0_37 = arith.constant 0 : index
    %c0_38 = arith.constant 0 : index
    %c1_39 = arith.constant 1 : index
    %c1_40 = arith.constant 1 : index
    %c0_41 = arith.constant 0 : index
    %20 = vector.load %arg2[%c0_37, %c0_38, %c1_39, %c1_40, %c0_41] : memref<1x1x12x18x4xbf16, #tpu.memory_space<vmem>>, vector<1x1x10x16x4xbf16>
    %21 = vector.shape_cast %20 : vector<1x1x10x16x4xbf16> to vector<10x16x4xbf16>
    %c0_42 = arith.constant 0 : index
    %c0_43 = arith.constant 0 : index
    %c128_44 = arith.constant 128 : index
    %22 = vector.load %arg9[%c0_42, %c0_43, %c128_44] : memref<10x16x384xbf16, #tpu.memory_space<vmem>>, vector<10x16x4xbf16>
    tpu.vector_store %arg9[%c0_42, %c0_43, %c128_44], %21 {strides = array<i32>} : memref<10x16x384xbf16, #tpu.memory_space<vmem>>, vector<10x16x4xbf16>,
    %c0_45 = arith.constant 0 : index
    %c0_46 = arith.constant 0 : index
    %c1_47 = arith.constant 1 : index
    %c2_48 = arith.constant 2 : index
    %c0_49 = arith.constant 0 : index
    %23 = vector.load %arg2[%c0_45, %c0_46, %c1_47, %c2_48, %c0_49] : memref<1x1x12x18x4xbf16, #tpu.memory_space<vmem>>, vector<1x1x10x16x4xbf16>
    %24 = vector.shape_cast %23 : vector<1x1x10x16x4xbf16> to vector<10x16x4xbf16>
    %c0_50 = arith.constant 0 : index
    %c0_51 = arith.constant 0 : index
    %c256_52 = arith.constant 256 : index
    %25 = vector.load %arg9[%c0_50, %c0_51, %c256_52] : memref<10x16x384xbf16, #tpu.memory_space<vmem>>, vector<10x16x4xbf16>
    tpu.vector_store %arg9[%c0_50, %c0_51, %c256_52], %24 {strides = array<i32>} : memref<10x16x384xbf16, #tpu.memory_space<vmem>>, vector<10x16x4xbf16>,
    %c0_53 = arith.constant 0 : index
    %c0_54 = arith.constant 0 : index
    %c0_55 = arith.constant 0 : index
    %26 = vector.load %arg9[%c0_53, %c0_54, %c0_55] : memref<10x16x384xbf16, #tpu.memory_space<vmem>>, vector<10x16x384xbf16>
    %27 = vector.shape_cast %26 : vector<10x16x384xbf16> to vector<160x384xbf16>
    %c384 = arith.constant 384 : index
    %c0_56 = arith.constant 0 : index
    %28 = vector.load %arg4[%c384, %c0_56] : memref<1152x4xbf16, #tpu.memory_space<vmem>>, vector<384x4xbf16>
    %cst_57 = arith.constant dense<0.000000e+00> : vector<160x4xf32>
    %29 = tpu.matmul %27, %28, %cst_57 {dimension_numbers = #tpu.dot_dimension_numbers<[1], [0], [0], [1], [0, 0, 1, 1], [], []>} : vector<160x384xbf16>, vector<384x4xbf16>, vector<160x4xf32> -> vector<160x4xf32>
    %30 = arith.addf %16, %29 : vector<160x4xf32>
    %c0_58 = arith.constant 0 : index
    %c0_59 = arith.constant 0 : index
    %c2_60 = arith.constant 2 : index
    %c0_61 = arith.constant 0 : index
    %c0_62 = arith.constant 0 : index
    %31 = vector.load %arg2[%c0_58, %c0_59, %c2_60, %c0_61, %c0_62] : memref<1x1x12x18x4xbf16, #tpu.memory_space<vmem>>, vector<1x1x10x16x4xbf16>
    %32 = vector.shape_cast %31 : vector<1x1x10x16x4xbf16> to vector<10x16x4xbf16>
    %c0_63 = arith.constant 0 : index
    %c0_64 = arith.constant 0 : index
    %c0_65 = arith.constant 0 : index
    %33 = vector.load %arg9[%c0_63, %c0_64, %c0_65] : memref<10x16x384xbf16, #tpu.memory_space<vmem>>, vector<10x16x4xbf16>
    tpu.vector_store %arg9[%c0_63, %c0_64, %c0_65], %32 {strides = array<i32>} : memref<10x16x384xbf16, #tpu.memory_space<vmem>>, vector<10x16x4xbf16>,
    %c0_66 = arith.constant 0 : index
    %c0_67 = arith.constant 0 : index
    %c2_68 = arith.constant 2 : index
    %c1_69 = arith.constant 1 : index
    %c0_70 = arith.constant 0 : index
    %34 = vector.load %arg2[%c0_66, %c0_67, %c2_68, %c1_69, %c0_70] : memref<1x1x12x18x4xbf16, #tpu.memory_space<vmem>>, vector<1x1x10x16x4xbf16>
    %35 = vector.shape_cast %34 : vector<1x1x10x16x4xbf16> to vector<10x16x4xbf16>
    %c0_71 = arith.constant 0 : index
    %c0_72 = arith.constant 0 : index
    %c128_73 = arith.constant 128 : index
    %36 = vector.load %arg9[%c0_71, %c0_72, %c128_73] : memref<10x16x384xbf16, #tpu.memory_space<vmem>>, vector<10x16x4xbf16>
    tpu.vector_store %arg9[%c0_71, %c0_72, %c128_73], %35 {strides = array<i32>} : memref<10x16x384xbf16, #tpu.memory_space<vmem>>, vector<10x16x4xbf16>,
    %c0_74 = arith.constant 0 : index
    %c0_75 = arith.constant 0 : index
    %c2_76 = arith.constant 2 : index
    %c2_77 = arith.constant 2 : index
    %c0_78 = arith.constant 0 : index
    %37 = vector.load %arg2[%c0_74, %c0_75, %c2_76, %c2_77, %c0_78] : memref<1x1x12x18x4xbf16, #tpu.memory_space<vmem>>, vector<1x1x10x16x4xbf16>
    %38 = vector.shape_cast %37 : vector<1x1x10x16x4xbf16> to vector<10x16x4xbf16>
    %c0_79 = arith.constant 0 : index
    %c0_80 = arith.constant 0 : index
    %c256_81 = arith.constant 256 : index
    %39 = vector.load %arg9[%c0_79, %c0_80, %c256_81] : memref<10x16x384xbf16, #tpu.memory_space<vmem>>, vector<10x16x4xbf16>
    tpu.vector_store %arg9[%c0_79, %c0_80, %c256_81], %38 {strides = array<i32>} : memref<10x16x384xbf16, #tpu.memory_space<vmem>>, vector<10x16x4xbf16>,
    %c0_82 = arith.constant 0 : index
    %c0_83 = arith.constant 0 : index
    %c0_84 = arith.constant 0 : index
    %40 = vector.load %arg9[%c0_82, %c0_83, %c0_84] : memref<10x16x384xbf16, #tpu.memory_space<vmem>>, vector<10x16x384xbf16>
    %41 = vector.shape_cast %40 : vector<10x16x384xbf16> to vector<160x384xbf16>
    %c768 = arith.constant 768 : index
    %c0_85 = arith.constant 0 : index
    %42 = vector.load %arg4[%c768, %c0_85] : memref<1152x4xbf16, #tpu.memory_space<vmem>>, vector<384x4xbf16>
    %cst_86 = arith.constant dense<0.000000e+00> : vector<160x4xf32>
    %43 = tpu.matmul %41, %42, %cst_86 {dimension_numbers = #tpu.dot_dimension_numbers<[1], [0], [0], [1], [0, 0, 1, 1], [], []>} : vector<160x384xbf16>, vector<384x4xbf16>, vector<160x4xf32> -> vector<160x4xf32>
    %44 = arith.addf %30, %43 : vector<160x4xf32>
    %c0_87 = arith.constant 0 : index
    %c0_88 = arith.constant 0 : index
    %45 = vector.load %arg6[%c0_87, %c0_88] : memref<2x4xf32, #tpu.memory_space<vmem>>, vector<1x4xf32>
    %46 = vector.broadcast %45 : vector<1x4xf32> to vector<160x4xf32>
    %47 = arith.addf %44, %46 : vector<160x4xf32>
    %cst_89 = arith.constant 0.000000e+00 : f32
    %48 = vector.broadcast %cst_89 : f32 to vector<160x4xf32>
    %49 = arith.maximumf %47, %48 : vector<160x4xf32>
    %50 = vector.shape_cast %49 : vector<160x4xf32> to vector<10x16x4xf32>
    %51 = arith.truncf %50 : vector<10x16x4xf32> to vector<10x16x4xbf16>
    %c0_90 = arith.constant 0 : index
    %c1_91 = arith.constant 1 : index
    %c0_92 = arith.constant 0 : index
    %52 = vector.load %arg8[%c0_90, %c1_91, %c0_92] : memref<10x18x4xbf16, #tpu.memory_space<vmem>>, vector<10x16x4xbf16>
    tpu.vector_store %arg8[%c0_90, %c1_91, %c0_92], %51 {strides = array<i32>} : memref<10x18x4xbf16, #tpu.memory_space<vmem>>, vector<10x16x4xbf16>,
    %cst_93 = arith.constant 0.000000e+00 : bf16
    %53 = vector.broadcast %cst_93 : bf16 to vector<10x1x4xbf16>
    %c0_94 = arith.constant 0 : index
    %c0_95 = arith.constant 0 : index
    %c0_96 = arith.constant 0 : index
    %54 = vector.load %arg8[%c0_94, %c0_95, %c0_96] : memref<10x18x4xbf16, #tpu.memory_space<vmem>>, vector<10x1x4xbf16>
    tpu.vector_store %arg8[%c0_94, %c0_95, %c0_96], %53 {strides = array<i32>} : memref<10x18x4xbf16, #tpu.memory_space<vmem>>, vector<10x1x4xbf16>,
    %c0_97 = arith.constant 0 : index
    %c17 = arith.constant 17 : index
    %c0_98 = arith.constant 0 : index
    %55 = vector.load %arg8[%c0_97, %c17, %c0_98] : memref<10x18x4xbf16, #tpu.memory_space<vmem>>, vector<10x1x4xbf16>
    tpu.vector_store %arg8[%c0_97, %c17, %c0_98], %53 {strides = array<i32>} : memref<10x18x4xbf16, #tpu.memory_space<vmem>>, vector<10x1x4xbf16>,
    %cst_99 = arith.constant 0.000000e+00 : bf16
    %56 = vector.broadcast %cst_99 : bf16 to vector<1x18x4xbf16>
    %c0_i32 = arith.constant 0 : i32
    %57 = arith.cmpi eq, %arg1, %c0_i32 : i32
    %58 = arith.extui %57 : i1 to i32
    %c0_i32_100 = arith.constant 0 : i32
    %59 = arith.cmpi ne, %58, %c0_i32_100 : i32
    scf.if %59 {
      %c0_185 = arith.constant 0 : index
      %c0_186 = arith.constant 0 : index
      %c0_187 = arith.constant 0 : index
      %108 = vector.load %arg8[%c0_185, %c0_186, %c0_187] : memref<10x18x4xbf16, #tpu.memory_space<vmem>>, vector<1x18x4xbf16>
      tpu.vector_store %arg8[%c0_185, %c0_186, %c0_187], %56 {strides = array<i32>} : memref<10x18x4xbf16, #tpu.memory_space<vmem>>, vector<1x18x4xbf16>,
    } else {
    }
    %c1_i32 = arith.constant 1 : i32
    %60 = arith.cmpi eq, %arg1, %c1_i32 : i32
    %61 = arith.extui %60 : i1 to i32
    %c0_i32_101 = arith.constant 0 : i32
    %62 = arith.cmpi ne, %61, %c0_i32_101 : i32
    scf.if %62 {
      %c9 = arith.constant 9 : index
      %c0_185 = arith.constant 0 : index
      %c0_186 = arith.constant 0 : index
      %108 = vector.load %arg8[%c9, %c0_185, %c0_186] : memref<10x18x4xbf16, #tpu.memory_space<vmem>>, vector<1x18x4xbf16>
      tpu.vector_store %arg8[%c9, %c0_185, %c0_186], %56 {strides = array<i32>} : memref<10x18x4xbf16, #tpu.memory_space<vmem>>, vector<1x18x4xbf16>,
    } else {
    }
    %cst_102 = arith.constant 0.000000e+00 : f32
    %63 = vector.broadcast %cst_102 : f32 to vector<128x4xf32>
    %c0_103 = arith.constant 0 : index
    %c0_104 = arith.constant 0 : index
    %c0_105 = arith.constant 0 : index
    %64 = vector.load %arg8[%c0_103, %c0_104, %c0_105] : memref<10x18x4xbf16, #tpu.memory_space<vmem>>, vector<8x16x4xbf16>
    %c0_106 = arith.constant 0 : index
    %c0_107 = arith.constant 0 : index
    %c0_108 = arith.constant 0 : index
    %65 = vector.load %arg9[%c0_106, %c0_107, %c0_108] : memref<10x16x384xbf16, #tpu.memory_space<vmem>>, vector<8x16x4xbf16>
    tpu.vector_store %arg9[%c0_106, %c0_107, %c0_108], %64 {strides = array<i32>} : memref<10x16x384xbf16, #tpu.memory_space<vmem>>, vector<8x16x4xbf16>,
    %c0_109 = arith.constant 0 : index
    %c1_110 = arith.constant 1 : index
    %c0_111 = arith.constant 0 : index
    %66 = vector.load %arg8[%c0_109, %c1_110, %c0_111] : memref<10x18x4xbf16, #tpu.memory_space<vmem>>, vector<8x16x4xbf16>
    %c0_112 = arith.constant 0 : index
    %c0_113 = arith.constant 0 : index
    %c128_114 = arith.constant 128 : index
    %67 = vector.load %arg9[%c0_112, %c0_113, %c128_114] : memref<10x16x384xbf16, #tpu.memory_space<vmem>>, vector<8x16x4xbf16>
    tpu.vector_store %arg9[%c0_112, %c0_113, %c128_114], %66 {strides = array<i32>} : memref<10x16x384xbf16, #tpu.memory_space<vmem>>, vector<8x16x4xbf16>,
    %c0_115 = arith.constant 0 : index
    %c2_116 = arith.constant 2 : index
    %c0_117 = arith.constant 0 : index
    %68 = vector.load %arg8[%c0_115, %c2_116, %c0_117] : memref<10x18x4xbf16, #tpu.memory_space<vmem>>, vector<8x16x4xbf16>
    %c0_118 = arith.constant 0 : index
    %c0_119 = arith.constant 0 : index
    %c256_120 = arith.constant 256 : index
    %69 = vector.load %arg9[%c0_118, %c0_119, %c256_120] : memref<10x16x384xbf16, #tpu.memory_space<vmem>>, vector<8x16x4xbf16>
    tpu.vector_store %arg9[%c0_118, %c0_119, %c256_120], %68 {strides = array<i32>} : memref<10x16x384xbf16, #tpu.memory_space<vmem>>, vector<8x16x4xbf16>,
    %c0_121 = arith.constant 0 : index
    %c0_122 = arith.constant 0 : index
    %c0_123 = arith.constant 0 : index
    %70 = vector.load %arg9[%c0_121, %c0_122, %c0_123] : memref<10x16x384xbf16, #tpu.memory_space<vmem>>, vector<8x16x384xbf16>
    %71 = vector.shape_cast %70 : vector<8x16x384xbf16> to vector<128x384xbf16>
    %c0_124 = arith.constant 0 : index
    %c0_125 = arith.constant 0 : index
    %72 = vector.load %arg5[%c0_124, %c0_125] : memref<1152x4xbf16, #tpu.memory_space<vmem>>, vector<384x4xbf16>
    %cst_126 = arith.constant dense<0.000000e+00> : vector<128x4xf32>
    %73 = tpu.matmul %71, %72, %cst_126 {dimension_numbers = #tpu.dot_dimension_numbers<[1], [0], [0], [1], [0, 0, 1, 1], [], []>} : vector<128x384xbf16>, vector<384x4xbf16>, vector<128x4xf32> -> vector<128x4xf32>
    %74 = arith.addf %63, %73 : vector<128x4xf32>
    %c1_127 = arith.constant 1 : index
    %c0_128 = arith.constant 0 : index
    %c0_129 = arith.constant 0 : index
    %75 = vector.load %arg8[%c1_127, %c0_128, %c0_129] : memref<10x18x4xbf16, #tpu.memory_space<vmem>>, vector<8x16x4xbf16>
    %c0_130 = arith.constant 0 : index
    %c0_131 = arith.constant 0 : index
    %c0_132 = arith.constant 0 : index
    %76 = vector.load %arg9[%c0_130, %c0_131, %c0_132] : memref<10x16x384xbf16, #tpu.memory_space<vmem>>, vector<8x16x4xbf16>
    tpu.vector_store %arg9[%c0_130, %c0_131, %c0_132], %75 {strides = array<i32>} : memref<10x16x384xbf16, #tpu.memory_space<vmem>>, vector<8x16x4xbf16>,
    %c1_133 = arith.constant 1 : index
    %c1_134 = arith.constant 1 : index
    %c0_135 = arith.constant 0 : index
    %77 = vector.load %arg8[%c1_133, %c1_134, %c0_135] : memref<10x18x4xbf16, #tpu.memory_space<vmem>>, vector<8x16x4xbf16>
    %c0_136 = arith.constant 0 : index
    %c0_137 = arith.constant 0 : index
    %c128_138 = arith.constant 128 : index
    %78 = vector.load %arg9[%c0_136, %c0_137, %c128_138] : memref<10x16x384xbf16, #tpu.memory_space<vmem>>, vector<8x16x4xbf16>
    tpu.vector_store %arg9[%c0_136, %c0_137, %c128_138], %77 {strides = array<i32>} : memref<10x16x384xbf16, #tpu.memory_space<vmem>>, vector<8x16x4xbf16>,
    %c1_139 = arith.constant 1 : index
    %c2_140 = arith.constant 2 : index
    %c0_141 = arith.constant 0 : index
    %79 = vector.load %arg8[%c1_139, %c2_140, %c0_141] : memref<10x18x4xbf16, #tpu.memory_space<vmem>>, vector<8x16x4xbf16>
    %c0_142 = arith.constant 0 : index
    %c0_143 = arith.constant 0 : index
    %c256_144 = arith.constant 256 : index
    %80 = vector.load %arg9[%c0_142, %c0_143, %c256_144] : memref<10x16x384xbf16, #tpu.memory_space<vmem>>, vector<8x16x4xbf16>
    tpu.vector_store %arg9[%c0_142, %c0_143, %c256_144], %79 {strides = array<i32>} : memref<10x16x384xbf16, #tpu.memory_space<vmem>>, vector<8x16x4xbf16>,
    %c0_145 = arith.constant 0 : index
    %c0_146 = arith.constant 0 : index
    %c0_147 = arith.constant 0 : index
    %81 = vector.load %arg9[%c0_145, %c0_146, %c0_147] : memref<10x16x384xbf16, #tpu.memory_space<vmem>>, vector<8x16x384xbf16>
    %82 = vector.shape_cast %81 : vector<8x16x384xbf16> to vector<128x384xbf16>
    %c384_148 = arith.constant 384 : index
    %c0_149 = arith.constant 0 : index
    %83 = vector.load %arg5[%c384_148, %c0_149] : memref<1152x4xbf16, #tpu.memory_space<vmem>>, vector<384x4xbf16>
    %cst_150 = arith.constant dense<0.000000e+00> : vector<128x4xf32>
    %84 = tpu.matmul %82, %83, %cst_150 {dimension_numbers = #tpu.dot_dimension_numbers<[1], [0], [0], [1], [0, 0, 1, 1], [], []>} : vector<128x384xbf16>, vector<384x4xbf16>, vector<128x4xf32> -> vector<128x4xf32>
    %85 = arith.addf %74, %84 : vector<128x4xf32>
    %c2_151 = arith.constant 2 : index
    %c0_152 = arith.constant 0 : index
    %c0_153 = arith.constant 0 : index
    %86 = vector.load %arg8[%c2_151, %c0_152, %c0_153] : memref<10x18x4xbf16, #tpu.memory_space<vmem>>, vector<8x16x4xbf16>
    %c0_154 = arith.constant 0 : index
    %c0_155 = arith.constant 0 : index
    %c0_156 = arith.constant 0 : index
    %87 = vector.load %arg9[%c0_154, %c0_155, %c0_156] : memref<10x16x384xbf16, #tpu.memory_space<vmem>>, vector<8x16x4xbf16>
    tpu.vector_store %arg9[%c0_154, %c0_155, %c0_156], %86 {strides = array<i32>} : memref<10x16x384xbf16, #tpu.memory_space<vmem>>, vector<8x16x4xbf16>,
    %c2_157 = arith.constant 2 : index
    %c1_158 = arith.constant 1 : index
    %c0_159 = arith.constant 0 : index
    %88 = vector.load %arg8[%c2_157, %c1_158, %c0_159] : memref<10x18x4xbf16, #tpu.memory_space<vmem>>, vector<8x16x4xbf16>
    %c0_160 = arith.constant 0 : index
    %c0_161 = arith.constant 0 : index
    %c128_162 = arith.constant 128 : index
    %89 = vector.load %arg9[%c0_160, %c0_161, %c128_162] : memref<10x16x384xbf16, #tpu.memory_space<vmem>>, vector<8x16x4xbf16>
    tpu.vector_store %arg9[%c0_160, %c0_161, %c128_162], %88 {strides = array<i32>} : memref<10x16x384xbf16, #tpu.memory_space<vmem>>, vector<8x16x4xbf16>,
    %c2_163 = arith.constant 2 : index
    %c2_164 = arith.constant 2 : index
    %c0_165 = arith.constant 0 : index
    %90 = vector.load %arg8[%c2_163, %c2_164, %c0_165] : memref<10x18x4xbf16, #tpu.memory_space<vmem>>, vector<8x16x4xbf16>
    %c0_166 = arith.constant 0 : index
    %c0_167 = arith.constant 0 : index
    %c256_168 = arith.constant 256 : index
    %91 = vector.load %arg9[%c0_166, %c0_167, %c256_168] : memref<10x16x384xbf16, #tpu.memory_space<vmem>>, vector<8x16x4xbf16>
    tpu.vector_store %arg9[%c0_166, %c0_167, %c256_168], %90 {strides = array<i32>} : memref<10x16x384xbf16, #tpu.memory_space<vmem>>, vector<8x16x4xbf16>,
    %c0_169 = arith.constant 0 : index
    %c0_170 = arith.constant 0 : index
    %c0_171 = arith.constant 0 : index
    %92 = vector.load %arg9[%c0_169, %c0_170, %c0_171] : memref<10x16x384xbf16, #tpu.memory_space<vmem>>, vector<8x16x384xbf16>
    %93 = vector.shape_cast %92 : vector<8x16x384xbf16> to vector<128x384xbf16>
    %c768_172 = arith.constant 768 : index
    %c0_173 = arith.constant 0 : index
    %94 = vector.load %arg5[%c768_172, %c0_173] : memref<1152x4xbf16, #tpu.memory_space<vmem>>, vector<384x4xbf16>
    %cst_174 = arith.constant dense<0.000000e+00> : vector<128x4xf32>
    %95 = tpu.matmul %93, %94, %cst_174 {dimension_numbers = #tpu.dot_dimension_numbers<[1], [0], [0], [1], [0, 0, 1, 1], [], []>} : vector<128x384xbf16>, vector<384x4xbf16>, vector<128x4xf32> -> vector<128x4xf32>
    %96 = arith.addf %85, %95 : vector<128x4xf32>
    %c1_175 = arith.constant 1 : index
    %c0_176 = arith.constant 0 : index
    %97 = vector.load %arg6[%c1_175, %c0_176] : memref<2x4xf32, #tpu.memory_space<vmem>>, vector<1x4xf32>
    %98 = vector.broadcast %97 : vector<1x4xf32> to vector<128x4xf32>
    %99 = arith.addf %96, %98 : vector<128x4xf32>
    %c0_177 = arith.constant 0 : index
    %c0_178 = arith.constant 0 : index
    %c0_179 = arith.constant 0 : index
    %c0_180 = arith.constant 0 : index
    %100 = vector.load %arg3[%c0_177, %c0_178, %c0_179, %c0_180] : memref<1x8x16x4xf32, #tpu.memory_space<vmem>>, vector<1x8x16x4xf32>
    %101 = vector.shape_cast %100 : vector<1x8x16x4xf32> to vector<8x16x4xf32>
    %102 = vector.shape_cast %101 : vector<8x16x4xf32> to vector<128x4xf32>
    %103 = arith.addf %99, %102 : vector<128x4xf32>
    %104 = vector.shape_cast %103 : vector<128x4xf32> to vector<8x16x4xf32>
    %c0_181 = arith.constant 0 : index
    %c0_182 = arith.constant 0 : index
    %c0_183 = arith.constant 0 : index
    %c0_184 = arith.constant 0 : index
    %105 = vector.load %arg7[%c0_181, %c0_182, %c0_183, %c0_184] : memref<1x8x16x4xf32, #tpu.memory_space<vmem>>, vector<1x8x16x4xf32>
    %106 = vector.shape_cast %105 : vector<1x8x16x4xf32> to vector<8x16x4xf32>
    %107 = vector.shape_cast %104 : vector<8x16x4xf32> to vector<1x8x16x4xf32>
    tpu.vector_store %arg7[%c0_181, %c0_182, %c0_183, %c0_184], %107 {strides = array<i32>} : memref<1x8x16x4xf32, #tpu.memory_space<vmem>>, vector<1x8x16x4xf32>,
    return
  }
  func.func @transform_0(%arg0: i32, %arg1: i32) -> (i32, i32, i32, i32, i32) {
    %c0_i32 = arith.constant 0 : i32
    %c0_i32_0 = arith.constant 0 : i32
    %c0_i32_1 = arith.constant 0 : i32
    %c0_i32_2 = arith.constant 0 : i32
    return %arg0, %arg1, %c0_i32, %c0_i32_0, %c0_i32_1 : i32, i32, i32, i32, i32
  }
  func.func @transform_1(%arg0: i32, %arg1: i32) -> (i32, i32, i32, i32) {
    %c0_i32 = arith.constant 0 : i32
    %c0_i32_0 = arith.constant 0 : i32
    %c0_i32_1 = arith.constant 0 : i32
    return %arg0, %arg1, %c0_i32, %c0_i32_0 : i32, i32, i32, i32
  }
  func.func @transform_2(%arg0: i32, %arg1: i32) -> (i32, i32) {
    %c0_i32 = arith.constant 0 : i32
    %c0_i32_0 = arith.constant 0 : i32
    %c0_i32_1 = arith.constant 0 : i32
    return %c0_i32, %c0_i32_0 : i32, i32
  }
  func.func @transform_3(%arg0: i32, %arg1: i32) -> (i32, i32) {
    %c0_i32 = arith.constant 0 : i32
    %c0_i32_0 = arith.constant 0 : i32
    %c0_i32_1 = arith.constant 0 : i32
    return %c0_i32, %c0_i32_0 : i32, i32
  }
  func.func @transform_4(%arg0: i32, %arg1: i32) -> (i32, i32) {
    %c0_i32 = arith.constant 0 : i32
    %c0_i32_0 = arith.constant 0 : i32
    %c0_i32_1 = arith.constant 0 : i32
    return %c0_i32, %c0_i32_0 : i32, i32
  }
  func.func @transform_5(%arg0: i32, %arg1: i32) -> (i32, i32, i32, i32) {
    %c0_i32 = arith.constant 0 : i32
    %c0_i32_0 = arith.constant 0 : i32
    %c0_i32_1 = arith.constant 0 : i32
    return %arg0, %arg1, %c0_i32, %c0_i32_0 : i32, i32, i32, i32
  }
}

module attributes {stable_mosaic.version = 11 : i64} {
  func.func @_resblock_kernel(%arg0: i32, %arg1: i32, %arg2: memref<1x1x12x18x4xbf16, #tpu.memory_space<vmem>>, %arg3: memref<1x8x16x4xf32, #tpu.memory_space<vmem>>, %arg4: memref<1152x4xbf16, #tpu.memory_space<vmem>>, %arg5: memref<1152x4xbf16, #tpu.memory_space<vmem>>, %arg6: memref<2x4xf32, #tpu.memory_space<vmem>>, %arg7: memref<1x8x16x4xf32, #tpu.memory_space<vmem>>, %arg8: memref<10x18x4xbf16, #tpu.memory_space<vmem>>, %arg9: memref<10x16x384xbf16, #tpu.memory_space<vmem>>) attributes {dimension_semantics = [#tpu.dimension_semantics<parallel>, #tpu.dimension_semantics<parallel>], iteration_bounds = array<i64: 2, 2>, scalar_prefetch = 0 : i64, scratch_operands = 2 : i64, tpu.core_type = #tpu.core_type<tc>, window_params = [{transform_indices = @transform_0, window_bounds = array<i64: 1, 1, 12, 18, 4>}, {transform_indices = @transform_1, window_bounds = array<i64: 1, 8, 16, 4>}, {pipeline_mode = #tpu.pipeline_mode<synchronous>, transform_indices = @transform_2, window_bounds = array<i64: 1152, 4>}, {pipeline_mode = #tpu.pipeline_mode<synchronous>, transform_indices = @transform_3, window_bounds = array<i64: 1152, 4>}, {pipeline_mode = #tpu.pipeline_mode<synchronous>, transform_indices = @transform_4, window_bounds = array<i64: 2, 4>}, {transform_indices = @transform_5, window_bounds = array<i64: 1, 8, 16, 4>}]} {
    %cst = arith.constant 0.000000e+00 : bf16
    %0 = vector.broadcast %cst : bf16 to vector<10x16x384xbf16>
    %c0 = arith.constant 0 : index
    %c0_0 = arith.constant 0 : index
    %c0_1 = arith.constant 0 : index
    %1 = vector.load %arg9[%c0, %c0_0, %c0_1] : memref<10x16x384xbf16, #tpu.memory_space<vmem>>, vector<10x16x384xbf16>
    tpu.vector_store %arg9[%c0, %c0_0, %c0_1], %0 {strides = array<i32>} : memref<10x16x384xbf16, #tpu.memory_space<vmem>>, vector<10x16x384xbf16>,
    %cst_2 = arith.constant 0.000000e+00 : f32
    %2 = vector.broadcast %cst_2 : f32 to vector<160x4xf32>
    %c0_3 = arith.constant 0 : index
    %c0_4 = arith.constant 0 : index
    %c0_5 = arith.constant 0 : index
    %c0_6 = arith.constant 0 : index
    %c0_7 = arith.constant 0 : index
    %3 = vector.load %arg2[%c0_3, %c0_4, %c0_5, %c0_6, %c0_7] : memref<1x1x12x18x4xbf16, #tpu.memory_space<vmem>>, vector<1x1x10x16x4xbf16>
    %4 = vector.shape_cast %3 : vector<1x1x10x16x4xbf16> to vector<10x16x4xbf16>
    %c0_8 = arith.constant 0 : index
    %c0_9 = arith.constant 0 : index
    %c0_10 = arith.constant 0 : index
    %5 = vector.load %arg9[%c0_8, %c0_9, %c0_10] : memref<10x16x384xbf16, #tpu.memory_space<vmem>>, vector<10x16x4xbf16>
    tpu.vector_store %arg9[%c0_8, %c0_9, %c0_10], %4 {strides = array<i32>} : memref<10x16x384xbf16, #tpu.memory_space<vmem>>, vector<10x16x4xbf16>,
    %c0_11 = arith.constant 0 : index
    %c0_12 = arith.constant 0 : index
    %c0_13 = arith.constant 0 : index
    %c1 = arith.constant 1 : index
    %c0_14 = arith.constant 0 : index
    %6 = vector.load %arg2[%c0_11, %c0_12, %c0_13, %c1, %c0_14] : memref<1x1x12x18x4xbf16, #tpu.memory_space<vmem>>, vector<1x1x10x16x4xbf16>
    %7 = vector.shape_cast %6 : vector<1x1x10x16x4xbf16> to vector<10x16x4xbf16>
    %c0_15 = arith.constant 0 : index
    %c0_16 = arith.constant 0 : index
    %c128 = arith.constant 128 : index
    %8 = vector.load %arg9[%c0_15, %c0_16, %c128] : memref<10x16x384xbf16, #tpu.memory_space<vmem>>, vector<10x16x4xbf16>
    tpu.vector_store %arg9[%c0_15, %c0_16, %c128], %7 {strides = array<i32>} : memref<10x16x384xbf16, #tpu.memory_space<vmem>>, vector<10x16x4xbf16>,
    %c0_17 = arith.constant 0 : index
    %c0_18 = arith.constant 0 : index
    %c0_19 = arith.constant 0 : index
    %c2 = arith.constant 2 : index
    %c0_20 = arith.constant 0 : index
    %9 = vector.load %arg2[%c0_17, %c0_18, %c0_19, %c2, %c0_20] : memref<1x1x12x18x4xbf16, #tpu.memory_space<vmem>>, vector<1x1x10x16x4xbf16>
    %10 = vector.shape_cast %9 : vector<1x1x10x16x4xbf16> to vector<10x16x4xbf16>
    %c0_21 = arith.constant 0 : index
    %c0_22 = arith.constant 0 : index
    %c256 = arith.constant 256 : index
    %11 = vector.load %arg9[%c0_21, %c0_22, %c256] : memref<10x16x384xbf16, #tpu.memory_space<vmem>>, vector<10x16x4xbf16>
    tpu.vector_store %arg9[%c0_21, %c0_22, %c256], %10 {strides = array<i32>} : memref<10x16x384xbf16, #tpu.memory_space<vmem>>, vector<10x16x4xbf16>,
    %c0_23 = arith.constant 0 : index
    %c0_24 = arith.constant 0 : index
    %c0_25 = arith.constant 0 : index
    %12 = vector.load %arg9[%c0_23, %c0_24, %c0_25] : memref<10x16x384xbf16, #tpu.memory_space<vmem>>, vector<10x16x384xbf16>
    %13 = vector.shape_cast %12 : vector<10x16x384xbf16> to vector<160x384xbf16>
    %c0_26 = arith.constant 0 : index
    %c0_27 = arith.constant 0 : index
    %14 = vector.load %arg4[%c0_26, %c0_27] : memref<1152x4xbf16, #tpu.memory_space<vmem>>, vector<384x4xbf16>
    %cst_28 = arith.constant dense<0.000000e+00> : vector<160x4xf32>
    %15 = tpu.matmul %13, %14, %cst_28 {dimension_numbers = #tpu.dot_dimension_numbers<[1], [0], [0], [1], [0, 0, 1, 1], [], []>} : vector<160x384xbf16>, vector<384x4xbf16>, vector<160x4xf32> -> vector<160x4xf32>
    %16 = arith.addf %2, %15 : vector<160x4xf32>
    %c0_29 = arith.constant 0 : index
    %c0_30 = arith.constant 0 : index
    %c1_31 = arith.constant 1 : index
    %c0_32 = arith.constant 0 : index
    %c0_33 = arith.constant 0 : index
    %17 = vector.load %arg2[%c0_29, %c0_30, %c1_31, %c0_32, %c0_33] : memref<1x1x12x18x4xbf16, #tpu.memory_space<vmem>>, vector<1x1x10x16x4xbf16>
    %18 = vector.shape_cast %17 : vector<1x1x10x16x4xbf16> to vector<10x16x4xbf16>
    %c0_34 = arith.constant 0 : index
    %c0_35 = arith.constant 0 : index
    %c0_36 = arith.constant 0 : index
    %19 = vector.load %arg9[%c0_34, %c0_35, %c0_36] : memref<10x16x384xbf16, #tpu.memory_space<vmem>>, vector<10x16x4xbf16>
    tpu.vector_store %arg9[%c0_34, %c0_35, %c0_36], %18 {strides = array<i32>} : memref<10x16x384xbf16, #tpu.memory_space<vmem>>, vector<10x16x4xbf16>,
    %c0_37 = arith.constant 0 : index
    %c0_38 = arith.constant 0 : index
    %c1_39 = arith.constant 1 : index
    %c1_40 = arith.constant 1 : index
    %c0_41 = arith.constant 0 : index
    %20 = vector.load %arg2[%c0_37, %c0_38, %c1_39, %c1_40, %c0_41] : memref<1x1x12x18x4xbf16, #tpu.memory_space<vmem>>, vector<1x1x10x16x4xbf16>
    %21 = vector.shape_cast %20 : vector<1x1x10x16x4xbf16> to vector<10x16x4xbf16>
    %c0_42 = arith.constant 0 : index
    %c0_43 = arith.constant 0 : index
    %c128_44 = arith.constant 128 : index
    %22 = vector.load %arg9[%c0_42, %c0_43, %c128_44] : memref<10x16x384xbf16, #tpu.memory_space<vmem>>, vector<10x16x4xbf16>
    tpu.vector_store %arg9[%c0_42, %c0_43, %c128_44], %21 {strides = array<i32>} : memref<10x16x384xbf16, #tpu.memory_space<vmem>>, vector<10x16x4xbf16>,
    %c0_45 = arith.constant 0 : index
    %c0_46 = arith.constant 0 : index
    %c1_47 = arith.constant 1 : index
    %c2_48 = arith.constant 2 : index
    %c0_49 = arith.constant 0 : index
    %23 = vector.load %arg2[%c0_45, %c0_46, %c1_47, %c2_48, %c0_49] : memref<1x1x12x18x4xbf16, #tpu.memory_space<vmem>>, vector<1x1x10x16x4xbf16>
    %24 = vector.shape_cast %23 : vector<1x1x10x16x4xbf16> to vector<10x16x4xbf16>
    %c0_50 = arith.constant 0 : index
    %c0_51 = arith.constant 0 : index
    %c256_52 = arith.constant 256 : index
    %25 = vector.load %arg9[%c0_50, %c0_51, %c256_52] : memref<10x16x384xbf16, #tpu.memory_space<vmem>>, vector<10x16x4xbf16>
    tpu.vector_store %arg9[%c0_50, %c0_51, %c256_52], %24 {strides = array<i32>} : memref<10x16x384xbf16, #tpu.memory_space<vmem>>, vector<10x16x4xbf16>,
    %c0_53 = arith.constant 0 : index
    %c0_54 = arith.constant 0 : index
    %c0_55 = arith.constant 0 : index
    %26 = vector.load %arg9[%c0_53, %c0_54, %c0_55] : memref<10x16x384xbf16, #tpu.memory_space<vmem>>, vector<10x16x384xbf16>
    %27 = vector.shape_cast %26 : vector<10x16x384xbf16> to vector<160x384xbf16>
    %c384 = arith.constant 384 : index
    %c0_56 = arith.constant 0 : index
    %28 = vector.load %arg4[%c384, %c0_56] : memref<1152x4xbf16, #tpu.memory_space<vmem>>, vector<384x4xbf16>
    %cst_57 = arith.constant dense<0.000000e+00> : vector<160x4xf32>
    %29 = tpu.matmul %27, %28, %cst_57 {dimension_numbers = #tpu.dot_dimension_numbers<[1], [0], [0], [1], [0, 0, 1, 1], [], []>} : vector<160x384xbf16>, vector<384x4xbf16>, vector<160x4xf32> -> vector<160x4xf32>
    %30 = arith.addf %16, %29 : vector<160x4xf32>
    %c0_58 = arith.constant 0 : index
    %c0_59 = arith.constant 0 : index
    %c2_60 = arith.constant 2 : index
    %c0_61 = arith.constant 0 : index
    %c0_62 = arith.constant 0 : index
    %31 = vector.load %arg2[%c0_58, %c0_59, %c2_60, %c0_61, %c0_62] : memref<1x1x12x18x4xbf16, #tpu.memory_space<vmem>>, vector<1x1x10x16x4xbf16>
    %32 = vector.shape_cast %31 : vector<1x1x10x16x4xbf16> to vector<10x16x4xbf16>
    %c0_63 = arith.constant 0 : index
    %c0_64 = arith.constant 0 : index
    %c0_65 = arith.constant 0 : index
    %33 = vector.load %arg9[%c0_63, %c0_64, %c0_65] : memref<10x16x384xbf16, #tpu.memory_space<vmem>>, vector<10x16x4xbf16>
    tpu.vector_store %arg9[%c0_63, %c0_64, %c0_65], %32 {strides = array<i32>} : memref<10x16x384xbf16, #tpu.memory_space<vmem>>, vector<10x16x4xbf16>,
    %c0_66 = arith.constant 0 : index
    %c0_67 = arith.constant 0 : index
    %c2_68 = arith.constant 2 : index
    %c1_69 = arith.constant 1 : index
    %c0_70 = arith.constant 0 : index
    %34 = vector.load %arg2[%c0_66, %c0_67, %c2_68, %c1_69, %c0_70] : memref<1x1x12x18x4xbf16, #tpu.memory_space<vmem>>, vector<1x1x10x16x4xbf16>
    %35 = vector.shape_cast %34 : vector<1x1x10x16x4xbf16> to vector<10x16x4xbf16>
    %c0_71 = arith.constant 0 : index
    %c0_72 = arith.constant 0 : index
    %c128_73 = arith.constant 128 : index
    %36 = vector.load %arg9[%c0_71, %c0_72, %c128_73] : memref<10x16x384xbf16, #tpu.memory_space<vmem>>, vector<10x16x4xbf16>
    tpu.vector_store %arg9[%c0_71, %c0_72, %c128_73], %35 {strides = array<i32>} : memref<10x16x384xbf16, #tpu.memory_space<vmem>>, vector<10x16x4xbf16>,
    %c0_74 = arith.constant 0 : index
    %c0_75 = arith.constant 0 : index
    %c2_76 = arith.constant 2 : index
    %c2_77 = arith.constant 2 : index
    %c0_78 = arith.constant 0 : index
    %37 = vector.load %arg2[%c0_74, %c0_75, %c2_76, %c2_77, %c0_78] : memref<1x1x12x18x4xbf16, #tpu.memory_space<vmem>>, vector<1x1x10x16x4xbf16>
    %38 = vector.shape_cast %37 : vector<1x1x10x16x4xbf16> to vector<10x16x4xbf16>
    %c0_79 = arith.constant 0 : index
    %c0_80 = arith.constant 0 : index
    %c256_81 = arith.constant 256 : index
    %39 = vector.load %arg9[%c0_79, %c0_80, %c256_81] : memref<10x16x384xbf16, #tpu.memory_space<vmem>>, vector<10x16x4xbf16>
    tpu.vector_store %arg9[%c0_79, %c0_80, %c256_81], %38 {strides = array<i32>} : memref<10x16x384xbf16, #tpu.memory_space<vmem>>, vector<10x16x4xbf16>,
    %c0_82 = arith.constant 0 : index
    %c0_83 = arith.constant 0 : index
    %c0_84 = arith.constant 0 : index
    %40 = vector.load %arg9[%c0_82, %c0_83, %c0_84] : memref<10x16x384xbf16, #tpu.memory_space<vmem>>, vector<10x16x384xbf16>
    %41 = vector.shape_cast %40 : vector<10x16x384xbf16> to vector<160x384xbf16>
    %c768 = arith.constant 768 : index
    %c0_85 = arith.constant 0 : index
    %42 = vector.load %arg4[%c768, %c0_85] : memref<1152x4xbf16, #tpu.memory_space<vmem>>, vector<384x4xbf16>
    %cst_86 = arith.constant dense<0.000000e+00> : vector<160x4xf32>
    %43 = tpu.matmul %41, %42, %cst_86 {dimension_numbers = #tpu.dot_dimension_numbers<[1], [0], [0], [1], [0, 0, 1, 1], [], []>} : vector<160x384xbf16>, vector<384x4xbf16>, vector<160x4xf32> -> vector<160x4xf32>
    %44 = arith.addf %30, %43 : vector<160x4xf32>
    %c0_87 = arith.constant 0 : index
    %c0_88 = arith.constant 0 : index
    %45 = vector.load %arg6[%c0_87, %c0_88] : memref<2x4xf32, #tpu.memory_space<vmem>>, vector<1x4xf32>
    %46 = vector.broadcast %45 : vector<1x4xf32> to vector<160x4xf32>
    %47 = arith.addf %44, %46 : vector<160x4xf32>
    %cst_89 = arith.constant 0.000000e+00 : f32
    %48 = vector.broadcast %cst_89 : f32 to vector<160x4xf32>
    %49 = arith.maximumf %47, %48 : vector<160x4xf32>
    %50 = vector.shape_cast %49 : vector<160x4xf32> to vector<10x16x4xf32>
    %51 = arith.truncf %50 : vector<10x16x4xf32> to vector<10x16x4xbf16>
    %c0_90 = arith.constant 0 : index
    %c1_91 = arith.constant 1 : index
    %c0_92 = arith.constant 0 : index
    %52 = vector.load %arg8[%c0_90, %c1_91, %c0_92] : memref<10x18x4xbf16, #tpu.memory_space<vmem>>, vector<10x16x4xbf16>
    tpu.vector_store %arg8[%c0_90, %c1_91, %c0_92], %51 {strides = array<i32>} : memref<10x18x4xbf16, #tpu.memory_space<vmem>>, vector<10x16x4xbf16>,
    %cst_93 = arith.constant 0.000000e+00 : bf16
    %53 = vector.broadcast %cst_93 : bf16 to vector<10x1x4xbf16>
    %c0_94 = arith.constant 0 : index
    %c0_95 = arith.constant 0 : index
    %c0_96 = arith.constant 0 : index
    %54 = vector.load %arg8[%c0_94, %c0_95, %c0_96] : memref<10x18x4xbf16, #tpu.memory_space<vmem>>, vector<10x1x4xbf16>
    tpu.vector_store %arg8[%c0_94, %c0_95, %c0_96], %53 {strides = array<i32>} : memref<10x18x4xbf16, #tpu.memory_space<vmem>>, vector<10x1x4xbf16>,
    %c0_97 = arith.constant 0 : index
    %c17 = arith.constant 17 : index
    %c0_98 = arith.constant 0 : index
    %55 = vector.load %arg8[%c0_97, %c17, %c0_98] : memref<10x18x4xbf16, #tpu.memory_space<vmem>>, vector<10x1x4xbf16>
    tpu.vector_store %arg8[%c0_97, %c17, %c0_98], %53 {strides = array<i32>} : memref<10x18x4xbf16, #tpu.memory_space<vmem>>, vector<10x1x4xbf16>,
    %cst_99 = arith.constant 0.000000e+00 : bf16
    %56 = vector.broadcast %cst_99 : bf16 to vector<1x18x4xbf16>
    %c0_i32 = arith.constant 0 : i32
    %57 = arith.cmpi eq, %arg1, %c0_i32 : i32
    %58 = arith.extui %57 : i1 to i32
    %c0_i32_100 = arith.constant 0 : i32
    %59 = arith.cmpi ne, %58, %c0_i32_100 : i32
    scf.if %59 {
      %c0_185 = arith.constant 0 : index
      %c0_186 = arith.constant 0 : index
      %c0_187 = arith.constant 0 : index
      %108 = vector.load %arg8[%c0_185, %c0_186, %c0_187] : memref<10x18x4xbf16, #tpu.memory_space<vmem>>, vector<1x18x4xbf16>
      tpu.vector_store %arg8[%c0_185, %c0_186, %c0_187], %56 {strides = array<i32>} : memref<10x18x4xbf16, #tpu.memory_space<vmem>>, vector<1x18x4xbf16>,
    } else {
    }
    %c1_i32 = arith.constant 1 : i32
    %60 = arith.cmpi eq, %arg1, %c1_i32 : i32
    %61 = arith.extui %60 : i1 to i32
    %c0_i32_101 = arith.constant 0 : i32
    %62 = arith.cmpi ne, %61, %c0_i32_101 : i32
    scf.if %62 {
      %c9 = arith.constant 9 : index
      %c0_185 = arith.constant 0 : index
      %c0_186 = arith.constant 0 : index
      %108 = vector.load %arg8[%c9, %c0_185, %c0_186] : memref<10x18x4xbf16, #tpu.memory_space<vmem>>, vector<1x18x4xbf16>
      tpu.vector_store %arg8[%c9, %c0_185, %c0_186], %56 {strides = array<i32>} : memref<10x18x4xbf16, #tpu.memory_space<vmem>>, vector<1x18x4xbf16>,
    } else {
    }
    %cst_102 = arith.constant 0.000000e+00 : f32
    %63 = vector.broadcast %cst_102 : f32 to vector<128x4xf32>
    %c0_103 = arith.constant 0 : index
    %c0_104 = arith.constant 0 : index
    %c0_105 = arith.constant 0 : index
    %64 = vector.load %arg8[%c0_103, %c0_104, %c0_105] : memref<10x18x4xbf16, #tpu.memory_space<vmem>>, vector<8x16x4xbf16>
    %c0_106 = arith.constant 0 : index
    %c0_107 = arith.constant 0 : index
    %c0_108 = arith.constant 0 : index
    %65 = vector.load %arg9[%c0_106, %c0_107, %c0_108] : memref<10x16x384xbf16, #tpu.memory_space<vmem>>, vector<8x16x4xbf16>
    tpu.vector_store %arg9[%c0_106, %c0_107, %c0_108], %64 {strides = array<i32>} : memref<10x16x384xbf16, #tpu.memory_space<vmem>>, vector<8x16x4xbf16>,
    %c0_109 = arith.constant 0 : index
    %c1_110 = arith.constant 1 : index
    %c0_111 = arith.constant 0 : index
    %66 = vector.load %arg8[%c0_109, %c1_110, %c0_111] : memref<10x18x4xbf16, #tpu.memory_space<vmem>>, vector<8x16x4xbf16>
    %c0_112 = arith.constant 0 : index
    %c0_113 = arith.constant 0 : index
    %c128_114 = arith.constant 128 : index
    %67 = vector.load %arg9[%c0_112, %c0_113, %c128_114] : memref<10x16x384xbf16, #tpu.memory_space<vmem>>, vector<8x16x4xbf16>
    tpu.vector_store %arg9[%c0_112, %c0_113, %c128_114], %66 {strides = array<i32>} : memref<10x16x384xbf16, #tpu.memory_space<vmem>>, vector<8x16x4xbf16>,
    %c0_115 = arith.constant 0 : index
    %c2_116 = arith.constant 2 : index
    %c0_117 = arith.constant 0 : index
    %68 = vector.load %arg8[%c0_115, %c2_116, %c0_117] : memref<10x18x4xbf16, #tpu.memory_space<vmem>>, vector<8x16x4xbf16>
    %c0_118 = arith.constant 0 : index
    %c0_119 = arith.constant 0 : index
    %c256_120 = arith.constant 256 : index
    %69 = vector.load %arg9[%c0_118, %c0_119, %c256_120] : memref<10x16x384xbf16, #tpu.memory_space<vmem>>, vector<8x16x4xbf16>
    tpu.vector_store %arg9[%c0_118, %c0_119, %c256_120], %68 {strides = array<i32>} : memref<10x16x384xbf16, #tpu.memory_space<vmem>>, vector<8x16x4xbf16>,
    %c0_121 = arith.constant 0 : index
    %c0_122 = arith.constant 0 : index
    %c0_123 = arith.constant 0 : index
    %70 = vector.load %arg9[%c0_121, %c0_122, %c0_123] : memref<10x16x384xbf16, #tpu.memory_space<vmem>>, vector<8x16x384xbf16>
    %71 = vector.shape_cast %70 : vector<8x16x384xbf16> to vector<128x384xbf16>
    %c0_124 = arith.constant 0 : index
    %c0_125 = arith.constant 0 : index
    %72 = vector.load %arg5[%c0_124, %c0_125] : memref<1152x4xbf16, #tpu.memory_space<vmem>>, vector<384x4xbf16>
    %cst_126 = arith.constant dense<0.000000e+00> : vector<128x4xf32>
    %73 = tpu.matmul %71, %72, %cst_126 {dimension_numbers = #tpu.dot_dimension_numbers<[1], [0], [0], [1], [0, 0, 1, 1], [], []>} : vector<128x384xbf16>, vector<384x4xbf16>, vector<128x4xf32> -> vector<128x4xf32>
    %74 = arith.addf %63, %73 : vector<128x4xf32>
    %c1_127 = arith.constant 1 : index
    %c0_128 = arith.constant 0 : index
    %c0_129 = arith.constant 0 : index
    %75 = vector.load %arg8[%c1_127, %c0_128, %c0_129] : memref<10x18x4xbf16, #tpu.memory_space<vmem>>, vector<8x16x4xbf16>
    %c0_130 = arith.constant 0 : index
    %c0_131 = arith.constant 0 : index
    %c0_132 = arith.constant 0 : index
    %76 = vector.load %arg9[%c0_130, %c0_131, %c0_132] : memref<10x16x384xbf16, #tpu.memory_space<vmem>>, vector<8x16x4xbf16>
    tpu.vector_store %arg9[%c0_130, %c0_131, %c0_132], %75 {strides = array<i32>} : memref<10x16x384xbf16, #tpu.memory_space<vmem>>, vector<8x16x4xbf16>,
    %c1_133 = arith.constant 1 : index
    %c1_134 = arith.constant 1 : index
    %c0_135 = arith.constant 0 : index
    %77 = vector.load %arg8[%c1_133, %c1_134, %c0_135] : memref<10x18x4xbf16, #tpu.memory_space<vmem>>, vector<8x16x4xbf16>
    %c0_136 = arith.constant 0 : index
    %c0_137 = arith.constant 0 : index
    %c128_138 = arith.constant 128 : index
    %78 = vector.load %arg9[%c0_136, %c0_137, %c128_138] : memref<10x16x384xbf16, #tpu.memory_space<vmem>>, vector<8x16x4xbf16>
    tpu.vector_store %arg9[%c0_136, %c0_137, %c128_138], %77 {strides = array<i32>} : memref<10x16x384xbf16, #tpu.memory_space<vmem>>, vector<8x16x4xbf16>,
    %c1_139 = arith.constant 1 : index
    %c2_140 = arith.constant 2 : index
    %c0_141 = arith.constant 0 : index
    %79 = vector.load %arg8[%c1_139, %c2_140, %c0_141] : memref<10x18x4xbf16, #tpu.memory_space<vmem>>, vector<8x16x4xbf16>
    %c0_142 = arith.constant 0 : index
    %c0_143 = arith.constant 0 : index
    %c256_144 = arith.constant 256 : index
    %80 = vector.load %arg9[%c0_142, %c0_143, %c256_144] : memref<10x16x384xbf16, #tpu.memory_space<vmem>>, vector<8x16x4xbf16>
    tpu.vector_store %arg9[%c0_142, %c0_143, %c256_144], %79 {strides = array<i32>} : memref<10x16x384xbf16, #tpu.memory_space<vmem>>, vector<8x16x4xbf16>,
    %c0_145 = arith.constant 0 : index
    %c0_146 = arith.constant 0 : index
    %c0_147 = arith.constant 0 : index
    %81 = vector.load %arg9[%c0_145, %c0_146, %c0_147] : memref<10x16x384xbf16, #tpu.memory_space<vmem>>, vector<8x16x384xbf16>
    %82 = vector.shape_cast %81 : vector<8x16x384xbf16> to vector<128x384xbf16>
    %c384_148 = arith.constant 384 : index
    %c0_149 = arith.constant 0 : index
    %83 = vector.load %arg5[%c384_148, %c0_149] : memref<1152x4xbf16, #tpu.memory_space<vmem>>, vector<384x4xbf16>
    %cst_150 = arith.constant dense<0.000000e+00> : vector<128x4xf32>
    %84 = tpu.matmul %82, %83, %cst_150 {dimension_numbers = #tpu.dot_dimension_numbers<[1], [0], [0], [1], [0, 0, 1, 1], [], []>} : vector<128x384xbf16>, vector<384x4xbf16>, vector<128x4xf32> -> vector<128x4xf32>
    %85 = arith.addf %74, %84 : vector<128x4xf32>
    %c2_151 = arith.constant 2 : index
    %c0_152 = arith.constant 0 : index
    %c0_153 = arith.constant 0 : index
    %86 = vector.load %arg8[%c2_151, %c0_152, %c0_153] : memref<10x18x4xbf16, #tpu.memory_space<vmem>>, vector<8x16x4xbf16>
    %c0_154 = arith.constant 0 : index
    %c0_155 = arith.constant 0 : index
    %c0_156 = arith.constant 0 : index
    %87 = vector.load %arg9[%c0_154, %c0_155, %c0_156] : memref<10x16x384xbf16, #tpu.memory_space<vmem>>, vector<8x16x4xbf16>
    tpu.vector_store %arg9[%c0_154, %c0_155, %c0_156], %86 {strides = array<i32>} : memref<10x16x384xbf16, #tpu.memory_space<vmem>>, vector<8x16x4xbf16>,
    %c2_157 = arith.constant 2 : index
    %c1_158 = arith.constant 1 : index
    %c0_159 = arith.constant 0 : index
    %88 = vector.load %arg8[%c2_157, %c1_158, %c0_159] : memref<10x18x4xbf16, #tpu.memory_space<vmem>>, vector<8x16x4xbf16>
    %c0_160 = arith.constant 0 : index
    %c0_161 = arith.constant 0 : index
    %c128_162 = arith.constant 128 : index
    %89 = vector.load %arg9[%c0_160, %c0_161, %c128_162] : memref<10x16x384xbf16, #tpu.memory_space<vmem>>, vector<8x16x4xbf16>
    tpu.vector_store %arg9[%c0_160, %c0_161, %c128_162], %88 {strides = array<i32>} : memref<10x16x384xbf16, #tpu.memory_space<vmem>>, vector<8x16x4xbf16>,
    %c2_163 = arith.constant 2 : index
    %c2_164 = arith.constant 2 : index
    %c0_165 = arith.constant 0 : index
    %90 = vector.load %arg8[%c2_163, %c2_164, %c0_165] : memref<10x18x4xbf16, #tpu.memory_space<vmem>>, vector<8x16x4xbf16>
    %c0_166 = arith.constant 0 : index
    %c0_167 = arith.constant 0 : index
    %c256_168 = arith.constant 256 : index
    %91 = vector.load %arg9[%c0_166, %c0_167, %c256_168] : memref<10x16x384xbf16, #tpu.memory_space<vmem>>, vector<8x16x4xbf16>
    tpu.vector_store %arg9[%c0_166, %c0_167, %c256_168], %90 {strides = array<i32>} : memref<10x16x384xbf16, #tpu.memory_space<vmem>>, vector<8x16x4xbf16>,
    %c0_169 = arith.constant 0 : index
    %c0_170 = arith.constant 0 : index
    %c0_171 = arith.constant 0 : index
    %92 = vector.load %arg9[%c0_169, %c0_170, %c0_171] : memref<10x16x384xbf16, #tpu.memory_space<vmem>>, vector<8x16x384xbf16>
    %93 = vector.shape_cast %92 : vector<8x16x384xbf16> to vector<128x384xbf16>
    %c768_172 = arith.constant 768 : index
    %c0_173 = arith.constant 0 : index
    %94 = vector.load %arg5[%c768_172, %c0_173] : memref<1152x4xbf16, #tpu.memory_space<vmem>>, vector<384x4xbf16>
    %cst_174 = arith.constant dense<0.000000e+00> : vector<128x4xf32>
    %95 = tpu.matmul %93, %94, %cst_174 {dimension_numbers = #tpu.dot_dimension_numbers<[1], [0], [0], [1], [0, 0, 1, 1], [], []>} : vector<128x384xbf16>, vector<384x4xbf16>, vector<128x4xf32> -> vector<128x4xf32>
    %96 = arith.addf %85, %95 : vector<128x4xf32>
    %c1_175 = arith.constant 1 : index
    %c0_176 = arith.constant 0 : index
    %97 = vector.load %arg6[%c1_175, %c0_176] : memref<2x4xf32, #tpu.memory_space<vmem>>, vector<1x4xf32>
    %98 = vector.broadcast %97 : vector<1x4xf32> to vector<128x4xf32>
    %99 = arith.addf %96, %98 : vector<128x4xf32>
    %c0_177 = arith.constant 0 : index
    %c0_178 = arith.constant 0 : index
    %c0_179 = arith.constant 0 : index
    %c0_180 = arith.constant 0 : index
    %100 = vector.load %arg3[%c0_177, %c0_178, %c0_179, %c0_180] : memref<1x8x16x4xf32, #tpu.memory_space<vmem>>, vector<1x8x16x4xf32>
    %101 = vector.shape_cast %100 : vector<1x8x16x4xf32> to vector<8x16x4xf32>
    %102 = vector.shape_cast %101 : vector<8x16x4xf32> to vector<128x4xf32>
    %103 = arith.addf %99, %102 : vector<128x4xf32>
    %104 = vector.shape_cast %103 : vector<128x4xf32> to vector<8x16x4xf32>
    %c0_181 = arith.constant 0 : index
    %c0_182 = arith.constant 0 : index
    %c0_183 = arith.constant 0 : index
    %c0_184 = arith.constant 0 : index
    %105 = vector.load %arg7[%c0_181, %c0_182, %c0_183, %c0_184] : memref<1x8x16x4xf32, #tpu.memory_space<vmem>>, vector<1x8x16x4xf32>
    %106 = vector.shape_cast %105 : vector<1x8x16x4xf32> to vector<8x16x4xf32>
    %107 = vector.shape_cast %104 : vector<8x16x4xf32> to vector<1x8x16x4xf32>
    tpu.vector_store %arg7[%c0_181, %c0_182, %c0_183, %c0_184], %107 {strides = array<i32>} : memref<1x8x16x4xf32, #tpu.memory_space<vmem>>, vector<1x8x16x4xf32>,
    return
  }
  func.func @transform_0(%arg0: i32, %arg1: i32) -> (i32, i32, i32, i32, i32) {
    %c0_i32 = arith.constant 0 : i32
    %c0_i32_0 = arith.constant 0 : i32
    %c0_i32_1 = arith.constant 0 : i32
    %c0_i32_2 = arith.constant 0 : i32
    return %arg0, %arg1, %c0_i32, %c0_i32_0, %c0_i32_1 : i32, i32, i32, i32, i32
  }
  func.func @transform_1(%arg0: i32, %arg1: i32) -> (i32, i32, i32, i32) {
    %c0_i32 = arith.constant 0 : i32
    %c0_i32_0 = arith.constant 0 : i32
    %c0_i32_1 = arith.constant 0 : i32
    return %arg0, %arg1, %c0_i32, %c0_i32_0 : i32, i32, i32, i32
  }
  func.func @transform_2(%arg0: i32, %arg1: i32) -> (i32, i32) {
    %c0_i32 = arith.constant 0 : i32
    %c0_i32_0 = arith.constant 0 : i32
    %c0_i32_1 = arith.constant 0 : i32
    return %c0_i32, %c0_i32_0 : i32, i32
  }
  func.func @transform_3(%arg0: i32, %arg1: i32) -> (i32, i32) {
    %c0_i32 = arith.constant 0 : i32
    %c0_i32_0 = arith.constant 0 : i32
    %c0_i32_1 = arith.constant 0 : i32
    return %c0_i32, %c0_i32_0 : i32, i32
  }
  func.func @transform_4(%arg0: i32, %arg1: i32) -> (i32, i32) {
    %c0_i32 = arith.constant 0 : i32
    %c0_i32_0 = arith.constant 0 : i32
    %c0_i32_1 = arith.constant 0 : i32
    return %c0_i32, %c0_i32_0 : i32, i32
  }
  func.func @transform_5(%arg0: i32, %arg1: i32) -> (i32, i32, i32, i32) {
    %c0_i32 = arith.constant 0 : i32
    %c0_i32_0 = arith.constant 0 : i32
    %c0_i32_1 = arith.constant 0 : i32
    return %arg0, %arg1, %c0_i32, %c0_i32_0 : i32, i32, i32, i32
  }
}

</mosaic_0001>

<llo_original>
// kernel: tpu_custom_call.1
$region0: #{tpu_custom_call.1}
  #allocation0 [shape = 'u32[]', space=smem, size = 0x4, offset = 0x4, fixed_abs, tag = 'smem constant byte address 0x4 - core index']
  #allocation1 [shape = 'u32[144,128]{1,0:T(1,128)}', space=vmem, size = 0x12000, scoped, tag = 'internal scratch']
  #allocation2 [shape = 'bf16[10,18,4]{2,1,0:T(8,128)(2,1)}', space=vmem, size = 0xf000, scoped, tag = 'scratch operand']
  #allocation3 [shape = 'bf16[10,16,384]{2,1,0:T(16,128)(2,1)}', space=vmem, size = 0x1e000, scoped, tag = 'scratch operand']
  %s0 = inlined_call_operand.vmem [shape: bf16[2,2,12,18,4], index: 0, kind: input, shape index: {}]
  %s1 = inlined_call_operand.vmem [shape: f32[2,16,16,4], index: 1, kind: input, shape index: {}]
  %s2 = inlined_call_operand.vmem [shape: bf16[1152,4], index: 2, kind: input, shape index: {}]
  %s3 = inlined_call_operand.vmem [shape: bf16[1152,4], index: 3, kind: input, shape index: {}]
  %s4 = inlined_call_operand.vmem [shape: f32[2,4], index: 4, kind: input, shape index: {}]
  %s5 = inlined_call_operand.vmem [shape: f32[2,16,16,4], index: 5, kind: output, shape index: {}]
  %s6 = sld [smem:[#allocation0]]
  $region61: #{tpu_custom_call.1} parent=0
    _
  %s8 = ssub.s32 1, %s6
  %s9 = scalar_select 0, %s8, %s6
  loop: start=0, step=1, limit=6
  $region2: #{tpu_custom_call.1} parent=0 // loop_pre_header
    _
  $region3: #{tpu_custom_call.1} parent=0 // loop_header
    %s11 = sphi 0, %s15
    %p12 = scmp.ge.s32.totalorder %s11, 6
    %s18 = sphi 0, %s30
    %s19 = sphi 0, %s26
    %s20 = sphi 0, %s18
    %s21 = sphi 0, %s19
    %s22 = sphi 0, %s20
    %s23 = sphi 0, %s21
    %s35 = sphi 0, %s37
    %s38 = sphi 0, %s35
    %s39 = sphi 0, %s38
    %s55 = sphi 0, %s39
    %s63 = sphi 0, %s65
    %s66 = sphi 0, %s63
    %s67 = sphi 0, %s66
    %s83 = sphi 0, %s67
    %s87 = sphi 0, %s87
    %s89 = sphi 0, %s87
    %s90 = sphi 0, %s89
    %s104 = sphi 0, %s90
    %s108 = sphi 0, %s108
    %s110 = sphi 0, %s108
    %s111 = sphi 0, %s110
    %s125 = sphi 0, %s111
    %s129 = sphi 0, %s129
    %s131 = sphi 0, %s129
    %s132 = sphi 0, %s131
    %s146 = sphi 0, %s132
    %s154 = sphi 0, %s156
    %s157 = sphi 0, %s154
    %s158 = sphi 0, %s157
    %s174 = sphi 0, %s158
  $region4: #{tpu_custom_call.1} parent=0 // loop_header_branch
    %14 = sbr.rel (%p12) target = $region8
  $region5: #{tpu_custom_call.1} parent=0 // loop_body
    %s16 = ssub.s32 %s11, 1
    %s17 = ssub.s32 %s11, 2
    %s24 = sadd.s32 1, %s19
    %p25 = scmp.ge.s32.totalorder %s24, 2
    %s26 = scalar_select %p25, 0, %s24
    %s27 = sadd.s32 1, %s18
    %s28 = scalar_select %p25, %s27, %s18
    %p29 = scmp.ge.s32.totalorder %s28, 2
    %s30 = scalar_select %p29, 0, %s28
    %s31 = ssub.s32 %s18, %s30
    %s32 = ssub.s32 %s19, %s26
    %s33 = sor.u32 %s31, %s32
    %p34 = scmp.eq.s32.totalorder %s33, 0
    %s36 = sadd.s32 %s35, 1
    %s37 = scalar_select %p34, %s35, %s36
    %p40 = pneg %p34
    %p41 = scmp.eq.s32.totalorder %s11, 3
    %p42 = por %p40, %p41
    %p43 = scmp.ne.s32.totalorder %s35, %s38
    %p44 = scmp.eq.s32.totalorder %s11, 0
    %p45 = por %p43, %p44
    %p46 = scmp.ne.s32.totalorder %s35, %s38
    %p47 = scmp.eq.s32.totalorder %s16, 3
    %p48 = por %p46, %p47
    %p49 = scmp.ne.s32.totalorder %s38, %s39
    %p50 = scmp.eq.s32.totalorder %s16, 0
    %p51 = por %p49, %p50
    %p52 = scmp.ne.s32.totalorder %s38, %s39
    %p53 = scmp.eq.s32.totalorder %s17, 3
    %p54 = por %p52, %p53
    %p56 = scmp.ne.s32.totalorder %s39, %s55
    %p57 = scmp.eq.s32.totalorder %s17, 0
    %p58 = por %p56, %p57
    %s59 = ssub.s32 %s18, %s30
    %s60 = ssub.s32 %s19, %s26
    %s61 = sor.u32 %s59, %s60
    %p62 = scmp.eq.s32.totalorder %s61, 0
    %s64 = sadd.s32 %s63, 1
    %s65 = scalar_select %p62, %s63, %s64
    %p68 = pneg %p62
    %p69 = scmp.eq.s32.totalorder %s11, 3
    %p70 = por %p68, %p69
    %p71 = scmp.ne.s32.totalorder %s63, %s66
    %p72 = scmp.eq.s32.totalorder %s11, 0
    %p73 = por %p71, %p72
    %p74 = scmp.ne.s32.totalorder %s63, %s66
    %p75 = scmp.eq.s32.totalorder %s16, 3
    %p76 = por %p74, %p75
    %p77 = scmp.ne.s32.totalorder %s66, %s67
    %p78 = scmp.eq.s32.totalorder %s16, 0
    %p79 = por %p77, %p78
    %p80 = scmp.ne.s32.totalorder %s66, %s67
    %p81 = scmp.eq.s32.totalorder %s17, 3
    %p82 = por %p80, %p81
    %p84 = scmp.ne.s32.totalorder %s67, %s83
    %p85 = scmp.eq.s32.totalorder %s17, 0
    %p86 = por %p84, %p85
    %s88 = sadd.s32 %s87, 1
    %p91 = scmp.eq.s32.totalorder %s11, 3
    %p92 = scmp.ne.s32.totalorder %s87, %s89
    %p93 = scmp.eq.s32.totalorder %s11, 0
    %p94 = por %p92, %p93
    %p95 = scmp.ne.s32.totalorder %s87, %s89
    %p96 = scmp.eq.s32.totalorder %s16, 3
    %p97 = por %p95, %p96
    %p98 = scmp.ne.s32.totalorder %s89, %s90
    %p99 = scmp.eq.s32.totalorder %s16, 0
    %p100 = por %p98, %p99
    %p101 = scmp.ne.s32.totalorder %s89, %s90
    %p102 = scmp.eq.s32.totalorder %s17, 3
    %p103 = por %p101, %p102
    %p105 = scmp.ne.s32.totalorder %s90, %s104
    %p106 = scmp.eq.s32.totalorder %s17, 0
    %p107 = por %p105, %p106
    %s109 = sadd.s32 %s108, 1
    %p112 = scmp.eq.s32.totalorder %s11, 3
    %p113 = scmp.ne.s32.totalorder %s108, %s110
    %p114 = scmp.eq.s32.totalorder %s11, 0
    %p115 = por %p113, %p114
    %p116 = scmp.ne.s32.totalorder %s108, %s110
    %p117 = scmp.eq.s32.totalorder %s16, 3
    %p118 = por %p116, %p117
    %p119 = scmp.ne.s32.totalorder %s110, %s111
    %p120 = scmp.eq.s32.totalorder %s16, 0
    %p121 = por %p119, %p120
    %p122 = scmp.ne.s32.totalorder %s110, %s111
    %p123 = scmp.eq.s32.totalorder %s17, 3
    %p124 = por %p122, %p123
    %p126 = scmp.ne.s32.totalorder %s111, %s125
    %p127 = scmp.eq.s32.totalorder %s17, 0
    %p128 = por %p126, %p127
    %s130 = sadd.s32 %s129, 1
    %p133 = scmp.eq.s32.totalorder %s11, 3
    %p134 = scmp.ne.s32.totalorder %s129, %s131
    %p135 = scmp.eq.s32.totalorder %s11, 0
    %p136 = por %p134, %p135
    %p137 = scmp.ne.s32.totalorder %s129, %s131
    %p138 = scmp.eq.s32.totalorder %s16, 3
    %p139 = por %p137, %p138
    %p140 = scmp.ne.s32.totalorder %s131, %s132
    %p141 = scmp.eq.s32.totalorder %s16, 0
    %p142 = por %p140, %p141
    %p143 = scmp.ne.s32.totalorder %s131, %s132
    %p144 = scmp.eq.s32.totalorder %s17, 3
    %p145 = por %p143, %p144
    %p147 = scmp.ne.s32.totalorder %s132, %s146
    %p148 = scmp.eq.s32.totalorder %s17, 0
    %p149 = por %p147, %p148
    %s150 = ssub.s32 %s18, %s30
    %s151 = ssub.s32 %s19, %s26
    %s152 = sor.u32 %s150, %s151
    %p153 = scmp.eq.s32.totalorder %s152, 0
    %s155 = sadd.s32 %s154, 1
    %s156 = scalar_select %p153, %s154, %s155
    %p159 = pneg %p153
    %p160 = scmp.eq.s32.totalorder %s11, 3
    %p161 = por %p159, %p160
    %p162 = scmp.ne.s32.totalorder %s154, %s157
    %p163 = scmp.eq.s32.totalorder %s11, 0
    %p164 = por %p162, %p163
    %p165 = scmp.ne.s32.totalorder %s154, %s157
    %p166 = scmp.eq.s32.totalorder %s16, 3
    %p167 = por %p165, %p166
    %p168 = scmp.ne.s32.totalorder %s157, %s158
    %p169 = scmp.eq.s32.totalorder %s16, 0
    %p170 = por %p168, %p169
    %p171 = scmp.ne.s32.totalorder %s157, %s158
    %p172 = scmp.eq.s32.totalorder %s17, 3
    %p173 = por %p171, %p172
    %p175 = scmp.ne.s32.totalorder %s158, %s174
    %p176 = scmp.eq.s32.totalorder %s17, 0
    %p177 = por %p175, %p176
    %p178 = scmp.le.s32.totalorder 1, %s11
    %p179 = scmp.lt.s32.totalorder %s11, 5
    %p180 = pnand %p178, %p179
    %p181 = pneg %p180
    // Predicated region
    $region9: #{tpu_custom_call.1} parent=5 // pred_check
      _
    $region10: #{tpu_custom_call.1} parent=5 // pred_check_branch
      %183 = sbr.rel (%p180) target = $region12
    $region11: #{tpu_custom_call.1} parent=5 // pred_region
      %s184 = ssub.s32 %s11, 1
      // Predicated region
      $region13: #{tpu_custom_call.1} parent=11 // pred_check
        %p185 = pneg %p100
      $region14: #{tpu_custom_call.1} parent=11 // pred_check_branch
        %187 = sbr.rel (%p185) target = $region16
      $region15: #{tpu_custom_call.1} parent=11 // pred_region
        _
      $region16: #{tpu_custom_call.1} parent=11 // pred_fallthru
        _
      // Predicated region
      $region17: #{tpu_custom_call.1} parent=11 // pred_check
        %p188 = pneg %p121
      $region18: #{tpu_custom_call.1} parent=11 // pred_check_branch
        %190 = sbr.rel (%p188) target = $region20
      $region19: #{tpu_custom_call.1} parent=11 // pred_region
        _
      $region20: #{tpu_custom_call.1} parent=11 // pred_fallthru
        _
      // Predicated region
      $region21: #{tpu_custom_call.1} parent=11 // pred_check
        %p191 = pneg %p142
      $region22: #{tpu_custom_call.1} parent=11 // pred_check_branch
        %193 = sbr.rel (%p191) target = $region24
      $region23: #{tpu_custom_call.1} parent=11 // pred_region
        _
      $region24: #{tpu_custom_call.1} parent=11 // pred_fallthru
        _
    $region12: #{tpu_custom_call.1} parent=5 // pred_fallthru
      _
    %p194 = scmp.lt.s32.totalorder %s11, 4
    // Predicated region
    $region25: #{tpu_custom_call.1} parent=5 // pred_check
      %p195 = pneg %p194
    $region26: #{tpu_custom_call.1} parent=5 // pred_check_branch
      %197 = sbr.rel (%p195) target = $region28
    $region27: #{tpu_custom_call.1} parent=5 // pred_region
      // Predicated region
      $region29: #{tpu_custom_call.1} parent=27 // pred_check
        %p198 = pneg %p45
      $region30: #{tpu_custom_call.1} parent=27 // pred_check_branch
        %200 = sbr.rel (%p198) target = $region32
      $region31: #{tpu_custom_call.1} parent=27 // pred_region
        %p201 = scmp.lt.s32.totalorder %s18, 1
        %s202 = scalar_select %p201, %s18, 1
        %p203 = scmp.lt.s32.totalorder %s19, 1
        %s204 = scalar_select %p203, %s19, 1
        %s205 = smul.addr %s204, 36
        %s206 = smul.addr %s202, 72
        %s207 = sadd.s32 %s205, %s206
        %s208 = smul.addr %s207, 4
        %s209 = scalar_lea.vmem %s0, %s208
      $region32: #{tpu_custom_call.1} parent=27 // pred_fallthru
        _
      // Predicated region
      $region33: #{tpu_custom_call.1} parent=27 // pred_check
        %p210 = pneg %p73
      $region34: #{tpu_custom_call.1} parent=27 // pred_check_branch
        %212 = sbr.rel (%p210) target = $region36
      $region35: #{tpu_custom_call.1} parent=27 // pred_region
        %s213 = smul.u32 8, %s19
        %p214 = scmp.lt.s32.totalorder %s18, 1
        %s215 = scalar_select %p214, %s18, 1
        %p216 = scmp.lt.s32.totalorder %s213, 15
        %s217 = scalar_select %p216, %s213, 15
        %s218 = smul.addr %s217, 2
        %s219 = smul.addr %s215, 32
        %s220 = sadd.s32 %s218, %s219
        %s221 = smul.addr %s220, 8
        %s222 = scalar_lea.vmem %s1, %s221
        %s223 = smul.u32 8, %s19
      $region36: #{tpu_custom_call.1} parent=27 // pred_fallthru
        _
    $region28: #{tpu_custom_call.1} parent=5 // pred_fallthru
      _
    %p224 = scmp.le.s32.totalorder 1, %s11
    %p225 = scmp.lt.s32.totalorder %s11, 5
    %p226 = pnand %p224, %p225
    %p227 = pneg %p226
    // Predicated region
    $region37: #{tpu_custom_call.1} parent=5 // pred_check
      _
    $region38: #{tpu_custom_call.1} parent=5 // pred_check_branch
      %229 = sbr.rel (%p226) target = $region40
    $region39: #{tpu_custom_call.1} parent=5 // pred_region
      %s230 = ssub.s32 %s11, 1
      %p231 = scmp.lt.s32.totalorder %s20, 1
      %s232 = scalar_select %p231, %s20, 1
      %p233 = scmp.lt.s32.totalorder %s21, 1
      %s234 = scalar_select %p233, %s21, 1
      %s235 = smul.addr %s234, 36
      %s236 = smul.addr %s232, 72
      %s237 = sadd.s32 %s235, %s236
      %s238 = smul.addr %s237, 4
      %s239 = scalar_lea.vmem %s0, %s238
      %p240 = pneg %p51
      %p241 = pneg %p48
      %s242 = smul.u32 8, %s21
      %p243 = scmp.lt.s32.totalorder %s20, 1
      %s244 = scalar_select %p243, %s20, 1
      %p245 = scmp.lt.s32.totalorder %s242, 15
      %s246 = scalar_select %p245, %s242, 15
      %s247 = smul.addr %s246, 2
      %s248 = smul.addr %s244, 32
      %s249 = sadd.s32 %s247, %s248
      %s250 = smul.addr %s249, 8
      %s251 = scalar_lea.vmem %s1, %s250
      %p252 = pneg %p79
      %p253 = pneg %p76
      %p254 = pneg %p100
      %p255 = pneg %p97
      %p256 = pneg %p121
      %p257 = pneg %p118
      %p258 = pneg %p142
      %p259 = pneg %p139
      %p260 = pneg %p170
      %p261 = pneg %p167
      %s262 = smul.u32 8, %s21
      %p263 = scmp.lt.s32.totalorder %s20, 1
      %s264 = scalar_select %p263, %s20, 1
      %p265 = scmp.lt.s32.totalorder %s262, 15
      %s266 = scalar_select %p265, %s262, 15
      %s267 = smul.addr %s266, 2
      %s268 = smul.addr %s264, 32
      %s269 = sadd.s32 %s267, %s268
      %s270 = smul.addr %s269, 8
      %s271 = scalar_lea.vmem %s5, %s270
      %p272 = scmp.lt.s32.totalorder %s20, 1
      %s273 = scalar_select %p272, %s20, 1
      %p274 = scmp.lt.s32.totalorder %s21, 1
      %s275 = scalar_select %p274, %s21, 1
      %s276 = smul.addr %s275, 36
      %s277 = smul.addr %s273, 72
      %s278 = sadd.s32 %s276, %s277
      %s279 = smul.addr %s278, 4
      %s280 = scalar_lea.vmem %s0, %s279
      %s281 = smul.u32 8, %s21
      %p282 = scmp.lt.s32.totalorder %s20, 1
      %s283 = scalar_select %p282, %s20, 1
      %p284 = scmp.lt.s32.totalorder %s281, 15
      %s285 = scalar_select %p284, %s281, 15
      %s286 = smul.addr %s285, 2
      %s287 = smul.addr %s283, 32
      %s288 = sadd.s32 %s286, %s287
      %s289 = smul.addr %s288, 8
      %s290 = scalar_lea.vmem %s1, %s289
      %s291 = smul.u32 8, %s21
      %s292 = smul.u32 8, %s21
      %p293 = scmp.lt.s32.totalorder %s20, 1
      %s294 = scalar_select %p293, %s20, 1
      %p295 = scmp.lt.s32.totalorder %s292, 15
      %s296 = scalar_select %p295, %s292, 15
      %s297 = smul.addr %s296, 2
      %s298 = smul.addr %s294, 32
      %s299 = sadd.s32 %s297, %s298
      %s300 = smul.addr %s299, 8
      %s301 = scalar_lea.vmem %s5, %s300
      %s302 = smul.u32 8, %s21
      %304 = vst [vmem:[#allocation3] sm:$0xff] 0
      %305 = vst [vmem:[#allocation3 + $0x8] sm:$0xff] 0
      %306 = vst [vmem:[#allocation3 + $0x10] sm:$0xff] 0
      %307 = vst [vmem:[#allocation3 + $0x18] sm:$0xff] 0
      %308 = vst [vmem:[#allocation3 + $0x20] sm:$0xff] 0
      %309 = vst [vmem:[#allocation3 + $0x28] sm:$0xff] 0
      %310 = vst [vmem:[#allocation3 + $0x30] sm:$0xff] 0
      %311 = vst [vmem:[#allocation3 + $0x38] sm:$0xff] 0
      %312 = vst [vmem:[#allocation3 + $0x40] sm:$0xff] 0
      %313 = vst [vmem:[#allocation3 + $0x48] sm:$0xff] 0
      %314 = vst [vmem:[#allocation3 + $0x50] sm:$0xff] 0
      %315 = vst [vmem:[#allocation3 + $0x58] sm:$0xff] 0
      %316 = vst [vmem:[#allocation3 + $0x60] sm:$0xff] 0
      %317 = vst [vmem:[#allocation3 + $0x68] sm:$0xff] 0
      %318 = vst [vmem:[#allocation3 + $0x70] sm:$0xff] 0
      %319 = vst [vmem:[#allocation3 + $0x78] sm:$0xff] 0
      %320 = vst [vmem:[#allocation3 + $0x80] sm:$0xff] 0
      %321 = vst [vmem:[#allocation3 + $0x88] sm:$0xff] 0
      %322 = vst [vmem:[#allocation3 + $0x90] sm:$0xff] 0
      %323 = vst [vmem:[#allocation3 + $0x98] sm:$0xff] 0
      %324 = vst [vmem:[#allocation3 + $0xa0] sm:$0xff] 0
      %325 = vst [vmem:[#allocation3 + $0xa8] sm:$0xff] 0
      %326 = vst [vmem:[#allocation3 + $0xb0] sm:$0xff] 0
      %327 = vst [vmem:[#allocation3 + $0xb8] sm:$0xff] 0
      %328 = vst [vmem:[#allocation3 + $0xc0] sm:$0xff] 0
      %329 = vst [vmem:[#allocation3 + $0xc8] sm:$0xff] 0
      %330 = vst [vmem:[#allocation3 + $0xd0] sm:$0xff] 0
      %331 = vst [vmem:[#allocation3 + $0xd8] sm:$0xff] 0
      %332 = vst [vmem:[#allocation3 + $0xe0] sm:$0xff] 0
      %333 = vst [vmem:[#allocation3 + $0xe8] sm:$0xff] 0
      %v334 = vld [vmem:[%s280] sm:$0xf]
      %v335 = vld [vmem:[%s280 + $0x4] sm:$0xf]
      %v336 = vld [vmem:[%s280 + $0xc] sm:$0xf]
      %v337 = vld [vmem:[%s280 + $0x10] sm:$0xf]
      %v338 = vld [vmem:[%s280 + $0x18] sm:$0xf]
      %v339 = vld [vmem:[%s280 + $0x1c] sm:$0xf]
      %v340 = vld [vmem:[%s280 + $0x24] sm:$0xf]
      %v341 = vld [vmem:[%s280 + $0x28] sm:$0xf]
      %v342 = vld [vmem:[%s280 + $0x30] sm:$0xf]
      %v343 = vld [vmem:[%s280 + $0x34] sm:$0xf]
      %v344 = vld [vmem:[%s280 + $0x3c] sm:$0xf]
      %v345 = vld [vmem:[%s280 + $0x40] sm:$0xf]
      %v346 = vld [vmem:[%s280 + $0x48] sm:$0xf]
      %v347 = vld [vmem:[%s280 + $0x4c] sm:$0xf]
      %v348 = vld [vmem:[%s280 + $0x54] sm:$0xf]
      %v349 = vld [vmem:[%s280 + $0x58] sm:$0xf]
      %v350 = vld [vmem:[%s280 + $0x60] sm:$0xf]
      %v351 = vld [vmem:[%s280 + $0x64] sm:$0xf]
      %v352 = vld [vmem:[%s280 + $0x6c] sm:$0xf]
      %v353 = vld [vmem:[%s280 + $0x70] sm:$0xf]
      %v374 = vunpack.c.l.b16 %v334
      %v375 = vunpack.c.l.b16 %v335
      %v376 = vunpack.c.l.b16 %v336
      %v377 = vunpack.c.l.b16 %v337
      %v378 = vunpack.c.l.b16 %v338
      %v379 = vunpack.c.l.b16 %v339
      %v380 = vunpack.c.l.b16 %v340
      %v381 = vunpack.c.l.b16 %v341
      %v382 = vunpack.c.l.b16 %v342
      %v383 = vunpack.c.l.b16 %v343
      %v384 = vunpack.c.l.b16 %v344
      %v385 = vunpack.c.l.b16 %v345
      %v386 = vunpack.c.l.b16 %v346
      %v387 = vunpack.c.l.b16 %v347
      %v388 = vunpack.c.l.b16 %v348
      %v389 = vunpack.c.l.b16 %v349
      %v390 = vunpack.c.l.b16 %v350
      %v391 = vunpack.c.l.b16 %v351
      %v392 = vunpack.c.l.b16 %v352
      %v393 = vunpack.c.l.b16 %v353
      %v394 = vpack.c.b16 %v375, %v374
      %v395 = vpack.c.b16 %v377, %v376
      %v396 = vpack.c.b16 %v379, %v378
      %v397 = vpack.c.b16 %v381, %v380
      %v398 = vpack.c.b16 %v383, %v382
      %v399 = vpack.c.b16 %v385, %v384
      %v400 = vpack.c.b16 %v387, %v386
      %v401 = vpack.c.b16 %v389, %v388
      %v402 = vpack.c.b16 %v391, %v390
      %v403 = vpack.c.b16 %v393, %v392
      %vm414 = vcmask 31744
      %415 = vst.msk [vmem:[#allocation3] sm:$0xff] %vm414, %v394
      %416 = vst.msk [vmem:[#allocation3 + $0x18] sm:$0xff] %vm414, %v395
      %417 = vst.msk [vmem:[#allocation3 + $0x30] sm:$0xff] %vm414, %v396
      %418 = vst.msk [vmem:[#allocation3 + $0x48] sm:$0xff] %vm414, %v397
      %419 = vst.msk [vmem:[#allocation3 + $0x60] sm:$0xff] %vm414, %v398
      %420 = vst.msk [vmem:[#allocation3 + $0x78] sm:$0xff] %vm414, %v399
      %421 = vst.msk [vmem:[#allocation3 + $0x90] sm:$0xff] %vm414, %v400
      %422 = vst.msk [vmem:[#allocation3 + $0xa8] sm:$0xff] %vm414, %v401
      %423 = vst.msk [vmem:[#allocation3 + $0xc0] sm:$0xff] %vm414, %v402
      %424 = vst.msk [vmem:[#allocation3 + $0xd8] sm:$0xff] %vm414, %v403
      %v425 = vld [vmem:[%s280] sm:$0xf]
      %v426 = vld [vmem:[%s280 + $0x4] sm:$0xf]
      %v427 = vld [vmem:[%s280 + $0x8] sm:$0x1]
      %v428 = vld [vmem:[%s280 + $0xc] sm:$0xf]
      %v429 = vld [vmem:[%s280 + $0x10] sm:$0xf]
      %v430 = vld [vmem:[%s280 + $0x14] sm:$0x1]
      %v431 = vld [vmem:[%s280 + $0x18] sm:$0xf]
      %v432 = vld [vmem:[%s280 + $0x1c] sm:$0xf]
      %v433 = vld [vmem:[%s280 + $0x20] sm:$0x1]
      %v434 = vld [vmem:[%s280 + $0x24] sm:$0xf]
      %v435 = vld [vmem:[%s280 + $0x28] sm:$0xf]
      %v436 = vld [vmem:[%s280 + $0x2c] sm:$0x1]
      %v437 = vld [vmem:[%s280 + $0x30] sm:$0xf]
      %v438 = vld [vmem:[%s280 + $0x34] sm:$0xf]
      %v439 = vld [vmem:[%s280 + $0x38] sm:$0x1]
      %v440 = vld [vmem:[%s280 + $0x3c] sm:$0xf]
      %v441 = vld [vmem:[%s280 + $0x40] sm:$0xf]
      %v442 = vld [vmem:[%s280 + $0x44] sm:$0x1]
      %v443 = vld [vmem:[%s280 + $0x48] sm:$0xf]
      %v444 = vld [vmem:[%s280 + $0x4c] sm:$0xf]
      %v445 = vld [vmem:[%s280 + $0x50] sm:$0x1]
      %v446 = vld [vmem:[%s280 + $0x54] sm:$0xf]
      %v447 = vld [vmem:[%s280 + $0x58] sm:$0xf]
      %v448 = vld [vmem:[%s280 + $0x5c] sm:$0x1]
      %v449 = vld [vmem:[%s280 + $0x60] sm:$0xf]
      %v450 = vld [vmem:[%s280 + $0x64] sm:$0xf]
      %v451 = vld [vmem:[%s280 + $0x68] sm:$0x1]
      %v452 = vld [vmem:[%s280 + $0x6c] sm:$0xf]
      %v453 = vld [vmem:[%s280 + $0x70] sm:$0xf]
      %v454 = vld [vmem:[%s280 + $0x74] sm:$0x1]
      %v485 = vunpack.c.l.b16 %v425
      %v486 = vunpack.c.l.b16 %v426
      %v487 = vunpack.c.l.b16 %v427
      %v488 = vunpack.c.l.b16 %v428
      %v489 = vunpack.c.l.b16 %v429
      %v490 = vunpack.c.l.b16 %v430
      %v491 = vunpack.c.l.b16 %v431
      %v492 = vunpack.c.l.b16 %v432
      %v493 = vunpack.c.l.b16 %v433
      %v494 = vunpack.c.l.b16 %v434
      %v495 = vunpack.c.l.b16 %v435
      %v496 = vunpack.c.l.b16 %v436
      %v497 = vunpack.c.l.b16 %v437
      %v498 = vunpack.c.l.b16 %v438
      %v499 = vunpack.c.l.b16 %v439
      %v500 = vunpack.c.l.b16 %v440
      %v501 = vunpack.c.l.b16 %v441
      %v502 = vunpack.c.l.b16 %v442
      %v503 = vunpack.c.l.b16 %v443
      %v504 = vunpack.c.l.b16 %v444
      %v505 = vunpack.c.l.b16 %v445
      %v506 = vunpack.c.l.b16 %v446
      %v507 = vunpack.c.l.b16 %v447
      %v508 = vunpack.c.l.b16 %v448
      %v509 = vunpack.c.l.b16 %v449
      %v510 = vunpack.c.l.b16 %v450
      %v511 = vunpack.c.l.b16 %v451
      %v512 = vunpack.c.l.b16 %v452
      %v513 = vunpack.c.l.b16 %v453
      %v514 = vunpack.c.l.b16 %v454
      %v515 = vpack.c.b16 %v486, %v485
      %v516 = vpack.c.b16 %v487, %v487
      %v517 = vpack.c.b16 %v489, %v488
      %v518 = vpack.c.b16 %v490, %v490
      %v519 = vpack.c.b16 %v492, %v491
      %v520 = vpack.c.b16 %v493, %v493
      %v521 = vpack.c.b16 %v495, %v494
      %v522 = vpack.c.b16 %v496, %v496
      %v523 = vpack.c.b16 %v498, %v497
      %v524 = vpack.c.b16 %v499, %v499
      %v525 = vpack.c.b16 %v501, %v500
      %v526 = vpack.c.b16 %v502, %v502
      %v527 = vpack.c.b16 %v504, %v503
      %v528 = vpack.c.b16 %v505, %v505
      %v529 = vpack.c.b16 %v507, %v506
      %v530 = vpack.c.b16 %v508, %v508
      %v531 = vpack.c.b16 %v510, %v509
      %v532 = vpack.c.b16 %v511, %v511
      %v533 = vpack.c.b16 %v513, %v512
      %v534 = vpack.c.b16 %v514, %v514
      %vm535 = vsmask.f32 7424
      %v537 = vshrl.u32 %v515, 16
      %v539 = vshll.u32 %v515, 16
      %v541 = vrot.slane %v539, 1
      %v542 = vor.u32 %v537, %v541
      %v544 = vshll.u32 %v516, 16
      %v546 = vrot.slane %v544, 1
      %v547 = vsel %vm535, %v542, %v546
      %v549 = vshrl.u32 %v517, 16
      %v551 = vshll.u32 %v517, 16
      %v553 = vrot.slane %v551, 1
      %v554 = vor.u32 %v549, %v553
      %v556 = vshll.u32 %v518, 16
      %v558 = vrot.slane %v556, 1
      %v559 = vsel %vm535, %v554, %v558
      %v561 = vshrl.u32 %v519, 16
      %v563 = vshll.u32 %v519, 16
      %v565 = vrot.slane %v563, 1
      %v566 = vor.u32 %v561, %v565
      %v568 = vshll.u32 %v520, 16
      %v570 = vrot.slane %v568, 1
      %v571 = vsel %vm535, %v566, %v570
      %v573 = vshrl.u32 %v521, 16
      %v575 = vshll.u32 %v521, 16
      %v577 = vrot.slane %v575, 1
      %v578 = vor.u32 %v573, %v577
      %v580 = vshll.u32 %v522, 16
      %v582 = vrot.slane %v580, 1
      %v583 = vsel %vm535, %v578, %v582
      %v585 = vshrl.u32 %v523, 16
      %v587 = vshll.u32 %v523, 16
      %v589 = vrot.slane %v587, 1
      %v590 = vor.u32 %v585, %v589
      %v592 = vshll.u32 %v524, 16
      %v594 = vrot.slane %v592, 1
      %v595 = vsel %vm535, %v590, %v594
      %v597 = vshrl.u32 %v525, 16
      %v599 = vshll.u32 %v525, 16
      %v601 = vrot.slane %v599, 1
      %v602 = vor.u32 %v597, %v601
      %v604 = vshll.u32 %v526, 16
      %v606 = vrot.slane %v604, 1
      %v607 = vsel %vm535, %v602, %v606
      %v609 = vshrl.u32 %v527, 16
      %v611 = vshll.u32 %v527, 16
      %v613 = vrot.slane %v611, 1
      %v614 = vor.u32 %v609, %v613
      %v616 = vshll.u32 %v528, 16
      %v618 = vrot.slane %v616, 1
      %v619 = vsel %vm535, %v614, %v618
      %v621 = vshrl.u32 %v529, 16
      %v623 = vshll.u32 %v529, 16
      %v625 = vrot.slane %v623, 1
      %v626 = vor.u32 %v621, %v625
      %v628 = vshll.u32 %v530, 16
      %v630 = vrot.slane %v628, 1
      %v631 = vsel %vm535, %v626, %v630
      %v633 = vshrl.u32 %v531, 16
      %v635 = vshll.u32 %v531, 16
      %v637 = vrot.slane %v635, 1
      %v638 = vor.u32 %v633, %v637
      %v640 = vshll.u32 %v532, 16
      %v642 = vrot.slane %v640, 1
      %v643 = vsel %vm535, %v638, %v642
      %v645 = vshrl.u32 %v533, 16
      %v647 = vshll.u32 %v533, 16
      %v649 = vrot.slane %v647, 1
      %v650 = vor.u32 %v645, %v649
      %v652 = vshll.u32 %v534, 16
      %v654 = vrot.slane %v652, 1
      %v655 = vsel %vm535, %v650, %v654
      %666 = vst.msk [vmem:[#allocation3 + $0x8] sm:$0xff] %vm414, %v547
      %667 = vst.msk [vmem:[#allocation3 + $0x20] sm:$0xff] %vm414, %v559
      %668 = vst.msk [vmem:[#allocation3 + $0x38] sm:$0xff] %vm414, %v571
      %669 = vst.msk [vmem:[#allocation3 + $0x50] sm:$0xff] %vm414, %v583
      %670 = vst.msk [vmem:[#allocation3 + $0x68] sm:$0xff] %vm414, %v595
      %671 = vst.msk [vmem:[#allocation3 + $0x80] sm:$0xff] %vm414, %v607
      %672 = vst.msk [vmem:[#allocation3 + $0x98] sm:$0xff] %vm414, %v619
      %673 = vst.msk [vmem:[#allocation3 + $0xb0] sm:$0xff] %vm414, %v631
      %674 = vst.msk [vmem:[#allocation3 + $0xc8] sm:$0xff] %vm414, %v643
      %675 = vst.msk [vmem:[#allocation3 + $0xe0] sm:$0xff] %vm414, %v655
      %v676 = vld [vmem:[%s280] sm:$0xe]
      %v677 = vld [vmem:[%s280 + $0x4] sm:$0xf]
      %v678 = vld [vmem:[%s280 + $0x8] sm:$0x1]
      %v679 = vld [vmem:[%s280 + $0xc] sm:$0xe]
      %v680 = vld [vmem:[%s280 + $0x10] sm:$0xf]
      %v681 = vld [vmem:[%s280 + $0x14] sm:$0x1]
      %v682 = vld [vmem:[%s280 + $0x18] sm:$0xe]
      %v683 = vld [vmem:[%s280 + $0x1c] sm:$0xf]
      %v684 = vld [vmem:[%s280 + $0x20] sm:$0x1]
      %v685 = vld [vmem:[%s280 + $0x24] sm:$0xe]
      %v686 = vld [vmem:[%s280 + $0x28] sm:$0xf]
      %v687 = vld [vmem:[%s280 + $0x2c] sm:$0x1]
      %v688 = vld [vmem:[%s280 + $0x30] sm:$0xe]
      %v689 = vld [vmem:[%s280 + $0x34] sm:$0xf]
      %v690 = vld [vmem:[%s280 + $0x38] sm:$0x1]
      %v691 = vld [vmem:[%s280 + $0x3c] sm:$0xe]
      %v692 = vld [vmem:[%s280 + $0x40] sm:$0xf]
      %v693 = vld [vmem:[%s280 + $0x44] sm:$0x1]
      %v694 = vld [vmem:[%s280 + $0x48] sm:$0xe]
      %v695 = vld [vmem:[%s280 + $0x4c] sm:$0xf]
      %v696 = vld [vmem:[%s280 + $0x50] sm:$0x1]
      %v697 = vld [vmem:[%s280 + $0x54] sm:$0xe]
      %v698 = vld [vmem:[%s280 + $0x58] sm:$0xf]
      %v699 = vld [vmem:[%s280 + $0x5c] sm:$0x1]
      %v700 = vld [vmem:[%s280 + $0x60] sm:$0xe]
      %v701 = vld [vmem:[%s280 + $0x64] sm:$0xf]
      %v702 = vld [vmem:[%s280 + $0x68] sm:$0x1]
      %v703 = vld [vmem:[%s280 + $0x6c] sm:$0xe]
      %v704 = vld [vmem:[%s280 + $0x70] sm:$0xf]
      %v705 = vld [vmem:[%s280 + $0x74] sm:$0x1]
      %v736 = vunpack.c.l.b16 %v676
      %v737 = vunpack.c.l.b16 %v677
      %v738 = vunpack.c.l.b16 %v678
      %v739 = vunpack.c.l.b16 %v679
      %v740 = vunpack.c.l.b16 %v680
      %v741 = vunpack.c.l.b16 %v681
      %v742 = vunpack.c.l.b16 %v682
      %v743 = vunpack.c.l.b16 %v683
      %v744 = vunpack.c.l.b16 %v684
      %v745 = vunpack.c.l.b16 %v685
      %v746 = vunpack.c.l.b16 %v686
      %v747 = vunpack.c.l.b16 %v687
      %v748 = vunpack.c.l.b16 %v688
      %v749 = vunpack.c.l.b16 %v689
      %v750 = vunpack.c.l.b16 %v690
      %v751 = vunpack.c.l.b16 %v691
      %v752 = vunpack.c.l.b16 %v692
      %v753 = vunpack.c.l.b16 %v693
      %v754 = vunpack.c.l.b16 %v694
      %v755 = vunpack.c.l.b16 %v695
      %v756 = vunpack.c.l.b16 %v696
      %v757 = vunpack.c.l.b16 %v697
      %v758 = vunpack.c.l.b16 %v698
      %v759 = vunpack.c.l.b16 %v699
      %v760 = vunpack.c.l.b16 %v700
      %v761 = vunpack.c.l.b16 %v701
      %v762 = vunpack.c.l.b16 %v702
      %v763 = vunpack.c.l.b16 %v703
      %v764 = vunpack.c.l.b16 %v704
      %v765 = vunpack.c.l.b16 %v705
      %v766 = vpack.c.b16 %v737, %v736
      %v767 = vpack.c.b16 %v738, %v738
      %v768 = vpack.c.b16 %v740, %v739
      %v769 = vpack.c.b16 %v741, %v741
      %v770 = vpack.c.b16 %v743, %v742
      %v771 = vpack.c.b16 %v744, %v744
      %v772 = vpack.c.b16 %v746, %v745
      %v773 = vpack.c.b16 %v747, %v747
      %v774 = vpack.c.b16 %v749, %v748
      %v775 = vpack.c.b16 %v750, %v750
      %v776 = vpack.c.b16 %v752, %v751
      %v777 = vpack.c.b16 %v753, %v753
      %v778 = vpack.c.b16 %v755, %v754
      %v779 = vpack.c.b16 %v756, %v756
      %v780 = vpack.c.b16 %v758, %v757
      %v781 = vpack.c.b16 %v759, %v759
      %v782 = vpack.c.b16 %v761, %v760
      %v783 = vpack.c.b16 %v762, %v762
      %v784 = vpack.c.b16 %v764, %v763
      %v785 = vpack.c.b16 %v765, %v765
      %vm786 = vcmask 1046528
      %v787 = vrot.slane %v766, 1
      %v788 = vrot.slane %v767, 1
      %v789 = vsel %vm786, %v787, %v788
      %v790 = vrot.slane %v768, 1
      %v791 = vrot.slane %v769, 1
      %v792 = vsel %vm786, %v790, %v791
      %v793 = vrot.slane %v770, 1
      %v794 = vrot.slane %v771, 1
      %v795 = vsel %vm786, %v793, %v794
      %v796 = vrot.slane %v772, 1
      %v797 = vrot.slane %v773, 1
      %v798 = vsel %vm786, %v796, %v797
      %v799 = vrot.slane %v774, 1
      %v800 = vrot.slane %v775, 1
      %v801 = vsel %vm786, %v799, %v800
      %v802 = vrot.slane %v776, 1
      %v803 = vrot.slane %v777, 1
      %v804 = vsel %vm786, %v802, %v803
      %v805 = vrot.slane %v778, 1
      %v806 = vrot.slane %v779, 1
      %v807 = vsel %vm786, %v805, %v806
      %v808 = vrot.slane %v780, 1
      %v809 = vrot.slane %v781, 1
      %v810 = vsel %vm786, %v808, %v809
      %v811 = vrot.slane %v782, 1
      %v812 = vrot.slane %v783, 1
      %v813 = vsel %vm786, %v811, %v812
      %v814 = vrot.slane %v784, 1
      %v815 = vrot.slane %v785, 1
      %v816 = vsel %vm786, %v814, %v815
      %827 = vst.msk [vmem:[#allocation3 + $0x10] sm:$0xff] %vm414, %v789
      %828 = vst.msk [vmem:[#allocation3 + $0x28] sm:$0xff] %vm414, %v792
      %829 = vst.msk [vmem:[#allocation3 + $0x40] sm:$0xff] %vm414, %v795
      %830 = vst.msk [vmem:[#allocation3 + $0x58] sm:$0xff] %vm414, %v798
      %831 = vst.msk [vmem:[#allocation3 + $0x70] sm:$0xff] %vm414, %v801
      %832 = vst.msk [vmem:[#allocation3 + $0x88] sm:$0xff] %vm414, %v804
      %833 = vst.msk [vmem:[#allocation3 + $0xa0] sm:$0xff] %vm414, %v807
      %834 = vst.msk [vmem:[#allocation3 + $0xb8] sm:$0xff] %vm414, %v810
      %835 = vst.msk [vmem:[#allocation3 + $0xd0] sm:$0xff] %vm414, %v813
      %836 = vst.msk [vmem:[#allocation3 + $0xe8] sm:$0xff] %vm414, %v816
      %v837 = vld [vmem:[#allocation3] sm:$0xff]
      %v838 = vld [vmem:[#allocation3 + $0x8] sm:$0xff]
      %v839 = vld [vmem:[#allocation3 + $0x10] sm:$0xff]
      %v840 = vld [vmem:[#allocation3 + $0x18] sm:$0xff]
      %v841 = vld [vmem:[#allocation3 + $0x20] sm:$0xff]
      %v842 = vld [vmem:[#allocation3 + $0x28] sm:$0xff]
      %v843 = vld [vmem:[#allocation3 + $0x30] sm:$0xff]
      %v844 = vld [vmem:[#allocation3 + $0x38] sm:$0xff]
      %v845 = vld [vmem:[#allocation3 + $0x40] sm:$0xff]
      %v846 = vld [vmem:[#allocation3 + $0x48] sm:$0xff]
      %v847 = vld [vmem:[#allocation3 + $0x50] sm:$0xff]
      %v848 = vld [vmem:[#allocation3 + $0x58] sm:$0xff]
      %v849 = vld [vmem:[#allocation3 + $0x60] sm:$0xff]
      %v850 = vld [vmem:[#allocation3 + $0x68] sm:$0xff]
      %v851 = vld [vmem:[#allocation3 + $0x70] sm:$0xff]
      %v852 = vld [vmem:[#allocation3 + $0x78] sm:$0xff]
      %v853 = vld [vmem:[#allocation3 + $0x80] sm:$0xff]
      %v854 = vld [vmem:[#allocation3 + $0x88] sm:$0xff]
      %v855 = vld [vmem:[#allocation3 + $0x90] sm:$0xff]
      %v856 = vld [vmem:[#allocation3 + $0x98] sm:$0xff]
      %v857 = vld [vmem:[#allocation3 + $0xa0] sm:$0xff]
      %v858 = vld [vmem:[#allocation3 + $0xa8] sm:$0xff]
      %v859 = vld [vmem:[#allocation3 + $0xb0] sm:$0xff]
      %v860 = vld [vmem:[#allocation3 + $0xb8] sm:$0xff]
      %v861 = vld [vmem:[#allocation3 + $0xc0] sm:$0xff]
      %v862 = vld [vmem:[#allocation3 + $0xc8] sm:$0xff]
      %v863 = vld [vmem:[#allocation3 + $0xd0] sm:$0xff]
      %v864 = vld [vmem:[#allocation3 + $0xd8] sm:$0xff]
      %v865 = vld [vmem:[#allocation3 + $0xe0] sm:$0xff]
      %v866 = vld [vmem:[#allocation3 + $0xe8] sm:$0xff]
      %v867 = vld [vmem:[%s2] sm:$0xf]
      %v868 = vld [vmem:[%s2 + $0x4] sm:$0xf]
      %v869 = vld [vmem:[%s2 + $0x8] sm:$0xf]
      %v870 = vld [vmem:[%s2 + $0xc] sm:$0xf]
      %v871 = vld [vmem:[%s2 + $0x10] sm:$0xf]
      %v872 = vld [vmem:[%s2 + $0x14] sm:$0xf]
      %v873 = vld [vmem:[%s2 + $0x18] sm:$0xf]
      %v874 = vld [vmem:[%s2 + $0x1c] sm:$0xf]
      %v875 = vld [vmem:[%s2 + $0x20] sm:$0xf]
      %v876 = vld [vmem:[%s2 + $0x24] sm:$0xf]
      %v877 = vld [vmem:[%s2 + $0x28] sm:$0xf]
      %v878 = vld [vmem:[%s2 + $0x2c] sm:$0xf]
      %v879 = vld [vmem:[%s2 + $0x30] sm:$0xf]
      %v880 = vld [vmem:[%s2 + $0x34] sm:$0xf]
      %v881 = vld [vmem:[%s2 + $0x38] sm:$0xf]
      %v882 = vld [vmem:[%s2 + $0x3c] sm:$0xf]
      %v883 = vld [vmem:[%s2 + $0x40] sm:$0xf]
      %v884 = vld [vmem:[%s2 + $0x44] sm:$0xf]
      %v885 = vld [vmem:[%s2 + $0x48] sm:$0xf]
      %v886 = vld [vmem:[%s2 + $0x4c] sm:$0xf]
      %v887 = vld [vmem:[%s2 + $0x50] sm:$0xf]
      %v888 = vld [vmem:[%s2 + $0x54] sm:$0xf]
      %v889 = vld [vmem:[%s2 + $0x58] sm:$0xf]
      %v890 = vld [vmem:[%s2 + $0x5c] sm:$0xf]
      %v891 = vld [vmem:[%s2 + $0x60] sm:$0xf]
      %v892 = vld [vmem:[%s2 + $0x64] sm:$0xf]
      %v893 = vld [vmem:[%s2 + $0x68] sm:$0xf]
      %v894 = vld [vmem:[%s2 + $0x6c] sm:$0xf]
      %v895 = vld [vmem:[%s2 + $0x70] sm:$0xf]
      %v896 = vld [vmem:[%s2 + $0x74] sm:$0xf]
      %v897 = vld [vmem:[%s2 + $0x78] sm:$0xf]
      %v898 = vld [vmem:[%s2 + $0x7c] sm:$0xf]
      %v899 = vld [vmem:[%s2 + $0x80] sm:$0xf]
      %v900 = vld [vmem:[%s2 + $0x84] sm:$0xf]
      %v901 = vld [vmem:[%s2 + $0x88] sm:$0xf]
      %v902 = vld [vmem:[%s2 + $0x8c] sm:$0xf]
      %v903 = vld [vmem:[%s2 + $0x90] sm:$0xf]
      %v904 = vld [vmem:[%s2 + $0x94] sm:$0xf]
      %v905 = vld [vmem:[%s2 + $0x98] sm:$0xf]
      %v906 = vld [vmem:[%s2 + $0x9c] sm:$0xf]
      %v907 = vld [vmem:[%s2 + $0xa0] sm:$0xf]
      %v908 = vld [vmem:[%s2 + $0xa4] sm:$0xf]
      %v909 = vld [vmem:[%s2 + $0xa8] sm:$0xf]
      %v910 = vld [vmem:[%s2 + $0xac] sm:$0xf]
      %v911 = vld [vmem:[%s2 + $0xb0] sm:$0xf]
      %v912 = vld [vmem:[%s2 + $0xb4] sm:$0xf]
      %v913 = vld [vmem:[%s2 + $0xb8] sm:$0xf]
      %v914 = vld [vmem:[%s2 + $0xbc] sm:$0xf]
      %s915 = scalar_lea.vmem %s280, 12
      %v916 = vld [vmem:[%s915] sm:$0xf]
      %v917 = vld [vmem:[%s915 + $0x4] sm:$0xf]
      %v918 = vld [vmem:[%s915 + $0xc] sm:$0xf]
      %v919 = vld [vmem:[%s915 + $0x10] sm:$0xf]
      %v920 = vld [vmem:[%s915 + $0x18] sm:$0xf]
      %v921 = vld [vmem:[%s915 + $0x1c] sm:$0xf]
      %v922 = vld [vmem:[%s915 + $0x24] sm:$0xf]
      %v923 = vld [vmem:[%s915 + $0x28] sm:$0xf]
      %v924 = vld [vmem:[%s915 + $0x30] sm:$0xf]
      %v925 = vld [vmem:[%s915 + $0x34] sm:$0xf]
      %v926 = vld [vmem:[%s915 + $0x3c] sm:$0xf]
      %v927 = vld [vmem:[%s915 + $0x40] sm:$0xf]
      %v928 = vld [vmem:[%s915 + $0x48] sm:$0xf]
      %v929 = vld [vmem:[%s915 + $0x4c] sm:$0xf]
      %v930 = vld [vmem:[%s915 + $0x54] sm:$0xf]
      %v931 = vld [vmem:[%s915 + $0x58] sm:$0xf]
      %v932 = vld [vmem:[%s915 + $0x60] sm:$0xf]
      %v933 = vld [vmem:[%s915 + $0x64] sm:$0xf]
      %v934 = vld [vmem:[%s915 + $0x6c] sm:$0xf]
      %v935 = vld [vmem:[%s915 + $0x70] sm:$0xf]
      %v956 = vunpack.c.l.b16 %v916
      %v957 = vunpack.c.l.b16 %v917
      %v958 = vunpack.c.l.b16 %v918
      %v959 = vunpack.c.l.b16 %v919
      %v960 = vunpack.c.l.b16 %v920
      %v961 = vunpack.c.l.b16 %v921
      %v962 = vunpack.c.l.b16 %v922
      %v963 = vunpack.c.l.b16 %v923
      %v964 = vunpack.c.l.b16 %v924
      %v965 = vunpack.c.l.b16 %v925
      %v966 = vunpack.c.l.b16 %v926
      %v967 = vunpack.c.l.b16 %v927
      %v968 = vunpack.c.l.b16 %v928
      %v969 = vunpack.c.l.b16 %v929
      %v970 = vunpack.c.l.b16 %v930
      %v971 = vunpack.c.l.b16 %v931
      %v972 = vunpack.c.l.b16 %v932
      %v973 = vunpack.c.l.b16 %v933
      %v974 = vunpack.c.l.b16 %v934
      %v975 = vunpack.c.l.b16 %v935
      %v976 = vpack.c.b16 %v957, %v956
      %v977 = vpack.c.b16 %v959, %v958
      %v978 = vpack.c.b16 %v961, %v960
      %v979 = vpack.c.b16 %v963, %v962
      %v980 = vpack.c.b16 %v965, %v964
      %v981 = vpack.c.b16 %v967, %v966
      %v982 = vpack.c.b16 %v969, %v968
      %v983 = vpack.c.b16 %v971, %v970
      %v984 = vpack.c.b16 %v973, %v972
      %v985 = vpack.c.b16 %v975, %v974
      %996 = vst.msk [vmem:[#allocation3] sm:$0xff] %vm414, %v976
      %997 = vst.msk [vmem:[#allocation3 + $0x18] sm:$0xff] %vm414, %v977
      %998 = vst.msk [vmem:[#allocation3 + $0x30] sm:$0xff] %vm414, %v978
      %999 = vst.msk [vmem:[#allocation3 + $0x48] sm:$0xff] %vm414, %v979
      %1000 = vst.msk [vmem:[#allocation3 + $0x60] sm:$0xff] %vm414, %v980
      %1001 = vst.msk [vmem:[#allocation3 + $0x78] sm:$0xff] %vm414, %v981
      %1002 = vst.msk [vmem:[#allocation3 + $0x90] sm:$0xff] %vm414, %v982
      %1003 = vst.msk [vmem:[#allocation3 + $0xa8] sm:$0xff] %vm414, %v983
      %1004 = vst.msk [vmem:[#allocation3 + $0xc0] sm:$0xff] %vm414, %v984
      %1005 = vst.msk [vmem:[#allocation3 + $0xd8] sm:$0xff] %vm414, %v985
      %v1006 = vld [vmem:[%s915] sm:$0xf]
      %v1007 = vld [vmem:[%s915 + $0x4] sm:$0xf]
      %v1008 = vld [vmem:[%s915 + $0x8] sm:$0x1]
      %v1009 = vld [vmem:[%s915 + $0xc] sm:$0xf]
      %v1010 = vld [vmem:[%s915 + $0x10] sm:$0xf]
      %v1011 = vld [vmem:[%s915 + $0x14] sm:$0x1]
      %v1012 = vld [vmem:[%s915 + $0x18] sm:$0xf]
      %v1013 = vld [vmem:[%s915 + $0x1c] sm:$0xf]
      %v1014 = vld [vmem:[%s915 + $0x20] sm:$0x1]
      %v1015 = vld [vmem:[%s915 + $0x24] sm:$0xf]
      %v1016 = vld [vmem:[%s915 + $0x28] sm:$0xf]
      %v1017 = vld [vmem:[%s915 + $0x2c] sm:$0x1]
      %v1018 = vld [vmem:[%s915 + $0x30] sm:$0xf]
      %v1019 = vld [vmem:[%s915 + $0x34] sm:$0xf]
      %v1020 = vld [vmem:[%s915 + $0x38] sm:$0x1]
      %v1021 = vld [vmem:[%s915 + $0x3c] sm:$0xf]
      %v1022 = vld [vmem:[%s915 + $0x40] sm:$0xf]
      %v1023 = vld [vmem:[%s915 + $0x44] sm:$0x1]
      %v1024 = vld [vmem:[%s915 + $0x48] sm:$0xf]
      %v1025 = vld [vmem:[%s915 + $0x4c] sm:$0xf]
      %v1026 = vld [vmem:[%s915 + $0x50] sm:$0x1]
      %v1027 = vld [vmem:[%s915 + $0x54] sm:$0xf]
      %v1028 = vld [vmem:[%s915 + $0x58] sm:$0xf]
      %v1029 = vld [vmem:[%s915 + $0x5c] sm:$0x1]
      %v1030 = vld [vmem:[%s915 + $0x60] sm:$0xf]
      %v1031 = vld [vmem:[%s915 + $0x64] sm:$0xf]
      %v1032 = vld [vmem:[%s915 + $0x68] sm:$0x1]
      %v1033 = vld [vmem:[%s915 + $0x6c] sm:$0xf]
      %v1034 = vld [vmem:[%s915 + $0x70] sm:$0xf]
      %v1035 = vld [vmem:[%s915 + $0x74] sm:$0x1]
      %v1066 = vunpack.c.l.b16 %v1006
      %v1067 = vunpack.c.l.b16 %v1007
      %v1068 = vunpack.c.l.b16 %v1008
      %v1069 = vunpack.c.l.b16 %v1009
      %v1070 = vunpack.c.l.b16 %v1010
      %v1071 = vunpack.c.l.b16 %v1011
      %v1072 = vunpack.c.l.b16 %v1012
      %v1073 = vunpack.c.l.b16 %v1013
      %v1074 = vunpack.c.l.b16 %v1014
      %v1075 = vunpack.c.l.b16 %v1015
      %v1076 = vunpack.c.l.b16 %v1016
      %v1077 = vunpack.c.l.b16 %v1017
      %v1078 = vunpack.c.l.b16 %v1018
      %v1079 = vunpack.c.l.b16 %v1019
      %v1080 = vunpack.c.l.b16 %v1020
      %v1081 = vunpack.c.l.b16 %v1021
      %v1082 = vunpack.c.l.b16 %v1022
      %v1083 = vunpack.c.l.b16 %v1023
      %v1084 = vunpack.c.l.b16 %v1024
      %v1085 = vunpack.c.l.b16 %v1025
      %v1086 = vunpack.c.l.b16 %v1026
      %v1087 = vunpack.c.l.b16 %v1027
      %v1088 = vunpack.c.l.b16 %v1028
      %v1089 = vunpack.c.l.b16 %v1029
      %v1090 = vunpack.c.l.b16 %v1030
      %v1091 = vunpack.c.l.b16 %v1031
      %v1092 = vunpack.c.l.b16 %v1032
      %v1093 = vunpack.c.l.b16 %v1033
      %v1094 = vunpack.c.l.b16 %v1034
      %v1095 = vunpack.c.l.b16 %v1035
      %v1096 = vpack.c.b16 %v1067, %v1066
      %v1097 = vpack.c.b16 %v1068, %v1068
      %v1098 = vpack.c.b16 %v1070, %v1069
      %v1099 = vpack.c.b16 %v1071, %v1071
      %v1100 = vpack.c.b16 %v1073, %v1072
      %v1101 = vpack.c.b16 %v1074, %v1074
      %v1102 = vpack.c.b16 %v1076, %v1075
      %v1103 = vpack.c.b16 %v1077, %v1077
      %v1104 = vpack.c.b16 %v1079, %v1078
      %v1105 = vpack.c.b16 %v1080, %v1080
      %v1106 = vpack.c.b16 %v1082, %v1081
      %v1107 = vpack.c.b16 %v1083, %v1083
      %v1108 = vpack.c.b16 %v1085, %v1084
      %v1109 = vpack.c.b16 %v1086, %v1086
      %v1110 = vpack.c.b16 %v1088, %v1087
      %v1111 = vpack.c.b16 %v1089, %v1089
      %v1112 = vpack.c.b16 %v1091, %v1090
      %v1113 = vpack.c.b16 %v1092, %v1092
      %v1114 = vpack.c.b16 %v1094, %v1093
      %v1115 = vpack.c.b16 %v1095, %v1095
      %v1117 = vshrl.u32 %v1096, 16
      %v1119 = vshll.u32 %v1096, 16
      %v1121 = vrot.slane %v1119, 1
      %v1122 = vor.u32 %v1117, %v1121
      %v1124 = vshll.u32 %v1097, 16
      %v1126 = vrot.slane %v1124, 1
      %v1127 = vsel %vm535, %v1122, %v1126
      %v1129 = vshrl.u32 %v1098, 16
      %v1131 = vshll.u32 %v1098, 16
      %v1133 = vrot.slane %v1131, 1
      %v1134 = vor.u32 %v1129, %v1133
      %v1136 = vshll.u32 %v1099, 16
      %v1138 = vrot.slane %v1136, 1
      %v1139 = vsel %vm535, %v1134, %v1138
      %v1141 = vshrl.u32 %v1100, 16
      %v1143 = vshll.u32 %v1100, 16
      %v1145 = vrot.slane %v1143, 1
      %v1146 = vor.u32 %v1141, %v1145
      %v1148 = vshll.u32 %v1101, 16
      %v1150 = vrot.slane %v1148, 1
      %v1151 = vsel %vm535, %v1146, %v1150
      %v1153 = vshrl.u32 %v1102, 16
      %v1155 = vshll.u32 %v1102, 16
      %v1157 = vrot.slane %v1155, 1
      %v1158 = vor.u32 %v1153, %v1157
      %v1160 = vshll.u32 %v1103, 16
      %v1162 = vrot.slane %v1160, 1
      %v1163 = vsel %vm535, %v1158, %v1162
      %v1165 = vshrl.u32 %v1104, 16
      %v1167 = vshll.u32 %v1104, 16
      %v1169 = vrot.slane %v1167, 1
      %v1170 = vor.u32 %v1165, %v1169
      %v1172 = vshll.u32 %v1105, 16
      %v1174 = vrot.slane %v1172, 1
      %v1175 = vsel %vm535, %v1170, %v1174
      %v1177 = vshrl.u32 %v1106, 16
      %v1179 = vshll.u32 %v1106, 16
      %v1181 = vrot.slane %v1179, 1
      %v1182 = vor.u32 %v1177, %v1181
      %v1184 = vshll.u32 %v1107, 16
      %v1186 = vrot.slane %v1184, 1
      %v1187 = vsel %vm535, %v1182, %v1186
      %v1189 = vshrl.u32 %v1108, 16
      %v1191 = vshll.u32 %v1108, 16
      %v1193 = vrot.slane %v1191, 1
      %v1194 = vor.u32 %v1189, %v1193
      %v1196 = vshll.u32 %v1109, 16
      %v1198 = vrot.slane %v1196, 1
      %v1199 = vsel %vm535, %v1194, %v1198
      %v1201 = vshrl.u32 %v1110, 16
      %v1203 = vshll.u32 %v1110, 16
      %v1205 = vrot.slane %v1203, 1
      %v1206 = vor.u32 %v1201, %v1205
      %v1208 = vshll.u32 %v1111, 16
      %v1210 = vrot.slane %v1208, 1
      %v1211 = vsel %vm535, %v1206, %v1210
      %v1213 = vshrl.u32 %v1112, 16
      %v1215 = vshll.u32 %v1112, 16
      %v1217 = vrot.slane %v1215, 1
      %v1218 = vor.u32 %v1213, %v1217
      %v1220 = vshll.u32 %v1113, 16
      %v1222 = vrot.slane %v1220, 1
      %v1223 = vsel %vm535, %v1218, %v1222
      %v1225 = vshrl.u32 %v1114, 16
      %v1227 = vshll.u32 %v1114, 16
      %v1229 = vrot.slane %v1227, 1
      %v1230 = vor.u32 %v1225, %v1229
      %v1232 = vshll.u32 %v1115, 16
      %v1234 = vrot.slane %v1232, 1
      %v1235 = vsel %vm535, %v1230, %v1234
      %1246 = vst.msk [vmem:[#allocation3 + $0x8] sm:$0xff] %vm414, %v1127
      %1247 = vst.msk [vmem:[#allocation3 + $0x20] sm:$0xff] %vm414, %v1139
      %1248 = vst.msk [vmem:[#allocation3 + $0x38] sm:$0xff] %vm414, %v1151
      %1249 = vst.msk [vmem:[#allocation3 + $0x50] sm:$0xff] %vm414, %v1163
      %1250 = vst.msk [vmem:[#allocation3 + $0x68] sm:$0xff] %vm414, %v1175
      %1251 = vst.msk [vmem:[#allocation3 + $0x80] sm:$0xff] %vm414, %v1187
      %1252 = vst.msk [vmem:[#allocation3 + $0x98] sm:$0xff] %vm414, %v1199
      %1253 = vst.msk [vmem:[#allocation3 + $0xb0] sm:$0xff] %vm414, %v1211
      %1254 = vst.msk [vmem:[#allocation3 + $0xc8] sm:$0xff] %vm414, %v1223
      %1255 = vst.msk [vmem:[#allocation3 + $0xe0] sm:$0xff] %vm414, %v1235
      %v1256 = vld [vmem:[%s915] sm:$0xe]
      %v1257 = vld [vmem:[%s915 + $0x4] sm:$0xf]
      %v1258 = vld [vmem:[%s915 + $0x8] sm:$0x1]
      %v1259 = vld [vmem:[%s915 + $0xc] sm:$0xe]
      %v1260 = vld [vmem:[%s915 + $0x10] sm:$0xf]
      %v1261 = vld [vmem:[%s915 + $0x14] sm:$0x1]
      %v1262 = vld [vmem:[%s915 + $0x18] sm:$0xe]
      %v1263 = vld [vmem:[%s915 + $0x1c] sm:$0xf]
      %v1264 = vld [vmem:[%s915 + $0x20] sm:$0x1]
      %v1265 = vld [vmem:[%s915 + $0x24] sm:$0xe]
      %v1266 = vld [vmem:[%s915 + $0x28] sm:$0xf]
      %v1267 = vld [vmem:[%s915 + $0x2c] sm:$0x1]
      %v1268 = vld [vmem:[%s915 + $0x30] sm:$0xe]
      %v1269 = vld [vmem:[%s915 + $0x34] sm:$0xf]
      %v1270 = vld [vmem:[%s915 + $0x38] sm:$0x1]
      %v1271 = vld [vmem:[%s915 + $0x3c] sm:$0xe]
      %v1272 = vld [vmem:[%s915 + $0x40] sm:$0xf]
      %v1273 = vld [vmem:[%s915 + $0x44] sm:$0x1]
      %v1274 = vld [vmem:[%s915 + $0x48] sm:$0xe]
      %v1275 = vld [vmem:[%s915 + $0x4c] sm:$0xf]
      %v1276 = vld [vmem:[%s915 + $0x50] sm:$0x1]
      %v1277 = vld [vmem:[%s915 + $0x54] sm:$0xe]
      %v1278 = vld [vmem:[%s915 + $0x58] sm:$0xf]
      %v1279 = vld [vmem:[%s915 + $0x5c] sm:$0x1]
      %v1280 = vld [vmem:[%s915 + $0x60] sm:$0xe]
      %v1281 = vld [vmem:[%s915 + $0x64] sm:$0xf]
      %v1282 = vld [vmem:[%s915 + $0x68] sm:$0x1]
      %v1283 = vld [vmem:[%s915 + $0x6c] sm:$0xe]
      %v1284 = vld [vmem:[%s915 + $0x70] sm:$0xf]
      %v1285 = vld [vmem:[%s915 + $0x74] sm:$0x1]
      %v1316 = vunpack.c.l.b16 %v1256
      %v1317 = vunpack.c.l.b16 %v1257
      %v1318 = vunpack.c.l.b16 %v1258
      %v1319 = vunpack.c.l.b16 %v1259
      %v1320 = vunpack.c.l.b16 %v1260
      %v1321 = vunpack.c.l.b16 %v1261
      %v1322 = vunpack.c.l.b16 %v1262
      %v1323 = vunpack.c.l.b16 %v1263
      %v1324 = vunpack.c.l.b16 %v1264
      %v1325 = vunpack.c.l.b16 %v1265
      %v1326 = vunpack.c.l.b16 %v1266
      %v1327 = vunpack.c.l.b16 %v1267
      %v1328 = vunpack.c.l.b16 %v1268
      %v1329 = vunpack.c.l.b16 %v1269
      %v1330 = vunpack.c.l.b16 %v1270
      %v1331 = vunpack.c.l.b16 %v1271
      %v1332 = vunpack.c.l.b16 %v1272
      %v1333 = vunpack.c.l.b16 %v1273
      %v1334 = vunpack.c.l.b16 %v1274
      %v1335 = vunpack.c.l.b16 %v1275
      %v1336 = vunpack.c.l.b16 %v1276
      %v1337 = vunpack.c.l.b16 %v1277
      %v1338 = vunpack.c.l.b16 %v1278
      %v1339 = vunpack.c.l.b16 %v1279
      %v1340 = vunpack.c.l.b16 %v1280
      %v1341 = vunpack.c.l.b16 %v1281
      %v1342 = vunpack.c.l.b16 %v1282
      %v1343 = vunpack.c.l.b16 %v1283
      %v1344 = vunpack.c.l.b16 %v1284
      %v1345 = vunpack.c.l.b16 %v1285
      %v1346 = vpack.c.b16 %v1317, %v1316
      %v1347 = vpack.c.b16 %v1318, %v1318
      %v1348 = vpack.c.b16 %v1320, %v1319
      %v1349 = vpack.c.b16 %v1321, %v1321
      %v1350 = vpack.c.b16 %v1323, %v1322
      %v1351 = vpack.c.b16 %v1324, %v1324
      %v1352 = vpack.c.b16 %v1326, %v1325
      %v1353 = vpack.c.b16 %v1327, %v1327
      %v1354 = vpack.c.b16 %v1329, %v1328
      %v1355 = vpack.c.b16 %v1330, %v1330
      %v1356 = vpack.c.b16 %v1332, %v1331
      %v1357 = vpack.c.b16 %v1333, %v1333
      %v1358 = vpack.c.b16 %v1335, %v1334
      %v1359 = vpack.c.b16 %v1336, %v1336
      %v1360 = vpack.c.b16 %v1338, %v1337
      %v1361 = vpack.c.b16 %v1339, %v1339
      %v1362 = vpack.c.b16 %v1341, %v1340
      %v1363 = vpack.c.b16 %v1342, %v1342
      %v1364 = vpack.c.b16 %v1344, %v1343
      %v1365 = vpack.c.b16 %v1345, %v1345
      %v1366 = vrot.slane %v1346, 1
      %v1367 = vrot.slane %v1347, 1
      %v1368 = vsel %vm786, %v1366, %v1367
      %v1369 = vrot.slane %v1348, 1
      %v1370 = vrot.slane %v1349, 1
      %v1371 = vsel %vm786, %v1369, %v1370
      %v1372 = vrot.slane %v1350, 1
      %v1373 = vrot.slane %v1351, 1
      %v1374 = vsel %vm786, %v1372, %v1373
      %v1375 = vrot.slane %v1352, 1
      %v1376 = vrot.slane %v1353, 1
      %v1377 = vsel %vm786, %v1375, %v1376
      %v1378 = vrot.slane %v1354, 1
      %v1379 = vrot.slane %v1355, 1
      %v1380 = vsel %vm786, %v1378, %v1379
      %v1381 = vrot.slane %v1356, 1
      %v1382 = vrot.slane %v1357, 1
      %v1383 = vsel %vm786, %v1381, %v1382
      %v1384 = vrot.slane %v1358, 1
      %v1385 = vrot.slane %v1359, 1
      %v1386 = vsel %vm786, %v1384, %v1385
      %v1387 = vrot.slane %v1360, 1
      %v1388 = vrot.slane %v1361, 1
      %v1389 = vsel %vm786, %v1387, %v1388
      %v1390 = vrot.slane %v1362, 1
      %v1391 = vrot.slane %v1363, 1
      %v1392 = vsel %vm786, %v1390, %v1391
      %v1393 = vrot.slane %v1364, 1
      %v1394 = vrot.slane %v1365, 1
      %v1395 = vsel %vm786, %v1393, %v1394
      %1406 = vst.msk [vmem:[#allocation3 + $0x10] sm:$0xff] %vm414, %v1368
      %1407 = vst.msk [vmem:[#allocation3 + $0x28] sm:$0xff] %vm414, %v1371
      %1408 = vst.msk [vmem:[#allocation3 + $0x40] sm:$0xff] %vm414, %v1374
      %1409 = vst.msk [vmem:[#allocation3 + $0x58] sm:$0xff] %vm414, %v1377
      %1410 = vst.msk [vmem:[#allocation3 + $0x70] sm:$0xff] %vm414, %v1380
      %1411 = vst.msk [vmem:[#allocation3 + $0x88] sm:$0xff] %vm414, %v1383
      %1412 = vst.msk [vmem:[#allocation3 + $0xa0] sm:$0xff] %vm414, %v1386
      %1413 = vst.msk [vmem:[#allocation3 + $0xb8] sm:$0xff] %vm414, %v1389
      %1414 = vst.msk [vmem:[#allocation3 + $0xd0] sm:$0xff] %vm414, %v1392
      %1415 = vst.msk [vmem:[#allocation3 + $0xe8] sm:$0xff] %vm414, %v1395
      %v1416 = vld [vmem:[#allocation3] sm:$0xff]
      %v1417 = vld [vmem:[#allocation3 + $0x8] sm:$0xff]
      %v1418 = vld [vmem:[#allocation3 + $0x10] sm:$0xff]
      %v1419 = vld [vmem:[#allocation3 + $0x18] sm:$0xff]
      %v1420 = vld [vmem:[#allocation3 + $0x20] sm:$0xff]
      %v1421 = vld [vmem:[#allocation3 + $0x28] sm:$0xff]
      %v1422 = vld [vmem:[#allocation3 + $0x30] sm:$0xff]
      %v1423 = vld [vmem:[#allocation3 + $0x38] sm:$0xff]
      %v1424 = vld [vmem:[#allocation3 + $0x40] sm:$0xff]
      %v1425 = vld [vmem:[#allocation3 + $0x48] sm:$0xff]
      %v1426 = vld [vmem:[#allocation3 + $0x50] sm:$0xff]
      %v1427 = vld [vmem:[#allocation3 + $0x58] sm:$0xff]
      %v1428 = vld [vmem:[#allocation3 + $0x60] sm:$0xff]
      %v1429 = vld [vmem:[#allocation3 + $0x68] sm:$0xff]
      %v1430 = vld [vmem:[#allocation3 + $0x70] sm:$0xff]
      %v1431 = vld [vmem:[#allocation3 + $0x78] sm:$0xff]
      %v1432 = vld [vmem:[#allocation3 + $0x80] sm:$0xff]
      %v1433 = vld [vmem:[#allocation3 + $0x88] sm:$0xff]
      %v1434 = vld [vmem:[#allocation3 + $0x90] sm:$0xff]
      %v1435 = vld [vmem:[#allocation3 + $0x98] sm:$0xff]
      %v1436 = vld [vmem:[#allocation3 + $0xa0] sm:$0xff]
      %v1437 = vld [vmem:[#allocation3 + $0xa8] sm:$0xff]
      %v1438 = vld [vmem:[#allocation3 + $0xb0] sm:$0xff]
      %v1439 = vld [vmem:[#allocation3 + $0xb8] sm:$0xff]
      %v1440 = vld [vmem:[#allocation3 + $0xc0] sm:$0xff]
      %v1441 = vld [vmem:[#allocation3 + $0xc8] sm:$0xff]
      %v1442 = vld [vmem:[#allocation3 + $0xd0] sm:$0xff]
      %v1443 = vld [vmem:[#allocation3 + $0xd8] sm:$0xff]
      %v1444 = vld [vmem:[#allocation3 + $0xe0] sm:$0xff]
      %v1445 = vld [vmem:[#allocation3 + $0xe8] sm:$0xff]
      %v1446 = vld [vmem:[%s2 + $0xc0] sm:$0xf]
      %v1447 = vld [vmem:[%s2 + $0xc4] sm:$0xf]
      %v1448 = vld [vmem:[%s2 + $0xc8] sm:$0xf]
      %v1449 = vld [vmem:[%s2 + $0xcc] sm:$0xf]
      %v1450 = vld [vmem:[%s2 + $0xd0] sm:$0xf]
      %v1451 = vld [vmem:[%s2 + $0xd4] sm:$0xf]
      %v1452 = vld [vmem:[%s2 + $0xd8] sm:$0xf]
      %v1453 = vld [vmem:[%s2 + $0xdc] sm:$0xf]
      %v1454 = vld [vmem:[%s2 + $0xe0] sm:$0xf]
      %v1455 = vld [vmem:[%s2 + $0xe4] sm:$0xf]
      %v1456 = vld [vmem:[%s2 + $0xe8] sm:$0xf]
      %v1457 = vld [vmem:[%s2 + $0xec] sm:$0xf]
      %v1458 = vld [vmem:[%s2 + $0xf0] sm:$0xf]
      %v1459 = vld [vmem:[%s2 + $0xf4] sm:$0xf]
      %v1460 = vld [vmem:[%s2 + $0xf8] sm:$0xf]
      %v1461 = vld [vmem:[%s2 + $0xfc] sm:$0xf]
      %v1462 = vld [vmem:[%s2 + $0x100] sm:$0xf]
      %v1463 = vld [vmem:[%s2 + $0x104] sm:$0xf]
      %v1464 = vld [vmem:[%s2 + $0x108] sm:$0xf]
      %v1465 = vld [vmem:[%s2 + $0x10c] sm:$0xf]
      %v1466 = vld [vmem:[%s2 + $0x110] sm:$0xf]
      %v1467 = vld [vmem:[%s2 + $0x114] sm:$0xf]
      %v1468 = vld [vmem:[%s2 + $0x118] sm:$0xf]
      %v1469 = vld [vmem:[%s2 + $0x11c] sm:$0xf]
      %v1470 = vld [vmem:[%s2 + $0x120] sm:$0xf]
      %v1471 = vld [vmem:[%s2 + $0x124] sm:$0xf]
      %v1472 = vld [vmem:[%s2 + $0x128] sm:$0xf]
      %v1473 = vld [vmem:[%s2 + $0x12c] sm:$0xf]
      %v1474 = vld [vmem:[%s2 + $0x130] sm:$0xf]
      %v1475 = vld [vmem:[%s2 + $0x134] sm:$0xf]
      %v1476 = vld [vmem:[%s2 + $0x138] sm:$0xf]
      %v1477 = vld [vmem:[%s2 + $0x13c] sm:$0xf]
      %v1478 = vld [vmem:[%s2 + $0x140] sm:$0xf]
      %v1479 = vld [vmem:[%s2 + $0x144] sm:$0xf]
      %v1480 = vld [vmem:[%s2 + $0x148] sm:$0xf]
      %v1481 = vld [vmem:[%s2 + $0x14c] sm:$0xf]
      %v1482 = vld [vmem:[%s2 + $0x150] sm:$0xf]
      %v1483 = vld [vmem:[%s2 + $0x154] sm:$0xf]
      %v1484 = vld [vmem:[%s2 + $0x158] sm:$0xf]
      %v1485 = vld [vmem:[%s2 + $0x15c] sm:$0xf]
      %v1486 = vld [vmem:[%s2 + $0x160] sm:$0xf]
      %v1487 = vld [vmem:[%s2 + $0x164] sm:$0xf]
      %v1488 = vld [vmem:[%s2 + $0x168] sm:$0xf]
      %v1489 = vld [vmem:[%s2 + $0x16c] sm:$0xf]
      %v1490 = vld [vmem:[%s2 + $0x170] sm:$0xf]
      %v1491 = vld [vmem:[%s2 + $0x174] sm:$0xf]
      %v1492 = vld [vmem:[%s2 + $0x178] sm:$0xf]
      %v1493 = vld [vmem:[%s2 + $0x17c] sm:$0xf]
      %v1542 = vunpack.c.l.b16 %v1446
      %v1543 = vunpack.c.l.b16 %v1447
      %v1544 = vunpack.c.l.b16 %v1448
      %v1545 = vunpack.c.l.b16 %v1449
      %v1546 = vunpack.c.l.b16 %v1450
      %v1547 = vunpack.c.l.b16 %v1451
      %v1548 = vunpack.c.l.b16 %v1452
      %v1549 = vunpack.c.l.b16 %v1453
      %v1550 = vunpack.c.l.b16 %v1454
      %v1551 = vunpack.c.l.b16 %v1455
      %v1552 = vunpack.c.l.b16 %v1456
      %v1553 = vunpack.c.l.b16 %v1457
      %v1554 = vunpack.c.l.b16 %v1458
      %v1555 = vunpack.c.l.b16 %v1459
      %v1556 = vunpack.c.l.b16 %v1460
      %v1557 = vunpack.c.l.b16 %v1461
      %v1558 = vunpack.c.l.b16 %v1462
      %v1559 = vunpack.c.l.b16 %v1463
      %v1560 = vunpack.c.l.b16 %v1464
      %v1561 = vunpack.c.l.b16 %v1465
      %v1562 = vunpack.c.l.b16 %v1466
      %v1563 = vunpack.c.l.b16 %v1467
      %v1564 = vunpack.c.l.b16 %v1468
      %v1565 = vunpack.c.l.b16 %v1469
      %v1566 = vunpack.c.l.b16 %v1470
      %v1567 = vunpack.c.l.b16 %v1471
      %v1568 = vunpack.c.l.b16 %v1472
      %v1569 = vunpack.c.l.b16 %v1473
      %v1570 = vunpack.c.l.b16 %v1474
      %v1571 = vunpack.c.l.b16 %v1475
      %v1572 = vunpack.c.l.b16 %v1476
      %v1573 = vunpack.c.l.b16 %v1477
      %v1574 = vunpack.c.l.b16 %v1478
      %v1575 = vunpack.c.l.b16 %v1479
      %v1576 = vunpack.c.l.b16 %v1480
      %v1577 = vunpack.c.l.b16 %v1481
      %v1578 = vunpack.c.l.b16 %v1482
      %v1579 = vunpack.c.l.b16 %v1483
      %v1580 = vunpack.c.l.b16 %v1484
      %v1581 = vunpack.c.l.b16 %v1485
      %v1582 = vunpack.c.l.b16 %v1486
      %v1583 = vunpack.c.l.b16 %v1487
      %v1584 = vunpack.c.l.b16 %v1488
      %v1585 = vunpack.c.l.b16 %v1489
      %v1586 = vunpack.c.l.b16 %v1490
      %v1587 = vunpack.c.l.b16 %v1491
      %v1588 = vunpack.c.l.b16 %v1492
      %v1589 = vunpack.c.l.b16 %v1493
      %v1590 = vpack.c.b16 %v1543, %v1542
      %v1591 = vpack.c.b16 %v1545, %v1544
      %v1592 = vpack.c.b16 %v1547, %v1546
      %v1593 = vpack.c.b16 %v1549, %v1548
      %v1594 = vpack.c.b16 %v1551, %v1550
      %v1595 = vpack.c.b16 %v1553, %v1552
      %v1596 = vpack.c.b16 %v1555, %v1554
      %v1597 = vpack.c.b16 %v1557, %v1556
      %v1598 = vpack.c.b16 %v1559, %v1558
      %v1599 = vpack.c.b16 %v1561, %v1560
      %v1600 = vpack.c.b16 %v1563, %v1562
      %v1601 = vpack.c.b16 %v1565, %v1564
      %v1602 = vpack.c.b16 %v1567, %v1566
      %v1603 = vpack.c.b16 %v1569, %v1568
      %v1604 = vpack.c.b16 %v1571, %v1570
      %v1605 = vpack.c.b16 %v1573, %v1572
      %v1606 = vpack.c.b16 %v1575, %v1574
      %v1607 = vpack.c.b16 %v1577, %v1576
      %v1608 = vpack.c.b16 %v1579, %v1578
      %v1609 = vpack.c.b16 %v1581, %v1580
      %v1610 = vpack.c.b16 %v1583, %v1582
      %v1611 = vpack.c.b16 %v1585, %v1584
      %v1612 = vpack.c.b16 %v1587, %v1586
      %v1613 = vpack.c.b16 %v1589, %v1588
      %1638 = vmatprep.subr.bf16.mxu0 0
      %1639 = vmatpush1.bf16.msra.mxu0 %v1590
      %1640 = vmatprep.subr.bf16.mxu0 0
      %1641 = vmatpush1.bf16.msra.mxu0 %v1591
      %1642 = vmatprep.subr.bf16.mxu0 0
      %1643 = vmatpush1.bf16.msra.mxu0 %v1592
      %1644 = vmatprep.subr.bf16.mxu0 0
      %1645 = vmatpush1.bf16.msra.mxu0 %v1593
      %1646 = vmatprep.subr.bf16.mxu0 0
      %1647 = vmatpush1.bf16.msra.mxu0 %v1594
      %1648 = vmatprep.subr.bf16.mxu0 0
      %1649 = vmatpush1.bf16.msra.mxu0 %v1595
      %1650 = vmatprep.subr.bf16.mxu0 0
      %1651 = vmatpush1.bf16.msra.mxu0 %v1596
      %1652 = vmatprep.subr.bf16.mxu0 0
      %1653 = vmatpush1.bf16.msra.mxu0 %v1597
      %1654 = vmatprep.subr.bf16.mxu0 0
      %1655 = vmatpush1.bf16.msra.mxu0 %v1598
      %1656 = vmatprep.subr.bf16.mxu0 0
      %1657 = vmatpush1.bf16.msra.mxu0 %v1599
      %1658 = vmatprep.subr.bf16.mxu0 0
      %1659 = vmatpush1.bf16.msra.mxu0 %v1600
      %1660 = vmatprep.subr.bf16.mxu0 0
      %1661 = vmatpush1.bf16.msra.mxu0 %v1601
      %1662 = vmatprep.subr.bf16.mxu0 0
      %1663 = vmatpush1.bf16.msra.mxu0 %v1602
      %1664 = vmatprep.subr.bf16.mxu0 0
      %1665 = vmatpush1.bf16.msra.mxu0 %v1603
      %1666 = vmatprep.subr.bf16.mxu0 0
      %1667 = vmatpush1.bf16.msra.mxu0 %v1604
      %1668 = vmatprep.subr.bf16.mxu0 0
      %1669 = vmatpush1.bf16.msra.mxu0 %v1605
      %1670 = vmatprep.mubr.bf16.mxu0 %v1417
      %1671 = vmatmul.mubr.bf16.gmra.mrb[0].mxu0 %v1416
      %v1672 = vpop.f32.mrb[0].mxu0
      %v1673 = vadd.f32 0.0, %v1672
      %v1674 = vpop.f32.mrb[0].mxu0
      %v1675 = vpop.f32.mrb[0].mxu0
      %v1676 = vadd.f32 0.0, %v1675
      %v1677 = vpop.f32.mrb[0].mxu0
      %1678 = vmatprep.mubr.bf16.mxu0 %v1420
      %1679 = vmatmul.mubr.bf16.gmra.mrb[0].mxu0 %v1419
      %v1680 = vpop.f32.mrb[0].mxu0
      %v1681 = vadd.f32 0.0, %v1680
      %v1682 = vpop.f32.mrb[0].mxu0
      %v1683 = vpop.f32.mrb[0].mxu0
      %v1684 = vadd.f32 0.0, %v1683
      %v1685 = vpop.f32.mrb[0].mxu0
      %1686 = vmatprep.mubr.bf16.mxu0 %v1423
      %1687 = vmatmul.mubr.bf16.gmra.mrb[0].mxu0 %v1422
      %v1688 = vpop.f32.mrb[0].mxu0
      %v1689 = vadd.f32 0.0, %v1688
      %v1690 = vpop.f32.mrb[0].mxu0
      %v1691 = vpop.f32.mrb[0].mxu0
      %v1692 = vadd.f32 0.0, %v1691
      %v1693 = vpop.f32.mrb[0].mxu0
      %1694 = vmatprep.mubr.bf16.mxu0 %v1426
      %1695 = vmatmul.mubr.bf16.gmra.mrb[0].mxu0 %v1425
      %v1696 = vpop.f32.mrb[0].mxu0
      %v1697 = vadd.f32 0.0, %v1696
      %v1698 = vpop.f32.mrb[0].mxu0
      %v1699 = vpop.f32.mrb[0].mxu0
      %v1700 = vadd.f32 0.0, %v1699
      %v1701 = vpop.f32.mrb[0].mxu0
      %1702 = vmatprep.mubr.bf16.mxu0 %v1429
      %1703 = vmatmul.mubr.bf16.gmra.mrb[0].mxu0 %v1428
      %v1704 = vpop.f32.mrb[0].mxu0
      %v1705 = vadd.f32 0.0, %v1704
      %v1706 = vpop.f32.mrb[0].mxu0
      %v1707 = vpop.f32.mrb[0].mxu0
      %v1708 = vadd.f32 0.0, %v1707
      %v1709 = vpop.f32.mrb[0].mxu0
      %1710 = vmatprep.mubr.bf16.mxu0 %v1432
      %1711 = vmatmul.mubr.bf16.gmra.mrb[0].mxu0 %v1431
      %v1712 = vpop.f32.mrb[0].mxu0
      %v1713 = vadd.f32 0.0, %v1712
      %v1714 = vpop.f32.mrb[0].mxu0
      %v1715 = vpop.f32.mrb[0].mxu0
      %v1716 = vadd.f32 0.0, %v1715
      %v1717 = vpop.f32.mrb[0].mxu0
      %1718 = vmatprep.mubr.bf16.mxu0 %v1435
      %1719 = vmatmul.mubr.bf16.gmra.mrb[0].mxu0 %v1434
      %v1720 = vpop.f32.mrb[0].mxu0
      %v1721 = vadd.f32 0.0, %v1720
      %v1722 = vpop.f32.mrb[0].mxu0
      %v1723 = vpop.f32.mrb[0].mxu0
      %v1724 = vadd.f32 0.0, %v1723
      %v1725 = vpop.f32.mrb[0].mxu0
      %1726 = vmatprep.mubr.bf16.mxu0 %v1438
      %1727 = vmatmul.mubr.bf16.gmra.mrb[0].mxu0 %v1437
      %v1728 = vpop.f32.mrb[0].mxu0
      %v1729 = vadd.f32 0.0, %v1728
      %v1730 = vpop.f32.mrb[0].mxu0
      %v1731 = vpop.f32.mrb[0].mxu0
      %v1732 = vadd.f32 0.0, %v1731
      %v1733 = vpop.f32.mrb[0].mxu0
      %1734 = vmatprep.mubr.bf16.mxu0 %v1441
      %1735 = vmatmul.mubr.bf16.gmra.mrb[0].mxu0 %v1440
      %v1736 = vpop.f32.mrb[0].mxu0
      %v1737 = vadd.f32 0.0, %v1736
      %v1738 = vpop.f32.mrb[0].mxu0
      %v1739 = vpop.f32.mrb[0].mxu0
      %v1740 = vadd.f32 0.0, %v1739
      %v1741 = vpop.f32.mrb[0].mxu0
      %1742 = vmatprep.mubr.bf16.mxu0 %v1444
      %1743 = vmatmul.mubr.bf16.gmra.mrb[0].mxu0 %v1443
      %v1744 = vpop.f32.mrb[0].mxu0
      %v1745 = vadd.f32 0.0, %v1744
      %v1746 = vpop.f32.mrb[0].mxu0
      %v1747 = vpop.f32.mrb[0].mxu0
      %v1748 = vadd.f32 0.0, %v1747
      %v1749 = vpop.f32.mrb[0].mxu0
      %1750 = vdwg.mxu0
      %1751 = vmatprep.subr.bf16.mxu0 0
      %1752 = vmatpush1.bf16.msra.mxu0 %v1606
      %1753 = vmatprep.subr.bf16.mxu0 0
      %1754 = vmatpush1.bf16.msra.mxu0 %v1607
      %1755 = vmatprep.subr.bf16.mxu0 0
      %1756 = vmatpush1.bf16.msra.mxu0 %v1608
      %1757 = vmatprep.subr.bf16.mxu0 0
      %1758 = vmatpush1.bf16.msra.mxu0 %v1609
      %1759 = vmatprep.subr.bf16.mxu0 0
      %1760 = vmatpush1.bf16.msra.mxu0 %v1610
      %1761 = vmatprep.subr.bf16.mxu0 0
      %1762 = vmatpush1.bf16.msra.mxu0 %v1611
      %1763 = vmatprep.subr.bf16.mxu0 0
      %1764 = vmatpush1.bf16.msra.mxu0 %v1612
      %1765 = vmatprep.subr.bf16.mxu0 0
      %1766 = vmatpush1.bf16.msra.mxu0 %v1613
      %1767 = vmatprep.subr.bf16.mxu0 0
      %1768 = vmatpush1.bf16.msra.mxu0 0
      %1769 = vmatprep.subr.bf16.mxu0 0
      %1770 = vmatpush1.bf16.msra.mxu0 0
      %1771 = vmatprep.subr.bf16.mxu0 0
      %1772 = vmatpush1.bf16.msra.mxu0 0
      %1773 = vmatprep.subr.bf16.mxu0 0
      %1774 = vmatpush1.bf16.msra.mxu0 0
      %1775 = vmatprep.subr.bf16.mxu0 0
      %1776 = vmatpush1.bf16.msra.mxu0 0
      %1777 = vmatprep.subr.bf16.mxu0 0
      %1778 = vmatpush1.bf16.msra.mxu0 0
      %1779 = vmatprep.subr.bf16.mxu0 0
      %1780 = vmatpush1.bf16.msra.mxu0 0
      %1781 = vmatprep.subr.bf16.mxu0 0
      %1782 = vmatpush1.bf16.msra.mxu0 0
      %1783 = vmatprep.mubr.bf16.mxu0 0
      %1784 = vmatmul.mubr.bf16.gmra.mrb[0].mxu0 %v1418
      %v1785 = vpop.f32.mrb[0].mxu0
      %v1786 = vadd.f32 %v1673, %v1785
      %v1787 = vpop.f32.mrb[0].mxu0
      %v1788 = vpop.f32.mrb[0].mxu0
      %v1789 = vadd.f32 %v1676, %v1788
      %v1790 = vpop.f32.mrb[0].mxu0
      %1791 = vmatprep.mubr.bf16.mxu0 0
      %1792 = vmatmul.mubr.bf16.gmra.mrb[0].mxu0 %v1421
      %v1793 = vpop.f32.mrb[0].mxu0
      %v1794 = vadd.f32 %v1681, %v1793
      %v1795 = vpop.f32.mrb[0].mxu0
      %v1796 = vpop.f32.mrb[0].mxu0
      %v1797 = vadd.f32 %v1684, %v1796
      %v1798 = vpop.f32.mrb[0].mxu0
      %1799 = vmatprep.mubr.bf16.mxu0 0
      %1800 = vmatmul.mubr.bf16.gmra.mrb[0].mxu0 %v1424
      %v1801 = vpop.f32.mrb[0].mxu0
      %v1802 = vadd.f32 %v1689, %v1801
      %v1803 = vpop.f32.mrb[0].mxu0
      %v1804 = vpop.f32.mrb[0].mxu0
      %v1805 = vadd.f32 %v1692, %v1804
      %v1806 = vpop.f32.mrb[0].mxu0
      %1807 = vmatprep.mubr.bf16.mxu0 0
      %1808 = vmatmul.mubr.bf16.gmra.mrb[0].mxu0 %v1427
      %v1809 = vpop.f32.mrb[0].mxu0
      %v1810 = vadd.f32 %v1697, %v1809
      %v1811 = vpop.f32.mrb[0].mxu0
      %v1812 = vpop.f32.mrb[0].mxu0
      %v1813 = vadd.f32 %v1700, %v1812
      %v1814 = vpop.f32.mrb[0].mxu0
      %1815 = vmatprep.mubr.bf16.mxu0 0
      %1816 = vmatmul.mubr.bf16.gmra.mrb[0].mxu0 %v1430
      %v1817 = vpop.f32.mrb[0].mxu0
      %v1818 = vadd.f32 %v1705, %v1817
      %v1819 = vpop.f32.mrb[0].mxu0
      %v1820 = vpop.f32.mrb[0].mxu0
      %v1821 = vadd.f32 %v1708, %v1820
      %v1822 = vpop.f32.mrb[0].mxu0
      %1823 = vmatprep.mubr.bf16.mxu0 0
      %1824 = vmatmul.mubr.bf16.gmra.mrb[0].mxu0 %v1433
      %v1825 = vpop.f32.mrb[0].mxu0
      %v1826 = vadd.f32 %v1713, %v1825
      %v1827 = vpop.f32.mrb[0].mxu0
      %v1828 = vpop.f32.mrb[0].mxu0
      %v1829 = vadd.f32 %v1716, %v1828
      %v1830 = vpop.f32.mrb[0].mxu0
      %1831 = vmatprep.mubr.bf16.mxu0 0
      %1832 = vmatmul.mubr.bf16.gmra.mrb[0].mxu0 %v1436
      %v1833 = vpop.f32.mrb[0].mxu0
      %v1834 = vadd.f32 %v1721, %v1833
      %v1835 = vpop.f32.mrb[0].mxu0
      %v1836 = vpop.f32.mrb[0].mxu0
      %v1837 = vadd.f32 %v1724, %v1836
      %v1838 = vpop.f32.mrb[0].mxu0
      %1839 = vmatprep.mubr.bf16.mxu0 0
      %1840 = vmatmul.mubr.bf16.gmra.mrb[0].mxu0 %v1439
      %v1841 = vpop.f32.mrb[0].mxu0
      %v1842 = vadd.f32 %v1729, %v1841
      %v1843 = vpop.f32.mrb[0].mxu0
      %v1844 = vpop.f32.mrb[0].mxu0
      %v1845 = vadd.f32 %v1732, %v1844
      %v1846 = vpop.f32.mrb[0].mxu0
      %1847 = vmatprep.mubr.bf16.mxu0 0
      %1848 = vmatmul.mubr.bf16.gmra.mrb[0].mxu0 %v1442
      %v1849 = vpop.f32.mrb[0].mxu0
      %v1850 = vadd.f32 %v1737, %v1849
      %v1851 = vpop.f32.mrb[0].mxu0
      %v1852 = vpop.f32.mrb[0].mxu0
      %v1853 = vadd.f32 %v1740, %v1852
      %v1854 = vpop.f32.mrb[0].mxu0
      %1855 = vmatprep.mubr.bf16.mxu0 0
      %1856 = vmatmul.mubr.bf16.gmra.mrb[0].mxu0 %v1445
      %v1857 = vpop.f32.mrb[0].mxu0
      %v1858 = vadd.f32 %v1745, %v1857
      %v1859 = vpop.f32.mrb[0].mxu0
      %v1860 = vpop.f32.mrb[0].mxu0
      %v1861 = vadd.f32 %v1748, %v1860
      %v1862 = vpop.f32.mrb[0].mxu0
      %1863 = vdwg.mxu0
      %v1912 = vunpack.c.l.b16 %v867
      %v1913 = vunpack.c.l.b16 %v868
      %v1914 = vunpack.c.l.b16 %v869
      %v1915 = vunpack.c.l.b16 %v870
      %v1916 = vunpack.c.l.b16 %v871
      %v1917 = vunpack.c.l.b16 %v872
      %v1918 = vunpack.c.l.b16 %v873
      %v1919 = vunpack.c.l.b16 %v874
      %v1920 = vunpack.c.l.b16 %v875
      %v1921 = vunpack.c.l.b16 %v876
      %v1922 = vunpack.c.l.b16 %v877
      %v1923 = vunpack.c.l.b16 %v878
      %v1924 = vunpack.c.l.b16 %v879
      %v1925 = vunpack.c.l.b16 %v880
      %v1926 = vunpack.c.l.b16 %v881
      %v1927 = vunpack.c.l.b16 %v882
      %v1928 = vunpack.c.l.b16 %v883
      %v1929 = vunpack.c.l.b16 %v884
      %v1930 = vunpack.c.l.b16 %v885
      %v1931 = vunpack.c.l.b16 %v886
      %v1932 = vunpack.c.l.b16 %v887
      %v1933 = vunpack.c.l.b16 %v888
      %v1934 = vunpack.c.l.b16 %v889
      %v1935 = vunpack.c.l.b16 %v890
      %v1936 = vunpack.c.l.b16 %v891
      %v1937 = vunpack.c.l.b16 %v892
      %v1938 = vunpack.c.l.b16 %v893
      %v1939 = vunpack.c.l.b16 %v894
      %v1940 = vunpack.c.l.b16 %v895
      %v1941 = vunpack.c.l.b16 %v896
      %v1942 = vunpack.c.l.b16 %v897
      %v1943 = vunpack.c.l.b16 %v898
      %v1944 = vunpack.c.l.b16 %v899
      %v1945 = vunpack.c.l.b16 %v900
      %v1946 = vunpack.c.l.b16 %v901
      %v1947 = vunpack.c.l.b16 %v902
      %v1948 = vunpack.c.l.b16 %v903
      %v1949 = vunpack.c.l.b16 %v904
      %v1950 = vunpack.c.l.b16 %v905
      %v1951 = vunpack.c.l.b16 %v906
      %v1952 = vunpack.c.l.b16 %v907
      %v1953 = vunpack.c.l.b16 %v908
      %v1954 = vunpack.c.l.b16 %v909
      %v1955 = vunpack.c.l.b16 %v910
      %v1956 = vunpack.c.l.b16 %v911
      %v1957 = vunpack.c.l.b16 %v912
      %v1958 = vunpack.c.l.b16 %v913
      %v1959 = vunpack.c.l.b16 %v914
      %v1960 = vpack.c.b16 %v1913, %v1912
      %v1961 = vpack.c.b16 %v1915, %v1914
      %v1962 = vpack.c.b16 %v1917, %v1916
      %v1963 = vpack.c.b16 %v1919, %v1918
      %v1964 = vpack.c.b16 %v1921, %v1920
      %v1965 = vpack.c.b16 %v1923, %v1922
      %v1966 = vpack.c.b16 %v1925, %v1924
      %v1967 = vpack.c.b16 %v1927, %v1926
      %v1968 = vpack.c.b16 %v1929, %v1928
      %v1969 = vpack.c.b16 %v1931, %v1930
      %v1970 = vpack.c.b16 %v1933, %v1932
      %v1971 = vpack.c.b16 %v1935, %v1934
      %v1972 = vpack.c.b16 %v1937, %v1936
      %v1973 = vpack.c.b16 %v1939, %v1938
      %v1974 = vpack.c.b16 %v1941, %v1940
      %v1975 = vpack.c.b16 %v1943, %v1942
      %v1976 = vpack.c.b16 %v1945, %v1944
      %v1977 = vpack.c.b16 %v1947, %v1946
      %v1978 = vpack.c.b16 %v1949, %v1948
      %v1979 = vpack.c.b16 %v1951, %v1950
      %v1980 = vpack.c.b16 %v1953, %v1952
      %v1981 = vpack.c.b16 %v1955, %v1954
      %v1982 = vpack.c.b16 %v1957, %v1956
      %v1983 = vpack.c.b16 %v1959, %v1958
      %2008 = vmatprep.subr.bf16.mxu0 0
      %2009 = vmatpush1.bf16.msra.mxu0 %v1960
      %2010 = vmatprep.subr.bf16.mxu0 0
      %2011 = vmatpush1.bf16.msra.mxu0 %v1961
      %2012 = vmatprep.subr.bf16.mxu0 0
      %2013 = vmatpush1.bf16.msra.mxu0 %v1962
      %2014 = vmatprep.subr.bf16.mxu0 0
      %2015 = vmatpush1.bf16.msra.mxu0 %v1963
      %2016 = vmatprep.subr.bf16.mxu0 0
      %2017 = vmatpush1.bf16.msra.mxu0 %v1964
      %2018 = vmatprep.subr.bf16.mxu0 0
      %2019 = vmatpush1.bf16.msra.mxu0 %v1965
      %2020 = vmatprep.subr.bf16.mxu0 0
      %2021 = vmatpush1.bf16.msra.mxu0 %v1966
      %2022 = vmatprep.subr.bf16.mxu0 0
      %2023 = vmatpush1.bf16.msra.mxu0 %v1967
      %2024 = vmatprep.subr.bf16.mxu0 0
      %2025 = vmatpush1.bf16.msra.mxu0 %v1968
      %2026 = vmatprep.subr.bf16.mxu0 0
      %2027 = vmatpush1.bf16.msra.mxu0 %v1969
      %2028 = vmatprep.subr.bf16.mxu0 0
      %2029 = vmatpush1.bf16.msra.mxu0 %v1970
      %2030 = vmatprep.subr.bf16.mxu0 0
      %2031 = vmatpush1.bf16.msra.mxu0 %v1971
      %2032 = vmatprep.subr.bf16.mxu0 0
      %2033 = vmatpush1.bf16.msra.mxu0 %v1972
      %2034 = vmatprep.subr.bf16.mxu0 0
      %2035 = vmatpush1.bf16.msra.mxu0 %v1973
      %2036 = vmatprep.subr.bf16.mxu0 0
      %2037 = vmatpush1.bf16.msra.mxu0 %v1974
      %2038 = vmatprep.subr.bf16.mxu0 0
      %2039 = vmatpush1.bf16.msra.mxu0 %v1975
      %2040 = vmatprep.mubr.bf16.mxu0 %v838
      %2041 = vmatmul.mubr.bf16.gmra.mrb[0].mxu0 %v837
      %v2042 = vpop.f32.mrb[0].mxu0
      %v2043 = vadd.f32 %v1786, %v2042
      %v2044 = vpop.f32.mrb[0].mxu0
      %v2045 = vpop.f32.mrb[0].mxu0
      %v2046 = vadd.f32 %v1789, %v2045
      %v2047 = vpop.f32.mrb[0].mxu0
      %2048 = vmatprep.mubr.bf16.mxu0 %v841
      %2049 = vmatmul.mubr.bf16.gmra.mrb[0].mxu0 %v840
      %v2050 = vpop.f32.mrb[0].mxu0
      %v2051 = vadd.f32 %v1794, %v2050
      %v2052 = vpop.f32.mrb[0].mxu0
      %v2053 = vpop.f32.mrb[0].mxu0
      %v2054 = vadd.f32 %v1797, %v2053
      %v2055 = vpop.f32.mrb[0].mxu0
      %2056 = vmatprep.mubr.bf16.mxu0 %v844
      %2057 = vmatmul.mubr.bf16.gmra.mrb[0].mxu0 %v843
      %v2058 = vpop.f32.mrb[0].mxu0
      %v2059 = vadd.f32 %v1802, %v2058
      %v2060 = vpop.f32.mrb[0].mxu0
      %v2061 = vpop.f32.mrb[0].mxu0
      %v2062 = vadd.f32 %v1805, %v2061
      %v2063 = vpop.f32.mrb[0].mxu0
      %2064 = vmatprep.mubr.bf16.mxu0 %v847
      %2065 = vmatmul.mubr.bf16.gmra.mrb[0].mxu0 %v846
      %v2066 = vpop.f32.mrb[0].mxu0
      %v2067 = vadd.f32 %v1810, %v2066
      %v2068 = vpop.f32.mrb[0].mxu0
      %v2069 = vpop.f32.mrb[0].mxu0
      %v2070 = vadd.f32 %v1813, %v2069
      %v2071 = vpop.f32.mrb[0].mxu0
      %2072 = vmatprep.mubr.bf16.mxu0 %v850
      %2073 = vmatmul.mubr.bf16.gmra.mrb[0].mxu0 %v849
      %v2074 = vpop.f32.mrb[0].mxu0
      %v2075 = vadd.f32 %v1818, %v2074
      %v2076 = vpop.f32.mrb[0].mxu0
      %v2077 = vpop.f32.mrb[0].mxu0
      %v2078 = vadd.f32 %v1821, %v2077
      %v2079 = vpop.f32.mrb[0].mxu0
      %2080 = vmatprep.mubr.bf16.mxu0 %v853
      %2081 = vmatmul.mubr.bf16.gmra.mrb[0].mxu0 %v852
      %v2082 = vpop.f32.mrb[0].mxu0
      %v2083 = vadd.f32 %v1826, %v2082
      %v2084 = vpop.f32.mrb[0].mxu0
      %v2085 = vpop.f32.mrb[0].mxu0
      %v2086 = vadd.f32 %v1829, %v2085
      %v2087 = vpop.f32.mrb[0].mxu0
      %2088 = vmatprep.mubr.bf16.mxu0 %v856
      %2089 = vmatmul.mubr.bf16.gmra.mrb[0].mxu0 %v855
      %v2090 = vpop.f32.mrb[0].mxu0
      %v2091 = vadd.f32 %v1834, %v2090
      %v2092 = vpop.f32.mrb[0].mxu0
      %v2093 = vpop.f32.mrb[0].mxu0
      %v2094 = vadd.f32 %v1837, %v2093
      %v2095 = vpop.f32.mrb[0].mxu0
      %2096 = vmatprep.mubr.bf16.mxu0 %v859
      %2097 = vmatmul.mubr.bf16.gmra.mrb[0].mxu0 %v858
      %v2098 = vpop.f32.mrb[0].mxu0
      %v2099 = vadd.f32 %v1842, %v2098
      %v2100 = vpop.f32.mrb[0].mxu0
      %v2101 = vpop.f32.mrb[0].mxu0
      %v2102 = vadd.f32 %v1845, %v2101
      %v2103 = vpop.f32.mrb[0].mxu0
      %2104 = vmatprep.mubr.bf16.mxu0 %v862
      %2105 = vmatmul.mubr.bf16.gmra.mrb[0].mxu0 %v861
      %v2106 = vpop.f32.mrb[0].mxu0
      %v2107 = vadd.f32 %v1850, %v2106
      %v2108 = vpop.f32.mrb[0].mxu0
      %v2109 = vpop.f32.mrb[0].mxu0
      %v2110 = vadd.f32 %v1853, %v2109
      %v2111 = vpop.f32.mrb[0].mxu0
      %2112 = vmatprep.mubr.bf16.mxu0 %v865
      %2113 = vmatmul.mubr.bf16.gmra.mrb[0].mxu0 %v864
      %v2114 = vpop.f32.mrb[0].mxu0
      %v2115 = vadd.f32 %v1858, %v2114
      %v2116 = vpop.f32.mrb[0].mxu0
      %v2117 = vpop.f32.mrb[0].mxu0
      %v2118 = vadd.f32 %v1861, %v2117
      %v2119 = vpop.f32.mrb[0].mxu0
      %2120 = vdwg.mxu0
      %2121 = vmatprep.subr.bf16.mxu0 0
      %2122 = vmatpush1.bf16.msra.mxu0 %v1976
      %2123 = vmatprep.subr.bf16.mxu0 0
      %2124 = vmatpush1.bf16.msra.mxu0 %v1977
      %2125 = vmatprep.subr.bf16.mxu0 0
      %2126 = vmatpush1.bf16.msra.mxu0 %v1978
      %2127 = vmatprep.subr.bf16.mxu0 0
      %2128 = vmatpush1.bf16.msra.mxu0 %v1979
      %2129 = vmatprep.subr.bf16.mxu0 0
      %2130 = vmatpush1.bf16.msra.mxu0 %v1980
      %2131 = vmatprep.subr.bf16.mxu0 0
      %2132 = vmatpush1.bf16.msra.mxu0 %v1981
      %2133 = vmatprep.subr.bf16.mxu0 0
      %2134 = vmatpush1.bf16.msra.mxu0 %v1982
      %2135 = vmatprep.subr.bf16.mxu0 0
      %2136 = vmatpush1.bf16.msra.mxu0 %v1983
      %2137 = vmatprep.subr.bf16.mxu0 0
      %2138 = vmatpush1.bf16.msra.mxu0 0
      %2139 = vmatprep.subr.bf16.mxu0 0
      %2140 = vmatpush1.bf16.msra.mxu0 0
      %2141 = vmatprep.subr.bf16.mxu0 0
      %2142 = vmatpush1.bf16.msra.mxu0 0
      %2143 = vmatprep.subr.bf16.mxu0 0
      %2144 = vmatpush1.bf16.msra.mxu0 0
      %2145 = vmatprep.subr.bf16.mxu0 0
      %2146 = vmatpush1.bf16.msra.mxu0 0
      %2147 = vmatprep.subr.bf16.mxu0 0
      %2148 = vmatpush1.bf16.msra.mxu0 0
      %2149 = vmatprep.subr.bf16.mxu0 0
      %2150 = vmatpush1.bf16.msra.mxu0 0
      %2151 = vmatprep.subr.bf16.mxu0 0
      %2152 = vmatpush1.bf16.msra.mxu0 0
      %2153 = vmatprep.mubr.bf16.mxu0 0
      %2154 = vmatmul.mubr.bf16.gmra.mrb[0].mxu0 %v839
      %v2155 = vpop.f32.mrb[0].mxu0
      %v2156 = vadd.f32 %v2043, %v2155
      %v2157 = vpop.f32.mrb[0].mxu0
      %v2158 = vpop.f32.mrb[0].mxu0
      %v2159 = vadd.f32 %v2046, %v2158
      %v2160 = vpop.f32.mrb[0].mxu0
      %2161 = vmatprep.mubr.bf16.mxu0 0
      %2162 = vmatmul.mubr.bf16.gmra.mrb[0].mxu0 %v842
      %v2163 = vpop.f32.mrb[0].mxu0
      %v2164 = vadd.f32 %v2051, %v2163
      %v2165 = vpop.f32.mrb[0].mxu0
      %v2166 = vpop.f32.mrb[0].mxu0
      %v2167 = vadd.f32 %v2054, %v2166
      %v2168 = vpop.f32.mrb[0].mxu0
      %2169 = vmatprep.mubr.bf16.mxu0 0
      %2170 = vmatmul.mubr.bf16.gmra.mrb[0].mxu0 %v845
      %v2171 = vpop.f32.mrb[0].mxu0
      %v2172 = vadd.f32 %v2059, %v2171
      %v2173 = vpop.f32.mrb[0].mxu0
      %v2174 = vpop.f32.mrb[0].mxu0
      %v2175 = vadd.f32 %v2062, %v2174
      %v2176 = vpop.f32.mrb[0].mxu0
      %2177 = vmatprep.mubr.bf16.mxu0 0
      %2178 = vmatmul.mubr.bf16.gmra.mrb[0].mxu0 %v848
      %v2179 = vpop.f32.mrb[0].mxu0
      %v2180 = vadd.f32 %v2067, %v2179
      %v2181 = vpop.f32.mrb[0].mxu0
      %v2182 = vpop.f32.mrb[0].mxu0
      %v2183 = vadd.f32 %v2070, %v2182
      %v2184 = vpop.f32.mrb[0].mxu0
      %2185 = vmatprep.mubr.bf16.mxu0 0
      %2186 = vmatmul.mubr.bf16.gmra.mrb[0].mxu0 %v851
      %v2187 = vpop.f32.mrb[0].mxu0
      %v2188 = vadd.f32 %v2075, %v2187
      %v2189 = vpop.f32.mrb[0].mxu0
      %v2190 = vpop.f32.mrb[0].mxu0
      %v2191 = vadd.f32 %v2078, %v2190
      %v2192 = vpop.f32.mrb[0].mxu0
      %2193 = vmatprep.mubr.bf16.mxu0 0
      %2194 = vmatmul.mubr.bf16.gmra.mrb[0].mxu0 %v854
      %v2195 = vpop.f32.mrb[0].mxu0
      %v2196 = vadd.f32 %v2083, %v2195
      %v2197 = vpop.f32.mrb[0].mxu0
      %v2198 = vpop.f32.mrb[0].mxu0
      %v2199 = vadd.f32 %v2086, %v2198
      %v2200 = vpop.f32.mrb[0].mxu0
      %2201 = vmatprep.mubr.bf16.mxu0 0
      %2202 = vmatmul.mubr.bf16.gmra.mrb[0].mxu0 %v857
      %v2203 = vpop.f32.mrb[0].mxu0
      %v2204 = vadd.f32 %v2091, %v2203
      %v2205 = vpop.f32.mrb[0].mxu0
      %v2206 = vpop.f32.mrb[0].mxu0
      %v2207 = vadd.f32 %v2094, %v2206
      %v2208 = vpop.f32.mrb[0].mxu0
      %2209 = vmatprep.mubr.bf16.mxu0 0
      %2210 = vmatmul.mubr.bf16.gmra.mrb[0].mxu0 %v860
      %v2211 = vpop.f32.mrb[0].mxu0
      %v2212 = vadd.f32 %v2099, %v2211
      %v2213 = vpop.f32.mrb[0].mxu0
      %v2214 = vpop.f32.mrb[0].mxu0
      %v2215 = vadd.f32 %v2102, %v2214
      %v2216 = vpop.f32.mrb[0].mxu0
      %2217 = vmatprep.mubr.bf16.mxu0 0
      %2218 = vmatmul.mubr.bf16.gmra.mrb[0].mxu0 %v863
      %v2219 = vpop.f32.mrb[0].mxu0
      %v2220 = vadd.f32 %v2107, %v2219
      %v2221 = vpop.f32.mrb[0].mxu0
      %v2222 = vpop.f32.mrb[0].mxu0
      %v2223 = vadd.f32 %v2110, %v2222
      %v2224 = vpop.f32.mrb[0].mxu0
      %2225 = vmatprep.mubr.bf16.mxu0 0
      %2226 = vmatmul.mubr.bf16.gmra.mrb[0].mxu0 %v866
      %v2227 = vpop.f32.mrb[0].mxu0
      %v2228 = vadd.f32 %v2115, %v2227
      %v2229 = vpop.f32.mrb[0].mxu0
      %v2230 = vpop.f32.mrb[0].mxu0
      %v2231 = vadd.f32 %v2118, %v2230
      %v2232 = vpop.f32.mrb[0].mxu0
      %2233 = vdwg.mxu0
      %s2234 = scalar_lea.vmem %s280, 24
      %v2235 = vld [vmem:[%s2234] sm:$0xf]
      %v2236 = vld [vmem:[%s2234 + $0x4] sm:$0xf]
      %v2237 = vld [vmem:[%s2234 + $0xc] sm:$0xf]
      %v2238 = vld [vmem:[%s2234 + $0x10] sm:$0xf]
      %v2239 = vld [vmem:[%s2234 + $0x18] sm:$0xf]
      %v2240 = vld [vmem:[%s2234 + $0x1c] sm:$0xf]
      %v2241 = vld [vmem:[%s2234 + $0x24] sm:$0xf]
      %v2242 = vld [vmem:[%s2234 + $0x28] sm:$0xf]
      %v2243 = vld [vmem:[%s2234 + $0x30] sm:$0xf]
      %v2244 = vld [vmem:[%s2234 + $0x34] sm:$0xf]
      %v2245 = vld [vmem:[%s2234 + $0x3c] sm:$0xf]
      %v2246 = vld [vmem:[%s2234 + $0x40] sm:$0xf]
      %v2247 = vld [vmem:[%s2234 + $0x48] sm:$0xf]
      %v2248 = vld [vmem:[%s2234 + $0x4c] sm:$0xf]
      %v2249 = vld [vmem:[%s2234 + $0x54] sm:$0xf]
      %v2250 = vld [vmem:[%s2234 + $0x58] sm:$0xf]
      %v2251 = vld [vmem:[%s2234 + $0x60] sm:$0xf]
      %v2252 = vld [vmem:[%s2234 + $0x64] sm:$0xf]
      %v2253 = vld [vmem:[%s2234 + $0x6c] sm:$0xf]
      %v2254 = vld [vmem:[%s2234 + $0x70] sm:$0xf]
      %v2275 = vunpack.c.l.b16 %v2235
      %v2276 = vunpack.c.l.b16 %v2236
      %v2277 = vunpack.c.l.b16 %v2237
      %v2278 = vunpack.c.l.b16 %v2238
      %v2279 = vunpack.c.l.b16 %v2239
      %v2280 = vunpack.c.l.b16 %v2240
      %v2281 = vunpack.c.l.b16 %v2241
      %v2282 = vunpack.c.l.b16 %v2242
      %v2283 = vunpack.c.l.b16 %v2243
      %v2284 = vunpack.c.l.b16 %v2244
      %v2285 = vunpack.c.l.b16 %v2245
      %v2286 = vunpack.c.l.b16 %v2246
      %v2287 = vunpack.c.l.b16 %v2247
      %v2288 = vunpack.c.l.b16 %v2248
      %v2289 = vunpack.c.l.b16 %v2249
      %v2290 = vunpack.c.l.b16 %v2250
      %v2291 = vunpack.c.l.b16 %v2251
      %v2292 = vunpack.c.l.b16 %v2252
      %v2293 = vunpack.c.l.b16 %v2253
      %v2294 = vunpack.c.l.b16 %v2254
      %v2295 = vpack.c.b16 %v2276, %v2275
      %v2296 = vpack.c.b16 %v2278, %v2277
      %v2297 = vpack.c.b16 %v2280, %v2279
      %v2298 = vpack.c.b16 %v2282, %v2281
      %v2299 = vpack.c.b16 %v2284, %v2283
      %v2300 = vpack.c.b16 %v2286, %v2285
      %v2301 = vpack.c.b16 %v2288, %v2287
      %v2302 = vpack.c.b16 %v2290, %v2289
      %v2303 = vpack.c.b16 %v2292, %v2291
      %v2304 = vpack.c.b16 %v2294, %v2293
      %2315 = vst.msk [vmem:[#allocation3] sm:$0xff] %vm414, %v2295
      %2316 = vst.msk [vmem:[#allocation3 + $0x18] sm:$0xff] %vm414, %v2296
      %2317 = vst.msk [vmem:[#allocation3 + $0x30] sm:$0xff] %vm414, %v2297
      %2318 = vst.msk [vmem:[#allocation3 + $0x48] sm:$0xff] %vm414, %v2298
      %2319 = vst.msk [vmem:[#allocation3 + $0x60] sm:$0xff] %vm414, %v2299
      %2320 = vst.msk [vmem:[#allocation3 + $0x78] sm:$0xff] %vm414, %v2300
      %2321 = vst.msk [vmem:[#allocation3 + $0x90] sm:$0xff] %vm414, %v2301
      %2322 = vst.msk [vmem:[#allocation3 + $0xa8] sm:$0xff] %vm414, %v2302
      %2323 = vst.msk [vmem:[#allocation3 + $0xc0] sm:$0xff] %vm414, %v2303
      %2324 = vst.msk [vmem:[#allocation3 + $0xd8] sm:$0xff] %vm414, %v2304
      %v2325 = vld [vmem:[%s2234] sm:$0xf]
      %v2326 = vld [vmem:[%s2234 + $0x4] sm:$0xf]
      %v2327 = vld [vmem:[%s2234 + $0x8] sm:$0x1]
      %v2328 = vld [vmem:[%s2234 + $0xc] sm:$0xf]
      %v2329 = vld [vmem:[%s2234 + $0x10] sm:$0xf]
      %v2330 = vld [vmem:[%s2234 + $0x14] sm:$0x1]
      %v2331 = vld [vmem:[%s2234 + $0x18] sm:$0xf]
      %v2332 = vld [vmem:[%s2234 + $0x1c] sm:$0xf]
      %v2333 = vld [vmem:[%s2234 + $0x20] sm:$0x1]
      %v2334 = vld [vmem:[%s2234 + $0x24] sm:$0xf]
      %v2335 = vld [vmem:[%s2234 + $0x28] sm:$0xf]
      %v2336 = vld [vmem:[%s2234 + $0x2c] sm:$0x1]
      %v2337 = vld [vmem:[%s2234 + $0x30] sm:$0xf]
      %v2338 = vld [vmem:[%s2234 + $0x34] sm:$0xf]
      %v2339 = vld [vmem:[%s2234 + $0x38] sm:$0x1]
      %v2340 = vld [vmem:[%s2234 + $0x3c] sm:$0xf]
      %v2341 = vld [vmem:[%s2234 + $0x40] sm:$0xf]
      %v2342 = vld [vmem:[%s2234 + $0x44] sm:$0x1]
      %v2343 = vld [vmem:[%s2234 + $0x48] sm:$0xf]
      %v2344 = vld [vmem:[%s2234 + $0x4c] sm:$0xf]
      %v2345 = vld [vmem:[%s2234 + $0x50] sm:$0x1]
      %v2346 = vld [vmem:[%s2234 + $0x54] sm:$0xf]
      %v2347 = vld [vmem:[%s2234 + $0x58] sm:$0xf]
      %v2348 = vld [vmem:[%s2234 + $0x5c] sm:$0x1]
      %v2349 = vld [vmem:[%s2234 + $0x60] sm:$0xf]
      %v2350 = vld [vmem:[%s2234 + $0x64] sm:$0xf]
      %v2351 = vld [vmem:[%s2234 + $0x68] sm:$0x1]
      %v2352 = vld [vmem:[%s2234 + $0x6c] sm:$0xf]
      %v2353 = vld [vmem:[%s2234 + $0x70] sm:$0xf]
      %v2354 = vld [vmem:[%s2234 + $0x74] sm:$0x1]
      %v2385 = vunpack.c.l.b16 %v2325
      %v2386 = vunpack.c.l.b16 %v2326
      %v2387 = vunpack.c.l.b16 %v2327
      %v2388 = vunpack.c.l.b16 %v2328
      %v2389 = vunpack.c.l.b16 %v2329
      %v2390 = vunpack.c.l.b16 %v2330
      %v2391 = vunpack.c.l.b16 %v2331
      %v2392 = vunpack.c.l.b16 %v2332
      %v2393 = vunpack.c.l.b16 %v2333
      %v2394 = vunpack.c.l.b16 %v2334
      %v2395 = vunpack.c.l.b16 %v2335
      %v2396 = vunpack.c.l.b16 %v2336
      %v2397 = vunpack.c.l.b16 %v2337
      %v2398 = vunpack.c.l.b16 %v2338
      %v2399 = vunpack.c.l.b16 %v2339
      %v2400 = vunpack.c.l.b16 %v2340
      %v2401 = vunpack.c.l.b16 %v2341
      %v2402 = vunpack.c.l.b16 %v2342
      %v2403 = vunpack.c.l.b16 %v2343
      %v2404 = vunpack.c.l.b16 %v2344
      %v2405 = vunpack.c.l.b16 %v2345
      %v2406 = vunpack.c.l.b16 %v2346
      %v2407 = vunpack.c.l.b16 %v2347
      %v2408 = vunpack.c.l.b16 %v2348
      %v2409 = vunpack.c.l.b16 %v2349
      %v2410 = vunpack.c.l.b16 %v2350
      %v2411 = vunpack.c.l.b16 %v2351
      %v2412 = vunpack.c.l.b16 %v2352
      %v2413 = vunpack.c.l.b16 %v2353
      %v2414 = vunpack.c.l.b16 %v2354
      %v2415 = vpack.c.b16 %v2386, %v2385
      %v2416 = vpack.c.b16 %v2387, %v2387
      %v2417 = vpack.c.b16 %v2389, %v2388
      %v2418 = vpack.c.b16 %v2390, %v2390
      %v2419 = vpack.c.b16 %v2392, %v2391
      %v2420 = vpack.c.b16 %v2393, %v2393
      %v2421 = vpack.c.b16 %v2395, %v2394
      %v2422 = vpack.c.b16 %v2396, %v2396
      %v2423 = vpack.c.b16 %v2398, %v2397
      %v2424 = vpack.c.b16 %v2399, %v2399
      %v2425 = vpack.c.b16 %v2401, %v2400
      %v2426 = vpack.c.b16 %v2402, %v2402
      %v2427 = vpack.c.b16 %v2404, %v2403
      %v2428 = vpack.c.b16 %v2405, %v2405
      %v2429 = vpack.c.b16 %v2407, %v2406
      %v2430 = vpack.c.b16 %v2408, %v2408
      %v2431 = vpack.c.b16 %v2410, %v2409
      %v2432 = vpack.c.b16 %v2411, %v2411
      %v2433 = vpack.c.b16 %v2413, %v2412
      %v2434 = vpack.c.b16 %v2414, %v2414
      %v2436 = vshrl.u32 %v2415, 16
      %v2438 = vshll.u32 %v2415, 16
      %v2440 = vrot.slane %v2438, 1
      %v2441 = vor.u32 %v2436, %v2440
      %v2443 = vshll.u32 %v2416, 16
      %v2445 = vrot.slane %v2443, 1
      %v2446 = vsel %vm535, %v2441, %v2445
      %v2448 = vshrl.u32 %v2417, 16
      %v2450 = vshll.u32 %v2417, 16
      %v2452 = vrot.slane %v2450, 1
      %v2453 = vor.u32 %v2448, %v2452
      %v2455 = vshll.u32 %v2418, 16
      %v2457 = vrot.slane %v2455, 1
      %v2458 = vsel %vm535, %v2453, %v2457
      %v2460 = vshrl.u32 %v2419, 16
      %v2462 = vshll.u32 %v2419, 16
      %v2464 = vrot.slane %v2462, 1
      %v2465 = vor.u32 %v2460, %v2464
      %v2467 = vshll.u32 %v2420, 16
      %v2469 = vrot.slane %v2467, 1
      %v2470 = vsel %vm535, %v2465, %v2469
      %v2472 = vshrl.u32 %v2421, 16
      %v2474 = vshll.u32 %v2421, 16
      %v2476 = vrot.slane %v2474, 1
      %v2477 = vor.u32 %v2472, %v2476
      %v2479 = vshll.u32 %v2422, 16
      %v2481 = vrot.slane %v2479, 1
      %v2482 = vsel %vm535, %v2477, %v2481
      %v2484 = vshrl.u32 %v2423, 16
      %v2486 = vshll.u32 %v2423, 16
      %v2488 = vrot.slane %v2486, 1
      %v2489 = vor.u32 %v2484, %v2488
      %v2491 = vshll.u32 %v2424, 16
      %v2493 = vrot.slane %v2491, 1
      %v2494 = vsel %vm535, %v2489, %v2493
      %v2496 = vshrl.u32 %v2425, 16
      %v2498 = vshll.u32 %v2425, 16
      %v2500 = vrot.slane %v2498, 1
      %v2501 = vor.u32 %v2496, %v2500
      %v2503 = vshll.u32 %v2426, 16
      %v2505 = vrot.slane %v2503, 1
      %v2506 = vsel %vm535, %v2501, %v2505
      %v2508 = vshrl.u32 %v2427, 16
      %v2510 = vshll.u32 %v2427, 16
      %v2512 = vrot.slane %v2510, 1
      %v2513 = vor.u32 %v2508, %v2512
      %v2515 = vshll.u32 %v2428, 16
      %v2517 = vrot.slane %v2515, 1
      %v2518 = vsel %vm535, %v2513, %v2517
      %v2520 = vshrl.u32 %v2429, 16
      %v2522 = vshll.u32 %v2429, 16
      %v2524 = vrot.slane %v2522, 1
      %v2525 = vor.u32 %v2520, %v2524
      %v2527 = vshll.u32 %v2430, 16
      %v2529 = vrot.slane %v2527, 1
      %v2530 = vsel %vm535, %v2525, %v2529
      %v2532 = vshrl.u32 %v2431, 16
      %v2534 = vshll.u32 %v2431, 16
      %v2536 = vrot.slane %v2534, 1
      %v2537 = vor.u32 %v2532, %v2536
      %v2539 = vshll.u32 %v2432, 16
      %v2541 = vrot.slane %v2539, 1
      %v2542 = vsel %vm535, %v2537, %v2541
      %v2544 = vshrl.u32 %v2433, 16
      %v2546 = vshll.u32 %v2433, 16
      %v2548 = vrot.slane %v2546, 1
      %v2549 = vor.u32 %v2544, %v2548
      %v2551 = vshll.u32 %v2434, 16
      %v2553 = vrot.slane %v2551, 1
      %v2554 = vsel %vm535, %v2549, %v2553
      %2565 = vst.msk [vmem:[#allocation3 + $0x8] sm:$0xff] %vm414, %v2446
      %2566 = vst.msk [vmem:[#allocation3 + $0x20] sm:$0xff] %vm414, %v2458
      %2567 = vst.msk [vmem:[#allocation3 + $0x38] sm:$0xff] %vm414, %v2470
      %2568 = vst.msk [vmem:[#allocation3 + $0x50] sm:$0xff] %vm414, %v2482
      %2569 = vst.msk [vmem:[#allocation3 + $0x68] sm:$0xff] %vm414, %v2494
      %2570 = vst.msk [vmem:[#allocation3 + $0x80] sm:$0xff] %vm414, %v2506
      %2571 = vst.msk [vmem:[#allocation3 + $0x98] sm:$0xff] %vm414, %v2518
      %2572 = vst.msk [vmem:[#allocation3 + $0xb0] sm:$0xff] %vm414, %v2530
      %2573 = vst.msk [vmem:[#allocation3 + $0xc8] sm:$0xff] %vm414, %v2542
      %2574 = vst.msk [vmem:[#allocation3 + $0xe0] sm:$0xff] %vm414, %v2554
      %v2575 = vld [vmem:[%s2234] sm:$0xe]
      %v2576 = vld [vmem:[%s2234 + $0x4] sm:$0xf]
      %v2577 = vld [vmem:[%s2234 + $0x8] sm:$0x1]
      %v2578 = vld [vmem:[%s2234 + $0xc] sm:$0xe]
      %v2579 = vld [vmem:[%s2234 + $0x10] sm:$0xf]
      %v2580 = vld [vmem:[%s2234 + $0x14] sm:$0x1]
      %v2581 = vld [vmem:[%s2234 + $0x18] sm:$0xe]
      %v2582 = vld [vmem:[%s2234 + $0x1c] sm:$0xf]
      %v2583 = vld [vmem:[%s2234 + $0x20] sm:$0x1]
      %v2584 = vld [vmem:[%s2234 + $0x24] sm:$0xe]
      %v2585 = vld [vmem:[%s2234 + $0x28] sm:$0xf]
      %v2586 = vld [vmem:[%s2234 + $0x2c] sm:$0x1]
      %v2587 = vld [vmem:[%s2234 + $0x30] sm:$0xe]
      %v2588 = vld [vmem:[%s2234 + $0x34] sm:$0xf]
      %v2589 = vld [vmem:[%s2234 + $0x38] sm:$0x1]
      %v2590 = vld [vmem:[%s2234 + $0x3c] sm:$0xe]
      %v2591 = vld [vmem:[%s2234 + $0x40] sm:$0xf]
      %v2592 = vld [vmem:[%s2234 + $0x44] sm:$0x1]
      %v2593 = vld [vmem:[%s2234 + $0x48] sm:$0xe]
      %v2594 = vld [vmem:[%s2234 + $0x4c] sm:$0xf]
      %v2595 = vld [vmem:[%s2234 + $0x50] sm:$0x1]
      %v2596 = vld [vmem:[%s2234 + $0x54] sm:$0xe]
      %v2597 = vld [vmem:[%s2234 + $0x58] sm:$0xf]
      %v2598 = vld [vmem:[%s2234 + $0x5c] sm:$0x1]
      %v2599 = vld [vmem:[%s2234 + $0x60] sm:$0xe]
      %v2600 = vld [vmem:[%s2234 + $0x64] sm:$0xf]
      %v2601 = vld [vmem:[%s2234 + $0x68] sm:$0x1]
      %v2602 = vld [vmem:[%s2234 + $0x6c] sm:$0xe]
      %v2603 = vld [vmem:[%s2234 + $0x70] sm:$0xf]
      %v2604 = vld [vmem:[%s2234 + $0x74] sm:$0x1]
      %v2635 = vunpack.c.l.b16 %v2575
      %v2636 = vunpack.c.l.b16 %v2576
      %v2637 = vunpack.c.l.b16 %v2577
      %v2638 = vunpack.c.l.b16 %v2578
      %v2639 = vunpack.c.l.b16 %v2579
      %v2640 = vunpack.c.l.b16 %v2580
      %v2641 = vunpack.c.l.b16 %v2581
      %v2642 = vunpack.c.l.b16 %v2582
      %v2643 = vunpack.c.l.b16 %v2583
      %v2644 = vunpack.c.l.b16 %v2584
      %v2645 = vunpack.c.l.b16 %v2585
      %v2646 = vunpack.c.l.b16 %v2586
      %v2647 = vunpack.c.l.b16 %v2587
      %v2648 = vunpack.c.l.b16 %v2588
      %v2649 = vunpack.c.l.b16 %v2589
      %v2650 = vunpack.c.l.b16 %v2590
      %v2651 = vunpack.c.l.b16 %v2591
      %v2652 = vunpack.c.l.b16 %v2592
      %v2653 = vunpack.c.l.b16 %v2593
      %v2654 = vunpack.c.l.b16 %v2594
      %v2655 = vunpack.c.l.b16 %v2595
      %v2656 = vunpack.c.l.b16 %v2596
      %v2657 = vunpack.c.l.b16 %v2597
      %v2658 = vunpack.c.l.b16 %v2598
      %v2659 = vunpack.c.l.b16 %v2599
      %v2660 = vunpack.c.l.b16 %v2600
      %v2661 = vunpack.c.l.b16 %v2601
      %v2662 = vunpack.c.l.b16 %v2602
      %v2663 = vunpack.c.l.b16 %v2603
      %v2664 = vunpack.c.l.b16 %v2604
      %v2665 = vpack.c.b16 %v2636, %v2635
      %v2666 = vpack.c.b16 %v2637, %v2637
      %v2667 = vpack.c.b16 %v2639, %v2638
      %v2668 = vpack.c.b16 %v2640, %v2640
      %v2669 = vpack.c.b16 %v2642, %v2641
      %v2670 = vpack.c.b16 %v2643, %v2643
      %v2671 = vpack.c.b16 %v2645, %v2644
      %v2672 = vpack.c.b16 %v2646, %v2646
      %v2673 = vpack.c.b16 %v2648, %v2647
      %v2674 = vpack.c.b16 %v2649, %v2649
      %v2675 = vpack.c.b16 %v2651, %v2650
      %v2676 = vpack.c.b16 %v2652, %v2652
      %v2677 = vpack.c.b16 %v2654, %v2653
      %v2678 = vpack.c.b16 %v2655, %v2655
      %v2679 = vpack.c.b16 %v2657, %v2656
      %v2680 = vpack.c.b16 %v2658, %v2658
      %v2681 = vpack.c.b16 %v2660, %v2659
      %v2682 = vpack.c.b16 %v2661, %v2661
      %v2683 = vpack.c.b16 %v2663, %v2662
      %v2684 = vpack.c.b16 %v2664, %v2664
      %v2685 = vrot.slane %v2665, 1
      %v2686 = vrot.slane %v2666, 1
      %v2687 = vsel %vm786, %v2685, %v2686
      %v2688 = vrot.slane %v2667, 1
      %v2689 = vrot.slane %v2668, 1
      %v2690 = vsel %vm786, %v2688, %v2689
      %v2691 = vrot.slane %v2669, 1
      %v2692 = vrot.slane %v2670, 1
      %v2693 = vsel %vm786, %v2691, %v2692
      %v2694 = vrot.slane %v2671, 1
      %v2695 = vrot.slane %v2672, 1
      %v2696 = vsel %vm786, %v2694, %v2695
      %v2697 = vrot.slane %v2673, 1
      %v2698 = vrot.slane %v2674, 1
      %v2699 = vsel %vm786, %v2697, %v2698
      %v2700 = vrot.slane %v2675, 1
      %v2701 = vrot.slane %v2676, 1
      %v2702 = vsel %vm786, %v2700, %v2701
      %v2703 = vrot.slane %v2677, 1
      %v2704 = vrot.slane %v2678, 1
      %v2705 = vsel %vm786, %v2703, %v2704
      %v2706 = vrot.slane %v2679, 1
      %v2707 = vrot.slane %v2680, 1
      %v2708 = vsel %vm786, %v2706, %v2707
      %v2709 = vrot.slane %v2681, 1
      %v2710 = vrot.slane %v2682, 1
      %v2711 = vsel %vm786, %v2709, %v2710
      %v2712 = vrot.slane %v2683, 1
      %v2713 = vrot.slane %v2684, 1
      %v2714 = vsel %vm786, %v2712, %v2713
      %2725 = vst.msk [vmem:[#allocation3 + $0x10] sm:$0xff] %vm414, %v2687
      %2726 = vst.msk [vmem:[#allocation3 + $0x28] sm:$0xff] %vm414, %v2690
      %2727 = vst.msk [vmem:[#allocation3 + $0x40] sm:$0xff] %vm414, %v2693
      %2728 = vst.msk [vmem:[#allocation3 + $0x58] sm:$0xff] %vm414, %v2696
      %2729 = vst.msk [vmem:[#allocation3 + $0x70] sm:$0xff] %vm414, %v2699
      %2730 = vst.msk [vmem:[#allocation3 + $0x88] sm:$0xff] %vm414, %v2702
      %2731 = vst.msk [vmem:[#allocation3 + $0xa0] sm:$0xff] %vm414, %v2705
      %2732 = vst.msk [vmem:[#allocation3 + $0xb8] sm:$0xff] %vm414, %v2708
      %2733 = vst.msk [vmem:[#allocation3 + $0xd0] sm:$0xff] %vm414, %v2711
      %2734 = vst.msk [vmem:[#allocation3 + $0xe8] sm:$0xff] %vm414, %v2714
      %v2735 = vld [vmem:[#allocation3] sm:$0xff]
      %v2736 = vld [vmem:[#allocation3 + $0x8] sm:$0xff]
      %v2737 = vld [vmem:[#allocation3 + $0x10] sm:$0xff]
      %v2738 = vld [vmem:[#allocation3 + $0x18] sm:$0xff]
      %v2739 = vld [vmem:[#allocation3 + $0x20] sm:$0xff]
      %v2740 = vld [vmem:[#allocation3 + $0x28] sm:$0xff]
      %v2741 = vld [vmem:[#allocation3 + $0x30] sm:$0xff]
      %v2742 = vld [vmem:[#allocation3 + $0x38] sm:$0xff]
      %v2743 = vld [vmem:[#allocation3 + $0x40] sm:$0xff]
      %v2744 = vld [vmem:[#allocation3 + $0x48] sm:$0xff]
      %v2745 = vld [vmem:[#allocation3 + $0x50] sm:$0xff]
      %v2746 = vld [vmem:[#allocation3 + $0x58] sm:$0xff]
      %v2747 = vld [vmem:[#allocation3 + $0x60] sm:$0xff]
      %v2748 = vld [vmem:[#allocation3 + $0x68] sm:$0xff]
      %v2749 = vld [vmem:[#allocation3 + $0x70] sm:$0xff]
      %v2750 = vld [vmem:[#allocation3 + $0x78] sm:$0xff]
      %v2751 = vld [vmem:[#allocation3 + $0x80] sm:$0xff]
      %v2752 = vld [vmem:[#allocation3 + $0x88] sm:$0xff]
      %v2753 = vld [vmem:[#allocation3 + $0x90] sm:$0xff]
      %v2754 = vld [vmem:[#allocation3 + $0x98] sm:$0xff]
      %v2755 = vld [vmem:[#allocation3 + $0xa0] sm:$0xff]
      %v2756 = vld [vmem:[#allocation3 + $0xa8] sm:$0xff]
      %v2757 = vld [vmem:[#allocation3 + $0xb0] sm:$0xff]
      %v2758 = vld [vmem:[#allocation3 + $0xb8] sm:$0xff]
      %v2759 = vld [vmem:[#allocation3 + $0xc0] sm:$0xff]
      %v2760 = vld [vmem:[#allocation3 + $0xc8] sm:$0xff]
      %v2761 = vld [vmem:[#allocation3 + $0xd0] sm:$0xff]
      %v2762 = vld [vmem:[#allocation3 + $0xd8] sm:$0xff]
      %v2763 = vld [vmem:[#allocation3 + $0xe0] sm:$0xff]
      %v2764 = vld [vmem:[#allocation3 + $0xe8] sm:$0xff]
      %v2765 = vld [vmem:[%s2 + $0x180] sm:$0xf]
      %v2766 = vld [vmem:[%s2 + $0x184] sm:$0xf]
      %v2767 = vld [vmem:[%s2 + $0x188] sm:$0xf]
      %v2768 = vld [vmem:[%s2 + $0x18c] sm:$0xf]
      %v2769 = vld [vmem:[%s2 + $0x190] sm:$0xf]
      %v2770 = vld [vmem:[%s2 + $0x194] sm:$0xf]
      %v2771 = vld [vmem:[%s2 + $0x198] sm:$0xf]
      %v2772 = vld [vmem:[%s2 + $0x19c] sm:$0xf]
      %v2773 = vld [vmem:[%s2 + $0x1a0] sm:$0xf]
      %v2774 = vld [vmem:[%s2 + $0x1a4] sm:$0xf]
      %v2775 = vld [vmem:[%s2 + $0x1a8] sm:$0xf]
      %v2776 = vld [vmem:[%s2 + $0x1ac] sm:$0xf]
      %v2777 = vld [vmem:[%s2 + $0x1b0] sm:$0xf]
      %v2778 = vld [vmem:[%s2 + $0x1b4] sm:$0xf]
      %v2779 = vld [vmem:[%s2 + $0x1b8] sm:$0xf]
      %v2780 = vld [vmem:[%s2 + $0x1bc] sm:$0xf]
      %v2781 = vld [vmem:[%s2 + $0x1c0] sm:$0xf]
      %v2782 = vld [vmem:[%s2 + $0x1c4] sm:$0xf]
      %v2783 = vld [vmem:[%s2 + $0x1c8] sm:$0xf]
      %v2784 = vld [vmem:[%s2 + $0x1cc] sm:$0xf]
      %v2785 = vld [vmem:[%s2 + $0x1d0] sm:$0xf]
      %v2786 = vld [vmem:[%s2 + $0x1d4] sm:$0xf]
      %v2787 = vld [vmem:[%s2 + $0x1d8] sm:$0xf]
      %v2788 = vld [vmem:[%s2 + $0x1dc] sm:$0xf]
      %v2789 = vld [vmem:[%s2 + $0x1e0] sm:$0xf]
      %v2790 = vld [vmem:[%s2 + $0x1e4] sm:$0xf]
      %v2791 = vld [vmem:[%s2 + $0x1e8] sm:$0xf]
      %v2792 = vld [vmem:[%s2 + $0x1ec] sm:$0xf]
      %v2793 = vld [vmem:[%s2 + $0x1f0] sm:$0xf]
      %v2794 = vld [vmem:[%s2 + $0x1f4] sm:$0xf]
      %v2795 = vld [vmem:[%s2 + $0x1f8] sm:$0xf]
      %v2796 = vld [vmem:[%s2 + $0x1fc] sm:$0xf]
      %v2797 = vld [vmem:[%s2 + $0x200] sm:$0xf]
      %v2798 = vld [vmem:[%s2 + $0x204] sm:$0xf]
      %v2799 = vld [vmem:[%s2 + $0x208] sm:$0xf]
      %v2800 = vld [vmem:[%s2 + $0x20c] sm:$0xf]
      %v2801 = vld [vmem:[%s2 + $0x210] sm:$0xf]
      %v2802 = vld [vmem:[%s2 + $0x214] sm:$0xf]
      %v2803 = vld [vmem:[%s2 + $0x218] sm:$0xf]
      %v2804 = vld [vmem:[%s2 + $0x21c] sm:$0xf]
      %v2805 = vld [vmem:[%s2 + $0x220] sm:$0xf]
      %v2806 = vld [vmem:[%s2 + $0x224] sm:$0xf]
      %v2807 = vld [vmem:[%s2 + $0x228] sm:$0xf]
      %v2808 = vld [vmem:[%s2 + $0x22c] sm:$0xf]
      %v2809 = vld [vmem:[%s2 + $0x230] sm:$0xf]
      %v2810 = vld [vmem:[%s2 + $0x234] sm:$0xf]
      %v2811 = vld [vmem:[%s2 + $0x238] sm:$0xf]
      %v2812 = vld [vmem:[%s2 + $0x23c] sm:$0xf]
      %v2861 = vunpack.c.l.b16 %v2765
      %v2862 = vunpack.c.l.b16 %v2766
      %v2863 = vunpack.c.l.b16 %v2767
      %v2864 = vunpack.c.l.b16 %v2768
      %v2865 = vunpack.c.l.b16 %v2769
      %v2866 = vunpack.c.l.b16 %v2770
      %v2867 = vunpack.c.l.b16 %v2771
      %v2868 = vunpack.c.l.b16 %v2772
      %v2869 = vunpack.c.l.b16 %v2773
      %v2870 = vunpack.c.l.b16 %v2774
      %v2871 = vunpack.c.l.b16 %v2775
      %v2872 = vunpack.c.l.b16 %v2776
      %v2873 = vunpack.c.l.b16 %v2777
      %v2874 = vunpack.c.l.b16 %v2778
      %v2875 = vunpack.c.l.b16 %v2779
      %v2876 = vunpack.c.l.b16 %v2780
      %v2877 = vunpack.c.l.b16 %v2781
      %v2878 = vunpack.c.l.b16 %v2782
      %v2879 = vunpack.c.l.b16 %v2783
      %v2880 = vunpack.c.l.b16 %v2784
      %v2881 = vunpack.c.l.b16 %v2785
      %v2882 = vunpack.c.l.b16 %v2786
      %v2883 = vunpack.c.l.b16 %v2787
      %v2884 = vunpack.c.l.b16 %v2788
      %v2885 = vunpack.c.l.b16 %v2789
      %v2886 = vunpack.c.l.b16 %v2790
      %v2887 = vunpack.c.l.b16 %v2791
      %v2888 = vunpack.c.l.b16 %v2792
      %v2889 = vunpack.c.l.b16 %v2793
      %v2890 = vunpack.c.l.b16 %v2794
      %v2891 = vunpack.c.l.b16 %v2795
      %v2892 = vunpack.c.l.b16 %v2796
      %v2893 = vunpack.c.l.b16 %v2797
      %v2894 = vunpack.c.l.b16 %v2798
      %v2895 = vunpack.c.l.b16 %v2799
      %v2896 = vunpack.c.l.b16 %v2800
      %v2897 = vunpack.c.l.b16 %v2801
      %v2898 = vunpack.c.l.b16 %v2802
      %v2899 = vunpack.c.l.b16 %v2803
      %v2900 = vunpack.c.l.b16 %v2804
      %v2901 = vunpack.c.l.b16 %v2805
      %v2902 = vunpack.c.l.b16 %v2806
      %v2903 = vunpack.c.l.b16 %v2807
      %v2904 = vunpack.c.l.b16 %v2808
      %v2905 = vunpack.c.l.b16 %v2809
      %v2906 = vunpack.c.l.b16 %v2810
      %v2907 = vunpack.c.l.b16 %v2811
      %v2908 = vunpack.c.l.b16 %v2812
      %v2909 = vpack.c.b16 %v2862, %v2861
      %v2910 = vpack.c.b16 %v2864, %v2863
      %v2911 = vpack.c.b16 %v2866, %v2865
      %v2912 = vpack.c.b16 %v2868, %v2867
      %v2913 = vpack.c.b16 %v2870, %v2869
      %v2914 = vpack.c.b16 %v2872, %v2871
      %v2915 = vpack.c.b16 %v2874, %v2873
      %v2916 = vpack.c.b16 %v2876, %v2875
      %v2917 = vpack.c.b16 %v2878, %v2877
      %v2918 = vpack.c.b16 %v2880, %v2879
      %v2919 = vpack.c.b16 %v2882, %v2881
      %v2920 = vpack.c.b16 %v2884, %v2883
      %v2921 = vpack.c.b16 %v2886, %v2885
      %v2922 = vpack.c.b16 %v2888, %v2887
      %v2923 = vpack.c.b16 %v2890, %v2889
      %v2924 = vpack.c.b16 %v2892, %v2891
      %v2925 = vpack.c.b16 %v2894, %v2893
      %v2926 = vpack.c.b16 %v2896, %v2895
      %v2927 = vpack.c.b16 %v2898, %v2897
      %v2928 = vpack.c.b16 %v2900, %v2899
      %v2929 = vpack.c.b16 %v2902, %v2901
      %v2930 = vpack.c.b16 %v2904, %v2903
      %v2931 = vpack.c.b16 %v2906, %v2905
      %v2932 = vpack.c.b16 %v2908, %v2907
      %2957 = vmatprep.subr.bf16.mxu0 0
      %2958 = vmatpush1.bf16.msra.mxu0 %v2909
      %2959 = vmatprep.subr.bf16.mxu0 0
      %2960 = vmatpush1.bf16.msra.mxu0 %v2910
      %2961 = vmatprep.subr.bf16.mxu0 0
      %2962 = vmatpush1.bf16.msra.mxu0 %v2911
      %2963 = vmatprep.subr.bf16.mxu0 0
      %2964 = vmatpush1.bf16.msra.mxu0 %v2912
      %2965 = vmatprep.subr.bf16.mxu0 0
      %2966 = vmatpush1.bf16.msra.mxu0 %v2913
      %2967 = vmatprep.subr.bf16.mxu0 0
      %2968 = vmatpush1.bf16.msra.mxu0 %v2914
      %2969 = vmatprep.subr.bf16.mxu0 0
      %2970 = vmatpush1.bf16.msra.mxu0 %v2915
      %2971 = vmatprep.subr.bf16.mxu0 0
      %2972 = vmatpush1.bf16.msra.mxu0 %v2916
      %2973 = vmatprep.subr.bf16.mxu0 0
      %2974 = vmatpush1.bf16.msra.mxu0 %v2917
      %2975 = vmatprep.subr.bf16.mxu0 0
      %2976 = vmatpush1.bf16.msra.mxu0 %v2918
      %2977 = vmatprep.subr.bf16.mxu0 0
      %2978 = vmatpush1.bf16.msra.mxu0 %v2919
      %2979 = vmatprep.subr.bf16.mxu0 0
      %2980 = vmatpush1.bf16.msra.mxu0 %v2920
      %2981 = vmatprep.subr.bf16.mxu0 0
      %2982 = vmatpush1.bf16.msra.mxu0 %v2921
      %2983 = vmatprep.subr.bf16.mxu0 0
      %2984 = vmatpush1.bf16.msra.mxu0 %v2922
      %2985 = vmatprep.subr.bf16.mxu0 0
      %2986 = vmatpush1.bf16.msra.mxu0 %v2923
      %2987 = vmatprep.subr.bf16.mxu0 0
      %2988 = vmatpush1.bf16.msra.mxu0 %v2924
      %2989 = vmatprep.mubr.bf16.mxu0 %v2736
      %2990 = vmatmul.mubr.bf16.gmra.mrb[0].mxu0 %v2735
      %v2991 = vpop.f32.mrb[0].mxu0
      %v2992 = vadd.f32 0.0, %v2991
      %v2993 = vpop.f32.mrb[0].mxu0
      %v2994 = vpop.f32.mrb[0].mxu0
      %v2995 = vadd.f32 0.0, %v2994
      %v2996 = vpop.f32.mrb[0].mxu0
      %2997 = vmatprep.mubr.bf16.mxu0 %v2739
      %2998 = vmatmul.mubr.bf16.gmra.mrb[0].mxu0 %v2738
      %v2999 = vpop.f32.mrb[0].mxu0
      %v3000 = vadd.f32 0.0, %v2999
      %v3001 = vpop.f32.mrb[0].mxu0
      %v3002 = vpop.f32.mrb[0].mxu0
      %v3003 = vadd.f32 0.0, %v3002
      %v3004 = vpop.f32.mrb[0].mxu0
      %3005 = vmatprep.mubr.bf16.mxu0 %v2742
      %3006 = vmatmul.mubr.bf16.gmra.mrb[0].mxu0 %v2741
      %v3007 = vpop.f32.mrb[0].mxu0
      %v3008 = vadd.f32 0.0, %v3007
      %v3009 = vpop.f32.mrb[0].mxu0
      %v3010 = vpop.f32.mrb[0].mxu0
      %v3011 = vadd.f32 0.0, %v3010
      %v3012 = vpop.f32.mrb[0].mxu0
      %3013 = vmatprep.mubr.bf16.mxu0 %v2745
      %3014 = vmatmul.mubr.bf16.gmra.mrb[0].mxu0 %v2744
      %v3015 = vpop.f32.mrb[0].mxu0
      %v3016 = vadd.f32 0.0, %v3015
      %v3017 = vpop.f32.mrb[0].mxu0
      %v3018 = vpop.f32.mrb[0].mxu0
      %v3019 = vadd.f32 0.0, %v3018
      %v3020 = vpop.f32.mrb[0].mxu0
      %3021 = vmatprep.mubr.bf16.mxu0 %v2748
      %3022 = vmatmul.mubr.bf16.gmra.mrb[0].mxu0 %v2747
      %v3023 = vpop.f32.mrb[0].mxu0
      %v3024 = vadd.f32 0.0, %v3023
      %v3025 = vpop.f32.mrb[0].mxu0
      %v3026 = vpop.f32.mrb[0].mxu0
      %v3027 = vadd.f32 0.0, %v3026
      %v3028 = vpop.f32.mrb[0].mxu0
      %3029 = vmatprep.mubr.bf16.mxu0 %v2751
      %3030 = vmatmul.mubr.bf16.gmra.mrb[0].mxu0 %v2750
      %v3031 = vpop.f32.mrb[0].mxu0
      %v3032 = vadd.f32 0.0, %v3031
      %v3033 = vpop.f32.mrb[0].mxu0
      %v3034 = vpop.f32.mrb[0].mxu0
      %v3035 = vadd.f32 0.0, %v3034
      %v3036 = vpop.f32.mrb[0].mxu0
      %3037 = vmatprep.mubr.bf16.mxu0 %v2754
      %3038 = vmatmul.mubr.bf16.gmra.mrb[0].mxu0 %v2753
      %v3039 = vpop.f32.mrb[0].mxu0
      %v3040 = vadd.f32 0.0, %v3039
      %v3041 = vpop.f32.mrb[0].mxu0
      %v3042 = vpop.f32.mrb[0].mxu0
      %v3043 = vadd.f32 0.0, %v3042
      %v3044 = vpop.f32.mrb[0].mxu0
      %3045 = vmatprep.mubr.bf16.mxu0 %v2757
      %3046 = vmatmul.mubr.bf16.gmra.mrb[0].mxu0 %v2756
      %v3047 = vpop.f32.mrb[0].mxu0
      %v3048 = vadd.f32 0.0, %v3047
      %v3049 = vpop.f32.mrb[0].mxu0
      %v3050 = vpop.f32.mrb[0].mxu0
      %v3051 = vadd.f32 0.0, %v3050
      %v3052 = vpop.f32.mrb[0].mxu0
      %3053 = vmatprep.mubr.bf16.mxu0 %v2760
      %3054 = vmatmul.mubr.bf16.gmra.mrb[0].mxu0 %v2759
      %v3055 = vpop.f32.mrb[0].mxu0
      %v3056 = vadd.f32 0.0, %v3055
      %v3057 = vpop.f32.mrb[0].mxu0
      %v3058 = vpop.f32.mrb[0].mxu0
      %v3059 = vadd.f32 0.0, %v3058
      %v3060 = vpop.f32.mrb[0].mxu0
      %3061 = vmatprep.mubr.bf16.mxu0 %v2763
      %3062 = vmatmul.mubr.bf16.gmra.mrb[0].mxu0 %v2762
      %v3063 = vpop.f32.mrb[0].mxu0
      %v3064 = vadd.f32 0.0, %v3063
      %v3065 = vpop.f32.mrb[0].mxu0
      %v3066 = vpop.f32.mrb[0].mxu0
      %v3067 = vadd.f32 0.0, %v3066
      %v3068 = vpop.f32.mrb[0].mxu0
      %3069 = vdwg.mxu0
      %3070 = vmatprep.subr.bf16.mxu0 0
      %3071 = vmatpush1.bf16.msra.mxu0 %v2925
      %3072 = vmatprep.subr.bf16.mxu0 0
      %3073 = vmatpush1.bf16.msra.mxu0 %v2926
      %3074 = vmatprep.subr.bf16.mxu0 0
      %3075 = vmatpush1.bf16.msra.mxu0 %v2927
      %3076 = vmatprep.subr.bf16.mxu0 0
      %3077 = vmatpush1.bf16.msra.mxu0 %v2928
      %3078 = vmatprep.subr.bf16.mxu0 0
      %3079 = vmatpush1.bf16.msra.mxu0 %v2929
      %3080 = vmatprep.subr.bf16.mxu0 0
      %3081 = vmatpush1.bf16.msra.mxu0 %v2930
      %3082 = vmatprep.subr.bf16.mxu0 0
      %3083 = vmatpush1.bf16.msra.mxu0 %v2931
      %3084 = vmatprep.subr.bf16.mxu0 0
      %3085 = vmatpush1.bf16.msra.mxu0 %v2932
      %3086 = vmatprep.subr.bf16.mxu0 0
      %3087 = vmatpush1.bf16.msra.mxu0 0
      %3088 = vmatprep.subr.bf16.mxu0 0
      %3089 = vmatpush1.bf16.msra.mxu0 0
      %3090 = vmatprep.subr.bf16.mxu0 0
      %3091 = vmatpush1.bf16.msra.mxu0 0
      %3092 = vmatprep.subr.bf16.mxu0 0
      %3093 = vmatpush1.bf16.msra.mxu0 0
      %3094 = vmatprep.subr.bf16.mxu0 0
      %3095 = vmatpush1.bf16.msra.mxu0 0
      %3096 = vmatprep.subr.bf16.mxu0 0
      %3097 = vmatpush1.bf16.msra.mxu0 0
      %3098 = vmatprep.subr.bf16.mxu0 0
      %3099 = vmatpush1.bf16.msra.mxu0 0
      %3100 = vmatprep.subr.bf16.mxu0 0
      %3101 = vmatpush1.bf16.msra.mxu0 0
      %3102 = vmatprep.mubr.bf16.mxu0 0
      %3103 = vmatmul.mubr.bf16.gmra.mrb[0].mxu0 %v2737
      %v3104 = vpop.f32.mrb[0].mxu0
      %v3105 = vadd.f32 %v2992, %v3104
      %v3106 = vpop.f32.mrb[0].mxu0
      %v3107 = vpop.f32.mrb[0].mxu0
      %v3108 = vadd.f32 %v2995, %v3107
      %v3109 = vpop.f32.mrb[0].mxu0
      %3110 = vmatprep.mubr.bf16.mxu0 0
      %3111 = vmatmul.mubr.bf16.gmra.mrb[0].mxu0 %v2740
      %v3112 = vpop.f32.mrb[0].mxu0
      %v3113 = vadd.f32 %v3000, %v3112
      %v3114 = vpop.f32.mrb[0].mxu0
      %v3115 = vpop.f32.mrb[0].mxu0
      %v3116 = vadd.f32 %v3003, %v3115
      %v3117 = vpop.f32.mrb[0].mxu0
      %3118 = vmatprep.mubr.bf16.mxu0 0
      %3119 = vmatmul.mubr.bf16.gmra.mrb[0].mxu0 %v2743
      %v3120 = vpop.f32.mrb[0].mxu0
      %v3121 = vadd.f32 %v3008, %v3120
      %v3122 = vpop.f32.mrb[0].mxu0
      %v3123 = vpop.f32.mrb[0].mxu0
      %v3124 = vadd.f32 %v3011, %v3123
      %v3125 = vpop.f32.mrb[0].mxu0
      %3126 = vmatprep.mubr.bf16.mxu0 0
      %3127 = vmatmul.mubr.bf16.gmra.mrb[0].mxu0 %v2746
      %v3128 = vpop.f32.mrb[0].mxu0
      %v3129 = vadd.f32 %v3016, %v3128
      %v3130 = vpop.f32.mrb[0].mxu0
      %v3131 = vpop.f32.mrb[0].mxu0
      %v3132 = vadd.f32 %v3019, %v3131
      %v3133 = vpop.f32.mrb[0].mxu0
      %3134 = vmatprep.mubr.bf16.mxu0 0
      %3135 = vmatmul.mubr.bf16.gmra.mrb[0].mxu0 %v2749
      %v3136 = vpop.f32.mrb[0].mxu0
      %v3137 = vadd.f32 %v3024, %v3136
      %v3138 = vpop.f32.mrb[0].mxu0
      %v3139 = vpop.f32.mrb[0].mxu0
      %v3140 = vadd.f32 %v3027, %v3139
      %v3141 = vpop.f32.mrb[0].mxu0
      %3142 = vmatprep.mubr.bf16.mxu0 0
      %3143 = vmatmul.mubr.bf16.gmra.mrb[0].mxu0 %v2752
      %v3144 = vpop.f32.mrb[0].mxu0
      %v3145 = vadd.f32 %v3032, %v3144
      %v3146 = vpop.f32.mrb[0].mxu0
      %v3147 = vpop.f32.mrb[0].mxu0
      %v3148 = vadd.f32 %v3035, %v3147
      %v3149 = vpop.f32.mrb[0].mxu0
      %3150 = vmatprep.mubr.bf16.mxu0 0
      %3151 = vmatmul.mubr.bf16.gmra.mrb[0].mxu0 %v2755
      %v3152 = vpop.f32.mrb[0].mxu0
      %v3153 = vadd.f32 %v3040, %v3152
      %v3154 = vpop.f32.mrb[0].mxu0
      %v3155 = vpop.f32.mrb[0].mxu0
      %v3156 = vadd.f32 %v3043, %v3155
      %v3157 = vpop.f32.mrb[0].mxu0
      %3158 = vmatprep.mubr.bf16.mxu0 0
      %3159 = vmatmul.mubr.bf16.gmra.mrb[0].mxu0 %v2758
      %v3160 = vpop.f32.mrb[0].mxu0
      %v3161 = vadd.f32 %v3048, %v3160
      %v3162 = vpop.f32.mrb[0].mxu0
      %v3163 = vpop.f32.mrb[0].mxu0
      %v3164 = vadd.f32 %v3051, %v3163
      %v3165 = vpop.f32.mrb[0].mxu0
      %3166 = vmatprep.mubr.bf16.mxu0 0
      %3167 = vmatmul.mubr.bf16.gmra.mrb[0].mxu0 %v2761
      %v3168 = vpop.f32.mrb[0].mxu0
      %v3169 = vadd.f32 %v3056, %v3168
      %v3170 = vpop.f32.mrb[0].mxu0
      %v3171 = vpop.f32.mrb[0].mxu0
      %v3172 = vadd.f32 %v3059, %v3171
      %v3173 = vpop.f32.mrb[0].mxu0
      %3174 = vmatprep.mubr.bf16.mxu0 0
      %3175 = vmatmul.mubr.bf16.gmra.mrb[0].mxu0 %v2764
      %v3176 = vpop.f32.mrb[0].mxu0
      %v3177 = vadd.f32 %v3064, %v3176
      %v3178 = vpop.f32.mrb[0].mxu0
      %v3179 = vpop.f32.mrb[0].mxu0
      %v3180 = vadd.f32 %v3067, %v3179
      %v3181 = vpop.f32.mrb[0].mxu0
      %3182 = vdwg.mxu0
      %v3183 = vadd.f32 %v2156, %v3105
      %v3184 = vadd.f32 %v2159, %v3108
      %v3185 = vadd.f32 %v2164, %v3113
      %v3186 = vadd.f32 %v2167, %v3116
      %v3187 = vadd.f32 %v2172, %v3121
      %v3188 = vadd.f32 %v2175, %v3124
      %v3189 = vadd.f32 %v2180, %v3129
      %v3190 = vadd.f32 %v2183, %v3132
      %v3191 = vadd.f32 %v2188, %v3137
      %v3192 = vadd.f32 %v2191, %v3140
      %v3193 = vadd.f32 %v2196, %v3145
      %v3194 = vadd.f32 %v2199, %v3148
      %v3195 = vadd.f32 %v2204, %v3153
      %v3196 = vadd.f32 %v2207, %v3156
      %v3197 = vadd.f32 %v2212, %v3161
      %v3198 = vadd.f32 %v2215, %v3164
      %v3199 = vadd.f32 %v2220, %v3169
      %v3200 = vadd.f32 %v2223, %v3172
      %v3201 = vadd.f32 %v2228, %v3177
      %v3202 = vadd.f32 %v2231, %v3180
      %v3203 = vld [vmem:[%s4] sm:$0x1]
      %v3204 = vlaneseq
      %v3205 = vshrl.u32 %v3204, 7
      %v3206 = vsub.s32 0, %v3205
      %v3207 = vrot.slane %v3203, %v3206
      %v3208 = vadd.f32 %v3183, %v3207
      %v3209 = vadd.f32 %v3184, %v3207
      %v3210 = vadd.f32 %v3185, %v3207
      %v3211 = vadd.f32 %v3186, %v3207
      %v3212 = vadd.f32 %v3187, %v3207
      %v3213 = vadd.f32 %v3188, %v3207
      %v3214 = vadd.f32 %v3189, %v3207
      %v3215 = vadd.f32 %v3190, %v3207
      %v3216 = vadd.f32 %v3191, %v3207
      %v3217 = vadd.f32 %v3192, %v3207
      %v3218 = vadd.f32 %v3193, %v3207
      %v3219 = vadd.f32 %v3194, %v3207
      %v3220 = vadd.f32 %v3195, %v3207
      %v3221 = vadd.f32 %v3196, %v3207
      %v3222 = vadd.f32 %v3197, %v3207
      %v3223 = vadd.f32 %v3198, %v3207
      %v3224 = vadd.f32 %v3199, %v3207
      %v3225 = vadd.f32 %v3200, %v3207
      %v3226 = vadd.f32 %v3201, %v3207
      %v3227 = vadd.f32 %v3202, %v3207
      %v3228 = vmax.f32 %v3208, 0.0
      %v3229 = vmax.f32 %v3209, 0.0
      %v3230 = vmax.f32 %v3210, 0.0
      %v3231 = vmax.f32 %v3211, 0.0
      %v3232 = vmax.f32 %v3212, 0.0
      %v3233 = vmax.f32 %v3213, 0.0
      %v3234 = vmax.f32 %v3214, 0.0
      %v3235 = vmax.f32 %v3215, 0.0
      %v3236 = vmax.f32 %v3216, 0.0
      %v3237 = vmax.f32 %v3217, 0.0
      %v3238 = vmax.f32 %v3218, 0.0
      %v3239 = vmax.f32 %v3219, 0.0
      %v3240 = vmax.f32 %v3220, 0.0
      %v3241 = vmax.f32 %v3221, 0.0
      %v3242 = vmax.f32 %v3222, 0.0
      %v3243 = vmax.f32 %v3223, 0.0
      %v3244 = vmax.f32 %v3224, 0.0
      %v3245 = vmax.f32 %v3225, 0.0
      %v3246 = vmax.f32 %v3226, 0.0
      %v3247 = vmax.f32 %v3227, 0.0
      %v3248 = vpack.c.bf16 %v3229, %v3228
      %v3249 = vpack.c.bf16 %v3231, %v3230
      %v3250 = vpack.c.bf16 %v3233, %v3232
      %v3251 = vpack.c.bf16 %v3235, %v3234
      %v3252 = vpack.c.bf16 %v3237, %v3236
      %v3253 = vpack.c.bf16 %v3239, %v3238
      %v3254 = vpack.c.bf16 %v3241, %v3240
      %v3255 = vpack.c.bf16 %v3243, %v3242
      %v3256 = vpack.c.bf16 %v3245, %v3244
      %v3257 = vpack.c.bf16 %v3247, %v3246
      %v3268 = vunpack.c.l.b16 %v3248
      %v3269 = vunpack.c.h.b16 %v3248
      %v3270 = vunpack.c.l.b16 %v3249
      %v3271 = vunpack.c.h.b16 %v3249
      %v3272 = vunpack.c.l.b16 %v3250
      %v3273 = vunpack.c.h.b16 %v3250
      %v3274 = vunpack.c.l.b16 %v3251
      %v3275 = vunpack.c.h.b16 %v3251
      %v3276 = vunpack.c.l.b16 %v3252
      %v3277 = vunpack.c.h.b16 %v3252
      %v3278 = vunpack.c.l.b16 %v3253
      %v3279 = vunpack.c.h.b16 %v3253
      %v3280 = vunpack.c.l.b16 %v3254
      %v3281 = vunpack.c.h.b16 %v3254
      %v3282 = vunpack.c.l.b16 %v3255
      %v3283 = vunpack.c.h.b16 %v3255
      %v3284 = vunpack.c.l.b16 %v3256
      %v3285 = vunpack.c.h.b16 %v3256
      %v3286 = vunpack.c.l.b16 %v3257
      %v3287 = vunpack.c.h.b16 %v3257
      %v3288 = vpack.c.b16 %v3268, %v3268
      %v3289 = vpack.c.b16 %v3269, %v3269
      %v3290 = vpack.c.b16 %v3270, %v3270
      %v3291 = vpack.c.b16 %v3271, %v3271
      %v3292 = vpack.c.b16 %v3272, %v3272
      %v3293 = vpack.c.b16 %v3273, %v3273
      %v3294 = vpack.c.b16 %v3274, %v3274
      %v3295 = vpack.c.b16 %v3275, %v3275
      %v3296 = vpack.c.b16 %v3276, %v3276
      %v3297 = vpack.c.b16 %v3277, %v3277
      %v3298 = vpack.c.b16 %v3278, %v3278
      %v3299 = vpack.c.b16 %v3279, %v3279
      %v3300 = vpack.c.b16 %v3280, %v3280
      %v3301 = vpack.c.b16 %v3281, %v3281
      %v3302 = vpack.c.b16 %v3282, %v3282
      %v3303 = vpack.c.b16 %v3283, %v3283
      %v3304 = vpack.c.b16 %v3284, %v3284
      %v3305 = vpack.c.b16 %v3285, %v3285
      %v3306 = vpack.c.b16 %v3286, %v3286
      %v3307 = vpack.c.b16 %v3287, %v3287
      %vm3308 = vsmask.f32 256
      %vm3309 = vsmask.f32 4368
      %vm3310 = vmor %vm3308, %vm3309
      %v3312 = vshrl.u32 %v3288, 16
      %v3314 = vrot.slane %v3312, 7
      %v3315 = vshll.u32 %v3288, 16
      %v3317 = vor.u32 %v3314, %v3315
      %v3318 = vrot.slane %v3314, 4
      %v3320 = vshrl.u32 %v3289, 16
      %v3322 = vrot.slane %v3320, 7
      %v3323 = vshll.u32 %v3289, 16
      %v3325 = vor.u32 %v3322, %v3323
      %v3326 = vsel %vm3310, %v3318, %v3325
      %v3327 = vrot.slane %v3322, 4
      %v3329 = vshrl.u32 %v3290, 16
      %v3331 = vrot.slane %v3329, 7
      %v3332 = vshll.u32 %v3290, 16
      %v3334 = vor.u32 %v3331, %v3332
      %v3335 = vrot.slane %v3331, 4
      %v3337 = vshrl.u32 %v3291, 16
      %v3339 = vrot.slane %v3337, 7
      %v3340 = vshll.u32 %v3291, 16
      %v3342 = vor.u32 %v3339, %v3340
      %v3343 = vsel %vm3310, %v3335, %v3342
      %v3344 = vrot.slane %v3339, 4
      %v3346 = vshrl.u32 %v3292, 16
      %v3348 = vrot.slane %v3346, 7
      %v3349 = vshll.u32 %v3292, 16
      %v3351 = vor.u32 %v3348, %v3349
      %v3352 = vrot.slane %v3348, 4
      %v3354 = vshrl.u32 %v3293, 16
      %v3356 = vrot.slane %v3354, 7
      %v3357 = vshll.u32 %v3293, 16
      %v3359 = vor.u32 %v3356, %v3357
      %v3360 = vsel %vm3310, %v3352, %v3359
      %v3361 = vrot.slane %v3356, 4
      %v3363 = vshrl.u32 %v3294, 16
      %v3365 = vrot.slane %v3363, 7
      %v3366 = vshll.u32 %v3294, 16
      %v3368 = vor.u32 %v3365, %v3366
      %v3369 = vrot.slane %v3365, 4
      %v3371 = vshrl.u32 %v3295, 16
      %v3373 = vrot.slane %v3371, 7
      %v3374 = vshll.u32 %v3295, 16
      %v3376 = vor.u32 %v3373, %v3374
      %v3377 = vsel %vm3310, %v3369, %v3376
      %v3378 = vrot.slane %v3373, 4
      %v3380 = vshrl.u32 %v3296, 16
      %v3382 = vrot.slane %v3380, 7
      %v3383 = vshll.u32 %v3296, 16
      %v3385 = vor.u32 %v3382, %v3383
      %v3386 = vrot.slane %v3382, 4
      %v3388 = vshrl.u32 %v3297, 16
      %v3390 = vrot.slane %v3388, 7
      %v3391 = vshll.u32 %v3297, 16
      %v3393 = vor.u32 %v3390, %v3391
      %v3394 = vsel %vm3310, %v3386, %v3393
      %v3395 = vrot.slane %v3390, 4
      %v3397 = vshrl.u32 %v3298, 16
      %v3399 = vrot.slane %v3397, 7
      %v3400 = vshll.u32 %v3298, 16
      %v3402 = vor.u32 %v3399, %v3400
      %v3403 = vrot.slane %v3399, 4
      %v3405 = vshrl.u32 %v3299, 16
      %v3407 = vrot.slane %v3405, 7
      %v3408 = vshll.u32 %v3299, 16
      %v3410 = vor.u32 %v3407, %v3408
      %v3411 = vsel %vm3310, %v3403, %v3410
      %v3412 = vrot.slane %v3407, 4
      %v3414 = vshrl.u32 %v3300, 16
      %v3416 = vrot.slane %v3414, 7
      %v3417 = vshll.u32 %v3300, 16
      %v3419 = vor.u32 %v3416, %v3417
      %v3420 = vrot.slane %v3416, 4
      %v3422 = vshrl.u32 %v3301, 16
      %v3424 = vrot.slane %v3422, 7
      %v3425 = vshll.u32 %v3301, 16
      %v3427 = vor.u32 %v3424, %v3425
      %v3428 = vsel %vm3310, %v3420, %v3427
      %v3429 = vrot.slane %v3424, 4
      %v3431 = vshrl.u32 %v3302, 16
      %v3433 = vrot.slane %v3431, 7
      %v3434 = vshll.u32 %v3302, 16
      %v3436 = vor.u32 %v3433, %v3434
      %v3437 = vrot.slane %v3433, 4
      %v3439 = vshrl.u32 %v3303, 16
      %v3441 = vrot.slane %v3439, 7
      %v3442 = vshll.u32 %v3303, 16
      %v3444 = vor.u32 %v3441, %v3442
      %v3445 = vsel %vm3310, %v3437, %v3444
      %v3446 = vrot.slane %v3441, 4
      %v3448 = vshrl.u32 %v3304, 16
      %v3450 = vrot.slane %v3448, 7
      %v3451 = vshll.u32 %v3304, 16
      %v3453 = vor.u32 %v3450, %v3451
      %v3454 = vrot.slane %v3450, 4
      %v3456 = vshrl.u32 %v3305, 16
      %v3458 = vrot.slane %v3456, 7
      %v3459 = vshll.u32 %v3305, 16
      %v3461 = vor.u32 %v3458, %v3459
      %v3462 = vsel %vm3310, %v3454, %v3461
      %v3463 = vrot.slane %v3458, 4
      %v3465 = vshrl.u32 %v3306, 16
      %v3467 = vrot.slane %v3465, 7
      %v3468 = vshll.u32 %v3306, 16
      %v3470 = vor.u32 %v3467, %v3468
      %v3471 = vrot.slane %v3467, 4
      %v3473 = vshrl.u32 %v3307, 16
      %v3475 = vrot.slane %v3473, 7
      %v3476 = vshll.u32 %v3307, 16
      %v3478 = vor.u32 %v3475, %v3476
      %v3479 = vsel %vm3310, %v3471, %v3478
      %v3480 = vrot.slane %v3475, 4
      %vm3511 = vcmask 27648
      %vm3512 = vsmask.f32 7938
      %vm3513 = vmand %vm3511, %vm3512
      %v3514 = vld [vmem:[#allocation2] sm:$0xf]
      %v3515 = vsel %vm3513, %v3317, %v3514
      %3516 = vst [vmem:[#allocation2] sm:$0xf] %v3515
      %vm3517 = vcmask 27648
      %3518 = vst.msk [vmem:[#allocation2 + $0x4] sm:$0xf] %vm3517, %v3326
      %vm3519 = vcmask 24576
      %vm3520 = vmand %vm3519, %vm3308
      %v3521 = vld [vmem:[#allocation2 + $0x8] sm:$0x1]
      %v3522 = vsel %vm3520, %v3327, %v3521
      %3523 = vst [vmem:[#allocation2 + $0x8] sm:$0x1] %v3522
      %v3524 = vld [vmem:[#allocation2 + $0xc] sm:$0xf]
      %v3525 = vsel %vm3513, %v3334, %v3524
      %3526 = vst [vmem:[#allocation2 + $0xc] sm:$0xf] %v3525
      %3527 = vst.msk [vmem:[#allocation2 + $0x10] sm:$0xf] %vm3517, %v3343
      %v3528 = vld [vmem:[#allocation2 + $0x14] sm:$0x1]
      %v3529 = vsel %vm3520, %v3344, %v3528
      %3530 = vst [vmem:[#allocation2 + $0x14] sm:$0x1] %v3529
      %v3531 = vld [vmem:[#allocation2 + $0x18] sm:$0xf]
      %v3532 = vsel %vm3513, %v3351, %v3531
      %3533 = vst [vmem:[#allocation2 + $0x18] sm:$0xf] %v3532
      %3534 = vst.msk [vmem:[#allocation2 + $0x1c] sm:$0xf] %vm3517, %v3360
      %v3535 = vld [vmem:[#allocation2 + $0x20] sm:$0x1]
      %v3536 = vsel %vm3520, %v3361, %v3535
      %3537 = vst [vmem:[#allocation2 + $0x20] sm:$0x1] %v3536
      %v3538 = vld [vmem:[#allocation2 + $0x24] sm:$0xf]
      %v3539 = vsel %vm3513, %v3368, %v3538
      %3540 = vst [vmem:[#allocation2 + $0x24] sm:$0xf] %v3539
      %3541 = vst.msk [vmem:[#allocation2 + $0x28] sm:$0xf] %vm3517, %v3377
      %v3542 = vld [vmem:[#allocation2 + $0x2c] sm:$0x1]
      %v3543 = vsel %vm3520, %v3378, %v3542
      %3544 = vst [vmem:[#allocation2 + $0x2c] sm:$0x1] %v3543
      %v3545 = vld [vmem:[#allocation2 + $0x30] sm:$0xf]
      %v3546 = vsel %vm3513, %v3385, %v3545
      %3547 = vst [vmem:[#allocation2 + $0x30] sm:$0xf] %v3546
      %3548 = vst.msk [vmem:[#allocation2 + $0x34] sm:$0xf] %vm3517, %v3394
      %v3549 = vld [vmem:[#allocation2 + $0x38] sm:$0x1]
      %v3550 = vsel %vm3520, %v3395, %v3549
      %3551 = vst [vmem:[#allocation2 + $0x38] sm:$0x1] %v3550
      %v3552 = vld [vmem:[#allocation2 + $0x3c] sm:$0xf]
      %v3553 = vsel %vm3513, %v3402, %v3552
      %3554 = vst [vmem:[#allocation2 + $0x3c] sm:$0xf] %v3553
      %3555 = vst.msk [vmem:[#allocation2 + $0x40] sm:$0xf] %vm3517, %v3411
      %v3556 = vld [vmem:[#allocation2 + $0x44] sm:$0x1]
      %v3557 = vsel %vm3520, %v3412, %v3556
      %3558 = vst [vmem:[#allocation2 + $0x44] sm:$0x1] %v3557
      %v3559 = vld [vmem:[#allocation2 + $0x48] sm:$0xf]
      %v3560 = vsel %vm3513, %v3419, %v3559
      %3561 = vst [vmem:[#allocation2 + $0x48] sm:$0xf] %v3560
      %3562 = vst.msk [vmem:[#allocation2 + $0x4c] sm:$0xf] %vm3517, %v3428
      %v3563 = vld [vmem:[#allocation2 + $0x50] sm:$0x1]
      %v3564 = vsel %vm3520, %v3429, %v3563
      %3565 = vst [vmem:[#allocation2 + $0x50] sm:$0x1] %v3564
      %v3566 = vld [vmem:[#allocation2 + $0x54] sm:$0xf]
      %v3567 = vsel %vm3513, %v3436, %v3566
      %3568 = vst [vmem:[#allocation2 + $0x54] sm:$0xf] %v3567
      %3569 = vst.msk [vmem:[#allocation2 + $0x58] sm:$0xf] %vm3517, %v3445
      %v3570 = vld [vmem:[#allocation2 + $0x5c] sm:$0x1]
      %v3571 = vsel %vm3520, %v3446, %v3570
      %3572 = vst [vmem:[#allocation2 + $0x5c] sm:$0x1] %v3571
      %v3573 = vld [vmem:[#allocation2 + $0x60] sm:$0xf]
      %v3574 = vsel %vm3513, %v3453, %v3573
      %3575 = vst [vmem:[#allocation2 + $0x60] sm:$0xf] %v3574
      %3576 = vst.msk [vmem:[#allocation2 + $0x64] sm:$0xf] %vm3517, %v3462
      %v3577 = vld [vmem:[#allocation2 + $0x68] sm:$0x1]
      %v3578 = vsel %vm3520, %v3463, %v3577
      %3579 = vst [vmem:[#allocation2 + $0x68] sm:$0x1] %v3578
      %v3580 = vld [vmem:[#allocation2 + $0x6c] sm:$0xf]
      %v3581 = vsel %vm3513, %v3470, %v3580
      %3582 = vst [vmem:[#allocation2 + $0x6c] sm:$0xf] %v3581
      %3583 = vst.msk [vmem:[#allocation2 + $0x70] sm:$0xf] %vm3517, %v3479
      %v3584 = vld [vmem:[#allocation2 + $0x74] sm:$0x1]
      %v3585 = vsel %vm3520, %v3480, %v3584
      %3586 = vst [vmem:[#allocation2 + $0x74] sm:$0x1] %v3585
      %v3587 = vld [vmem:[#allocation2] sm:$0x1]
      %v3588 = vsel %vm3520, 0, %v3587
      %3589 = vst [vmem:[#allocation2] sm:$0x1] %v3588
      %v3590 = vld [vmem:[#allocation2 + $0xc] sm:$0x1]
      %v3591 = vsel %vm3520, 0, %v3590
      %3592 = vst [vmem:[#allocation2 + $0xc] sm:$0x1] %v3591
      %v3593 = vld [vmem:[#allocation2 + $0x18] sm:$0x1]
      %v3594 = vsel %vm3520, 0, %v3593
      %3595 = vst [vmem:[#allocation2 + $0x18] sm:$0x1] %v3594
      %v3596 = vld [vmem:[#allocation2 + $0x24] sm:$0x1]
      %v3597 = vsel %vm3520, 0, %v3596
      %3598 = vst [vmem:[#allocation2 + $0x24] sm:$0x1] %v3597
      %v3599 = vld [vmem:[#allocation2 + $0x30] sm:$0x1]
      %v3600 = vsel %vm3520, 0, %v3599
      %3601 = vst [vmem:[#allocation2 + $0x30] sm:$0x1] %v3600
      %v3602 = vld [vmem:[#allocation2 + $0x3c] sm:$0x1]
      %v3603 = vsel %vm3520, 0, %v3602
      %3604 = vst [vmem:[#allocation2 + $0x3c] sm:$0x1] %v3603
      %v3605 = vld [vmem:[#allocation2 + $0x48] sm:$0x1]
      %v3606 = vsel %vm3520, 0, %v3605
      %3607 = vst [vmem:[#allocation2 + $0x48] sm:$0x1] %v3606
      %v3608 = vld [vmem:[#allocation2 + $0x54] sm:$0x1]
      %v3609 = vsel %vm3520, 0, %v3608
      %3610 = vst [vmem:[#allocation2 + $0x54] sm:$0x1] %v3609
      %v3611 = vld [vmem:[#allocation2 + $0x60] sm:$0x1]
      %v3612 = vsel %vm3520, 0, %v3611
      %3613 = vst [vmem:[#allocation2 + $0x60] sm:$0x1] %v3612
      %v3614 = vld [vmem:[#allocation2 + $0x6c] sm:$0x1]
      %v3615 = vsel %vm3520, 0, %v3614
      %3616 = vst [vmem:[#allocation2 + $0x6c] sm:$0x1] %v3615
      %vm3617 = vmand %vm3519, %vm3512
      %v3618 = vld [vmem:[#allocation2 + $0x8] sm:$0x1]
      %v3619 = vsel %vm3617, 0, %v3618
      %3620 = vst [vmem:[#allocation2 + $0x8] sm:$0x1] %v3619
      %v3621 = vld [vmem:[#allocation2 + $0x14] sm:$0x1]
      %v3622 = vsel %vm3617, 0, %v3621
      %3623 = vst [vmem:[#allocation2 + $0x14] sm:$0x1] %v3622
      %v3624 = vld [vmem:[#allocation2 + $0x20] sm:$0x1]
      %v3625 = vsel %vm3617, 0, %v3624
      %3626 = vst [vmem:[#allocation2 + $0x20] sm:$0x1] %v3625
      %v3627 = vld [vmem:[#allocation2 + $0x2c] sm:$0x1]
      %v3628 = vsel %vm3617, 0, %v3627
      %3629 = vst [vmem:[#allocation2 + $0x2c] sm:$0x1] %v3628
      %v3630 = vld [vmem:[#allocation2 + $0x38] sm:$0x1]
      %v3631 = vsel %vm3617, 0, %v3630
      %3632 = vst [vmem:[#allocation2 + $0x38] sm:$0x1] %v3631
      %v3633 = vld [vmem:[#allocation2 + $0x44] sm:$0x1]
      %v3634 = vsel %vm3617, 0, %v3633
      %3635 = vst [vmem:[#allocation2 + $0x44] sm:$0x1] %v3634
      %v3636 = vld [vmem:[#allocation2 + $0x50] sm:$0x1]
      %v3637 = vsel %vm3617, 0, %v3636
      %3638 = vst [vmem:[#allocation2 + $0x50] sm:$0x1] %v3637
      %v3639 = vld [vmem:[#allocation2 + $0x5c] sm:$0x1]
      %v3640 = vsel %vm3617, 0, %v3639
      %3641 = vst [vmem:[#allocation2 + $0x5c] sm:$0x1] %v3640
      %v3642 = vld [vmem:[#allocation2 + $0x68] sm:$0x1]
      %v3643 = vsel %vm3617, 0, %v3642
      %3644 = vst [vmem:[#allocation2 + $0x68] sm:$0x1] %v3643
      %v3645 = vld [vmem:[#allocation2 + $0x74] sm:$0x1]
      %v3646 = vsel %vm3617, 0, %v3645
      %3647 = vst [vmem:[#allocation2 + $0x74] sm:$0x1] %v3646
      %p3648 = scmp.eq.s32.totalorder %s21, 0
      // Predicated region
      $region41: #{tpu_custom_call.1} parent=39 // pred_check
        %p3649 = pneg %p3648
      $region42: #{tpu_custom_call.1} parent=39 // pred_check_branch
        %3651 = sbr.rel (%p3649) target = $region44
      $region43: #{tpu_custom_call.1} parent=39 // pred_region
        %3652 = vst.msk [vmem:[#allocation2] sm:$0xf] %vm3517, 0
        %3653 = vst.msk [vmem:[#allocation2 + $0x4] sm:$0xf] %vm3517, 0
        %vm3654 = vcmask 24576
        %3655 = vst.msk [vmem:[#allocation2 + $0x8] sm:$0x1] %vm3654, 0
      $region44: #{tpu_custom_call.1} parent=39 // pred_fallthru
        _
      %p3656 = scmp.eq.s32.totalorder %s21, 1
      // Predicated region
      $region45: #{tpu_custom_call.1} parent=39 // pred_check
        %p3657 = pneg %p3656
      $region46: #{tpu_custom_call.1} parent=39 // pred_check_branch
        %3659 = sbr.rel (%p3657) target = $region48
      $region47: #{tpu_custom_call.1} parent=39 // pred_region
        %s3660 = scalar_lea.vmem [#allocation2], 108
        %3661 = vst.msk [vmem:[%s3660] sm:$0xf] %vm3517, 0
        %3662 = vst.msk [vmem:[%s3660 + $0x4] sm:$0xf] %vm3517, 0
        %vm3663 = vcmask 24576
        %3664 = vst.msk [vmem:[%s3660 + $0x8] sm:$0x1] %vm3663, 0
      $region48: #{tpu_custom_call.1} parent=39 // pred_fallthru
        _
      %v3665 = vld [vmem:[#allocation2] sm:$0xf]
      %v3666 = vld [vmem:[#allocation2 + $0x4] sm:$0xf]
      %v3667 = vld [vmem:[#allocation2 + $0xc] sm:$0xf]
      %v3668 = vld [vmem:[#allocation2 + $0x10] sm:$0xf]
      %v3669 = vld [vmem:[#allocation2 + $0x18] sm:$0xf]
      %v3670 = vld [vmem:[#allocation2 + $0x1c] sm:$0xf]
      %v3671 = vld [vmem:[#allocation2 + $0x24] sm:$0xf]
      %v3672 = vld [vmem:[#allocation2 + $0x28] sm:$0xf]
      %v3673 = vld [vmem:[#allocation2 + $0x30] sm:$0xf]
      %v3674 = vld [vmem:[#allocation2 + $0x34] sm:$0xf]
      %v3675 = vld [vmem:[#allocation2 + $0x3c] sm:$0xf]
      %v3676 = vld [vmem:[#allocation2 + $0x40] sm:$0xf]
      %v3677 = vld [vmem:[#allocation2 + $0x48] sm:$0xf]
      %v3678 = vld [vmem:[#allocation2 + $0x4c] sm:$0xf]
      %v3679 = vld [vmem:[#allocation2 + $0x54] sm:$0xf]
      %v3680 = vld [vmem:[#allocation2 + $0x58] sm:$0xf]
      %v3697 = vunpack.c.l.b16 %v3665
      %v3698 = vunpack.c.l.b16 %v3666
      %v3699 = vunpack.c.l.b16 %v3667
      %v3700 = vunpack.c.l.b16 %v3668
      %v3701 = vunpack.c.l.b16 %v3669
      %v3702 = vunpack.c.l.b16 %v3670
      %v3703 = vunpack.c.l.b16 %v3671
      %v3704 = vunpack.c.l.b16 %v3672
      %v3705 = vunpack.c.l.b16 %v3673
      %v3706 = vunpack.c.l.b16 %v3674
      %v3707 = vunpack.c.l.b16 %v3675
      %v3708 = vunpack.c.l.b16 %v3676
      %v3709 = vunpack.c.l.b16 %v3677
      %v3710 = vunpack.c.l.b16 %v3678
      %v3711 = vunpack.c.l.b16 %v3679
      %v3712 = vunpack.c.l.b16 %v3680
      %v3713 = vpack.c.b16 %v3698, %v3697
      %v3714 = vpack.c.b16 %v3700, %v3699
      %v3715 = vpack.c.b16 %v3702, %v3701
      %v3716 = vpack.c.b16 %v3704, %v3703
      %v3717 = vpack.c.b16 %v3706, %v3705
      %v3718 = vpack.c.b16 %v3708, %v3707
      %v3719 = vpack.c.b16 %v3710, %v3709
      %v3720 = vpack.c.b16 %v3712, %v3711
      %3729 = vst.msk [vmem:[#allocation3] sm:$0xff] %vm414, %v3713
      %3730 = vst.msk [vmem:[#allocation3 + $0x18] sm:$0xff] %vm414, %v3714
      %3731 = vst.msk [vmem:[#allocation3 + $0x30] sm:$0xff] %vm414, %v3715
      %3732 = vst.msk [vmem:[#allocation3 + $0x48] sm:$0xff] %vm414, %v3716
      %3733 = vst.msk [vmem:[#allocation3 + $0x60] sm:$0xff] %vm414, %v3717
      %3734 = vst.msk [vmem:[#allocation3 + $0x78] sm:$0xff] %vm414, %v3718
      %3735 = vst.msk [vmem:[#allocation3 + $0x90] sm:$0xff] %vm414, %v3719
      %3736 = vst.msk [vmem:[#allocation3 + $0xa8] sm:$0xff] %vm414, %v3720
      %v3737 = vld [vmem:[#allocation2] sm:$0xf]
      %v3738 = vld [vmem:[#allocation2 + $0x4] sm:$0xf]
      %v3739 = vld [vmem:[#allocation2 + $0x8] sm:$0x1]
      %v3740 = vld [vmem:[#allocation2 + $0xc] sm:$0xf]
      %v3741 = vld [vmem:[#allocation2 + $0x10] sm:$0xf]
      %v3742 = vld [vmem:[#allocation2 + $0x14] sm:$0x1]
      %v3743 = vld [vmem:[#allocation2 + $0x18] sm:$0xf]
      %v3744 = vld [vmem:[#allocation2 + $0x1c] sm:$0xf]
      %v3745 = vld [vmem:[#allocation2 + $0x20] sm:$0x1]
      %v3746 = vld [vmem:[#allocation2 + $0x24] sm:$0xf]
      %v3747 = vld [vmem:[#allocation2 + $0x28] sm:$0xf]
      %v3748 = vld [vmem:[#allocation2 + $0x2c] sm:$0x1]
      %v3749 = vld [vmem:[#allocation2 + $0x30] sm:$0xf]
      %v3750 = vld [vmem:[#allocation2 + $0x34] sm:$0xf]
      %v3751 = vld [vmem:[#allocation2 + $0x38] sm:$0x1]
      %v3752 = vld [vmem:[#allocation2 + $0x3c] sm:$0xf]
      %v3753 = vld [vmem:[#allocation2 + $0x40] sm:$0xf]
      %v3754 = vld [vmem:[#allocation2 + $0x44] sm:$0x1]
      %v3755 = vld [vmem:[#allocation2 + $0x48] sm:$0xf]
      %v3756 = vld [vmem:[#allocation2 + $0x4c] sm:$0xf]
      %v3757 = vld [vmem:[#allocation2 + $0x50] sm:$0x1]
      %v3758 = vld [vmem:[#allocation2 + $0x54] sm:$0xf]
      %v3759 = vld [vmem:[#allocation2 + $0x58] sm:$0xf]
      %v3760 = vld [vmem:[#allocation2 + $0x5c] sm:$0x1]
      %v3785 = vunpack.c.l.b16 %v3737
      %v3786 = vunpack.c.l.b16 %v3738
      %v3787 = vunpack.c.l.b16 %v3739
      %v3788 = vunpack.c.l.b16 %v3740
      %v3789 = vunpack.c.l.b16 %v3741
      %v3790 = vunpack.c.l.b16 %v3742
      %v3791 = vunpack.c.l.b16 %v3743
      %v3792 = vunpack.c.l.b16 %v3744
      %v3793 = vunpack.c.l.b16 %v3745
      %v3794 = vunpack.c.l.b16 %v3746
      %v3795 = vunpack.c.l.b16 %v3747
      %v3796 = vunpack.c.l.b16 %v3748
      %v3797 = vunpack.c.l.b16 %v3749
      %v3798 = vunpack.c.l.b16 %v3750
      %v3799 = vunpack.c.l.b16 %v3751
      %v3800 = vunpack.c.l.b16 %v3752
      %v3801 = vunpack.c.l.b16 %v3753
      %v3802 = vunpack.c.l.b16 %v3754
      %v3803 = vunpack.c.l.b16 %v3755
      %v3804 = vunpack.c.l.b16 %v3756
      %v3805 = vunpack.c.l.b16 %v3757
      %v3806 = vunpack.c.l.b16 %v3758
      %v3807 = vunpack.c.l.b16 %v3759
      %v3808 = vunpack.c.l.b16 %v3760
      %v3809 = vpack.c.b16 %v3786, %v3785
      %v3810 = vpack.c.b16 %v3787, %v3787
      %v3811 = vpack.c.b16 %v3789, %v3788
      %v3812 = vpack.c.b16 %v3790, %v3790
      %v3813 = vpack.c.b16 %v3792, %v3791
      %v3814 = vpack.c.b16 %v3793, %v3793
      %v3815 = vpack.c.b16 %v3795, %v3794
      %v3816 = vpack.c.b16 %v3796, %v3796
      %v3817 = vpack.c.b16 %v3798, %v3797
      %v3818 = vpack.c.b16 %v3799, %v3799
      %v3819 = vpack.c.b16 %v3801, %v3800
      %v3820 = vpack.c.b16 %v3802, %v3802
      %v3821 = vpack.c.b16 %v3804, %v3803
      %v3822 = vpack.c.b16 %v3805, %v3805
      %v3823 = vpack.c.b16 %v3807, %v3806
      %v3824 = vpack.c.b16 %v3808, %v3808
      %v3826 = vshrl.u32 %v3809, 16
      %v3828 = vshll.u32 %v3809, 16
      %v3830 = vrot.slane %v3828, 1
      %v3831 = vor.u32 %v3826, %v3830
      %v3833 = vshll.u32 %v3810, 16
      %v3835 = vrot.slane %v3833, 1
      %v3836 = vsel %vm535, %v3831, %v3835
      %v3838 = vshrl.u32 %v3811, 16
      %v3840 = vshll.u32 %v3811, 16
      %v3842 = vrot.slane %v3840, 1
      %v3843 = vor.u32 %v3838, %v3842
      %v3845 = vshll.u32 %v3812, 16
      %v3847 = vrot.slane %v3845, 1
      %v3848 = vsel %vm535, %v3843, %v3847
      %v3850 = vshrl.u32 %v3813, 16
      %v3852 = vshll.u32 %v3813, 16
      %v3854 = vrot.slane %v3852, 1
      %v3855 = vor.u32 %v3850, %v3854
      %v3857 = vshll.u32 %v3814, 16
      %v3859 = vrot.slane %v3857, 1
      %v3860 = vsel %vm535, %v3855, %v3859
      %v3862 = vshrl.u32 %v3815, 16
      %v3864 = vshll.u32 %v3815, 16
      %v3866 = vrot.slane %v3864, 1
      %v3867 = vor.u32 %v3862, %v3866
      %v3869 = vshll.u32 %v3816, 16
      %v3871 = vrot.slane %v3869, 1
      %v3872 = vsel %vm535, %v3867, %v3871
      %v3874 = vshrl.u32 %v3817, 16
      %v3876 = vshll.u32 %v3817, 16
      %v3878 = vrot.slane %v3876, 1
      %v3879 = vor.u32 %v3874, %v3878
      %v3881 = vshll.u32 %v3818, 16
      %v3883 = vrot.slane %v3881, 1
      %v3884 = vsel %vm535, %v3879, %v3883
      %v3886 = vshrl.u32 %v3819, 16
      %v3888 = vshll.u32 %v3819, 16
      %v3890 = vrot.slane %v3888, 1
      %v3891 = vor.u32 %v3886, %v3890
      %v3893 = vshll.u32 %v3820, 16
      %v3895 = vrot.slane %v3893, 1
      %v3896 = vsel %vm535, %v3891, %v3895
      %v3898 = vshrl.u32 %v3821, 16
      %v3900 = vshll.u32 %v3821, 16
      %v3902 = vrot.slane %v3900, 1
      %v3903 = vor.u32 %v3898, %v3902
      %v3905 = vshll.u32 %v3822, 16
      %v3907 = vrot.slane %v3905, 1
      %v3908 = vsel %vm535, %v3903, %v3907
      %v3910 = vshrl.u32 %v3823, 16
      %v3912 = vshll.u32 %v3823, 16
      %v3914 = vrot.slane %v3912, 1
      %v3915 = vor.u32 %v3910, %v3914
      %v3917 = vshll.u32 %v3824, 16
      %v3919 = vrot.slane %v3917, 1
      %v3920 = vsel %vm535, %v3915, %v3919
      %3929 = vst.msk [vmem:[#allocation3 + $0x8] sm:$0xff] %vm414, %v3836
      %3930 = vst.msk [vmem:[#allocation3 + $0x20] sm:$0xff] %vm414, %v3848
      %3931 = vst.msk [vmem:[#allocation3 + $0x38] sm:$0xff] %vm414, %v3860
      %3932 = vst.msk [vmem:[#allocation3 + $0x50] sm:$0xff] %vm414, %v3872
      %3933 = vst.msk [vmem:[#allocation3 + $0x68] sm:$0xff] %vm414, %v3884
      %3934 = vst.msk [vmem:[#allocation3 + $0x80] sm:$0xff] %vm414, %v3896
      %3935 = vst.msk [vmem:[#allocation3 + $0x98] sm:$0xff] %vm414, %v3908
      %3936 = vst.msk [vmem:[#allocation3 + $0xb0] sm:$0xff] %vm414, %v3920
      %v3937 = vld [vmem:[#allocation2] sm:$0xe]
      %v3938 = vld [vmem:[#allocation2 + $0x4] sm:$0xf]
      %v3939 = vld [vmem:[#allocation2 + $0x8] sm:$0x1]
      %v3940 = vld [vmem:[#allocation2 + $0xc] sm:$0xe]
      %v3941 = vld [vmem:[#allocation2 + $0x10] sm:$0xf]
      %v3942 = vld [vmem:[#allocation2 + $0x14] sm:$0x1]
      %v3943 = vld [vmem:[#allocation2 + $0x18] sm:$0xe]
      %v3944 = vld [vmem:[#allocation2 + $0x1c] sm:$0xf]
      %v3945 = vld [vmem:[#allocation2 + $0x20] sm:$0x1]
      %v3946 = vld [vmem:[#allocation2 + $0x24] sm:$0xe]
      %v3947 = vld [vmem:[#allocation2 + $0x28] sm:$0xf]
      %v3948 = vld [vmem:[#allocation2 + $0x2c] sm:$0x1]
      %v3949 = vld [vmem:[#allocation2 + $0x30] sm:$0xe]
      %v3950 = vld [vmem:[#allocation2 + $0x34] sm:$0xf]
      %v3951 = vld [vmem:[#allocation2 + $0x38] sm:$0x1]
      %v3952 = vld [vmem:[#allocation2 + $0x3c] sm:$0xe]
      %v3953 = vld [vmem:[#allocation2 + $0x40] sm:$0xf]
      %v3954 = vld [vmem:[#allocation2 + $0x44] sm:$0x1]
      %v3955 = vld [vmem:[#allocation2 + $0x48] sm:$0xe]
      %v3956 = vld [vmem:[#allocation2 + $0x4c] sm:$0xf]
      %v3957 = vld [vmem:[#allocation2 + $0x50] sm:$0x1]
      %v3958 = vld [vmem:[#allocation2 + $0x54] sm:$0xe]
      %v3959 = vld [vmem:[#allocation2 + $0x58] sm:$0xf]
      %v3960 = vld [vmem:[#allocation2 + $0x5c] sm:$0x1]
      %v3985 = vunpack.c.l.b16 %v3937
      %v3986 = vunpack.c.l.b16 %v3938
      %v3987 = vunpack.c.l.b16 %v3939
      %v3988 = vunpack.c.l.b16 %v3940
      %v3989 = vunpack.c.l.b16 %v3941
      %v3990 = vunpack.c.l.b16 %v3942
      %v3991 = vunpack.c.l.b16 %v3943
      %v3992 = vunpack.c.l.b16 %v3944
      %v3993 = vunpack.c.l.b16 %v3945
      %v3994 = vunpack.c.l.b16 %v3946
      %v3995 = vunpack.c.l.b16 %v3947
      %v3996 = vunpack.c.l.b16 %v3948
      %v3997 = vunpack.c.l.b16 %v3949
      %v3998 = vunpack.c.l.b16 %v3950
      %v3999 = vunpack.c.l.b16 %v3951
      %v4000 = vunpack.c.l.b16 %v3952
      %v4001 = vunpack.c.l.b16 %v3953
      %v4002 = vunpack.c.l.b16 %v3954
      %v4003 = vunpack.c.l.b16 %v3955
      %v4004 = vunpack.c.l.b16 %v3956
      %v4005 = vunpack.c.l.b16 %v3957
      %v4006 = vunpack.c.l.b16 %v3958
      %v4007 = vunpack.c.l.b16 %v3959
      %v4008 = vunpack.c.l.b16 %v3960
      %v4009 = vpack.c.b16 %v3986, %v3985
      %v4010 = vpack.c.b16 %v3987, %v3987
      %v4011 = vpack.c.b16 %v3989, %v3988
      %v4012 = vpack.c.b16 %v3990, %v3990
      %v4013 = vpack.c.b16 %v3992, %v3991
      %v4014 = vpack.c.b16 %v3993, %v3993
      %v4015 = vpack.c.b16 %v3995, %v3994
      %v4016 = vpack.c.b16 %v3996, %v3996
      %v4017 = vpack.c.b16 %v3998, %v3997
      %v4018 = vpack.c.b16 %v3999, %v3999
      %v4019 = vpack.c.b16 %v4001, %v4000
      %v4020 = vpack.c.b16 %v4002, %v4002
      %v4021 = vpack.c.b16 %v4004, %v4003
      %v4022 = vpack.c.b16 %v4005, %v4005
      %v4023 = vpack.c.b16 %v4007, %v4006
      %v4024 = vpack.c.b16 %v4008, %v4008
      %v4025 = vrot.slane %v4009, 1
      %v4026 = vrot.slane %v4010, 1
      %v4027 = vsel %vm786, %v4025, %v4026
      %v4028 = vrot.slane %v4011, 1
      %v4029 = vrot.slane %v4012, 1
      %v4030 = vsel %vm786, %v4028, %v4029
      %v4031 = vrot.slane %v4013, 1
      %v4032 = vrot.slane %v4014, 1
      %v4033 = vsel %vm786, %v4031, %v4032
      %v4034 = vrot.slane %v4015, 1
      %v4035 = vrot.slane %v4016, 1
      %v4036 = vsel %vm786, %v4034, %v4035
      %v4037 = vrot.slane %v4017, 1
      %v4038 = vrot.slane %v4018, 1
      %v4039 = vsel %vm786, %v4037, %v4038
      %v4040 = vrot.slane %v4019, 1
      %v4041 = vrot.slane %v4020, 1
      %v4042 = vsel %vm786, %v4040, %v4041
      %v4043 = vrot.slane %v4021, 1
      %v4044 = vrot.slane %v4022, 1
      %v4045 = vsel %vm786, %v4043, %v4044
      %v4046 = vrot.slane %v4023, 1
      %v4047 = vrot.slane %v4024, 1
      %v4048 = vsel %vm786, %v4046, %v4047
      %4057 = vst.msk [vmem:[#allocation3 + $0x10] sm:$0xff] %vm414, %v4027
      %4058 = vst.msk [vmem:[#allocation3 + $0x28] sm:$0xff] %vm414, %v4030
      %4059 = vst.msk [vmem:[#allocation3 + $0x40] sm:$0xff] %vm414, %v4033
      %4060 = vst.msk [vmem:[#allocation3 + $0x58] sm:$0xff] %vm414, %v4036
      %4061 = vst.msk [vmem:[#allocation3 + $0x70] sm:$0xff] %vm414, %v4039
      %4062 = vst.msk [vmem:[#allocation3 + $0x88] sm:$0xff] %vm414, %v4042
      %4063 = vst.msk [vmem:[#allocation3 + $0xa0] sm:$0xff] %vm414, %v4045
      %4064 = vst.msk [vmem:[#allocation3 + $0xb8] sm:$0xff] %vm414, %v4048
      %v4065 = vld [vmem:[#allocation3] sm:$0xff]
      %v4066 = vld [vmem:[#allocation3 + $0x8] sm:$0xff]
      %v4067 = vld [vmem:[#allocation3 + $0x10] sm:$0xff]
      %v4068 = vld [vmem:[#allocation3 + $0x18] sm:$0xff]
      %v4069 = vld [vmem:[#allocation3 + $0x20] sm:$0xff]
      %v4070 = vld [vmem:[#allocation3 + $0x28] sm:$0xff]
      %v4071 = vld [vmem:[#allocation3 + $0x30] sm:$0xff]
      %v4072 = vld [vmem:[#allocation3 + $0x38] sm:$0xff]
      %v4073 = vld [vmem:[#allocation3 + $0x40] sm:$0xff]
      %v4074 = vld [vmem:[#allocation3 + $0x48] sm:$0xff]
      %v4075 = vld [vmem:[#allocation3 + $0x50] sm:$0xff]
      %v4076 = vld [vmem:[#allocation3 + $0x58] sm:$0xff]
      %v4077 = vld [vmem:[#allocation3 + $0x60] sm:$0xff]
      %v4078 = vld [vmem:[#allocation3 + $0x68] sm:$0xff]
      %v4079 = vld [vmem:[#allocation3 + $0x70] sm:$0xff]
      %v4080 = vld [vmem:[#allocation3 + $0x78] sm:$0xff]
      %v4081 = vld [vmem:[#allocation3 + $0x80] sm:$0xff]
      %v4082 = vld [vmem:[#allocation3 + $0x88] sm:$0xff]
      %v4083 = vld [vmem:[#allocation3 + $0x90] sm:$0xff]
      %v4084 = vld [vmem:[#allocation3 + $0x98] sm:$0xff]
      %v4085 = vld [vmem:[#allocation3 + $0xa0] sm:$0xff]
      %v4086 = vld [vmem:[#allocation3 + $0xa8] sm:$0xff]
      %v4087 = vld [vmem:[#allocation3 + $0xb0] sm:$0xff]
      %v4088 = vld [vmem:[#allocation3 + $0xb8] sm:$0xff]
      %v4089 = vld [vmem:[%s3] sm:$0xf]
      %v4090 = vld [vmem:[%s3 + $0x4] sm:$0xf]
      %v4091 = vld [vmem:[%s3 + $0x8] sm:$0xf]
      %v4092 = vld [vmem:[%s3 + $0xc] sm:$0xf]
      %v4093 = vld [vmem:[%s3 + $0x10] sm:$0xf]
      %v4094 = vld [vmem:[%s3 + $0x14] sm:$0xf]
      %v4095 = vld [vmem:[%s3 + $0x18] sm:$0xf]
      %v4096 = vld [vmem:[%s3 + $0x1c] sm:$0xf]
      %v4097 = vld [vmem:[%s3 + $0x20] sm:$0xf]
      %v4098 = vld [vmem:[%s3 + $0x24] sm:$0xf]
      %v4099 = vld [vmem:[%s3 + $0x28] sm:$0xf]
      %v4100 = vld [vmem:[%s3 + $0x2c] sm:$0xf]
      %v4101 = vld [vmem:[%s3 + $0x30] sm:$0xf]
      %v4102 = vld [vmem:[%s3 + $0x34] sm:$0xf]
      %v4103 = vld [vmem:[%s3 + $0x38] sm:$0xf]
      %v4104 = vld [vmem:[%s3 + $0x3c] sm:$0xf]
      %v4105 = vld [vmem:[%s3 + $0x40] sm:$0xf]
      %v4106 = vld [vmem:[%s3 + $0x44] sm:$0xf]
      %v4107 = vld [vmem:[%s3 + $0x48] sm:$0xf]
      %v4108 = vld [vmem:[%s3 + $0x4c] sm:$0xf]
      %v4109 = vld [vmem:[%s3 + $0x50] sm:$0xf]
      %v4110 = vld [vmem:[%s3 + $0x54] sm:$0xf]
      %v4111 = vld [vmem:[%s3 + $0x58] sm:$0xf]
      %v4112 = vld [vmem:[%s3 + $0x5c] sm:$0xf]
      %v4113 = vld [vmem:[%s3 + $0x60] sm:$0xf]
      %v4114 = vld [vmem:[%s3 + $0x64] sm:$0xf]
      %v4115 = vld [vmem:[%s3 + $0x68] sm:$0xf]
      %v4116 = vld [vmem:[%s3 + $0x6c] sm:$0xf]
      %v4117 = vld [vmem:[%s3 + $0x70] sm:$0xf]
      %v4118 = vld [vmem:[%s3 + $0x74] sm:$0xf]
      %v4119 = vld [vmem:[%s3 + $0x78] sm:$0xf]
      %v4120 = vld [vmem:[%s3 + $0x7c] sm:$0xf]
      %v4121 = vld [vmem:[%s3 + $0x80] sm:$0xf]
      %v4122 = vld [vmem:[%s3 + $0x84] sm:$0xf]
      %v4123 = vld [vmem:[%s3 + $0x88] sm:$0xf]
      %v4124 = vld [vmem:[%s3 + $0x8c] sm:$0xf]
      %v4125 = vld [vmem:[%s3 + $0x90] sm:$0xf]
      %v4126 = vld [vmem:[%s3 + $0x94] sm:$0xf]
      %v4127 = vld [vmem:[%s3 + $0x98] sm:$0xf]
      %v4128 = vld [vmem:[%s3 + $0x9c] sm:$0xf]
      %v4129 = vld [vmem:[%s3 + $0xa0] sm:$0xf]
      %v4130 = vld [vmem:[%s3 + $0xa4] sm:$0xf]
      %v4131 = vld [vmem:[%s3 + $0xa8] sm:$0xf]
      %v4132 = vld [vmem:[%s3 + $0xac] sm:$0xf]
      %v4133 = vld [vmem:[%s3 + $0xb0] sm:$0xf]
      %v4134 = vld [vmem:[%s3 + $0xb4] sm:$0xf]
      %v4135 = vld [vmem:[%s3 + $0xb8] sm:$0xf]
      %v4136 = vld [vmem:[%s3 + $0xbc] sm:$0xf]
      %s4137 = scalar_lea.vmem [#allocation2], 12
      %v4138 = vld [vmem:[%s4137] sm:$0xf]
      %v4139 = vld [vmem:[%s4137 + $0x4] sm:$0xf]
      %v4140 = vld [vmem:[%s4137 + $0xc] sm:$0xf]
      %v4141 = vld [vmem:[%s4137 + $0x10] sm:$0xf]
      %v4142 = vld [vmem:[%s4137 + $0x18] sm:$0xf]
      %v4143 = vld [vmem:[%s4137 + $0x1c] sm:$0xf]
      %v4144 = vld [vmem:[%s4137 + $0x24] sm:$0xf]
      %v4145 = vld [vmem:[%s4137 + $0x28] sm:$0xf]
      %v4146 = vld [vmem:[%s4137 + $0x30] sm:$0xf]
      %v4147 = vld [vmem:[%s4137 + $0x34] sm:$0xf]
      %v4148 = vld [vmem:[%s4137 + $0x3c] sm:$0xf]
      %v4149 = vld [vmem:[%s4137 + $0x40] sm:$0xf]
      %v4150 = vld [vmem:[%s4137 + $0x48] sm:$0xf]
      %v4151 = vld [vmem:[%s4137 + $0x4c] sm:$0xf]
      %v4152 = vld [vmem:[%s4137 + $0x54] sm:$0xf]
      %v4153 = vld [vmem:[%s4137 + $0x58] sm:$0xf]
      %v4170 = vunpack.c.l.b16 %v4138
      %v4171 = vunpack.c.l.b16 %v4139
      %v4172 = vunpack.c.l.b16 %v4140
      %v4173 = vunpack.c.l.b16 %v4141
      %v4174 = vunpack.c.l.b16 %v4142
      %v4175 = vunpack.c.l.b16 %v4143
      %v4176 = vunpack.c.l.b16 %v4144
      %v4177 = vunpack.c.l.b16 %v4145
      %v4178 = vunpack.c.l.b16 %v4146
      %v4179 = vunpack.c.l.b16 %v4147
      %v4180 = vunpack.c.l.b16 %v4148
      %v4181 = vunpack.c.l.b16 %v4149
      %v4182 = vunpack.c.l.b16 %v4150
      %v4183 = vunpack.c.l.b16 %v4151
      %v4184 = vunpack.c.l.b16 %v4152
      %v4185 = vunpack.c.l.b16 %v4153
      %v4186 = vpack.c.b16 %v4171, %v4170
      %v4187 = vpack.c.b16 %v4173, %v4172
      %v4188 = vpack.c.b16 %v4175, %v4174
      %v4189 = vpack.c.b16 %v4177, %v4176
      %v4190 = vpack.c.b16 %v4179, %v4178
      %v4191 = vpack.c.b16 %v4181, %v4180
      %v4192 = vpack.c.b16 %v4183, %v4182
      %v4193 = vpack.c.b16 %v4185, %v4184
      %4202 = vst.msk [vmem:[#allocation3] sm:$0xff] %vm414, %v4186
      %4203 = vst.msk [vmem:[#allocation3 + $0x18] sm:$0xff] %vm414, %v4187
      %4204 = vst.msk [vmem:[#allocation3 + $0x30] sm:$0xff] %vm414, %v4188
      %4205 = vst.msk [vmem:[#allocation3 + $0x48] sm:$0xff] %vm414, %v4189
      %4206 = vst.msk [vmem:[#allocation3 + $0x60] sm:$0xff] %vm414, %v4190
      %4207 = vst.msk [vmem:[#allocation3 + $0x78] sm:$0xff] %vm414, %v4191
      %4208 = vst.msk [vmem:[#allocation3 + $0x90] sm:$0xff] %vm414, %v4192
      %4209 = vst.msk [vmem:[#allocation3 + $0xa8] sm:$0xff] %vm414, %v4193
      %v4210 = vld [vmem:[%s4137] sm:$0xf]
      %v4211 = vld [vmem:[%s4137 + $0x4] sm:$0xf]
      %v4212 = vld [vmem:[%s4137 + $0x8] sm:$0x1]
      %v4213 = vld [vmem:[%s4137 + $0xc] sm:$0xf]
      %v4214 = vld [vmem:[%s4137 + $0x10] sm:$0xf]
      %v4215 = vld [vmem:[%s4137 + $0x14] sm:$0x1]
      %v4216 = vld [vmem:[%s4137 + $0x18] sm:$0xf]
      %v4217 = vld [vmem:[%s4137 + $0x1c] sm:$0xf]
      %v4218 = vld [vmem:[%s4137 + $0x20] sm:$0x1]
      %v4219 = vld [vmem:[%s4137 + $0x24] sm:$0xf]
      %v4220 = vld [vmem:[%s4137 + $0x28] sm:$0xf]
      %v4221 = vld [vmem:[%s4137 + $0x2c] sm:$0x1]
      %v4222 = vld [vmem:[%s4137 + $0x30] sm:$0xf]
      %v4223 = vld [vmem:[%s4137 + $0x34] sm:$0xf]
      %v4224 = vld [vmem:[%s4137 + $0x38] sm:$0x1]
      %v4225 = vld [vmem:[%s4137 + $0x3c] sm:$0xf]
      %v4226 = vld [vmem:[%s4137 + $0x40] sm:$0xf]
      %v4227 = vld [vmem:[%s4137 + $0x44] sm:$0x1]
      %v4228 = vld [vmem:[%s4137 + $0x48] sm:$0xf]
      %v4229 = vld [vmem:[%s4137 + $0x4c] sm:$0xf]
      %v4230 = vld [vmem:[%s4137 + $0x50] sm:$0x1]
      %v4231 = vld [vmem:[%s4137 + $0x54] sm:$0xf]
      %v4232 = vld [vmem:[%s4137 + $0x58] sm:$0xf]
      %v4233 = vld [vmem:[%s4137 + $0x5c] sm:$0x1]
      %v4258 = vunpack.c.l.b16 %v4210
      %v4259 = vunpack.c.l.b16 %v4211
      %v4260 = vunpack.c.l.b16 %v4212
      %v4261 = vunpack.c.l.b16 %v4213
      %v4262 = vunpack.c.l.b16 %v4214
      %v4263 = vunpack.c.l.b16 %v4215
      %v4264 = vunpack.c.l.b16 %v4216
      %v4265 = vunpack.c.l.b16 %v4217
      %v4266 = vunpack.c.l.b16 %v4218
      %v4267 = vunpack.c.l.b16 %v4219
      %v4268 = vunpack.c.l.b16 %v4220
      %v4269 = vunpack.c.l.b16 %v4221
      %v4270 = vunpack.c.l.b16 %v4222
      %v4271 = vunpack.c.l.b16 %v4223
      %v4272 = vunpack.c.l.b16 %v4224
      %v4273 = vunpack.c.l.b16 %v4225
      %v4274 = vunpack.c.l.b16 %v4226
      %v4275 = vunpack.c.l.b16 %v4227
      %v4276 = vunpack.c.l.b16 %v4228
      %v4277 = vunpack.c.l.b16 %v4229
      %v4278 = vunpack.c.l.b16 %v4230
      %v4279 = vunpack.c.l.b16 %v4231
      %v4280 = vunpack.c.l.b16 %v4232
      %v4281 = vunpack.c.l.b16 %v4233
      %v4282 = vpack.c.b16 %v4259, %v4258
      %v4283 = vpack.c.b16 %v4260, %v4260
      %v4284 = vpack.c.b16 %v4262, %v4261
      %v4285 = vpack.c.b16 %v4263, %v4263
      %v4286 = vpack.c.b16 %v4265, %v4264
      %v4287 = vpack.c.b16 %v4266, %v4266
      %v4288 = vpack.c.b16 %v4268, %v4267
      %v4289 = vpack.c.b16 %v4269, %v4269
      %v4290 = vpack.c.b16 %v4271, %v4270
      %v4291 = vpack.c.b16 %v4272, %v4272
      %v4292 = vpack.c.b16 %v4274, %v4273
      %v4293 = vpack.c.b16 %v4275, %v4275
      %v4294 = vpack.c.b16 %v4277, %v4276
      %v4295 = vpack.c.b16 %v4278, %v4278
      %v4296 = vpack.c.b16 %v4280, %v4279
      %v4297 = vpack.c.b16 %v4281, %v4281
      %v4299 = vshrl.u32 %v4282, 16
      %v4301 = vshll.u32 %v4282, 16
      %v4303 = vrot.slane %v4301, 1
      %v4304 = vor.u32 %v4299, %v4303
      %v4306 = vshll.u32 %v4283, 16
      %v4308 = vrot.slane %v4306, 1
      %v4309 = vsel %vm535, %v4304, %v4308
      %v4311 = vshrl.u32 %v4284, 16
      %v4313 = vshll.u32 %v4284, 16
      %v4315 = vrot.slane %v4313, 1
      %v4316 = vor.u32 %v4311, %v4315
      %v4318 = vshll.u32 %v4285, 16
      %v4320 = vrot.slane %v4318, 1
      %v4321 = vsel %vm535, %v4316, %v4320
      %v4323 = vshrl.u32 %v4286, 16
      %v4325 = vshll.u32 %v4286, 16
      %v4327 = vrot.slane %v4325, 1
      %v4328 = vor.u32 %v4323, %v4327
      %v4330 = vshll.u32 %v4287, 16
      %v4332 = vrot.slane %v4330, 1
      %v4333 = vsel %vm535, %v4328, %v4332
      %v4335 = vshrl.u32 %v4288, 16
      %v4337 = vshll.u32 %v4288, 16
      %v4339 = vrot.slane %v4337, 1
      %v4340 = vor.u32 %v4335, %v4339
      %v4342 = vshll.u32 %v4289, 16
      %v4344 = vrot.slane %v4342, 1
      %v4345 = vsel %vm535, %v4340, %v4344
      %v4347 = vshrl.u32 %v4290, 16
      %v4349 = vshll.u32 %v4290, 16
      %v4351 = vrot.slane %v4349, 1
      %v4352 = vor.u32 %v4347, %v4351
      %v4354 = vshll.u32 %v4291, 16
      %v4356 = vrot.slane %v4354, 1
      %v4357 = vsel %vm535, %v4352, %v4356
      %v4359 = vshrl.u32 %v4292, 16
      %v4361 = vshll.u32 %v4292, 16
      %v4363 = vrot.slane %v4361, 1
      %v4364 = vor.u32 %v4359, %v4363
      %v4366 = vshll.u32 %v4293, 16
      %v4368 = vrot.slane %v4366, 1
      %v4369 = vsel %vm535, %v4364, %v4368
      %v4371 = vshrl.u32 %v4294, 16
      %v4373 = vshll.u32 %v4294, 16
      %v4375 = vrot.slane %v4373, 1
      %v4376 = vor.u32 %v4371, %v4375
      %v4378 = vshll.u32 %v4295, 16
      %v4380 = vrot.slane %v4378, 1
      %v4381 = vsel %vm535, %v4376, %v4380
      %v4383 = vshrl.u32 %v4296, 16
      %v4385 = vshll.u32 %v4296, 16
      %v4387 = vrot.slane %v4385, 1
      %v4388 = vor.u32 %v4383, %v4387
      %v4390 = vshll.u32 %v4297, 16
      %v4392 = vrot.slane %v4390, 1
      %v4393 = vsel %vm535, %v4388, %v4392
      %4402 = vst.msk [vmem:[#allocation3 + $0x8] sm:$0xff] %vm414, %v4309
      %4403 = vst.msk [vmem:[#allocation3 + $0x20] sm:$0xff] %vm414, %v4321
      %4404 = vst.msk [vmem:[#allocation3 + $0x38] sm:$0xff] %vm414, %v4333
      %4405 = vst.msk [vmem:[#allocation3 + $0x50] sm:$0xff] %vm414, %v4345
      %4406 = vst.msk [vmem:[#allocation3 + $0x68] sm:$0xff] %vm414, %v4357
      %4407 = vst.msk [vmem:[#allocation3 + $0x80] sm:$0xff] %vm414, %v4369
      %4408 = vst.msk [vmem:[#allocation3 + $0x98] sm:$0xff] %vm414, %v4381
      %4409 = vst.msk [vmem:[#allocation3 + $0xb0] sm:$0xff] %vm414, %v4393
      %v4410 = vld [vmem:[%s4137] sm:$0xe]
      %v4411 = vld [vmem:[%s4137 + $0x4] sm:$0xf]
      %v4412 = vld [vmem:[%s4137 + $0x8] sm:$0x1]
      %v4413 = vld [vmem:[%s4137 + $0xc] sm:$0xe]
      %v4414 = vld [vmem:[%s4137 + $0x10] sm:$0xf]
      %v4415 = vld [vmem:[%s4137 + $0x14] sm:$0x1]
      %v4416 = vld [vmem:[%s4137 + $0x18] sm:$0xe]
      %v4417 = vld [vmem:[%s4137 + $0x1c] sm:$0xf]
      %v4418 = vld [vmem:[%s4137 + $0x20] sm:$0x1]
      %v4419 = vld [vmem:[%s4137 + $0x24] sm:$0xe]
      %v4420 = vld [vmem:[%s4137 + $0x28] sm:$0xf]
      %v4421 = vld [vmem:[%s4137 + $0x2c] sm:$0x1]
      %v4422 = vld [vmem:[%s4137 + $0x30] sm:$0xe]
      %v4423 = vld [vmem:[%s4137 + $0x34] sm:$0xf]
      %v4424 = vld [vmem:[%s4137 + $0x38] sm:$0x1]
      %v4425 = vld [vmem:[%s4137 + $0x3c] sm:$0xe]
      %v4426 = vld [vmem:[%s4137 + $0x40] sm:$0xf]
      %v4427 = vld [vmem:[%s4137 + $0x44] sm:$0x1]
      %v4428 = vld [vmem:[%s4137 + $0x48] sm:$0xe]
      %v4429 = vld [vmem:[%s4137 + $0x4c] sm:$0xf]
      %v4430 = vld [vmem:[%s4137 + $0x50] sm:$0x1]
      %v4431 = vld [vmem:[%s4137 + $0x54] sm:$0xe]
      %v4432 = vld [vmem:[%s4137 + $0x58] sm:$0xf]
      %v4433 = vld [vmem:[%s4137 + $0x5c] sm:$0x1]
      %v4458 = vunpack.c.l.b16 %v4410
      %v4459 = vunpack.c.l.b16 %v4411
      %v4460 = vunpack.c.l.b16 %v4412
      %v4461 = vunpack.c.l.b16 %v4413
      %v4462 = vunpack.c.l.b16 %v4414
      %v4463 = vunpack.c.l.b16 %v4415
      %v4464 = vunpack.c.l.b16 %v4416
      %v4465 = vunpack.c.l.b16 %v4417
      %v4466 = vunpack.c.l.b16 %v4418
      %v4467 = vunpack.c.l.b16 %v4419
      %v4468 = vunpack.c.l.b16 %v4420
      %v4469 = vunpack.c.l.b16 %v4421
      %v4470 = vunpack.c.l.b16 %v4422
      %v4471 = vunpack.c.l.b16 %v4423
      %v4472 = vunpack.c.l.b16 %v4424
      %v4473 = vunpack.c.l.b16 %v4425
      %v4474 = vunpack.c.l.b16 %v4426
      %v4475 = vunpack.c.l.b16 %v4427
      %v4476 = vunpack.c.l.b16 %v4428
      %v4477 = vunpack.c.l.b16 %v4429
      %v4478 = vunpack.c.l.b16 %v4430
      %v4479 = vunpack.c.l.b16 %v4431
      %v4480 = vunpack.c.l.b16 %v4432
      %v4481 = vunpack.c.l.b16 %v4433
      %v4482 = vpack.c.b16 %v4459, %v4458
      %v4483 = vpack.c.b16 %v4460, %v4460
      %v4484 = vpack.c.b16 %v4462, %v4461
      %v4485 = vpack.c.b16 %v4463, %v4463
      %v4486 = vpack.c.b16 %v4465, %v4464
      %v4487 = vpack.c.b16 %v4466, %v4466
      %v4488 = vpack.c.b16 %v4468, %v4467
      %v4489 = vpack.c.b16 %v4469, %v4469
      %v4490 = vpack.c.b16 %v4471, %v4470
      %v4491 = vpack.c.b16 %v4472, %v4472
      %v4492 = vpack.c.b16 %v4474, %v4473
      %v4493 = vpack.c.b16 %v4475, %v4475
      %v4494 = vpack.c.b16 %v4477, %v4476
      %v4495 = vpack.c.b16 %v4478, %v4478
      %v4496 = vpack.c.b16 %v4480, %v4479
      %v4497 = vpack.c.b16 %v4481, %v4481
      %v4498 = vrot.slane %v4482, 1
      %v4499 = vrot.slane %v4483, 1
      %v4500 = vsel %vm786, %v4498, %v4499
      %v4501 = vrot.slane %v4484, 1
      %v4502 = vrot.slane %v4485, 1
      %v4503 = vsel %vm786, %v4501, %v4502
      %v4504 = vrot.slane %v4486, 1
      %v4505 = vrot.slane %v4487, 1
      %v4506 = vsel %vm786, %v4504, %v4505
      %v4507 = vrot.slane %v4488, 1
      %v4508 = vrot.slane %v4489, 1
      %v4509 = vsel %vm786, %v4507, %v4508
      %v4510 = vrot.slane %v4490, 1
      %v4511 = vrot.slane %v4491, 1
      %v4512 = vsel %vm786, %v4510, %v4511
      %v4513 = vrot.slane %v4492, 1
      %v4514 = vrot.slane %v4493, 1
      %v4515 = vsel %vm786, %v4513, %v4514
      %v4516 = vrot.slane %v4494, 1
      %v4517 = vrot.slane %v4495, 1
      %v4518 = vsel %vm786, %v4516, %v4517
      %v4519 = vrot.slane %v4496, 1
      %v4520 = vrot.slane %v4497, 1
      %v4521 = vsel %vm786, %v4519, %v4520
      %4530 = vst.msk [vmem:[#allocation3 + $0x10] sm:$0xff] %vm414, %v4500
      %4531 = vst.msk [vmem:[#allocation3 + $0x28] sm:$0xff] %vm414, %v4503
      %4532 = vst.msk [vmem:[#allocation3 + $0x40] sm:$0xff] %vm414, %v4506
      %4533 = vst.msk [vmem:[#allocation3 + $0x58] sm:$0xff] %vm414, %v4509
      %4534 = vst.msk [vmem:[#allocation3 + $0x70] sm:$0xff] %vm414, %v4512
      %4535 = vst.msk [vmem:[#allocation3 + $0x88] sm:$0xff] %vm414, %v4515
      %4536 = vst.msk [vmem:[#allocation3 + $0xa0] sm:$0xff] %vm414, %v4518
      %4537 = vst.msk [vmem:[#allocation3 + $0xb8] sm:$0xff] %vm414, %v4521
      %v4538 = vld [vmem:[#allocation3] sm:$0xff]
      %v4539 = vld [vmem:[#allocation3 + $0x8] sm:$0xff]
      %v4540 = vld [vmem:[#allocation3 + $0x10] sm:$0xff]
      %v4541 = vld [vmem:[#allocation3 + $0x18] sm:$0xff]
      %v4542 = vld [vmem:[#allocation3 + $0x20] sm:$0xff]
      %v4543 = vld [vmem:[#allocation3 + $0x28] sm:$0xff]
      %v4544 = vld [vmem:[#allocation3 + $0x30] sm:$0xff]
      %v4545 = vld [vmem:[#allocation3 + $0x38] sm:$0xff]
      %v4546 = vld [vmem:[#allocation3 + $0x40] sm:$0xff]
      %v4547 = vld [vmem:[#allocation3 + $0x48] sm:$0xff]
      %v4548 = vld [vmem:[#allocation3 + $0x50] sm:$0xff]
      %v4549 = vld [vmem:[#allocation3 + $0x58] sm:$0xff]
      %v4550 = vld [vmem:[#allocation3 + $0x60] sm:$0xff]
      %v4551 = vld [vmem:[#allocation3 + $0x68] sm:$0xff]
      %v4552 = vld [vmem:[#allocation3 + $0x70] sm:$0xff]
      %v4553 = vld [vmem:[#allocation3 + $0x78] sm:$0xff]
      %v4554 = vld [vmem:[#allocation3 + $0x80] sm:$0xff]
      %v4555 = vld [vmem:[#allocation3 + $0x88] sm:$0xff]
      %v4556 = vld [vmem:[#allocation3 + $0x90] sm:$0xff]
      %v4557 = vld [vmem:[#allocation3 + $0x98] sm:$0xff]
      %v4558 = vld [vmem:[#allocation3 + $0xa0] sm:$0xff]
      %v4559 = vld [vmem:[#allocation3 + $0xa8] sm:$0xff]
      %v4560 = vld [vmem:[#allocation3 + $0xb0] sm:$0xff]
      %v4561 = vld [vmem:[#allocation3 + $0xb8] sm:$0xff]
      %v4562 = vld [vmem:[%s3 + $0xc0] sm:$0xf]
      %v4563 = vld [vmem:[%s3 + $0xc4] sm:$0xf]
      %v4564 = vld [vmem:[%s3 + $0xc8] sm:$0xf]
      %v4565 = vld [vmem:[%s3 + $0xcc] sm:$0xf]
      %v4566 = vld [vmem:[%s3 + $0xd0] sm:$0xf]
      %v4567 = vld [vmem:[%s3 + $0xd4] sm:$0xf]
      %v4568 = vld [vmem:[%s3 + $0xd8] sm:$0xf]
      %v4569 = vld [vmem:[%s3 + $0xdc] sm:$0xf]
      %v4570 = vld [vmem:[%s3 + $0xe0] sm:$0xf]
      %v4571 = vld [vmem:[%s3 + $0xe4] sm:$0xf]
      %v4572 = vld [vmem:[%s3 + $0xe8] sm:$0xf]
      %v4573 = vld [vmem:[%s3 + $0xec] sm:$0xf]
      %v4574 = vld [vmem:[%s3 + $0xf0] sm:$0xf]
      %v4575 = vld [vmem:[%s3 + $0xf4] sm:$0xf]
      %v4576 = vld [vmem:[%s3 + $0xf8] sm:$0xf]
      %v4577 = vld [vmem:[%s3 + $0xfc] sm:$0xf]
      %v4578 = vld [vmem:[%s3 + $0x100] sm:$0xf]
      %v4579 = vld [vmem:[%s3 + $0x104] sm:$0xf]
      %v4580 = vld [vmem:[%s3 + $0x108] sm:$0xf]
      %v4581 = vld [vmem:[%s3 + $0x10c] sm:$0xf]
      %v4582 = vld [vmem:[%s3 + $0x110] sm:$0xf]
      %v4583 = vld [vmem:[%s3 + $0x114] sm:$0xf]
      %v4584 = vld [vmem:[%s3 + $0x118] sm:$0xf]
      %v4585 = vld [vmem:[%s3 + $0x11c] sm:$0xf]
      %v4586 = vld [vmem:[%s3 + $0x120] sm:$0xf]
      %v4587 = vld [vmem:[%s3 + $0x124] sm:$0xf]
      %v4588 = vld [vmem:[%s3 + $0x128] sm:$0xf]
      %v4589 = vld [vmem:[%s3 + $0x12c] sm:$0xf]
      %v4590 = vld [vmem:[%s3 + $0x130] sm:$0xf]
      %v4591 = vld [vmem:[%s3 + $0x134] sm:$0xf]
      %v4592 = vld [vmem:[%s3 + $0x138] sm:$0xf]
      %v4593 = vld [vmem:[%s3 + $0x13c] sm:$0xf]
      %v4594 = vld [vmem:[%s3 + $0x140] sm:$0xf]
      %v4595 = vld [vmem:[%s3 + $0x144] sm:$0xf]
      %v4596 = vld [vmem:[%s3 + $0x148] sm:$0xf]
      %v4597 = vld [vmem:[%s3 + $0x14c] sm:$0xf]
      %v4598 = vld [vmem:[%s3 + $0x150] sm:$0xf]
      %v4599 = vld [vmem:[%s3 + $0x154] sm:$0xf]
      %v4600 = vld [vmem:[%s3 + $0x158] sm:$0xf]
      %v4601 = vld [vmem:[%s3 + $0x15c] sm:$0xf]
      %v4602 = vld [vmem:[%s3 + $0x160] sm:$0xf]
      %v4603 = vld [vmem:[%s3 + $0x164] sm:$0xf]
      %v4604 = vld [vmem:[%s3 + $0x168] sm:$0xf]
      %v4605 = vld [vmem:[%s3 + $0x16c] sm:$0xf]
      %v4606 = vld [vmem:[%s3 + $0x170] sm:$0xf]
      %v4607 = vld [vmem:[%s3 + $0x174] sm:$0xf]
      %v4608 = vld [vmem:[%s3 + $0x178] sm:$0xf]
      %v4609 = vld [vmem:[%s3 + $0x17c] sm:$0xf]
      %v4658 = vunpack.c.l.b16 %v4562
      %v4659 = vunpack.c.l.b16 %v4563
      %v4660 = vunpack.c.l.b16 %v4564
      %v4661 = vunpack.c.l.b16 %v4565
      %v4662 = vunpack.c.l.b16 %v4566
      %v4663 = vunpack.c.l.b16 %v4567
      %v4664 = vunpack.c.l.b16 %v4568
      %v4665 = vunpack.c.l.b16 %v4569
      %v4666 = vunpack.c.l.b16 %v4570
      %v4667 = vunpack.c.l.b16 %v4571
      %v4668 = vunpack.c.l.b16 %v4572
      %v4669 = vunpack.c.l.b16 %v4573
      %v4670 = vunpack.c.l.b16 %v4574
      %v4671 = vunpack.c.l.b16 %v4575
      %v4672 = vunpack.c.l.b16 %v4576
      %v4673 = vunpack.c.l.b16 %v4577
      %v4674 = vunpack.c.l.b16 %v4578
      %v4675 = vunpack.c.l.b16 %v4579
      %v4676 = vunpack.c.l.b16 %v4580
      %v4677 = vunpack.c.l.b16 %v4581
      %v4678 = vunpack.c.l.b16 %v4582
      %v4679 = vunpack.c.l.b16 %v4583
      %v4680 = vunpack.c.l.b16 %v4584
      %v4681 = vunpack.c.l.b16 %v4585
      %v4682 = vunpack.c.l.b16 %v4586
      %v4683 = vunpack.c.l.b16 %v4587
      %v4684 = vunpack.c.l.b16 %v4588
      %v4685 = vunpack.c.l.b16 %v4589
      %v4686 = vunpack.c.l.b16 %v4590
      %v4687 = vunpack.c.l.b16 %v4591
      %v4688 = vunpack.c.l.b16 %v4592
      %v4689 = vunpack.c.l.b16 %v4593
      %v4690 = vunpack.c.l.b16 %v4594
      %v4691 = vunpack.c.l.b16 %v4595
      %v4692 = vunpack.c.l.b16 %v4596
      %v4693 = vunpack.c.l.b16 %v4597
      %v4694 = vunpack.c.l.b16 %v4598
      %v4695 = vunpack.c.l.b16 %v4599
      %v4696 = vunpack.c.l.b16 %v4600
      %v4697 = vunpack.c.l.b16 %v4601
      %v4698 = vunpack.c.l.b16 %v4602
      %v4699 = vunpack.c.l.b16 %v4603
      %v4700 = vunpack.c.l.b16 %v4604
      %v4701 = vunpack.c.l.b16 %v4605
      %v4702 = vunpack.c.l.b16 %v4606
      %v4703 = vunpack.c.l.b16 %v4607
      %v4704 = vunpack.c.l.b16 %v4608
      %v4705 = vunpack.c.l.b16 %v4609
      %v4706 = vpack.c.b16 %v4659, %v4658
      %v4707 = vpack.c.b16 %v4661, %v4660
      %v4708 = vpack.c.b16 %v4663, %v4662
      %v4709 = vpack.c.b16 %v4665, %v4664
      %v4710 = vpack.c.b16 %v4667, %v4666
      %v4711 = vpack.c.b16 %v4669, %v4668
      %v4712 = vpack.c.b16 %v4671, %v4670
      %v4713 = vpack.c.b16 %v4673, %v4672
      %v4714 = vpack.c.b16 %v4675, %v4674
      %v4715 = vpack.c.b16 %v4677, %v4676
      %v4716 = vpack.c.b16 %v4679, %v4678
      %v4717 = vpack.c.b16 %v4681, %v4680
      %v4718 = vpack.c.b16 %v4683, %v4682
      %v4719 = vpack.c.b16 %v4685, %v4684
      %v4720 = vpack.c.b16 %v4687, %v4686
      %v4721 = vpack.c.b16 %v4689, %v4688
      %v4722 = vpack.c.b16 %v4691, %v4690
      %v4723 = vpack.c.b16 %v4693, %v4692
      %v4724 = vpack.c.b16 %v4695, %v4694
      %v4725 = vpack.c.b16 %v4697, %v4696
      %v4726 = vpack.c.b16 %v4699, %v4698
      %v4727 = vpack.c.b16 %v4701, %v4700
      %v4728 = vpack.c.b16 %v4703, %v4702
      %v4729 = vpack.c.b16 %v4705, %v4704
      %4754 = vmatprep.subr.bf16.mxu0 0
      %4755 = vmatpush1.bf16.msra.mxu0 %v4706
      %4756 = vmatprep.subr.bf16.mxu0 0
      %4757 = vmatpush1.bf16.msra.mxu0 %v4707
      %4758 = vmatprep.subr.bf16.mxu0 0
      %4759 = vmatpush1.bf16.msra.mxu0 %v4708
      %4760 = vmatprep.subr.bf16.mxu0 0
      %4761 = vmatpush1.bf16.msra.mxu0 %v4709
      %4762 = vmatprep.subr.bf16.mxu0 0
      %4763 = vmatpush1.bf16.msra.mxu0 %v4710
      %4764 = vmatprep.subr.bf16.mxu0 0
      %4765 = vmatpush1.bf16.msra.mxu0 %v4711
      %4766 = vmatprep.subr.bf16.mxu0 0
      %4767 = vmatpush1.bf16.msra.mxu0 %v4712
      %4768 = vmatprep.subr.bf16.mxu0 0
      %4769 = vmatpush1.bf16.msra.mxu0 %v4713
      %4770 = vmatprep.subr.bf16.mxu0 0
      %4771 = vmatpush1.bf16.msra.mxu0 %v4714
      %4772 = vmatprep.subr.bf16.mxu0 0
      %4773 = vmatpush1.bf16.msra.mxu0 %v4715
      %4774 = vmatprep.subr.bf16.mxu0 0
      %4775 = vmatpush1.bf16.msra.mxu0 %v4716
      %4776 = vmatprep.subr.bf16.mxu0 0
      %4777 = vmatpush1.bf16.msra.mxu0 %v4717
      %4778 = vmatprep.subr.bf16.mxu0 0
      %4779 = vmatpush1.bf16.msra.mxu0 %v4718
      %4780 = vmatprep.subr.bf16.mxu0 0
      %4781 = vmatpush1.bf16.msra.mxu0 %v4719
      %4782 = vmatprep.subr.bf16.mxu0 0
      %4783 = vmatpush1.bf16.msra.mxu0 %v4720
      %4784 = vmatprep.subr.bf16.mxu0 0
      %4785 = vmatpush1.bf16.msra.mxu0 %v4721
      %4786 = vmatprep.mubr.bf16.mxu0 %v4539
      %4787 = vmatmul.mubr.bf16.gmra.mrb[0].mxu0 %v4538
      %v4788 = vpop.f32.mrb[0].mxu0
      %v4789 = vadd.f32 0.0, %v4788
      %v4790 = vpop.f32.mrb[0].mxu0
      %v4791 = vpop.f32.mrb[0].mxu0
      %v4792 = vadd.f32 0.0, %v4791
      %v4793 = vpop.f32.mrb[0].mxu0
      %4794 = vmatprep.mubr.bf16.mxu0 %v4542
      %4795 = vmatmul.mubr.bf16.gmra.mrb[0].mxu0 %v4541
      %v4796 = vpop.f32.mrb[0].mxu0
      %v4797 = vadd.f32 0.0, %v4796
      %v4798 = vpop.f32.mrb[0].mxu0
      %v4799 = vpop.f32.mrb[0].mxu0
      %v4800 = vadd.f32 0.0, %v4799
      %v4801 = vpop.f32.mrb[0].mxu0
      %4802 = vmatprep.mubr.bf16.mxu0 %v4545
      %4803 = vmatmul.mubr.bf16.gmra.mrb[0].mxu0 %v4544
      %v4804 = vpop.f32.mrb[0].mxu0
      %v4805 = vadd.f32 0.0, %v4804
      %v4806 = vpop.f32.mrb[0].mxu0
      %v4807 = vpop.f32.mrb[0].mxu0
      %v4808 = vadd.f32 0.0, %v4807
      %v4809 = vpop.f32.mrb[0].mxu0
      %4810 = vmatprep.mubr.bf16.mxu0 %v4548
      %4811 = vmatmul.mubr.bf16.gmra.mrb[0].mxu0 %v4547
      %v4812 = vpop.f32.mrb[0].mxu0
      %v4813 = vadd.f32 0.0, %v4812
      %v4814 = vpop.f32.mrb[0].mxu0
      %v4815 = vpop.f32.mrb[0].mxu0
      %v4816 = vadd.f32 0.0, %v4815
      %v4817 = vpop.f32.mrb[0].mxu0
      %4818 = vmatprep.mubr.bf16.mxu0 %v4551
      %4819 = vmatmul.mubr.bf16.gmra.mrb[0].mxu0 %v4550
      %v4820 = vpop.f32.mrb[0].mxu0
      %v4821 = vadd.f32 0.0, %v4820
      %v4822 = vpop.f32.mrb[0].mxu0
      %v4823 = vpop.f32.mrb[0].mxu0
      %v4824 = vadd.f32 0.0, %v4823
      %v4825 = vpop.f32.mrb[0].mxu0
      %4826 = vmatprep.mubr.bf16.mxu0 %v4554
      %4827 = vmatmul.mubr.bf16.gmra.mrb[0].mxu0 %v4553
      %v4828 = vpop.f32.mrb[0].mxu0
      %v4829 = vadd.f32 0.0, %v4828
      %v4830 = vpop.f32.mrb[0].mxu0
      %v4831 = vpop.f32.mrb[0].mxu0
      %v4832 = vadd.f32 0.0, %v4831
      %v4833 = vpop.f32.mrb[0].mxu0
      %4834 = vmatprep.mubr.bf16.mxu0 %v4557
      %4835 = vmatmul.mubr.bf16.gmra.mrb[0].mxu0 %v4556
      %v4836 = vpop.f32.mrb[0].mxu0
      %v4837 = vadd.f32 0.0, %v4836
      %v4838 = vpop.f32.mrb[0].mxu0
      %v4839 = vpop.f32.mrb[0].mxu0
      %v4840 = vadd.f32 0.0, %v4839
      %v4841 = vpop.f32.mrb[0].mxu0
      %4842 = vmatprep.mubr.bf16.mxu0 %v4560
      %4843 = vmatmul.mubr.bf16.gmra.mrb[0].mxu0 %v4559
      %v4844 = vpop.f32.mrb[0].mxu0
      %v4845 = vadd.f32 0.0, %v4844
      %v4846 = vpop.f32.mrb[0].mxu0
      %v4847 = vpop.f32.mrb[0].mxu0
      %v4848 = vadd.f32 0.0, %v4847
      %v4849 = vpop.f32.mrb[0].mxu0
      %4850 = vdwg.mxu0
      %4851 = vmatprep.subr.bf16.mxu0 0
      %4852 = vmatpush1.bf16.msra.mxu0 %v4722
      %4853 = vmatprep.subr.bf16.mxu0 0
      %4854 = vmatpush1.bf16.msra.mxu0 %v4723
      %4855 = vmatprep.subr.bf16.mxu0 0
      %4856 = vmatpush1.bf16.msra.mxu0 %v4724
      %4857 = vmatprep.subr.bf16.mxu0 0
      %4858 = vmatpush1.bf16.msra.mxu0 %v4725
      %4859 = vmatprep.subr.bf16.mxu0 0
      %4860 = vmatpush1.bf16.msra.mxu0 %v4726
      %4861 = vmatprep.subr.bf16.mxu0 0
      %4862 = vmatpush1.bf16.msra.mxu0 %v4727
      %4863 = vmatprep.subr.bf16.mxu0 0
      %4864 = vmatpush1.bf16.msra.mxu0 %v4728
      %4865 = vmatprep.subr.bf16.mxu0 0
      %4866 = vmatpush1.bf16.msra.mxu0 %v4729
      %4867 = vmatprep.subr.bf16.mxu0 0
      %4868 = vmatpush1.bf16.msra.mxu0 0
      %4869 = vmatprep.subr.bf16.mxu0 0
      %4870 = vmatpush1.bf16.msra.mxu0 0
      %4871 = vmatprep.subr.bf16.mxu0 0
      %4872 = vmatpush1.bf16.msra.mxu0 0
      %4873 = vmatprep.subr.bf16.mxu0 0
      %4874 = vmatpush1.bf16.msra.mxu0 0
      %4875 = vmatprep.subr.bf16.mxu0 0
      %4876 = vmatpush1.bf16.msra.mxu0 0
      %4877 = vmatprep.subr.bf16.mxu0 0
      %4878 = vmatpush1.bf16.msra.mxu0 0
      %4879 = vmatprep.subr.bf16.mxu0 0
      %4880 = vmatpush1.bf16.msra.mxu0 0
      %4881 = vmatprep.subr.bf16.mxu0 0
      %4882 = vmatpush1.bf16.msra.mxu0 0
      %4883 = vmatprep.mubr.bf16.mxu0 0
      %4884 = vmatmul.mubr.bf16.gmra.mrb[0].mxu0 %v4540
      %v4885 = vpop.f32.mrb[0].mxu0
      %v4886 = vadd.f32 %v4789, %v4885
      %v4887 = vpop.f32.mrb[0].mxu0
      %v4888 = vpop.f32.mrb[0].mxu0
      %v4889 = vadd.f32 %v4792, %v4888
      %v4890 = vpop.f32.mrb[0].mxu0
      %4891 = vmatprep.mubr.bf16.mxu0 0
      %4892 = vmatmul.mubr.bf16.gmra.mrb[0].mxu0 %v4543
      %v4893 = vpop.f32.mrb[0].mxu0
      %v4894 = vadd.f32 %v4797, %v4893
      %v4895 = vpop.f32.mrb[0].mxu0
      %v4896 = vpop.f32.mrb[0].mxu0
      %v4897 = vadd.f32 %v4800, %v4896
      %v4898 = vpop.f32.mrb[0].mxu0
      %4899 = vmatprep.mubr.bf16.mxu0 0
      %4900 = vmatmul.mubr.bf16.gmra.mrb[0].mxu0 %v4546
      %v4901 = vpop.f32.mrb[0].mxu0
      %v4902 = vadd.f32 %v4805, %v4901
      %v4903 = vpop.f32.mrb[0].mxu0
      %v4904 = vpop.f32.mrb[0].mxu0
      %v4905 = vadd.f32 %v4808, %v4904
      %v4906 = vpop.f32.mrb[0].mxu0
      %4907 = vmatprep.mubr.bf16.mxu0 0
      %4908 = vmatmul.mubr.bf16.gmra.mrb[0].mxu0 %v4549
      %v4909 = vpop.f32.mrb[0].mxu0
      %v4910 = vadd.f32 %v4813, %v4909
      %v4911 = vpop.f32.mrb[0].mxu0
      %v4912 = vpop.f32.mrb[0].mxu0
      %v4913 = vadd.f32 %v4816, %v4912
      %v4914 = vpop.f32.mrb[0].mxu0
      %4915 = vmatprep.mubr.bf16.mxu0 0
      %4916 = vmatmul.mubr.bf16.gmra.mrb[0].mxu0 %v4552
      %v4917 = vpop.f32.mrb[0].mxu0
      %v4918 = vadd.f32 %v4821, %v4917
      %v4919 = vpop.f32.mrb[0].mxu0
      %v4920 = vpop.f32.mrb[0].mxu0
      %v4921 = vadd.f32 %v4824, %v4920
      %v4922 = vpop.f32.mrb[0].mxu0
      %4923 = vmatprep.mubr.bf16.mxu0 0
      %4924 = vmatmul.mubr.bf16.gmra.mrb[0].mxu0 %v4555
      %v4925 = vpop.f32.mrb[0].mxu0
      %v4926 = vadd.f32 %v4829, %v4925
      %v4927 = vpop.f32.mrb[0].mxu0
      %v4928 = vpop.f32.mrb[0].mxu0
      %v4929 = vadd.f32 %v4832, %v4928
      %v4930 = vpop.f32.mrb[0].mxu0
      %4931 = vmatprep.mubr.bf16.mxu0 0
      %4932 = vmatmul.mubr.bf16.gmra.mrb[0].mxu0 %v4558
      %v4933 = vpop.f32.mrb[0].mxu0
      %v4934 = vadd.f32 %v4837, %v4933
      %v4935 = vpop.f32.mrb[0].mxu0
      %v4936 = vpop.f32.mrb[0].mxu0
      %v4937 = vadd.f32 %v4840, %v4936
      %v4938 = vpop.f32.mrb[0].mxu0
      %4939 = vmatprep.mubr.bf16.mxu0 0
      %4940 = vmatmul.mubr.bf16.gmra.mrb[0].mxu0 %v4561
      %v4941 = vpop.f32.mrb[0].mxu0
      %v4942 = vadd.f32 %v4845, %v4941
      %v4943 = vpop.f32.mrb[0].mxu0
      %v4944 = vpop.f32.mrb[0].mxu0
      %v4945 = vadd.f32 %v4848, %v4944
      %v4946 = vpop.f32.mrb[0].mxu0
      %4947 = vdwg.mxu0
      %v4996 = vunpack.c.l.b16 %v4089
      %v4997 = vunpack.c.l.b16 %v4090
      %v4998 = vunpack.c.l.b16 %v4091
      %v4999 = vunpack.c.l.b16 %v4092
      %v5000 = vunpack.c.l.b16 %v4093
      %v5001 = vunpack.c.l.b16 %v4094
      %v5002 = vunpack.c.l.b16 %v4095
      %v5003 = vunpack.c.l.b16 %v4096
      %v5004 = vunpack.c.l.b16 %v4097
      %v5005 = vunpack.c.l.b16 %v4098
      %v5006 = vunpack.c.l.b16 %v4099
      %v5007 = vunpack.c.l.b16 %v4100
      %v5008 = vunpack.c.l.b16 %v4101
      %v5009 = vunpack.c.l.b16 %v4102
      %v5010 = vunpack.c.l.b16 %v4103
      %v5011 = vunpack.c.l.b16 %v4104
      %v5012 = vunpack.c.l.b16 %v4105
      %v5013 = vunpack.c.l.b16 %v4106
      %v5014 = vunpack.c.l.b16 %v4107
      %v5015 = vunpack.c.l.b16 %v4108
      %v5016 = vunpack.c.l.b16 %v4109
      %v5017 = vunpack.c.l.b16 %v4110
      %v5018 = vunpack.c.l.b16 %v4111
      %v5019 = vunpack.c.l.b16 %v4112
      %v5020 = vunpack.c.l.b16 %v4113
      %v5021 = vunpack.c.l.b16 %v4114
      %v5022 = vunpack.c.l.b16 %v4115
      %v5023 = vunpack.c.l.b16 %v4116
      %v5024 = vunpack.c.l.b16 %v4117
      %v5025 = vunpack.c.l.b16 %v4118
      %v5026 = vunpack.c.l.b16 %v4119
      %v5027 = vunpack.c.l.b16 %v4120
      %v5028 = vunpack.c.l.b16 %v4121
      %v5029 = vunpack.c.l.b16 %v4122
      %v5030 = vunpack.c.l.b16 %v4123
      %v5031 = vunpack.c.l.b16 %v4124
      %v5032 = vunpack.c.l.b16 %v4125
      %v5033 = vunpack.c.l.b16 %v4126
      %v5034 = vunpack.c.l.b16 %v4127
      %v5035 = vunpack.c.l.b16 %v4128
      %v5036 = vunpack.c.l.b16 %v4129
      %v5037 = vunpack.c.l.b16 %v4130
      %v5038 = vunpack.c.l.b16 %v4131
      %v5039 = vunpack.c.l.b16 %v4132
      %v5040 = vunpack.c.l.b16 %v4133
      %v5041 = vunpack.c.l.b16 %v4134
      %v5042 = vunpack.c.l.b16 %v4135
      %v5043 = vunpack.c.l.b16 %v4136
      %v5044 = vpack.c.b16 %v4997, %v4996
      %v5045 = vpack.c.b16 %v4999, %v4998
      %v5046 = vpack.c.b16 %v5001, %v5000
      %v5047 = vpack.c.b16 %v5003, %v5002
      %v5048 = vpack.c.b16 %v5005, %v5004
      %v5049 = vpack.c.b16 %v5007, %v5006
      %v5050 = vpack.c.b16 %v5009, %v5008
      %v5051 = vpack.c.b16 %v5011, %v5010
      %v5052 = vpack.c.b16 %v5013, %v5012
      %v5053 = vpack.c.b16 %v5015, %v5014
      %v5054 = vpack.c.b16 %v5017, %v5016
      %v5055 = vpack.c.b16 %v5019, %v5018
      %v5056 = vpack.c.b16 %v5021, %v5020
      %v5057 = vpack.c.b16 %v5023, %v5022
      %v5058 = vpack.c.b16 %v5025, %v5024
      %v5059 = vpack.c.b16 %v5027, %v5026
      %v5060 = vpack.c.b16 %v5029, %v5028
      %v5061 = vpack.c.b16 %v5031, %v5030
      %v5062 = vpack.c.b16 %v5033, %v5032
      %v5063 = vpack.c.b16 %v5035, %v5034
      %v5064 = vpack.c.b16 %v5037, %v5036
      %v5065 = vpack.c.b16 %v5039, %v5038
      %v5066 = vpack.c.b16 %v5041, %v5040
      %v5067 = vpack.c.b16 %v5043, %v5042
      %5092 = vmatprep.subr.bf16.mxu0 0
      %5093 = vmatpush1.bf16.msra.mxu0 %v5044
      %5094 = vmatprep.subr.bf16.mxu0 0
      %5095 = vmatpush1.bf16.msra.mxu0 %v5045
      %5096 = vmatprep.subr.bf16.mxu0 0
      %5097 = vmatpush1.bf16.msra.mxu0 %v5046
      %5098 = vmatprep.subr.bf16.mxu0 0
      %5099 = vmatpush1.bf16.msra.mxu0 %v5047
      %5100 = vmatprep.subr.bf16.mxu0 0
      %5101 = vmatpush1.bf16.msra.mxu0 %v5048
      %5102 = vmatprep.subr.bf16.mxu0 0
      %5103 = vmatpush1.bf16.msra.mxu0 %v5049
      %5104 = vmatprep.subr.bf16.mxu0 0
      %5105 = vmatpush1.bf16.msra.mxu0 %v5050
      %5106 = vmatprep.subr.bf16.mxu0 0
      %5107 = vmatpush1.bf16.msra.mxu0 %v5051
      %5108 = vmatprep.subr.bf16.mxu0 0
      %5109 = vmatpush1.bf16.msra.mxu0 %v5052
      %5110 = vmatprep.subr.bf16.mxu0 0
      %5111 = vmatpush1.bf16.msra.mxu0 %v5053
      %5112 = vmatprep.subr.bf16.mxu0 0
      %5113 = vmatpush1.bf16.msra.mxu0 %v5054
      %5114 = vmatprep.subr.bf16.mxu0 0
      %5115 = vmatpush1.bf16.msra.mxu0 %v5055
      %5116 = vmatprep.subr.bf16.mxu0 0
      %5117 = vmatpush1.bf16.msra.mxu0 %v5056
      %5118 = vmatprep.subr.bf16.mxu0 0
      %5119 = vmatpush1.bf16.msra.mxu0 %v5057
      %5120 = vmatprep.subr.bf16.mxu0 0
      %5121 = vmatpush1.bf16.msra.mxu0 %v5058
      %5122 = vmatprep.subr.bf16.mxu0 0
      %5123 = vmatpush1.bf16.msra.mxu0 %v5059
      %5124 = vmatprep.mubr.bf16.mxu0 %v4066
      %5125 = vmatmul.mubr.bf16.gmra.mrb[0].mxu0 %v4065
      %v5126 = vpop.f32.mrb[0].mxu0
      %v5127 = vadd.f32 %v4886, %v5126
      %v5128 = vpop.f32.mrb[0].mxu0
      %v5129 = vpop.f32.mrb[0].mxu0
      %v5130 = vadd.f32 %v4889, %v5129
      %v5131 = vpop.f32.mrb[0].mxu0
      %5132 = vmatprep.mubr.bf16.mxu0 %v4069
      %5133 = vmatmul.mubr.bf16.gmra.mrb[0].mxu0 %v4068
      %v5134 = vpop.f32.mrb[0].mxu0
      %v5135 = vadd.f32 %v4894, %v5134
      %v5136 = vpop.f32.mrb[0].mxu0
      %v5137 = vpop.f32.mrb[0].mxu0
      %v5138 = vadd.f32 %v4897, %v5137
      %v5139 = vpop.f32.mrb[0].mxu0
      %5140 = vmatprep.mubr.bf16.mxu0 %v4072
      %5141 = vmatmul.mubr.bf16.gmra.mrb[0].mxu0 %v4071
      %v5142 = vpop.f32.mrb[0].mxu0
      %v5143 = vadd.f32 %v4902, %v5142
      %v5144 = vpop.f32.mrb[0].mxu0
      %v5145 = vpop.f32.mrb[0].mxu0
      %v5146 = vadd.f32 %v4905, %v5145
      %v5147 = vpop.f32.mrb[0].mxu0
      %5148 = vmatprep.mubr.bf16.mxu0 %v4075
      %5149 = vmatmul.mubr.bf16.gmra.mrb[0].mxu0 %v4074
      %v5150 = vpop.f32.mrb[0].mxu0
      %v5151 = vadd.f32 %v4910, %v5150
      %v5152 = vpop.f32.mrb[0].mxu0
      %v5153 = vpop.f32.mrb[0].mxu0
      %v5154 = vadd.f32 %v4913, %v5153
      %v5155 = vpop.f32.mrb[0].mxu0
      %5156 = vmatprep.mubr.bf16.mxu0 %v4078
      %5157 = vmatmul.mubr.bf16.gmra.mrb[0].mxu0 %v4077
      %v5158 = vpop.f32.mrb[0].mxu0
      %v5159 = vadd.f32 %v4918, %v5158
      %v5160 = vpop.f32.mrb[0].mxu0
      %v5161 = vpop.f32.mrb[0].mxu0
      %v5162 = vadd.f32 %v4921, %v5161
      %v5163 = vpop.f32.mrb[0].mxu0
      %5164 = vmatprep.mubr.bf16.mxu0 %v4081
      %5165 = vmatmul.mubr.bf16.gmra.mrb[0].mxu0 %v4080
      %v5166 = vpop.f32.mrb[0].mxu0
      %v5167 = vadd.f32 %v4926, %v5166
      %v5168 = vpop.f32.mrb[0].mxu0
      %v5169 = vpop.f32.mrb[0].mxu0
      %v5170 = vadd.f32 %v4929, %v5169
      %v5171 = vpop.f32.mrb[0].mxu0
      %5172 = vmatprep.mubr.bf16.mxu0 %v4084
      %5173 = vmatmul.mubr.bf16.gmra.mrb[0].mxu0 %v4083
      %v5174 = vpop.f32.mrb[0].mxu0
      %v5175 = vadd.f32 %v4934, %v5174
      %v5176 = vpop.f32.mrb[0].mxu0
      %v5177 = vpop.f32.mrb[0].mxu0
      %v5178 = vadd.f32 %v4937, %v5177
      %v5179 = vpop.f32.mrb[0].mxu0
      %5180 = vmatprep.mubr.bf16.mxu0 %v4087
      %5181 = vmatmul.mubr.bf16.gmra.mrb[0].mxu0 %v4086
      %v5182 = vpop.f32.mrb[0].mxu0
      %v5183 = vadd.f32 %v4942, %v5182
      %v5184 = vpop.f32.mrb[0].mxu0
      %v5185 = vpop.f32.mrb[0].mxu0
      %v5186 = vadd.f32 %v4945, %v5185
      %v5187 = vpop.f32.mrb[0].mxu0
      %5188 = vdwg.mxu0
      %5189 = vmatprep.subr.bf16.mxu0 0
      %5190 = vmatpush1.bf16.msra.mxu0 %v5060
      %5191 = vmatprep.subr.bf16.mxu0 0
      %5192 = vmatpush1.bf16.msra.mxu0 %v5061
      %5193 = vmatprep.subr.bf16.mxu0 0
      %5194 = vmatpush1.bf16.msra.mxu0 %v5062
      %5195 = vmatprep.subr.bf16.mxu0 0
      %5196 = vmatpush1.bf16.msra.mxu0 %v5063
      %5197 = vmatprep.subr.bf16.mxu0 0
      %5198 = vmatpush1.bf16.msra.mxu0 %v5064
      %5199 = vmatprep.subr.bf16.mxu0 0
      %5200 = vmatpush1.bf16.msra.mxu0 %v5065
      %5201 = vmatprep.subr.bf16.mxu0 0
      %5202 = vmatpush1.bf16.msra.mxu0 %v5066
      %5203 = vmatprep.subr.bf16.mxu0 0
      %5204 = vmatpush1.bf16.msra.mxu0 %v5067
      %5205 = vmatprep.subr.bf16.mxu0 0
      %5206 = vmatpush1.bf16.msra.mxu0 0
      %5207 = vmatprep.subr.bf16.mxu0 0
      %5208 = vmatpush1.bf16.msra.mxu0 0
      %5209 = vmatprep.subr.bf16.mxu0 0
      %5210 = vmatpush1.bf16.msra.mxu0 0
      %5211 = vmatprep.subr.bf16.mxu0 0
      %5212 = vmatpush1.bf16.msra.mxu0 0
      %5213 = vmatprep.subr.bf16.mxu0 0
      %5214 = vmatpush1.bf16.msra.mxu0 0
      %5215 = vmatprep.subr.bf16.mxu0 0
      %5216 = vmatpush1.bf16.msra.mxu0 0
      %5217 = vmatprep.subr.bf16.mxu0 0
      %5218 = vmatpush1.bf16.msra.mxu0 0
      %5219 = vmatprep.subr.bf16.mxu0 0
      %5220 = vmatpush1.bf16.msra.mxu0 0
      %5221 = vmatprep.mubr.bf16.mxu0 0
      %5222 = vmatmul.mubr.bf16.gmra.mrb[0].mxu0 %v4067
      %v5223 = vpop.f32.mrb[0].mxu0
      %v5224 = vadd.f32 %v5127, %v5223
      %v5225 = vpop.f32.mrb[0].mxu0
      %v5226 = vpop.f32.mrb[0].mxu0
      %v5227 = vadd.f32 %v5130, %v5226
      %v5228 = vpop.f32.mrb[0].mxu0
      %5229 = vmatprep.mubr.bf16.mxu0 0
      %5230 = vmatmul.mubr.bf16.gmra.mrb[0].mxu0 %v4070
      %v5231 = vpop.f32.mrb[0].mxu0
      %v5232 = vadd.f32 %v5135, %v5231
      %v5233 = vpop.f32.mrb[0].mxu0
      %v5234 = vpop.f32.mrb[0].mxu0
      %v5235 = vadd.f32 %v5138, %v5234
      %v5236 = vpop.f32.mrb[0].mxu0
      %5237 = vmatprep.mubr.bf16.mxu0 0
      %5238 = vmatmul.mubr.bf16.gmra.mrb[0].mxu0 %v4073
      %v5239 = vpop.f32.mrb[0].mxu0
      %v5240 = vadd.f32 %v5143, %v5239
      %v5241 = vpop.f32.mrb[0].mxu0
      %v5242 = vpop.f32.mrb[0].mxu0
      %v5243 = vadd.f32 %v5146, %v5242
      %v5244 = vpop.f32.mrb[0].mxu0
      %5245 = vmatprep.mubr.bf16.mxu0 0
      %5246 = vmatmul.mubr.bf16.gmra.mrb[0].mxu0 %v4076
      %v5247 = vpop.f32.mrb[0].mxu0
      %v5248 = vadd.f32 %v5151, %v5247
      %v5249 = vpop.f32.mrb[0].mxu0
      %v5250 = vpop.f32.mrb[0].mxu0
      %v5251 = vadd.f32 %v5154, %v5250
      %v5252 = vpop.f32.mrb[0].mxu0
      %5253 = vmatprep.mubr.bf16.mxu0 0
      %5254 = vmatmul.mubr.bf16.gmra.mrb[0].mxu0 %v4079
      %v5255 = vpop.f32.mrb[0].mxu0
      %v5256 = vadd.f32 %v5159, %v5255
      %v5257 = vpop.f32.mrb[0].mxu0
      %v5258 = vpop.f32.mrb[0].mxu0
      %v5259 = vadd.f32 %v5162, %v5258
      %v5260 = vpop.f32.mrb[0].mxu0
      %5261 = vmatprep.mubr.bf16.mxu0 0
      %5262 = vmatmul.mubr.bf16.gmra.mrb[0].mxu0 %v4082
      %v5263 = vpop.f32.mrb[0].mxu0
      %v5264 = vadd.f32 %v5167, %v5263
      %v5265 = vpop.f32.mrb[0].mxu0
      %v5266 = vpop.f32.mrb[0].mxu0
      %v5267 = vadd.f32 %v5170, %v5266
      %v5268 = vpop.f32.mrb[0].mxu0
      %5269 = vmatprep.mubr.bf16.mxu0 0
      %5270 = vmatmul.mubr.bf16.gmra.mrb[0].mxu0 %v4085
      %v5271 = vpop.f32.mrb[0].mxu0
      %v5272 = vadd.f32 %v5175, %v5271
      %v5273 = vpop.f32.mrb[0].mxu0
      %v5274 = vpop.f32.mrb[0].mxu0
      %v5275 = vadd.f32 %v5178, %v5274
      %v5276 = vpop.f32.mrb[0].mxu0
      %5277 = vmatprep.mubr.bf16.mxu0 0
      %5278 = vmatmul.mubr.bf16.gmra.mrb[0].mxu0 %v4088
      %v5279 = vpop.f32.mrb[0].mxu0
      %v5280 = vadd.f32 %v5183, %v5279
      %v5281 = vpop.f32.mrb[0].mxu0
      %v5282 = vpop.f32.mrb[0].mxu0
      %v5283 = vadd.f32 %v5186, %v5282
      %v5284 = vpop.f32.mrb[0].mxu0
      %5285 = vdwg.mxu0
      %s5286 = scalar_lea.vmem [#allocation2], 24
      %v5287 = vld [vmem:[%s5286] sm:$0xf]
      %v5288 = vld [vmem:[%s5286 + $0x4] sm:$0xf]
      %v5289 = vld [vmem:[%s5286 + $0xc] sm:$0xf]
      %v5290 = vld [vmem:[%s5286 + $0x10] sm:$0xf]
      %v5291 = vld [vmem:[%s5286 + $0x18] sm:$0xf]
      %v5292 = vld [vmem:[%s5286 + $0x1c] sm:$0xf]
      %v5293 = vld [vmem:[%s5286 + $0x24] sm:$0xf]
      %v5294 = vld [vmem:[%s5286 + $0x28] sm:$0xf]
      %v5295 = vld [vmem:[%s5286 + $0x30] sm:$0xf]
      %v5296 = vld [vmem:[%s5286 + $0x34] sm:$0xf]
      %v5297 = vld [vmem:[%s5286 + $0x3c] sm:$0xf]
      %v5298 = vld [vmem:[%s5286 + $0x40] sm:$0xf]
      %v5299 = vld [vmem:[%s5286 + $0x48] sm:$0xf]
      %v5300 = vld [vmem:[%s5286 + $0x4c] sm:$0xf]
      %v5301 = vld [vmem:[%s5286 + $0x54] sm:$0xf]
      %v5302 = vld [vmem:[%s5286 + $0x58] sm:$0xf]
      %v5319 = vunpack.c.l.b16 %v5287
      %v5320 = vunpack.c.l.b16 %v5288
      %v5321 = vunpack.c.l.b16 %v5289
      %v5322 = vunpack.c.l.b16 %v5290
      %v5323 = vunpack.c.l.b16 %v5291
      %v5324 = vunpack.c.l.b16 %v5292
      %v5325 = vunpack.c.l.b16 %v5293
      %v5326 = vunpack.c.l.b16 %v5294
      %v5327 = vunpack.c.l.b16 %v5295
      %v5328 = vunpack.c.l.b16 %v5296
      %v5329 = vunpack.c.l.b16 %v5297
      %v5330 = vunpack.c.l.b16 %v5298
      %v5331 = vunpack.c.l.b16 %v5299
      %v5332 = vunpack.c.l.b16 %v5300
      %v5333 = vunpack.c.l.b16 %v5301
      %v5334 = vunpack.c.l.b16 %v5302
      %v5335 = vpack.c.b16 %v5320, %v5319
      %v5336 = vpack.c.b16 %v5322, %v5321
      %v5337 = vpack.c.b16 %v5324, %v5323
      %v5338 = vpack.c.b16 %v5326, %v5325
      %v5339 = vpack.c.b16 %v5328, %v5327
      %v5340 = vpack.c.b16 %v5330, %v5329
      %v5341 = vpack.c.b16 %v5332, %v5331
      %v5342 = vpack.c.b16 %v5334, %v5333
      %5351 = vst.msk [vmem:[#allocation3] sm:$0xff] %vm414, %v5335
      %5352 = vst.msk [vmem:[#allocation3 + $0x18] sm:$0xff] %vm414, %v5336
      %5353 = vst.msk [vmem:[#allocation3 + $0x30] sm:$0xff] %vm414, %v5337
      %5354 = vst.msk [vmem:[#allocation3 + $0x48] sm:$0xff] %vm414, %v5338
      %5355 = vst.msk [vmem:[#allocation3 + $0x60] sm:$0xff] %vm414, %v5339
      %5356 = vst.msk [vmem:[#allocation3 + $0x78] sm:$0xff] %vm414, %v5340
      %5357 = vst.msk [vmem:[#allocation3 + $0x90] sm:$0xff] %vm414, %v5341
      %5358 = vst.msk [vmem:[#allocation3 + $0xa8] sm:$0xff] %vm414, %v5342
      %v5359 = vld [vmem:[%s5286] sm:$0xf]
      %v5360 = vld [vmem:[%s5286 + $0x4] sm:$0xf]
      %v5361 = vld [vmem:[%s5286 + $0x8] sm:$0x1]
      %v5362 = vld [vmem:[%s5286 + $0xc] sm:$0xf]
      %v5363 = vld [vmem:[%s5286 + $0x10] sm:$0xf]
      %v5364 = vld [vmem:[%s5286 + $0x14] sm:$0x1]
      %v5365 = vld [vmem:[%s5286 + $0x18] sm:$0xf]
      %v5366 = vld [vmem:[%s5286 + $0x1c] sm:$0xf]
      %v5367 = vld [vmem:[%s5286 + $0x20] sm:$0x1]
      %v5368 = vld [vmem:[%s5286 + $0x24] sm:$0xf]
      %v5369 = vld [vmem:[%s5286 + $0x28] sm:$0xf]
      %v5370 = vld [vmem:[%s5286 + $0x2c] sm:$0x1]
      %v5371 = vld [vmem:[%s5286 + $0x30] sm:$0xf]
      %v5372 = vld [vmem:[%s5286 + $0x34] sm:$0xf]
      %v5373 = vld [vmem:[%s5286 + $0x38] sm:$0x1]
      %v5374 = vld [vmem:[%s5286 + $0x3c] sm:$0xf]
      %v5375 = vld [vmem:[%s5286 + $0x40] sm:$0xf]
      %v5376 = vld [vmem:[%s5286 + $0x44] sm:$0x1]
      %v5377 = vld [vmem:[%s5286 + $0x48] sm:$0xf]
      %v5378 = vld [vmem:[%s5286 + $0x4c] sm:$0xf]
      %v5379 = vld [vmem:[%s5286 + $0x50] sm:$0x1]
      %v5380 = vld [vmem:[%s5286 + $0x54] sm:$0xf]
      %v5381 = vld [vmem:[%s5286 + $0x58] sm:$0xf]
      %v5382 = vld [vmem:[%s5286 + $0x5c] sm:$0x1]
      %v5407 = vunpack.c.l.b16 %v5359
      %v5408 = vunpack.c.l.b16 %v5360
      %v5409 = vunpack.c.l.b16 %v5361
      %v5410 = vunpack.c.l.b16 %v5362
      %v5411 = vunpack.c.l.b16 %v5363
      %v5412 = vunpack.c.l.b16 %v5364
      %v5413 = vunpack.c.l.b16 %v5365
      %v5414 = vunpack.c.l.b16 %v5366
      %v5415 = vunpack.c.l.b16 %v5367
      %v5416 = vunpack.c.l.b16 %v5368
      %v5417 = vunpack.c.l.b16 %v5369
      %v5418 = vunpack.c.l.b16 %v5370
      %v5419 = vunpack.c.l.b16 %v5371
      %v5420 = vunpack.c.l.b16 %v5372
      %v5421 = vunpack.c.l.b16 %v5373
      %v5422 = vunpack.c.l.b16 %v5374
      %v5423 = vunpack.c.l.b16 %v5375
      %v5424 = vunpack.c.l.b16 %v5376
      %v5425 = vunpack.c.l.b16 %v5377
      %v5426 = vunpack.c.l.b16 %v5378
      %v5427 = vunpack.c.l.b16 %v5379
      %v5428 = vunpack.c.l.b16 %v5380
      %v5429 = vunpack.c.l.b16 %v5381
      %v5430 = vunpack.c.l.b16 %v5382
      %v5431 = vpack.c.b16 %v5408, %v5407
      %v5432 = vpack.c.b16 %v5409, %v5409
      %v5433 = vpack.c.b16 %v5411, %v5410
      %v5434 = vpack.c.b16 %v5412, %v5412
      %v5435 = vpack.c.b16 %v5414, %v5413
      %v5436 = vpack.c.b16 %v5415, %v5415
      %v5437 = vpack.c.b16 %v5417, %v5416
      %v5438 = vpack.c.b16 %v5418, %v5418
      %v5439 = vpack.c.b16 %v5420, %v5419
      %v5440 = vpack.c.b16 %v5421, %v5421
      %v5441 = vpack.c.b16 %v5423, %v5422
      %v5442 = vpack.c.b16 %v5424, %v5424
      %v5443 = vpack.c.b16 %v5426, %v5425
      %v5444 = vpack.c.b16 %v5427, %v5427
      %v5445 = vpack.c.b16 %v5429, %v5428
      %v5446 = vpack.c.b16 %v5430, %v5430
      %v5448 = vshrl.u32 %v5431, 16
      %v5450 = vshll.u32 %v5431, 16
      %v5452 = vrot.slane %v5450, 1
      %v5453 = vor.u32 %v5448, %v5452
      %v5455 = vshll.u32 %v5432, 16
      %v5457 = vrot.slane %v5455, 1
      %v5458 = vsel %vm535, %v5453, %v5457
      %v5460 = vshrl.u32 %v5433, 16
      %v5462 = vshll.u32 %v5433, 16
      %v5464 = vrot.slane %v5462, 1
      %v5465 = vor.u32 %v5460, %v5464
      %v5467 = vshll.u32 %v5434, 16
      %v5469 = vrot.slane %v5467, 1
      %v5470 = vsel %vm535, %v5465, %v5469
      %v5472 = vshrl.u32 %v5435, 16
      %v5474 = vshll.u32 %v5435, 16
      %v5476 = vrot.slane %v5474, 1
      %v5477 = vor.u32 %v5472, %v5476
      %v5479 = vshll.u32 %v5436, 16
      %v5481 = vrot.slane %v5479, 1
      %v5482 = vsel %vm535, %v5477, %v5481
      %v5484 = vshrl.u32 %v5437, 16
      %v5486 = vshll.u32 %v5437, 16
      %v5488 = vrot.slane %v5486, 1
      %v5489 = vor.u32 %v5484, %v5488
      %v5491 = vshll.u32 %v5438, 16
      %v5493 = vrot.slane %v5491, 1
      %v5494 = vsel %vm535, %v5489, %v5493
      %v5496 = vshrl.u32 %v5439, 16
      %v5498 = vshll.u32 %v5439, 16
      %v5500 = vrot.slane %v5498, 1
      %v5501 = vor.u32 %v5496, %v5500
      %v5503 = vshll.u32 %v5440, 16
      %v5505 = vrot.slane %v5503, 1
      %v5506 = vsel %vm535, %v5501, %v5505
      %v5508 = vshrl.u32 %v5441, 16
      %v5510 = vshll.u32 %v5441, 16
      %v5512 = vrot.slane %v5510, 1
      %v5513 = vor.u32 %v5508, %v5512
      %v5515 = vshll.u32 %v5442, 16
      %v5517 = vrot.slane %v5515, 1
      %v5518 = vsel %vm535, %v5513, %v5517
      %v5520 = vshrl.u32 %v5443, 16
      %v5522 = vshll.u32 %v5443, 16
      %v5524 = vrot.slane %v5522, 1
      %v5525 = vor.u32 %v5520, %v5524
      %v5527 = vshll.u32 %v5444, 16
      %v5529 = vrot.slane %v5527, 1
      %v5530 = vsel %vm535, %v5525, %v5529
      %v5532 = vshrl.u32 %v5445, 16
      %v5534 = vshll.u32 %v5445, 16
      %v5536 = vrot.slane %v5534, 1
      %v5537 = vor.u32 %v5532, %v5536
      %v5539 = vshll.u32 %v5446, 16
      %v5541 = vrot.slane %v5539, 1
      %v5542 = vsel %vm535, %v5537, %v5541
      %5551 = vst.msk [vmem:[#allocation3 + $0x8] sm:$0xff] %vm414, %v5458
      %5552 = vst.msk [vmem:[#allocation3 + $0x20] sm:$0xff] %vm414, %v5470
      %5553 = vst.msk [vmem:[#allocation3 + $0x38] sm:$0xff] %vm414, %v5482
      %5554 = vst.msk [vmem:[#allocation3 + $0x50] sm:$0xff] %vm414, %v5494
      %5555 = vst.msk [vmem:[#allocation3 + $0x68] sm:$0xff] %vm414, %v5506
      %5556 = vst.msk [vmem:[#allocation3 + $0x80] sm:$0xff] %vm414, %v5518
      %5557 = vst.msk [vmem:[#allocation3 + $0x98] sm:$0xff] %vm414, %v5530
      %5558 = vst.msk [vmem:[#allocation3 + $0xb0] sm:$0xff] %vm414, %v5542
      %v5559 = vld [vmem:[%s5286] sm:$0xe]
      %v5560 = vld [vmem:[%s5286 + $0x4] sm:$0xf]
      %v5561 = vld [vmem:[%s5286 + $0x8] sm:$0x1]
      %v5562 = vld [vmem:[%s5286 + $0xc] sm:$0xe]
      %v5563 = vld [vmem:[%s5286 + $0x10] sm:$0xf]
      %v5564 = vld [vmem:[%s5286 + $0x14] sm:$0x1]
      %v5565 = vld [vmem:[%s5286 + $0x18] sm:$0xe]
      %v5566 = vld [vmem:[%s5286 + $0x1c] sm:$0xf]
      %v5567 = vld [vmem:[%s5286 + $0x20] sm:$0x1]
      %v5568 = vld [vmem:[%s5286 + $0x24] sm:$0xe]
      %v5569 = vld [vmem:[%s5286 + $0x28] sm:$0xf]
      %v5570 = vld [vmem:[%s5286 + $0x2c] sm:$0x1]
      %v5571 = vld [vmem:[%s5286 + $0x30] sm:$0xe]
      %v5572 = vld [vmem:[%s5286 + $0x34] sm:$0xf]
      %v5573 = vld [vmem:[%s5286 + $0x38] sm:$0x1]
      %v5574 = vld [vmem:[%s5286 + $0x3c] sm:$0xe]
      %v5575 = vld [vmem:[%s5286 + $0x40] sm:$0xf]
      %v5576 = vld [vmem:[%s5286 + $0x44] sm:$0x1]
      %v5577 = vld [vmem:[%s5286 + $0x48] sm:$0xe]
      %v5578 = vld [vmem:[%s5286 + $0x4c] sm:$0xf]
      %v5579 = vld [vmem:[%s5286 + $0x50] sm:$0x1]
      %v5580 = vld [vmem:[%s5286 + $0x54] sm:$0xe]
      %v5581 = vld [vmem:[%s5286 + $0x58] sm:$0xf]
      %v5582 = vld [vmem:[%s5286 + $0x5c] sm:$0x1]
      %v5607 = vunpack.c.l.b16 %v5559
      %v5608 = vunpack.c.l.b16 %v5560
      %v5609 = vunpack.c.l.b16 %v5561
      %v5610 = vunpack.c.l.b16 %v5562
      %v5611 = vunpack.c.l.b16 %v5563
      %v5612 = vunpack.c.l.b16 %v5564
      %v5613 = vunpack.c.l.b16 %v5565
      %v5614 = vunpack.c.l.b16 %v5566
      %v5615 = vunpack.c.l.b16 %v5567
      %v5616 = vunpack.c.l.b16 %v5568
      %v5617 = vunpack.c.l.b16 %v5569
      %v5618 = vunpack.c.l.b16 %v5570
      %v5619 = vunpack.c.l.b16 %v5571
      %v5620 = vunpack.c.l.b16 %v5572
      %v5621 = vunpack.c.l.b16 %v5573
      %v5622 = vunpack.c.l.b16 %v5574
      %v5623 = vunpack.c.l.b16 %v5575
      %v5624 = vunpack.c.l.b16 %v5576
      %v5625 = vunpack.c.l.b16 %v5577
      %v5626 = vunpack.c.l.b16 %v5578
      %v5627 = vunpack.c.l.b16 %v5579
      %v5628 = vunpack.c.l.b16 %v5580
      %v5629 = vunpack.c.l.b16 %v5581
      %v5630 = vunpack.c.l.b16 %v5582
      %v5631 = vpack.c.b16 %v5608, %v5607
      %v5632 = vpack.c.b16 %v5609, %v5609
      %v5633 = vpack.c.b16 %v5611, %v5610
      %v5634 = vpack.c.b16 %v5612, %v5612
      %v5635 = vpack.c.b16 %v5614, %v5613
      %v5636 = vpack.c.b16 %v5615, %v5615
      %v5637 = vpack.c.b16 %v5617, %v5616
      %v5638 = vpack.c.b16 %v5618, %v5618
      %v5639 = vpack.c.b16 %v5620, %v5619
      %v5640 = vpack.c.b16 %v5621, %v5621
      %v5641 = vpack.c.b16 %v5623, %v5622
      %v5642 = vpack.c.b16 %v5624, %v5624
      %v5643 = vpack.c.b16 %v5626, %v5625
      %v5644 = vpack.c.b16 %v5627, %v5627
      %v5645 = vpack.c.b16 %v5629, %v5628
      %v5646 = vpack.c.b16 %v5630, %v5630
      %v5647 = vrot.slane %v5631, 1
      %v5648 = vrot.slane %v5632, 1
      %v5649 = vsel %vm786, %v5647, %v5648
      %v5650 = vrot.slane %v5633, 1
      %v5651 = vrot.slane %v5634, 1
      %v5652 = vsel %vm786, %v5650, %v5651
      %v5653 = vrot.slane %v5635, 1
      %v5654 = vrot.slane %v5636, 1
      %v5655 = vsel %vm786, %v5653, %v5654
      %v5656 = vrot.slane %v5637, 1
      %v5657 = vrot.slane %v5638, 1
      %v5658 = vsel %vm786, %v5656, %v5657
      %v5659 = vrot.slane %v5639, 1
      %v5660 = vrot.slane %v5640, 1
      %v5661 = vsel %vm786, %v5659, %v5660
      %v5662 = vrot.slane %v5641, 1
      %v5663 = vrot.slane %v5642, 1
      %v5664 = vsel %vm786, %v5662, %v5663
      %v5665 = vrot.slane %v5643, 1
      %v5666 = vrot.slane %v5644, 1
      %v5667 = vsel %vm786, %v5665, %v5666
      %v5668 = vrot.slane %v5645, 1
      %v5669 = vrot.slane %v5646, 1
      %v5670 = vsel %vm786, %v5668, %v5669
      %5679 = vst.msk [vmem:[#allocation3 + $0x10] sm:$0xff] %vm414, %v5649
      %5680 = vst.msk [vmem:[#allocation3 + $0x28] sm:$0xff] %vm414, %v5652
      %5681 = vst.msk [vmem:[#allocation3 + $0x40] sm:$0xff] %vm414, %v5655
      %5682 = vst.msk [vmem:[#allocation3 + $0x58] sm:$0xff] %vm414, %v5658
      %5683 = vst.msk [vmem:[#allocation3 + $0x70] sm:$0xff] %vm414, %v5661
      %5684 = vst.msk [vmem:[#allocation3 + $0x88] sm:$0xff] %vm414, %v5664
      %5685 = vst.msk [vmem:[#allocation3 + $0xa0] sm:$0xff] %vm414, %v5667
      %5686 = vst.msk [vmem:[#allocation3 + $0xb8] sm:$0xff] %vm414, %v5670
      %v5687 = vld [vmem:[#allocation3] sm:$0xff]
      %v5688 = vld [vmem:[#allocation3 + $0x8] sm:$0xff]
      %v5689 = vld [vmem:[#allocation3 + $0x10] sm:$0xff]
      %v5690 = vld [vmem:[#allocation3 + $0x18] sm:$0xff]
      %v5691 = vld [vmem:[#allocation3 + $0x20] sm:$0xff]
      %v5692 = vld [vmem:[#allocation3 + $0x28] sm:$0xff]
      %v5693 = vld [vmem:[#allocation3 + $0x30] sm:$0xff]
      %v5694 = vld [vmem:[#allocation3 + $0x38] sm:$0xff]
      %v5695 = vld [vmem:[#allocation3 + $0x40] sm:$0xff]
      %v5696 = vld [vmem:[#allocation3 + $0x48] sm:$0xff]
      %v5697 = vld [vmem:[#allocation3 + $0x50] sm:$0xff]
      %v5698 = vld [vmem:[#allocation3 + $0x58] sm:$0xff]
      %v5699 = vld [vmem:[#allocation3 + $0x60] sm:$0xff]
      %v5700 = vld [vmem:[#allocation3 + $0x68] sm:$0xff]
      %v5701 = vld [vmem:[#allocation3 + $0x70] sm:$0xff]
      %v5702 = vld [vmem:[#allocation3 + $0x78] sm:$0xff]
      %v5703 = vld [vmem:[#allocation3 + $0x80] sm:$0xff]
      %v5704 = vld [vmem:[#allocation3 + $0x88] sm:$0xff]
      %v5705 = vld [vmem:[#allocation3 + $0x90] sm:$0xff]
      %v5706 = vld [vmem:[#allocation3 + $0x98] sm:$0xff]
      %v5707 = vld [vmem:[#allocation3 + $0xa0] sm:$0xff]
      %v5708 = vld [vmem:[#allocation3 + $0xa8] sm:$0xff]
      %v5709 = vld [vmem:[#allocation3 + $0xb0] sm:$0xff]
      %v5710 = vld [vmem:[#allocation3 + $0xb8] sm:$0xff]
      %v5711 = vld [vmem:[%s3 + $0x180] sm:$0xf]
      %v5712 = vld [vmem:[%s3 + $0x184] sm:$0xf]
      %v5713 = vld [vmem:[%s3 + $0x188] sm:$0xf]
      %v5714 = vld [vmem:[%s3 + $0x18c] sm:$0xf]
      %v5715 = vld [vmem:[%s3 + $0x190] sm:$0xf]
      %v5716 = vld [vmem:[%s3 + $0x194] sm:$0xf]
      %v5717 = vld [vmem:[%s3 + $0x198] sm:$0xf]
      %v5718 = vld [vmem:[%s3 + $0x19c] sm:$0xf]
      %v5719 = vld [vmem:[%s3 + $0x1a0] sm:$0xf]
      %v5720 = vld [vmem:[%s3 + $0x1a4] sm:$0xf]
      %v5721 = vld [vmem:[%s3 + $0x1a8] sm:$0xf]
      %v5722 = vld [vmem:[%s3 + $0x1ac] sm:$0xf]
      %v5723 = vld [vmem:[%s3 + $0x1b0] sm:$0xf]
      %v5724 = vld [vmem:[%s3 + $0x1b4] sm:$0xf]
      %v5725 = vld [vmem:[%s3 + $0x1b8] sm:$0xf]
      %v5726 = vld [vmem:[%s3 + $0x1bc] sm:$0xf]
      %v5727 = vld [vmem:[%s3 + $0x1c0] sm:$0xf]
      %v5728 = vld [vmem:[%s3 + $0x1c4] sm:$0xf]
      %v5729 = vld [vmem:[%s3 + $0x1c8] sm:$0xf]
      %v5730 = vld [vmem:[%s3 + $0x1cc] sm:$0xf]
      %v5731 = vld [vmem:[%s3 + $0x1d0] sm:$0xf]
      %v5732 = vld [vmem:[%s3 + $0x1d4] sm:$0xf]
      %v5733 = vld [vmem:[%s3 + $0x1d8] sm:$0xf]
      %v5734 = vld [vmem:[%s3 + $0x1dc] sm:$0xf]
      %v5735 = vld [vmem:[%s3 + $0x1e0] sm:$0xf]
      %v5736 = vld [vmem:[%s3 + $0x1e4] sm:$0xf]
      %v5737 = vld [vmem:[%s3 + $0x1e8] sm:$0xf]
      %v5738 = vld [vmem:[%s3 + $0x1ec] sm:$0xf]
      %v5739 = vld [vmem:[%s3 + $0x1f0] sm:$0xf]
      %v5740 = vld [vmem:[%s3 + $0x1f4] sm:$0xf]
      %v5741 = vld [vmem:[%s3 + $0x1f8] sm:$0xf]
      %v5742 = vld [vmem:[%s3 + $0x1fc] sm:$0xf]
      %v5743 = vld [vmem:[%s3 + $0x200] sm:$0xf]
      %v5744 = vld [vmem:[%s3 + $0x204] sm:$0xf]
      %v5745 = vld [vmem:[%s3 + $0x208] sm:$0xf]
      %v5746 = vld [vmem:[%s3 + $0x20c] sm:$0xf]
      %v5747 = vld [vmem:[%s3 + $0x210] sm:$0xf]
      %v5748 = vld [vmem:[%s3 + $0x214] sm:$0xf]
      %v5749 = vld [vmem:[%s3 + $0x218] sm:$0xf]
      %v5750 = vld [vmem:[%s3 + $0x21c] sm:$0xf]
      %v5751 = vld [vmem:[%s3 + $0x220] sm:$0xf]
      %v5752 = vld [vmem:[%s3 + $0x224] sm:$0xf]
      %v5753 = vld [vmem:[%s3 + $0x228] sm:$0xf]
      %v5754 = vld [vmem:[%s3 + $0x22c] sm:$0xf]
      %v5755 = vld [vmem:[%s3 + $0x230] sm:$0xf]
      %v5756 = vld [vmem:[%s3 + $0x234] sm:$0xf]
      %v5757 = vld [vmem:[%s3 + $0x238] sm:$0xf]
      %v5758 = vld [vmem:[%s3 + $0x23c] sm:$0xf]
      %v5807 = vunpack.c.l.b16 %v5711
      %v5808 = vunpack.c.l.b16 %v5712
      %v5809 = vunpack.c.l.b16 %v5713
      %v5810 = vunpack.c.l.b16 %v5714
      %v5811 = vunpack.c.l.b16 %v5715
      %v5812 = vunpack.c.l.b16 %v5716
      %v5813 = vunpack.c.l.b16 %v5717
      %v5814 = vunpack.c.l.b16 %v5718
      %v5815 = vunpack.c.l.b16 %v5719
      %v5816 = vunpack.c.l.b16 %v5720
      %v5817 = vunpack.c.l.b16 %v5721
      %v5818 = vunpack.c.l.b16 %v5722
      %v5819 = vunpack.c.l.b16 %v5723
      %v5820 = vunpack.c.l.b16 %v5724
      %v5821 = vunpack.c.l.b16 %v5725
      %v5822 = vunpack.c.l.b16 %v5726
      %v5823 = vunpack.c.l.b16 %v5727
      %v5824 = vunpack.c.l.b16 %v5728
      %v5825 = vunpack.c.l.b16 %v5729
      %v5826 = vunpack.c.l.b16 %v5730
      %v5827 = vunpack.c.l.b16 %v5731
      %v5828 = vunpack.c.l.b16 %v5732
      %v5829 = vunpack.c.l.b16 %v5733
      %v5830 = vunpack.c.l.b16 %v5734
      %v5831 = vunpack.c.l.b16 %v5735
      %v5832 = vunpack.c.l.b16 %v5736
      %v5833 = vunpack.c.l.b16 %v5737
      %v5834 = vunpack.c.l.b16 %v5738
      %v5835 = vunpack.c.l.b16 %v5739
      %v5836 = vunpack.c.l.b16 %v5740
      %v5837 = vunpack.c.l.b16 %v5741
      %v5838 = vunpack.c.l.b16 %v5742
      %v5839 = vunpack.c.l.b16 %v5743
      %v5840 = vunpack.c.l.b16 %v5744
      %v5841 = vunpack.c.l.b16 %v5745
      %v5842 = vunpack.c.l.b16 %v5746
      %v5843 = vunpack.c.l.b16 %v5747
      %v5844 = vunpack.c.l.b16 %v5748
      %v5845 = vunpack.c.l.b16 %v5749
      %v5846 = vunpack.c.l.b16 %v5750
      %v5847 = vunpack.c.l.b16 %v5751
      %v5848 = vunpack.c.l.b16 %v5752
      %v5849 = vunpack.c.l.b16 %v5753
      %v5850 = vunpack.c.l.b16 %v5754
      %v5851 = vunpack.c.l.b16 %v5755
      %v5852 = vunpack.c.l.b16 %v5756
      %v5853 = vunpack.c.l.b16 %v5757
      %v5854 = vunpack.c.l.b16 %v5758
      %v5855 = vpack.c.b16 %v5808, %v5807
      %v5856 = vpack.c.b16 %v5810, %v5809
      %v5857 = vpack.c.b16 %v5812, %v5811
      %v5858 = vpack.c.b16 %v5814, %v5813
      %v5859 = vpack.c.b16 %v5816, %v5815
      %v5860 = vpack.c.b16 %v5818, %v5817
      %v5861 = vpack.c.b16 %v5820, %v5819
      %v5862 = vpack.c.b16 %v5822, %v5821
      %v5863 = vpack.c.b16 %v5824, %v5823
      %v5864 = vpack.c.b16 %v5826, %v5825
      %v5865 = vpack.c.b16 %v5828, %v5827
      %v5866 = vpack.c.b16 %v5830, %v5829
      %v5867 = vpack.c.b16 %v5832, %v5831
      %v5868 = vpack.c.b16 %v5834, %v5833
      %v5869 = vpack.c.b16 %v5836, %v5835
      %v5870 = vpack.c.b16 %v5838, %v5837
      %v5871 = vpack.c.b16 %v5840, %v5839
      %v5872 = vpack.c.b16 %v5842, %v5841
      %v5873 = vpack.c.b16 %v5844, %v5843
      %v5874 = vpack.c.b16 %v5846, %v5845
      %v5875 = vpack.c.b16 %v5848, %v5847
      %v5876 = vpack.c.b16 %v5850, %v5849
      %v5877 = vpack.c.b16 %v5852, %v5851
      %v5878 = vpack.c.b16 %v5854, %v5853
      %5903 = vmatprep.subr.bf16.mxu0 0
      %5904 = vmatpush1.bf16.msra.mxu0 %v5855
      %5905 = vmatprep.subr.bf16.mxu0 0
      %5906 = vmatpush1.bf16.msra.mxu0 %v5856
      %5907 = vmatprep.subr.bf16.mxu0 0
      %5908 = vmatpush1.bf16.msra.mxu0 %v5857
      %5909 = vmatprep.subr.bf16.mxu0 0
      %5910 = vmatpush1.bf16.msra.mxu0 %v5858
      %5911 = vmatprep.subr.bf16.mxu0 0
      %5912 = vmatpush1.bf16.msra.mxu0 %v5859
      %5913 = vmatprep.subr.bf16.mxu0 0
      %5914 = vmatpush1.bf16.msra.mxu0 %v5860
      %5915 = vmatprep.subr.bf16.mxu0 0
      %5916 = vmatpush1.bf16.msra.mxu0 %v5861
      %5917 = vmatprep.subr.bf16.mxu0 0
      %5918 = vmatpush1.bf16.msra.mxu0 %v5862
      %5919 = vmatprep.subr.bf16.mxu0 0
      %5920 = vmatpush1.bf16.msra.mxu0 %v5863
      %5921 = vmatprep.subr.bf16.mxu0 0
      %5922 = vmatpush1.bf16.msra.mxu0 %v5864
      %5923 = vmatprep.subr.bf16.mxu0 0
      %5924 = vmatpush1.bf16.msra.mxu0 %v5865
      %5925 = vmatprep.subr.bf16.mxu0 0
      %5926 = vmatpush1.bf16.msra.mxu0 %v5866
      %5927 = vmatprep.subr.bf16.mxu0 0
      %5928 = vmatpush1.bf16.msra.mxu0 %v5867
      %5929 = vmatprep.subr.bf16.mxu0 0
      %5930 = vmatpush1.bf16.msra.mxu0 %v5868
      %5931 = vmatprep.subr.bf16.mxu0 0
      %5932 = vmatpush1.bf16.msra.mxu0 %v5869
      %5933 = vmatprep.subr.bf16.mxu0 0
      %5934 = vmatpush1.bf16.msra.mxu0 %v5870
      %5935 = vmatprep.mubr.bf16.mxu0 %v5688
      %5936 = vmatmul.mubr.bf16.gmra.mrb[0].mxu0 %v5687
      %v5937 = vpop.f32.mrb[0].mxu0
      %v5938 = vadd.f32 0.0, %v5937
      %v5939 = vpop.f32.mrb[0].mxu0
      %v5940 = vpop.f32.mrb[0].mxu0
      %v5941 = vadd.f32 0.0, %v5940
      %v5942 = vpop.f32.mrb[0].mxu0
      %5943 = vmatprep.mubr.bf16.mxu0 %v5691
      %5944 = vmatmul.mubr.bf16.gmra.mrb[0].mxu0 %v5690
      %v5945 = vpop.f32.mrb[0].mxu0
      %v5946 = vadd.f32 0.0, %v5945
      %v5947 = vpop.f32.mrb[0].mxu0
      %v5948 = vpop.f32.mrb[0].mxu0
      %v5949 = vadd.f32 0.0, %v5948
      %v5950 = vpop.f32.mrb[0].mxu0
      %5951 = vmatprep.mubr.bf16.mxu0 %v5694
      %5952 = vmatmul.mubr.bf16.gmra.mrb[0].mxu0 %v5693
      %v5953 = vpop.f32.mrb[0].mxu0
      %v5954 = vadd.f32 0.0, %v5953
      %v5955 = vpop.f32.mrb[0].mxu0
      %v5956 = vpop.f32.mrb[0].mxu0
      %v5957 = vadd.f32 0.0, %v5956
      %v5958 = vpop.f32.mrb[0].mxu0
      %5959 = vmatprep.mubr.bf16.mxu0 %v5697
      %5960 = vmatmul.mubr.bf16.gmra.mrb[0].mxu0 %v5696
      %v5961 = vpop.f32.mrb[0].mxu0
      %v5962 = vadd.f32 0.0, %v5961
      %v5963 = vpop.f32.mrb[0].mxu0
      %v5964 = vpop.f32.mrb[0].mxu0
      %v5965 = vadd.f32 0.0, %v5964
      %v5966 = vpop.f32.mrb[0].mxu0
      %5967 = vmatprep.mubr.bf16.mxu0 %v5700
      %5968 = vmatmul.mubr.bf16.gmra.mrb[0].mxu0 %v5699
      %v5969 = vpop.f32.mrb[0].mxu0
      %v5970 = vadd.f32 0.0, %v5969
      %v5971 = vpop.f32.mrb[0].mxu0
      %v5972 = vpop.f32.mrb[0].mxu0
      %v5973 = vadd.f32 0.0, %v5972
      %v5974 = vpop.f32.mrb[0].mxu0
      %5975 = vmatprep.mubr.bf16.mxu0 %v5703
      %5976 = vmatmul.mubr.bf16.gmra.mrb[0].mxu0 %v5702
      %v5977 = vpop.f32.mrb[0].mxu0
      %v5978 = vadd.f32 0.0, %v5977
      %v5979 = vpop.f32.mrb[0].mxu0
      %v5980 = vpop.f32.mrb[0].mxu0
      %v5981 = vadd.f32 0.0, %v5980
      %v5982 = vpop.f32.mrb[0].mxu0
      %5983 = vmatprep.mubr.bf16.mxu0 %v5706
      %5984 = vmatmul.mubr.bf16.gmra.mrb[0].mxu0 %v5705
      %v5985 = vpop.f32.mrb[0].mxu0
      %v5986 = vadd.f32 0.0, %v5985
      %v5987 = vpop.f32.mrb[0].mxu0
      %v5988 = vpop.f32.mrb[0].mxu0
      %v5989 = vadd.f32 0.0, %v5988
      %v5990 = vpop.f32.mrb[0].mxu0
      %5991 = vmatprep.mubr.bf16.mxu0 %v5709
      %5992 = vmatmul.mubr.bf16.gmra.mrb[0].mxu0 %v5708
      %v5993 = vpop.f32.mrb[0].mxu0
      %v5994 = vadd.f32 0.0, %v5993
      %v5995 = vpop.f32.mrb[0].mxu0
      %v5996 = vpop.f32.mrb[0].mxu0
      %v5997 = vadd.f32 0.0, %v5996
      %v5998 = vpop.f32.mrb[0].mxu0
      %5999 = vdwg.mxu0
      %6000 = vmatprep.subr.bf16.mxu0 0
      %6001 = vmatpush1.bf16.msra.mxu0 %v5871
      %6002 = vmatprep.subr.bf16.mxu0 0
      %6003 = vmatpush1.bf16.msra.mxu0 %v5872
      %6004 = vmatprep.subr.bf16.mxu0 0
      %6005 = vmatpush1.bf16.msra.mxu0 %v5873
      %6006 = vmatprep.subr.bf16.mxu0 0
      %6007 = vmatpush1.bf16.msra.mxu0 %v5874
      %6008 = vmatprep.subr.bf16.mxu0 0
      %6009 = vmatpush1.bf16.msra.mxu0 %v5875
      %6010 = vmatprep.subr.bf16.mxu0 0
      %6011 = vmatpush1.bf16.msra.mxu0 %v5876
      %6012 = vmatprep.subr.bf16.mxu0 0
      %6013 = vmatpush1.bf16.msra.mxu0 %v5877
      %6014 = vmatprep.subr.bf16.mxu0 0
      %6015 = vmatpush1.bf16.msra.mxu0 %v5878
      %6016 = vmatprep.subr.bf16.mxu0 0
      %6017 = vmatpush1.bf16.msra.mxu0 0
      %6018 = vmatprep.subr.bf16.mxu0 0
      %6019 = vmatpush1.bf16.msra.mxu0 0
      %6020 = vmatprep.subr.bf16.mxu0 0
      %6021 = vmatpush1.bf16.msra.mxu0 0
      %6022 = vmatprep.subr.bf16.mxu0 0
      %6023 = vmatpush1.bf16.msra.mxu0 0
      %6024 = vmatprep.subr.bf16.mxu0 0
      %6025 = vmatpush1.bf16.msra.mxu0 0
      %6026 = vmatprep.subr.bf16.mxu0 0
      %6027 = vmatpush1.bf16.msra.mxu0 0
      %6028 = vmatprep.subr.bf16.mxu0 0
      %6029 = vmatpush1.bf16.msra.mxu0 0
      %6030 = vmatprep.subr.bf16.mxu0 0
      %6031 = vmatpush1.bf16.msra.mxu0 0
      %6032 = vmatprep.mubr.bf16.mxu0 0
      %6033 = vmatmul.mubr.bf16.gmra.mrb[0].mxu0 %v5689
      %v6034 = vpop.f32.mrb[0].mxu0
      %v6035 = vadd.f32 %v5938, %v6034
      %v6036 = vpop.f32.mrb[0].mxu0
      %v6037 = vpop.f32.mrb[0].mxu0
      %v6038 = vadd.f32 %v5941, %v6037
      %v6039 = vpop.f32.mrb[0].mxu0
      %6040 = vmatprep.mubr.bf16.mxu0 0
      %6041 = vmatmul.mubr.bf16.gmra.mrb[0].mxu0 %v5692
      %v6042 = vpop.f32.mrb[0].mxu0
      %v6043 = vadd.f32 %v5946, %v6042
      %v6044 = vpop.f32.mrb[0].mxu0
      %v6045 = vpop.f32.mrb[0].mxu0
      %v6046 = vadd.f32 %v5949, %v6045
      %v6047 = vpop.f32.mrb[0].mxu0
      %6048 = vmatprep.mubr.bf16.mxu0 0
      %6049 = vmatmul.mubr.bf16.gmra.mrb[0].mxu0 %v5695
      %v6050 = vpop.f32.mrb[0].mxu0
      %v6051 = vadd.f32 %v5954, %v6050
      %v6052 = vpop.f32.mrb[0].mxu0
      %v6053 = vpop.f32.mrb[0].mxu0
      %v6054 = vadd.f32 %v5957, %v6053
      %v6055 = vpop.f32.mrb[0].mxu0
      %6056 = vmatprep.mubr.bf16.mxu0 0
      %6057 = vmatmul.mubr.bf16.gmra.mrb[0].mxu0 %v5698
      %v6058 = vpop.f32.mrb[0].mxu0
      %v6059 = vadd.f32 %v5962, %v6058
      %v6060 = vpop.f32.mrb[0].mxu0
      %v6061 = vpop.f32.mrb[0].mxu0
      %v6062 = vadd.f32 %v5965, %v6061
      %v6063 = vpop.f32.mrb[0].mxu0
      %6064 = vmatprep.mubr.bf16.mxu0 0
      %6065 = vmatmul.mubr.bf16.gmra.mrb[0].mxu0 %v5701
      %v6066 = vpop.f32.mrb[0].mxu0
      %v6067 = vadd.f32 %v5970, %v6066
      %v6068 = vpop.f32.mrb[0].mxu0
      %v6069 = vpop.f32.mrb[0].mxu0
      %v6070 = vadd.f32 %v5973, %v6069
      %v6071 = vpop.f32.mrb[0].mxu0
      %6072 = vmatprep.mubr.bf16.mxu0 0
      %6073 = vmatmul.mubr.bf16.gmra.mrb[0].mxu0 %v5704
      %v6074 = vpop.f32.mrb[0].mxu0
      %v6075 = vadd.f32 %v5978, %v6074
      %v6076 = vpop.f32.mrb[0].mxu0
      %v6077 = vpop.f32.mrb[0].mxu0
      %v6078 = vadd.f32 %v5981, %v6077
      %v6079 = vpop.f32.mrb[0].mxu0
      %6080 = vmatprep.mubr.bf16.mxu0 0
      %6081 = vmatmul.mubr.bf16.gmra.mrb[0].mxu0 %v5707
      %v6082 = vpop.f32.mrb[0].mxu0
      %v6083 = vadd.f32 %v5986, %v6082
      %v6084 = vpop.f32.mrb[0].mxu0
      %v6085 = vpop.f32.mrb[0].mxu0
      %v6086 = vadd.f32 %v5989, %v6085
      %v6087 = vpop.f32.mrb[0].mxu0
      %6088 = vmatprep.mubr.bf16.mxu0 0
      %6089 = vmatmul.mubr.bf16.gmra.mrb[0].mxu0 %v5710
      %v6090 = vpop.f32.mrb[0].mxu0
      %v6091 = vadd.f32 %v5994, %v6090
      %v6092 = vpop.f32.mrb[0].mxu0
      %v6093 = vpop.f32.mrb[0].mxu0
      %v6094 = vadd.f32 %v5997, %v6093
      %v6095 = vpop.f32.mrb[0].mxu0
      %6096 = vdwg.mxu0
      %v6097 = vadd.f32 %v5224, %v6035
      %v6098 = vadd.f32 %v5227, %v6038
      %v6099 = vadd.f32 %v5232, %v6043
      %v6100 = vadd.f32 %v5235, %v6046
      %v6101 = vadd.f32 %v5240, %v6051
      %v6102 = vadd.f32 %v5243, %v6054
      %v6103 = vadd.f32 %v5248, %v6059
      %v6104 = vadd.f32 %v5251, %v6062
      %v6105 = vadd.f32 %v5256, %v6067
      %v6106 = vadd.f32 %v5259, %v6070
      %v6107 = vadd.f32 %v5264, %v6075
      %v6108 = vadd.f32 %v5267, %v6078
      %v6109 = vadd.f32 %v5272, %v6083
      %v6110 = vadd.f32 %v5275, %v6086
      %v6111 = vadd.f32 %v5280, %v6091
      %v6112 = vadd.f32 %v5283, %v6094
      %v6113 = vld [vmem:[%s4 + $0x1] sm:$0x1]
      %v6114 = vlaneseq
      %v6115 = vshrl.u32 %v6114, 7
      %v6116 = vsub.s32 0, %v6115
      %v6117 = vrot.slane %v6113, %v6116
      %v6118 = vadd.f32 %v6097, %v6117
      %v6119 = vadd.f32 %v6098, %v6117
      %v6120 = vadd.f32 %v6099, %v6117
      %v6121 = vadd.f32 %v6100, %v6117
      %v6122 = vadd.f32 %v6101, %v6117
      %v6123 = vadd.f32 %v6102, %v6117
      %v6124 = vadd.f32 %v6103, %v6117
      %v6125 = vadd.f32 %v6104, %v6117
      %v6126 = vadd.f32 %v6105, %v6117
      %v6127 = vadd.f32 %v6106, %v6117
      %v6128 = vadd.f32 %v6107, %v6117
      %v6129 = vadd.f32 %v6108, %v6117
      %v6130 = vadd.f32 %v6109, %v6117
      %v6131 = vadd.f32 %v6110, %v6117
      %v6132 = vadd.f32 %v6111, %v6117
      %v6133 = vadd.f32 %v6112, %v6117
      %v6134 = vld [vmem:[%s290] sm:$0xff]
      %v6135 = vld [vmem:[%s290 + $0x8] sm:$0xff]
      %v6136 = vld [vmem:[%s290 + $0x10] sm:$0xff]
      %v6137 = vld [vmem:[%s290 + $0x18] sm:$0xff]
      %v6138 = vld [vmem:[%s290 + $0x20] sm:$0xff]
      %v6139 = vld [vmem:[%s290 + $0x28] sm:$0xff]
      %v6140 = vld [vmem:[%s290 + $0x30] sm:$0xff]
      %v6141 = vld [vmem:[%s290 + $0x38] sm:$0xff]
      %v6142 = vld [vmem:[%s290 + $0x40] sm:$0xff]
      %v6143 = vld [vmem:[%s290 + $0x48] sm:$0xff]
      %v6144 = vld [vmem:[%s290 + $0x50] sm:$0xff]
      %v6145 = vld [vmem:[%s290 + $0x58] sm:$0xff]
      %v6146 = vld [vmem:[%s290 + $0x60] sm:$0xff]
      %v6147 = vld [vmem:[%s290 + $0x68] sm:$0xff]
      %v6148 = vld [vmem:[%s290 + $0x70] sm:$0xff]
      %v6149 = vld [vmem:[%s290 + $0x78] sm:$0xff]
      %v6150 = vadd.f32 %v6118, %v6134
      %v6151 = vadd.f32 %v6119, %v6135
      %v6152 = vadd.f32 %v6120, %v6136
      %v6153 = vadd.f32 %v6121, %v6137
      %v6154 = vadd.f32 %v6122, %v6138
      %v6155 = vadd.f32 %v6123, %v6139
      %v6156 = vadd.f32 %v6124, %v6140
      %v6157 = vadd.f32 %v6125, %v6141
      %v6158 = vadd.f32 %v6126, %v6142
      %v6159 = vadd.f32 %v6127, %v6143
      %v6160 = vadd.f32 %v6128, %v6144
      %v6161 = vadd.f32 %v6129, %v6145
      %v6162 = vadd.f32 %v6130, %v6146
      %v6163 = vadd.f32 %v6131, %v6147
      %v6164 = vadd.f32 %v6132, %v6148
      %v6165 = vadd.f32 %v6133, %v6149
      %6166 = vst.msk [vmem:[%s301] sm:$0xff] %vm414, %v6150
      %6167 = vst.msk [vmem:[%s301 + $0x8] sm:$0xff] %vm414, %v6151
      %6168 = vst.msk [vmem:[%s301 + $0x10] sm:$0xff] %vm414, %v6152
      %6169 = vst.msk [vmem:[%s301 + $0x18] sm:$0xff] %vm414, %v6153
      %6170 = vst.msk [vmem:[%s301 + $0x20] sm:$0xff] %vm414, %v6154
      %6171 = vst.msk [vmem:[%s301 + $0x28] sm:$0xff] %vm414, %v6155
      %6172 = vst.msk [vmem:[%s301 + $0x30] sm:$0xff] %vm414, %v6156
      %6173 = vst.msk [vmem:[%s301 + $0x38] sm:$0xff] %vm414, %v6157
      %6174 = vst.msk [vmem:[%s301 + $0x40] sm:$0xff] %vm414, %v6158
      %6175 = vst.msk [vmem:[%s301 + $0x48] sm:$0xff] %vm414, %v6159
      %6176 = vst.msk [vmem:[%s301 + $0x50] sm:$0xff] %vm414, %v6160
      %6177 = vst.msk [vmem:[%s301 + $0x58] sm:$0xff] %vm414, %v6161
      %6178 = vst.msk [vmem:[%s301 + $0x60] sm:$0xff] %vm414, %v6162
      %6179 = vst.msk [vmem:[%s301 + $0x68] sm:$0xff] %vm414, %v6163
      %6180 = vst.msk [vmem:[%s301 + $0x70] sm:$0xff] %vm414, %v6164
      %6181 = vst.msk [vmem:[%s301 + $0x78] sm:$0xff] %vm414, %v6165
      %s6182 = smul.u32 8, %s21
      %p6183 = scmp.lt.s32.totalorder %s20, 1
      %s6184 = scalar_select %p6183, %s20, 1
      %p6185 = scmp.lt.s32.totalorder %s6182, 15
      %s6186 = scalar_select %p6185, %s6182, 15
      %s6187 = smul.addr %s6186, 2
      %s6188 = smul.addr %s6184, 32
      %s6189 = sadd.s32 %s6187, %s6188
      %s6190 = smul.addr %s6189, 8
      %s6191 = scalar_lea.vmem %s5, %s6190
      // Predicated region
      $region49: #{tpu_custom_call.1} parent=39 // pred_check
        %p6192 = pneg %p167
      $region50: #{tpu_custom_call.1} parent=39 // pred_check_branch
        %6194 = sbr.rel (%p6192) target = $region52
      $region51: #{tpu_custom_call.1} parent=39 // pred_region
        %s6195 = smul.u32 8, %s21
      $region52: #{tpu_custom_call.1} parent=39 // pred_fallthru
        _
    $region40: #{tpu_custom_call.1} parent=5 // pred_fallthru
      _
    %p6196 = scmp.le.s32.totalorder 2, %s11
    // Predicated region
    $region53: #{tpu_custom_call.1} parent=5 // pred_check
      %p6197 = pneg %p6196
    $region54: #{tpu_custom_call.1} parent=5 // pred_check_branch
      %6199 = sbr.rel (%p6197) target = $region56
    $region55: #{tpu_custom_call.1} parent=5 // pred_region
      %s6200 = ssub.s32 %s11, 2
      // Predicated region
      $region57: #{tpu_custom_call.1} parent=55 // pred_check
        %p6201 = pneg %p173
      $region58: #{tpu_custom_call.1} parent=55 // pred_check_branch
        %6203 = sbr.rel (%p6201) target = $region60
      $region59: #{tpu_custom_call.1} parent=55 // pred_region
        %s6204 = smul.u32 8, %s23
        %p6205 = scmp.lt.s32.totalorder %s22, 1
        %s6206 = scalar_select %p6205, %s22, 1
        %p6207 = scmp.lt.s32.totalorder %s6204, 15
        %s6208 = scalar_select %p6207, %s6204, 15
        %s6209 = smul.addr %s6208, 2
        %s6210 = smul.addr %s6206, 32
        %s6211 = sadd.s32 %s6209, %s6210
        %s6212 = smul.addr %s6211, 8
        %s6213 = scalar_lea.vmem %s5, %s6212
      $region60: #{tpu_custom_call.1} parent=55 // pred_fallthru
        _
    $region56: #{tpu_custom_call.1} parent=5 // pred_fallthru
      _
  $region6: #{tpu_custom_call.1} parent=0 // loop_footer
    %s15 = sadd.s32 1, %s11
  $region7: #{tpu_custom_call.1} parent=0 // loop_footer_branch
    %10 = sbr.rel target = $region3
  $region8: #{tpu_custom_call.1} parent=0 // loop_exit
    _

// kernel: tpu_custom_call.1
$region0: #{tpu_custom_call.1}
  #allocation0 [shape = 'u32[]', space=smem, size = 0x4, offset = 0x4, fixed_abs, tag = 'smem constant byte address 0x4 - core index']
  #allocation1 [shape = 'u32[144,128]{1,0:T(1,128)}', space=vmem, size = 0x12000, scoped, tag = 'internal scratch']
  #allocation2 [shape = 'bf16[10,18,4]{2,1,0:T(8,128)(2,1)}', space=vmem, size = 0xf000, scoped, tag = 'scratch operand']
  #allocation3 [shape = 'bf16[10,16,384]{2,1,0:T(16,128)(2,1)}', space=vmem, size = 0x1e000, scoped, tag = 'scratch operand']
  %s0 = inlined_call_operand.vmem [shape: bf16[2,2,12,18,4], index: 0, kind: input, shape index: {}]
  %s1 = inlined_call_operand.vmem [shape: f32[2,16,16,4], index: 1, kind: input, shape index: {}]
  %s2 = inlined_call_operand.vmem [shape: bf16[1152,4], index: 2, kind: input, shape index: {}]
  %s3 = inlined_call_operand.vmem [shape: bf16[1152,4], index: 3, kind: input, shape index: {}]
  %s4 = inlined_call_operand.vmem [shape: f32[2,4], index: 4, kind: input, shape index: {}]
  %s5 = inlined_call_operand.vmem [shape: f32[2,16,16,4], index: 5, kind: output, shape index: {}]
  %s6 = sld [smem:[#allocation0]]
  $region61: #{tpu_custom_call.1} parent=0
    _
  %s8 = ssub.s32 1, %s6
  %s9 = scalar_select 0, %s8, %s6
  loop: start=0, step=1, limit=6
  $region2: #{tpu_custom_call.1} parent=0 // loop_pre_header
    _
  $region3: #{tpu_custom_call.1} parent=0 // loop_header
    %s11 = sphi 0, %s15
    %p12 = scmp.ge.s32.totalorder %s11, 6
    %s18 = sphi 0, %s30
    %s19 = sphi 0, %s26
    %s20 = sphi 0, %s18
    %s21 = sphi 0, %s19
    %s22 = sphi 0, %s20
    %s23 = sphi 0, %s21
    %s35 = sphi 0, %s37
    %s38 = sphi 0, %s35
    %s39 = sphi 0, %s38
    %s55 = sphi 0, %s39
    %s63 = sphi 0, %s65
    %s66 = sphi 0, %s63
    %s67 = sphi 0, %s66
    %s83 = sphi 0, %s67
    %s87 = sphi 0, %s87
    %s89 = sphi 0, %s87
    %s90 = sphi 0, %s89
    %s104 = sphi 0, %s90
    %s108 = sphi 0, %s108
    %s110 = sphi 0, %s108
    %s111 = sphi 0, %s110
    %s125 = sphi 0, %s111
    %s129 = sphi 0, %s129
    %s131 = sphi 0, %s129
    %s132 = sphi 0, %s131
    %s146 = sphi 0, %s132
    %s154 = sphi 0, %s156
    %s157 = sphi 0, %s154
    %s158 = sphi 0, %s157
    %s174 = sphi 0, %s158
  $region4: #{tpu_custom_call.1} parent=0 // loop_header_branch
    %14 = sbr.rel (%p12) target = $region8
  $region5: #{tpu_custom_call.1} parent=0 // loop_body
    %s16 = ssub.s32 %s11, 1
    %s17 = ssub.s32 %s11, 2
    %s24 = sadd.s32 1, %s19
    %p25 = scmp.ge.s32.totalorder %s24, 2
    %s26 = scalar_select %p25, 0, %s24
    %s27 = sadd.s32 1, %s18
    %s28 = scalar_select %p25, %s27, %s18
    %p29 = scmp.ge.s32.totalorder %s28, 2
    %s30 = scalar_select %p29, 0, %s28
    %s31 = ssub.s32 %s18, %s30
    %s32 = ssub.s32 %s19, %s26
    %s33 = sor.u32 %s31, %s32
    %p34 = scmp.eq.s32.totalorder %s33, 0
    %s36 = sadd.s32 %s35, 1
    %s37 = scalar_select %p34, %s35, %s36
    %p40 = pneg %p34
    %p41 = scmp.eq.s32.totalorder %s11, 3
    %p42 = por %p40, %p41
    %p43 = scmp.ne.s32.totalorder %s35, %s38
    %p44 = scmp.eq.s32.totalorder %s11, 0
    %p45 = por %p43, %p44
    %p46 = scmp.ne.s32.totalorder %s35, %s38
    %p47 = scmp.eq.s32.totalorder %s16, 3
    %p48 = por %p46, %p47
    %p49 = scmp.ne.s32.totalorder %s38, %s39
    %p50 = scmp.eq.s32.totalorder %s16, 0
    %p51 = por %p49, %p50
    %p52 = scmp.ne.s32.totalorder %s38, %s39
    %p53 = scmp.eq.s32.totalorder %s17, 3
    %p54 = por %p52, %p53
    %p56 = scmp.ne.s32.totalorder %s39, %s55
    %p57 = scmp.eq.s32.totalorder %s17, 0
    %p58 = por %p56, %p57
    %s59 = ssub.s32 %s18, %s30
    %s60 = ssub.s32 %s19, %s26
    %s61 = sor.u32 %s59, %s60
    %p62 = scmp.eq.s32.totalorder %s61, 0
    %s64 = sadd.s32 %s63, 1
    %s65 = scalar_select %p62, %s63, %s64
    %p68 = pneg %p62
    %p69 = scmp.eq.s32.totalorder %s11, 3
    %p70 = por %p68, %p69
    %p71 = scmp.ne.s32.totalorder %s63, %s66
    %p72 = scmp.eq.s32.totalorder %s11, 0
    %p73 = por %p71, %p72
    %p74 = scmp.ne.s32.totalorder %s63, %s66
    %p75 = scmp.eq.s32.totalorder %s16, 3
    %p76 = por %p74, %p75
    %p77 = scmp.ne.s32.totalorder %s66, %s67
    %p78 = scmp.eq.s32.totalorder %s16, 0
    %p79 = por %p77, %p78
    %p80 = scmp.ne.s32.totalorder %s66, %s67
    %p81 = scmp.eq.s32.totalorder %s17, 3
    %p82 = por %p80, %p81
    %p84 = scmp.ne.s32.totalorder %s67, %s83
    %p85 = scmp.eq.s32.totalorder %s17, 0
    %p86 = por %p84, %p85
    %s88 = sadd.s32 %s87, 1
    %p91 = scmp.eq.s32.totalorder %s11, 3
    %p92 = scmp.ne.s32.totalorder %s87, %s89
    %p93 = scmp.eq.s32.totalorder %s11, 0
    %p94 = por %p92, %p93
    %p95 = scmp.ne.s32.totalorder %s87, %s89
    %p96 = scmp.eq.s32.totalorder %s16, 3
    %p97 = por %p95, %p96
    %p98 = scmp.ne.s32.totalorder %s89, %s90
    %p99 = scmp.eq.s32.totalorder %s16, 0
    %p100 = por %p98, %p99
    %p101 = scmp.ne.s32.totalorder %s89, %s90
    %p102 = scmp.eq.s32.totalorder %s17, 3
    %p103 = por %p101, %p102
    %p105 = scmp.ne.s32.totalorder %s90, %s104
    %p106 = scmp.eq.s32.totalorder %s17, 0
    %p107 = por %p105, %p106
    %s109 = sadd.s32 %s108, 1
    %p112 = scmp.eq.s32.totalorder %s11, 3
    %p113 = scmp.ne.s32.totalorder %s108, %s110
    %p114 = scmp.eq.s32.totalorder %s11, 0
    %p115 = por %p113, %p114
    %p116 = scmp.ne.s32.totalorder %s108, %s110
    %p117 = scmp.eq.s32.totalorder %s16, 3
    %p118 = por %p116, %p117
    %p119 = scmp.ne.s32.totalorder %s110, %s111
    %p120 = scmp.eq.s32.totalorder %s16, 0
    %p121 = por %p119, %p120
    %p122 = scmp.ne.s32.totalorder %s110, %s111
    %p123 = scmp.eq.s32.totalorder %s17, 3
    %p124 = por %p122, %p123
    %p126 = scmp.ne.s32.totalorder %s111, %s125
    %p127 = scmp.eq.s32.totalorder %s17, 0
    %p128 = por %p126, %p127
    %s130 = sadd.s32 %s129, 1
    %p133 = scmp.eq.s32.totalorder %s11, 3
    %p134 = scmp.ne.s32.totalorder %s129, %s131
    %p135 = scmp.eq.s32.totalorder %s11, 0
    %p136 = por %p134, %p135
    %p137 = scmp.ne.s32.totalorder %s129, %s131
    %p138 = scmp.eq.s32.totalorder %s16, 3
    %p139 = por %p137, %p138
    %p140 = scmp.ne.s32.totalorder %s131, %s132
    %p141 = scmp.eq.s32.totalorder %s16, 0
    %p142 = por %p140, %p141
    %p143 = scmp.ne.s32.totalorder %s131, %s132
    %p144 = scmp.eq.s32.totalorder %s17, 3
    %p145 = por %p143, %p144
    %p147 = scmp.ne.s32.totalorder %s132, %s146
    %p148 = scmp.eq.s32.totalorder %s17, 0
    %p149 = por %p147, %p148
    %s150 = ssub.s32 %s18, %s30
    %s151 = ssub.s32 %s19, %s26
    %s152 = sor.u32 %s150, %s151
    %p153 = scmp.eq.s32.totalorder %s152, 0
    %s155 = sadd.s32 %s154, 1
    %s156 = scalar_select %p153, %s154, %s155
    %p159 = pneg %p153
    %p160 = scmp.eq.s32.totalorder %s11, 3
    %p161 = por %p159, %p160
    %p162 = scmp.ne.s32.totalorder %s154, %s157
    %p163 = scmp.eq.s32.totalorder %s11, 0
    %p164 = por %p162, %p163
    %p165 = scmp.ne.s32.totalorder %s154, %s157
    %p166 = scmp.eq.s32.totalorder %s16, 3
    %p167 = por %p165, %p166
    %p168 = scmp.ne.s32.totalorder %s157, %s158
    %p169 = scmp.eq.s32.totalorder %s16, 0
    %p170 = por %p168, %p169
    %p171 = scmp.ne.s32.totalorder %s157, %s158
    %p172 = scmp.eq.s32.totalorder %s17, 3
    %p173 = por %p171, %p172
    %p175 = scmp.ne.s32.totalorder %s158, %s174
    %p176 = scmp.eq.s32.totalorder %s17, 0
    %p177 = por %p175, %p176
    %p178 = scmp.le.s32.totalorder 1, %s11
    %p179 = scmp.lt.s32.totalorder %s11, 5
    %p180 = pnand %p178, %p179
    %p181 = pneg %p180
    // Predicated region
    $region9: #{tpu_custom_call.1} parent=5 // pred_check
      _
    $region10: #{tpu_custom_call.1} parent=5 // pred_check_branch
      %183 = sbr.rel (%p180) target = $region12
    $region11: #{tpu_custom_call.1} parent=5 // pred_region
      %s184 = ssub.s32 %s11, 1
      // Predicated region
      $region13: #{tpu_custom_call.1} parent=11 // pred_check
        %p185 = pneg %p100
      $region14: #{tpu_custom_call.1} parent=11 // pred_check_branch
        %187 = sbr.rel (%p185) target = $region16
      $region15: #{tpu_custom_call.1} parent=11 // pred_region
        _
      $region16: #{tpu_custom_call.1} parent=11 // pred_fallthru
        _
      // Predicated region
      $region17: #{tpu_custom_call.1} parent=11 // pred_check
        %p188 = pneg %p121
      $region18: #{tpu_custom_call.1} parent=11 // pred_check_branch
        %190 = sbr.rel (%p188) target = $region20
      $region19: #{tpu_custom_call.1} parent=11 // pred_region
        _
      $region20: #{tpu_custom_call.1} parent=11 // pred_fallthru
        _
      // Predicated region
      $region21: #{tpu_custom_call.1} parent=11 // pred_check
        %p191 = pneg %p142
      $region22: #{tpu_custom_call.1} parent=11 // pred_check_branch
        %193 = sbr.rel (%p191) target = $region24
      $region23: #{tpu_custom_call.1} parent=11 // pred_region
        _
      $region24: #{tpu_custom_call.1} parent=11 // pred_fallthru
        _
    $region12: #{tpu_custom_call.1} parent=5 // pred_fallthru
      _
    %p194 = scmp.lt.s32.totalorder %s11, 4
    // Predicated region
    $region25: #{tpu_custom_call.1} parent=5 // pred_check
      %p195 = pneg %p194
    $region26: #{tpu_custom_call.1} parent=5 // pred_check_branch
      %197 = sbr.rel (%p195) target = $region28
    $region27: #{tpu_custom_call.1} parent=5 // pred_region
      // Predicated region
      $region29: #{tpu_custom_call.1} parent=27 // pred_check
        %p198 = pneg %p45
      $region30: #{tpu_custom_call.1} parent=27 // pred_check_branch
        %200 = sbr.rel (%p198) target = $region32
      $region31: #{tpu_custom_call.1} parent=27 // pred_region
        %p201 = scmp.lt.s32.totalorder %s18, 1
        %s202 = scalar_select %p201, %s18, 1
        %p203 = scmp.lt.s32.totalorder %s19, 1
        %s204 = scalar_select %p203, %s19, 1
        %s205 = smul.addr %s204, 36
        %s206 = smul.addr %s202, 72
        %s207 = sadd.s32 %s205, %s206
        %s208 = smul.addr %s207, 4
        %s209 = scalar_lea.vmem %s0, %s208
      $region32: #{tpu_custom_call.1} parent=27 // pred_fallthru
        _
      // Predicated region
      $region33: #{tpu_custom_call.1} parent=27 // pred_check
        %p210 = pneg %p73
      $region34: #{tpu_custom_call.1} parent=27 // pred_check_branch
        %212 = sbr.rel (%p210) target = $region36
      $region35: #{tpu_custom_call.1} parent=27 // pred_region
        %s213 = smul.u32 8, %s19
        %p214 = scmp.lt.s32.totalorder %s18, 1
        %s215 = scalar_select %p214, %s18, 1
        %p216 = scmp.lt.s32.totalorder %s213, 15
        %s217 = scalar_select %p216, %s213, 15
        %s218 = smul.addr %s217, 2
        %s219 = smul.addr %s215, 32
        %s220 = sadd.s32 %s218, %s219
        %s221 = smul.addr %s220, 8
        %s222 = scalar_lea.vmem %s1, %s221
        %s223 = smul.u32 8, %s19
      $region36: #{tpu_custom_call.1} parent=27 // pred_fallthru
        _
    $region28: #{tpu_custom_call.1} parent=5 // pred_fallthru
      _
    %p224 = scmp.le.s32.totalorder 1, %s11
    %p225 = scmp.lt.s32.totalorder %s11, 5
    %p226 = pnand %p224, %p225
    %p227 = pneg %p226
    // Predicated region
    $region37: #{tpu_custom_call.1} parent=5 // pred_check
      _
    $region38: #{tpu_custom_call.1} parent=5 // pred_check_branch
      %229 = sbr.rel (%p226) target = $region40
    $region39: #{tpu_custom_call.1} parent=5 // pred_region
      %s230 = ssub.s32 %s11, 1
      %p231 = scmp.lt.s32.totalorder %s20, 1
      %s232 = scalar_select %p231, %s20, 1
      %p233 = scmp.lt.s32.totalorder %s21, 1
      %s234 = scalar_select %p233, %s21, 1
      %s235 = smul.addr %s234, 36
      %s236 = smul.addr %s232, 72
      %s237 = sadd.s32 %s235, %s236
      %s238 = smul.addr %s237, 4
      %s239 = scalar_lea.vmem %s0, %s238
      %p240 = pneg %p51
      %p241 = pneg %p48
      %s242 = smul.u32 8, %s21
      %p243 = scmp.lt.s32.totalorder %s20, 1
      %s244 = scalar_select %p243, %s20, 1
      %p245 = scmp.lt.s32.totalorder %s242, 15
      %s246 = scalar_select %p245, %s242, 15
      %s247 = smul.addr %s246, 2
      %s248 = smul.addr %s244, 32
      %s249 = sadd.s32 %s247, %s248
      %s250 = smul.addr %s249, 8
      %s251 = scalar_lea.vmem %s1, %s250
      %p252 = pneg %p79
      %p253 = pneg %p76
      %p254 = pneg %p100
      %p255 = pneg %p97
      %p256 = pneg %p121
      %p257 = pneg %p118
      %p258 = pneg %p142
      %p259 = pneg %p139
      %p260 = pneg %p170
      %p261 = pneg %p167
      %s262 = smul.u32 8, %s21
      %p263 = scmp.lt.s32.totalorder %s20, 1
      %s264 = scalar_select %p263, %s20, 1
      %p265 = scmp.lt.s32.totalorder %s262, 15
      %s266 = scalar_select %p265, %s262, 15
      %s267 = smul.addr %s266, 2
      %s268 = smul.addr %s264, 32
      %s269 = sadd.s32 %s267, %s268
      %s270 = smul.addr %s269, 8
      %s271 = scalar_lea.vmem %s5, %s270
      %p272 = scmp.lt.s32.totalorder %s20, 1
      %s273 = scalar_select %p272, %s20, 1
      %p274 = scmp.lt.s32.totalorder %s21, 1
      %s275 = scalar_select %p274, %s21, 1
      %s276 = smul.addr %s275, 36
      %s277 = smul.addr %s273, 72
      %s278 = sadd.s32 %s276, %s277
      %s279 = smul.addr %s278, 4
      %s280 = scalar_lea.vmem %s0, %s279
      %s281 = smul.u32 8, %s21
      %p282 = scmp.lt.s32.totalorder %s20, 1
      %s283 = scalar_select %p282, %s20, 1
      %p284 = scmp.lt.s32.totalorder %s281, 15
      %s285 = scalar_select %p284, %s281, 15
      %s286 = smul.addr %s285, 2
      %s287 = smul.addr %s283, 32
      %s288 = sadd.s32 %s286, %s287
      %s289 = smul.addr %s288, 8
      %s290 = scalar_lea.vmem %s1, %s289
      %s291 = smul.u32 8, %s21
      %s292 = smul.u32 8, %s21
      %p293 = scmp.lt.s32.totalorder %s20, 1
      %s294 = scalar_select %p293, %s20, 1
      %p295 = scmp.lt.s32.totalorder %s292, 15
      %s296 = scalar_select %p295, %s292, 15
      %s297 = smul.addr %s296, 2
      %s298 = smul.addr %s294, 32
      %s299 = sadd.s32 %s297, %s298
      %s300 = smul.addr %s299, 8
      %s301 = scalar_lea.vmem %s5, %s300
      %s302 = smul.u32 8, %s21
      %304 = vst [vmem:[#allocation3] sm:$0xff] 0
      %305 = vst [vmem:[#allocation3 + $0x8] sm:$0xff] 0
      %306 = vst [vmem:[#allocation3 + $0x10] sm:$0xff] 0
      %307 = vst [vmem:[#allocation3 + $0x18] sm:$0xff] 0
      %308 = vst [vmem:[#allocation3 + $0x20] sm:$0xff] 0
      %309 = vst [vmem:[#allocation3 + $0x28] sm:$0xff] 0
      %310 = vst [vmem:[#allocation3 + $0x30] sm:$0xff] 0
      %311 = vst [vmem:[#allocation3 + $0x38] sm:$0xff] 0
      %312 = vst [vmem:[#allocation3 + $0x40] sm:$0xff] 0
      %313 = vst [vmem:[#allocation3 + $0x48] sm:$0xff] 0
      %314 = vst [vmem:[#allocation3 + $0x50] sm:$0xff] 0
      %315 = vst [vmem:[#allocation3 + $0x58] sm:$0xff] 0
      %316 = vst [vmem:[#allocation3 + $0x60] sm:$0xff] 0
      %317 = vst [vmem:[#allocation3 + $0x68] sm:$0xff] 0
      %318 = vst [vmem:[#allocation3 + $0x70] sm:$0xff] 0
      %319 = vst [vmem:[#allocation3 + $0x78] sm:$0xff] 0
      %320 = vst [vmem:[#allocation3 + $0x80] sm:$0xff] 0
      %321 = vst [vmem:[#allocation3 + $0x88] sm:$0xff] 0
      %322 = vst [vmem:[#allocation3 + $0x90] sm:$0xff] 0
      %323 = vst [vmem:[#allocation3 + $0x98] sm:$0xff] 0
      %324 = vst [vmem:[#allocation3 + $0xa0] sm:$0xff] 0
      %325 = vst [vmem:[#allocation3 + $0xa8] sm:$0xff] 0
      %326 = vst [vmem:[#allocation3 + $0xb0] sm:$0xff] 0
      %327 = vst [vmem:[#allocation3 + $0xb8] sm:$0xff] 0
      %328 = vst [vmem:[#allocation3 + $0xc0] sm:$0xff] 0
      %329 = vst [vmem:[#allocation3 + $0xc8] sm:$0xff] 0
      %330 = vst [vmem:[#allocation3 + $0xd0] sm:$0xff] 0
      %331 = vst [vmem:[#allocation3 + $0xd8] sm:$0xff] 0
      %332 = vst [vmem:[#allocation3 + $0xe0] sm:$0xff] 0
      %333 = vst [vmem:[#allocation3 + $0xe8] sm:$0xff] 0
      %v334 = vld [vmem:[%s280] sm:$0xf]
      %v335 = vld [vmem:[%s280 + $0x4] sm:$0xf]
      %v336 = vld [vmem:[%s280 + $0xc] sm:$0xf]
      %v337 = vld [vmem:[%s280 + $0x10] sm:$0xf]
      %v338 = vld [vmem:[%s280 + $0x18] sm:$0xf]
      %v339 = vld [vmem:[%s280 + $0x1c] sm:$0xf]
      %v340 = vld [vmem:[%s280 + $0x24] sm:$0xf]
      %v341 = vld [vmem:[%s280 + $0x28] sm:$0xf]
      %v342 = vld [vmem:[%s280 + $0x30] sm:$0xf]
      %v343 = vld [vmem:[%s280 + $0x34] sm:$0xf]
      %v344 = vld [vmem:[%s280 + $0x3c] sm:$0xf]
      %v345 = vld [vmem:[%s280 + $0x40] sm:$0xf]
      %v346 = vld [vmem:[%s280 + $0x48] sm:$0xf]
      %v347 = vld [vmem:[%s280 + $0x4c] sm:$0xf]
      %v348 = vld [vmem:[%s280 + $0x54] sm:$0xf]
      %v349 = vld [vmem:[%s280 + $0x58] sm:$0xf]
      %v350 = vld [vmem:[%s280 + $0x60] sm:$0xf]
      %v351 = vld [vmem:[%s280 + $0x64] sm:$0xf]
      %v352 = vld [vmem:[%s280 + $0x6c] sm:$0xf]
      %v353 = vld [vmem:[%s280 + $0x70] sm:$0xf]
      %v374 = vunpack.c.l.b16 %v334
      %v375 = vunpack.c.l.b16 %v335
      %v376 = vunpack.c.l.b16 %v336
      %v377 = vunpack.c.l.b16 %v337
      %v378 = vunpack.c.l.b16 %v338
      %v379 = vunpack.c.l.b16 %v339
      %v380 = vunpack.c.l.b16 %v340
      %v381 = vunpack.c.l.b16 %v341
      %v382 = vunpack.c.l.b16 %v342
      %v383 = vunpack.c.l.b16 %v343
      %v384 = vunpack.c.l.b16 %v344
      %v385 = vunpack.c.l.b16 %v345
      %v386 = vunpack.c.l.b16 %v346
      %v387 = vunpack.c.l.b16 %v347
      %v388 = vunpack.c.l.b16 %v348
      %v389 = vunpack.c.l.b16 %v349
      %v390 = vunpack.c.l.b16 %v350
      %v391 = vunpack.c.l.b16 %v351
      %v392 = vunpack.c.l.b16 %v352
      %v393 = vunpack.c.l.b16 %v353
      %v394 = vpack.c.b16 %v375, %v374
      %v395 = vpack.c.b16 %v377, %v376
      %v396 = vpack.c.b16 %v379, %v378
      %v397 = vpack.c.b16 %v381, %v380
      %v398 = vpack.c.b16 %v383, %v382
      %v399 = vpack.c.b16 %v385, %v384
      %v400 = vpack.c.b16 %v387, %v386
      %v401 = vpack.c.b16 %v389, %v388
      %v402 = vpack.c.b16 %v391, %v390
      %v403 = vpack.c.b16 %v393, %v392
      %vm414 = vcmask 31744
      %415 = vst.msk [vmem:[#allocation3] sm:$0xff] %vm414, %v394
      %416 = vst.msk [vmem:[#allocation3 + $0x18] sm:$0xff] %vm414, %v395
      %417 = vst.msk [vmem:[#allocation3 + $0x30] sm:$0xff] %vm414, %v396
      %418 = vst.msk [vmem:[#allocation3 + $0x48] sm:$0xff] %vm414, %v397
      %419 = vst.msk [vmem:[#allocation3 + $0x60] sm:$0xff] %vm414, %v398
      %420 = vst.msk [vmem:[#allocation3 + $0x78] sm:$0xff] %vm414, %v399
      %421 = vst.msk [vmem:[#allocation3 + $0x90] sm:$0xff] %vm414, %v400
      %422 = vst.msk [vmem:[#allocation3 + $0xa8] sm:$0xff] %vm414, %v401
      %423 = vst.msk [vmem:[#allocation3 + $0xc0] sm:$0xff] %vm414, %v402
      %424 = vst.msk [vmem:[#allocation3 + $0xd8] sm:$0xff] %vm414, %v403
      %v425 = vld [vmem:[%s280] sm:$0xf]
      %v426 = vld [vmem:[%s280 + $0x4] sm:$0xf]
      %v427 = vld [vmem:[%s280 + $0x8] sm:$0x1]
      %v428 = vld [vmem:[%s280 + $0xc] sm:$0xf]
      %v429 = vld [vmem:[%s280 + $0x10] sm:$0xf]
      %v430 = vld [vmem:[%s280 + $0x14] sm:$0x1]
      %v431 = vld [vmem:[%s280 + $0x18] sm:$0xf]
      %v432 = vld [vmem:[%s280 + $0x1c] sm:$0xf]
      %v433 = vld [vmem:[%s280 + $0x20] sm:$0x1]
      %v434 = vld [vmem:[%s280 + $0x24] sm:$0xf]
      %v435 = vld [vmem:[%s280 + $0x28] sm:$0xf]
      %v436 = vld [vmem:[%s280 + $0x2c] sm:$0x1]
      %v437 = vld [vmem:[%s280 + $0x30] sm:$0xf]
      %v438 = vld [vmem:[%s280 + $0x34] sm:$0xf]
      %v439 = vld [vmem:[%s280 + $0x38] sm:$0x1]
      %v440 = vld [vmem:[%s280 + $0x3c] sm:$0xf]
      %v441 = vld [vmem:[%s280 + $0x40] sm:$0xf]
      %v442 = vld [vmem:[%s280 + $0x44] sm:$0x1]
      %v443 = vld [vmem:[%s280 + $0x48] sm:$0xf]
      %v444 = vld [vmem:[%s280 + $0x4c] sm:$0xf]
      %v445 = vld [vmem:[%s280 + $0x50] sm:$0x1]
      %v446 = vld [vmem:[%s280 + $0x54] sm:$0xf]
      %v447 = vld [vmem:[%s280 + $0x58] sm:$0xf]
      %v448 = vld [vmem:[%s280 + $0x5c] sm:$0x1]
      %v449 = vld [vmem:[%s280 + $0x60] sm:$0xf]
      %v450 = vld [vmem:[%s280 + $0x64] sm:$0xf]
      %v451 = vld [vmem:[%s280 + $0x68] sm:$0x1]
      %v452 = vld [vmem:[%s280 + $0x6c] sm:$0xf]
      %v453 = vld [vmem:[%s280 + $0x70] sm:$0xf]
      %v454 = vld [vmem:[%s280 + $0x74] sm:$0x1]
      %v485 = vunpack.c.l.b16 %v425
      %v486 = vunpack.c.l.b16 %v426
      %v487 = vunpack.c.l.b16 %v427
      %v488 = vunpack.c.l.b16 %v428
      %v489 = vunpack.c.l.b16 %v429
      %v490 = vunpack.c.l.b16 %v430
      %v491 = vunpack.c.l.b16 %v431
      %v492 = vunpack.c.l.b16 %v432
      %v493 = vunpack.c.l.b16 %v433
      %v494 = vunpack.c.l.b16 %v434
      %v495 = vunpack.c.l.b16 %v435
      %v496 = vunpack.c.l.b16 %v436
      %v497 = vunpack.c.l.b16 %v437
      %v498 = vunpack.c.l.b16 %v438
      %v499 = vunpack.c.l.b16 %v439
      %v500 = vunpack.c.l.b16 %v440
      %v501 = vunpack.c.l.b16 %v441
      %v502 = vunpack.c.l.b16 %v442
      %v503 = vunpack.c.l.b16 %v443
      %v504 = vunpack.c.l.b16 %v444
      %v505 = vunpack.c.l.b16 %v445
      %v506 = vunpack.c.l.b16 %v446
      %v507 = vunpack.c.l.b16 %v447
      %v508 = vunpack.c.l.b16 %v448
      %v509 = vunpack.c.l.b16 %v449
      %v510 = vunpack.c.l.b16 %v450
      %v511 = vunpack.c.l.b16 %v451
      %v512 = vunpack.c.l.b16 %v452
      %v513 = vunpack.c.l.b16 %v453
      %v514 = vunpack.c.l.b16 %v454
      %v515 = vpack.c.b16 %v486, %v485
      %v516 = vpack.c.b16 %v487, %v487
      %v517 = vpack.c.b16 %v489, %v488
      %v518 = vpack.c.b16 %v490, %v490
      %v519 = vpack.c.b16 %v492, %v491
      %v520 = vpack.c.b16 %v493, %v493
      %v521 = vpack.c.b16 %v495, %v494
      %v522 = vpack.c.b16 %v496, %v496
      %v523 = vpack.c.b16 %v498, %v497
      %v524 = vpack.c.b16 %v499, %v499
      %v525 = vpack.c.b16 %v501, %v500
      %v526 = vpack.c.b16 %v502, %v502
      %v527 = vpack.c.b16 %v504, %v503
      %v528 = vpack.c.b16 %v505, %v505
      %v529 = vpack.c.b16 %v507, %v506
      %v530 = vpack.c.b16 %v508, %v508
      %v531 = vpack.c.b16 %v510, %v509
      %v532 = vpack.c.b16 %v511, %v511
      %v533 = vpack.c.b16 %v513, %v512
      %v534 = vpack.c.b16 %v514, %v514
      %vm535 = vsmask.f32 7424
      %v537 = vshrl.u32 %v515, 16
      %v539 = vshll.u32 %v515, 16
      %v541 = vrot.slane %v539, 1
      %v542 = vor.u32 %v537, %v541
      %v544 = vshll.u32 %v516, 16
      %v546 = vrot.slane %v544, 1
      %v547 = vsel %vm535, %v542, %v546
      %v549 = vshrl.u32 %v517, 16
      %v551 = vshll.u32 %v517, 16
      %v553 = vrot.slane %v551, 1
      %v554 = vor.u32 %v549, %v553
      %v556 = vshll.u32 %v518, 16
      %v558 = vrot.slane %v556, 1
      %v559 = vsel %vm535, %v554, %v558
      %v561 = vshrl.u32 %v519, 16
      %v563 = vshll.u32 %v519, 16
      %v565 = vrot.slane %v563, 1
      %v566 = vor.u32 %v561, %v565
      %v568 = vshll.u32 %v520, 16
      %v570 = vrot.slane %v568, 1
      %v571 = vsel %vm535, %v566, %v570
      %v573 = vshrl.u32 %v521, 16
      %v575 = vshll.u32 %v521, 16
      %v577 = vrot.slane %v575, 1
      %v578 = vor.u32 %v573, %v577
      %v580 = vshll.u32 %v522, 16
      %v582 = vrot.slane %v580, 1
      %v583 = vsel %vm535, %v578, %v582
      %v585 = vshrl.u32 %v523, 16
      %v587 = vshll.u32 %v523, 16
      %v589 = vrot.slane %v587, 1
      %v590 = vor.u32 %v585, %v589
      %v592 = vshll.u32 %v524, 16
      %v594 = vrot.slane %v592, 1
      %v595 = vsel %vm535, %v590, %v594
      %v597 = vshrl.u32 %v525, 16
      %v599 = vshll.u32 %v525, 16
      %v601 = vrot.slane %v599, 1
      %v602 = vor.u32 %v597, %v601
      %v604 = vshll.u32 %v526, 16
      %v606 = vrot.slane %v604, 1
      %v607 = vsel %vm535, %v602, %v606
      %v609 = vshrl.u32 %v527, 16
      %v611 = vshll.u32 %v527, 16
      %v613 = vrot.slane %v611, 1
      %v614 = vor.u32 %v609, %v613
      %v616 = vshll.u32 %v528, 16
      %v618 = vrot.slane %v616, 1
      %v619 = vsel %vm535, %v614, %v618
      %v621 = vshrl.u32 %v529, 16
      %v623 = vshll.u32 %v529, 16
      %v625 = vrot.slane %v623, 1
      %v626 = vor.u32 %v621, %v625
      %v628 = vshll.u32 %v530, 16
      %v630 = vrot.slane %v628, 1
      %v631 = vsel %vm535, %v626, %v630
      %v633 = vshrl.u32 %v531, 16
      %v635 = vshll.u32 %v531, 16
      %v637 = vrot.slane %v635, 1
      %v638 = vor.u32 %v633, %v637
      %v640 = vshll.u32 %v532, 16
      %v642 = vrot.slane %v640, 1
      %v643 = vsel %vm535, %v638, %v642
      %v645 = vshrl.u32 %v533, 16
      %v647 = vshll.u32 %v533, 16
      %v649 = vrot.slane %v647, 1
      %v650 = vor.u32 %v645, %v649
      %v652 = vshll.u32 %v534, 16
      %v654 = vrot.slane %v652, 1
      %v655 = vsel %vm535, %v650, %v654
      %666 = vst.msk [vmem:[#allocation3 + $0x8] sm:$0xff] %vm414, %v547
      %667 = vst.msk [vmem:[#allocation3 + $0x20] sm:$0xff] %vm414, %v559
      %668 = vst.msk [vmem:[#allocation3 + $0x38] sm:$0xff] %vm414, %v571
      %669 = vst.msk [vmem:[#allocation3 + $0x50] sm:$0xff] %vm414, %v583
      %670 = vst.msk [vmem:[#allocation3 + $0x68] sm:$0xff] %vm414, %v595
      %671 = vst.msk [vmem:[#allocation3 + $0x80] sm:$0xff] %vm414, %v607
      %672 = vst.msk [vmem:[#allocation3 + $0x98] sm:$0xff] %vm414, %v619
      %673 = vst.msk [vmem:[#allocation3 + $0xb0] sm:$0xff] %vm414, %v631
      %674 = vst.msk [vmem:[#allocation3 + $0xc8] sm:$0xff] %vm414, %v643
      %675 = vst.msk [vmem:[#allocation3 + $0xe0] sm:$0xff] %vm414, %v655
      %v676 = vld [vmem:[%s280] sm:$0xe]
      %v677 = vld [vmem:[%s280 + $0x4] sm:$0xf]
      %v678 = vld [vmem:[%s280 + $0x8] sm:$0x1]
      %v679 = vld [vmem:[%s280 + $0xc] sm:$0xe]
      %v680 = vld [vmem:[%s280 + $0x10] sm:$0xf]
      %v681 = vld [vmem:[%s280 + $0x14] sm:$0x1]
      %v682 = vld [vmem:[%s280 + $0x18] sm:$0xe]
      %v683 = vld [vmem:[%s280 + $0x1c] sm:$0xf]
      %v684 = vld [vmem:[%s280 + $0x20] sm:$0x1]
      %v685 = vld [vmem:[%s280 + $0x24] sm:$0xe]
      %v686 = vld [vmem:[%s280 + $0x28] sm:$0xf]
      %v687 = vld [vmem:[%s280 + $0x2c] sm:$0x1]
      %v688 = vld [vmem:[%s280 + $0x30] sm:$0xe]
      %v689 = vld [vmem:[%s280 + $0x34] sm:$0xf]
      %v690 = vld [vmem:[%s280 + $0x38] sm:$0x1]
      %v691 = vld [vmem:[%s280 + $0x3c] sm:$0xe]
      %v692 = vld [vmem:[%s280 + $0x40] sm:$0xf]
      %v693 = vld [vmem:[%s280 + $0x44] sm:$0x1]
      %v694 = vld [vmem:[%s280 + $0x48] sm:$0xe]
      %v695 = vld [vmem:[%s280 + $0x4c] sm:$0xf]
      %v696 = vld [vmem:[%s280 + $0x50] sm:$0x1]
      %v697 = vld [vmem:[%s280 + $0x54] sm:$0xe]
      %v698 = vld [vmem:[%s280 + $0x58] sm:$0xf]
      %v699 = vld [vmem:[%s280 + $0x5c] sm:$0x1]
      %v700 = vld [vmem:[%s280 + $0x60] sm:$0xe]
      %v701 = vld [vmem:[%s280 + $0x64] sm:$0xf]
      %v702 = vld [vmem:[%s280 + $0x68] sm:$0x1]
      %v703 = vld [vmem:[%s280 + $0x6c] sm:$0xe]
      %v704 = vld [vmem:[%s280 + $0x70] sm:$0xf]
      %v705 = vld [vmem:[%s280 + $0x74] sm:$0x1]
      %v736 = vunpack.c.l.b16 %v676
      %v737 = vunpack.c.l.b16 %v677
      %v738 = vunpack.c.l.b16 %v678
      %v739 = vunpack.c.l.b16 %v679
      %v740 = vunpack.c.l.b16 %v680
      %v741 = vunpack.c.l.b16 %v681
      %v742 = vunpack.c.l.b16 %v682
      %v743 = vunpack.c.l.b16 %v683
      %v744 = vunpack.c.l.b16 %v684
      %v745 = vunpack.c.l.b16 %v685
      %v746 = vunpack.c.l.b16 %v686
      %v747 = vunpack.c.l.b16 %v687
      %v748 = vunpack.c.l.b16 %v688
      %v749 = vunpack.c.l.b16 %v689
      %v750 = vunpack.c.l.b16 %v690
      %v751 = vunpack.c.l.b16 %v691
      %v752 = vunpack.c.l.b16 %v692
      %v753 = vunpack.c.l.b16 %v693
      %v754 = vunpack.c.l.b16 %v694
      %v755 = vunpack.c.l.b16 %v695
      %v756 = vunpack.c.l.b16 %v696
      %v757 = vunpack.c.l.b16 %v697
      %v758 = vunpack.c.l.b16 %v698
      %v759 = vunpack.c.l.b16 %v699
      %v760 = vunpack.c.l.b16 %v700
      %v761 = vunpack.c.l.b16 %v701
      %v762 = vunpack.c.l.b16 %v702
      %v763 = vunpack.c.l.b16 %v703
      %v764 = vunpack.c.l.b16 %v704
      %v765 = vunpack.c.l.b16 %v705
      %v766 = vpack.c.b16 %v737, %v736
      %v767 = vpack.c.b16 %v738, %v738
      %v768 = vpack.c.b16 %v740, %v739
      %v769 = vpack.c.b16 %v741, %v741
      %v770 = vpack.c.b16 %v743, %v742
      %v771 = vpack.c.b16 %v744, %v744
      %v772 = vpack.c.b16 %v746, %v745
      %v773 = vpack.c.b16 %v747, %v747
      %v774 = vpack.c.b16 %v749, %v748
      %v775 = vpack.c.b16 %v750, %v750
      %v776 = vpack.c.b16 %v752, %v751
      %v777 = vpack.c.b16 %v753, %v753
      %v778 = vpack.c.b16 %v755, %v754
      %v779 = vpack.c.b16 %v756, %v756
      %v780 = vpack.c.b16 %v758, %v757
      %v781 = vpack.c.b16 %v759, %v759
      %v782 = vpack.c.b16 %v761, %v760
      %v783 = vpack.c.b16 %v762, %v762
      %v784 = vpack.c.b16 %v764, %v763
      %v785 = vpack.c.b16 %v765, %v765
      %vm786 = vcmask 1046528
      %v787 = vrot.slane %v766, 1
      %v788 = vrot.slane %v767, 1
      %v789 = vsel %vm786, %v787, %v788
      %v790 = vrot.slane %v768, 1
      %v791 = vrot.slane %v769, 1
      %v792 = vsel %vm786, %v790, %v791
      %v793 = vrot.slane %v770, 1
      %v794 = vrot.slane %v771, 1
      %v795 = vsel %vm786, %v793, %v794
      %v796 = vrot.slane %v772, 1
      %v797 = vrot.slane %v773, 1
      %v798 = vsel %vm786, %v796, %v797
      %v799 = vrot.slane %v774, 1
      %v800 = vrot.slane %v775, 1
      %v801 = vsel %vm786, %v799, %v800
      %v802 = vrot.slane %v776, 1
      %v803 = vrot.slane %v777, 1
      %v804 = vsel %vm786, %v802, %v803
      %v805 = vrot.slane %v778, 1
      %v806 = vrot.slane %v779, 1
      %v807 = vsel %vm786, %v805, %v806
      %v808 = vrot.slane %v780, 1
      %v809 = vrot.slane %v781, 1
      %v810 = vsel %vm786, %v808, %v809
      %v811 = vrot.slane %v782, 1
      %v812 = vrot.slane %v783, 1
      %v813 = vsel %vm786, %v811, %v812
      %v814 = vrot.slane %v784, 1
      %v815 = vrot.slane %v785, 1
      %v816 = vsel %vm786, %v814, %v815
      %827 = vst.msk [vmem:[#allocation3 + $0x10] sm:$0xff] %vm414, %v789
      %828 = vst.msk [vmem:[#allocation3 + $0x28] sm:$0xff] %vm414, %v792
      %829 = vst.msk [vmem:[#allocation3 + $0x40] sm:$0xff] %vm414, %v795
      %830 = vst.msk [vmem:[#allocation3 + $0x58] sm:$0xff] %vm414, %v798
      %831 = vst.msk [vmem:[#allocation3 + $0x70] sm:$0xff] %vm414, %v801
      %832 = vst.msk [vmem:[#allocation3 + $0x88] sm:$0xff] %vm414, %v804
      %833 = vst.msk [vmem:[#allocation3 + $0xa0] sm:$0xff] %vm414, %v807
      %834 = vst.msk [vmem:[#allocation3 + $0xb8] sm:$0xff] %vm414, %v810
      %835 = vst.msk [vmem:[#allocation3 + $0xd0] sm:$0xff] %vm414, %v813
      %836 = vst.msk [vmem:[#allocation3 + $0xe8] sm:$0xff] %vm414, %v816
      %v837 = vld [vmem:[#allocation3] sm:$0xff]
      %v838 = vld [vmem:[#allocation3 + $0x8] sm:$0xff]
      %v839 = vld [vmem:[#allocation3 + $0x10] sm:$0xff]
      %v840 = vld [vmem:[#allocation3 + $0x18] sm:$0xff]
      %v841 = vld [vmem:[#allocation3 + $0x20] sm:$0xff]
      %v842 = vld [vmem:[#allocation3 + $0x28] sm:$0xff]
      %v843 = vld [vmem:[#allocation3 + $0x30] sm:$0xff]
      %v844 = vld [vmem:[#allocation3 + $0x38] sm:$0xff]
      %v845 = vld [vmem:[#allocation3 + $0x40] sm:$0xff]
      %v846 = vld [vmem:[#allocation3 + $0x48] sm:$0xff]
      %v847 = vld [vmem:[#allocation3 + $0x50] sm:$0xff]
      %v848 = vld [vmem:[#allocation3 + $0x58] sm:$0xff]
      %v849 = vld [vmem:[#allocation3 + $0x60] sm:$0xff]
      %v850 = vld [vmem:[#allocation3 + $0x68] sm:$0xff]
      %v851 = vld [vmem:[#allocation3 + $0x70] sm:$0xff]
      %v852 = vld [vmem:[#allocation3 + $0x78] sm:$0xff]
      %v853 = vld [vmem:[#allocation3 + $0x80] sm:$0xff]
      %v854 = vld [vmem:[#allocation3 + $0x88] sm:$0xff]
      %v855 = vld [vmem:[#allocation3 + $0x90] sm:$0xff]
      %v856 = vld [vmem:[#allocation3 + $0x98] sm:$0xff]
      %v857 = vld [vmem:[#allocation3 + $0xa0] sm:$0xff]
      %v858 = vld [vmem:[#allocation3 + $0xa8] sm:$0xff]
      %v859 = vld [vmem:[#allocation3 + $0xb0] sm:$0xff]
      %v860 = vld [vmem:[#allocation3 + $0xb8] sm:$0xff]
      %v861 = vld [vmem:[#allocation3 + $0xc0] sm:$0xff]
      %v862 = vld [vmem:[#allocation3 + $0xc8] sm:$0xff]
      %v863 = vld [vmem:[#allocation3 + $0xd0] sm:$0xff]
      %v864 = vld [vmem:[#allocation3 + $0xd8] sm:$0xff]
      %v865 = vld [vmem:[#allocation3 + $0xe0] sm:$0xff]
      %v866 = vld [vmem:[#allocation3 + $0xe8] sm:$0xff]
      %v867 = vld [vmem:[%s2] sm:$0xf]
      %v868 = vld [vmem:[%s2 + $0x4] sm:$0xf]
      %v869 = vld [vmem:[%s2 + $0x8] sm:$0xf]
      %v870 = vld [vmem:[%s2 + $0xc] sm:$0xf]
      %v871 = vld [vmem:[%s2 + $0x10] sm:$0xf]
      %v872 = vld [vmem:[%s2 + $0x14] sm:$0xf]
      %v873 = vld [vmem:[%s2 + $0x18] sm:$0xf]
      %v874 = vld [vmem:[%s2 + $0x1c] sm:$0xf]
      %v875 = vld [vmem:[%s2 + $0x20] sm:$0xf]
      %v876 = vld [vmem:[%s2 + $0x24] sm:$0xf]
      %v877 = vld [vmem:[%s2 + $0x28] sm:$0xf]
      %v878 = vld [vmem:[%s2 + $0x2c] sm:$0xf]
      %v879 = vld [vmem:[%s2 + $0x30] sm:$0xf]
      %v880 = vld [vmem:[%s2 + $0x34] sm:$0xf]
      %v881 = vld [vmem:[%s2 + $0x38] sm:$0xf]
      %v882 = vld [vmem:[%s2 + $0x3c] sm:$0xf]
      %v883 = vld [vmem:[%s2 + $0x40] sm:$0xf]
      %v884 = vld [vmem:[%s2 + $0x44] sm:$0xf]
      %v885 = vld [vmem:[%s2 + $0x48] sm:$0xf]
      %v886 = vld [vmem:[%s2 + $0x4c] sm:$0xf]
      %v887 = vld [vmem:[%s2 + $0x50] sm:$0xf]
      %v888 = vld [vmem:[%s2 + $0x54] sm:$0xf]
      %v889 = vld [vmem:[%s2 + $0x58] sm:$0xf]
      %v890 = vld [vmem:[%s2 + $0x5c] sm:$0xf]
      %v891 = vld [vmem:[%s2 + $0x60] sm:$0xf]
      %v892 = vld [vmem:[%s2 + $0x64] sm:$0xf]
      %v893 = vld [vmem:[%s2 + $0x68] sm:$0xf]
      %v894 = vld [vmem:[%s2 + $0x6c] sm:$0xf]
      %v895 = vld [vmem:[%s2 + $0x70] sm:$0xf]
      %v896 = vld [vmem:[%s2 + $0x74] sm:$0xf]
      %v897 = vld [vmem:[%s2 + $0x78] sm:$0xf]
      %v898 = vld [vmem:[%s2 + $0x7c] sm:$0xf]
      %v899 = vld [vmem:[%s2 + $0x80] sm:$0xf]
      %v900 = vld [vmem:[%s2 + $0x84] sm:$0xf]
      %v901 = vld [vmem:[%s2 + $0x88] sm:$0xf]
      %v902 = vld [vmem:[%s2 + $0x8c] sm:$0xf]
      %v903 = vld [vmem:[%s2 + $0x90] sm:$0xf]
      %v904 = vld [vmem:[%s2 + $0x94] sm:$0xf]
      %v905 = vld [vmem:[%s2 + $0x98] sm:$0xf]
      %v906 = vld [vmem:[%s2 + $0x9c] sm:$0xf]
      %v907 = vld [vmem:[%s2 + $0xa0] sm:$0xf]
      %v908 = vld [vmem:[%s2 + $0xa4] sm:$0xf]
      %v909 = vld [vmem:[%s2 + $0xa8] sm:$0xf]
      %v910 = vld [vmem:[%s2 + $0xac] sm:$0xf]
      %v911 = vld [vmem:[%s2 + $0xb0] sm:$0xf]
      %v912 = vld [vmem:[%s2 + $0xb4] sm:$0xf]
      %v913 = vld [vmem:[%s2 + $0xb8] sm:$0xf]
      %v914 = vld [vmem:[%s2 + $0xbc] sm:$0xf]
      %s915 = scalar_lea.vmem %s280, 12
      %v916 = vld [vmem:[%s915] sm:$0xf]
      %v917 = vld [vmem:[%s915 + $0x4] sm:$0xf]
      %v918 = vld [vmem:[%s915 + $0xc] sm:$0xf]
      %v919 = vld [vmem:[%s915 + $0x10] sm:$0xf]
      %v920 = vld [vmem:[%s915 + $0x18] sm:$0xf]
      %v921 = vld [vmem:[%s915 + $0x1c] sm:$0xf]
      %v922 = vld [vmem:[%s915 + $0x24] sm:$0xf]
      %v923 = vld [vmem:[%s915 + $0x28] sm:$0xf]
      %v924 = vld [vmem:[%s915 + $0x30] sm:$0xf]
      %v925 = vld [vmem:[%s915 + $0x34] sm:$0xf]
      %v926 = vld [vmem:[%s915 + $0x3c] sm:$0xf]
      %v927 = vld [vmem:[%s915 + $0x40] sm:$0xf]
      %v928 = vld [vmem:[%s915 + $0x48] sm:$0xf]
      %v929 = vld [vmem:[%s915 + $0x4c] sm:$0xf]
      %v930 = vld [vmem:[%s915 + $0x54] sm:$0xf]
      %v931 = vld [vmem:[%s915 + $0x58] sm:$0xf]
      %v932 = vld [vmem:[%s915 + $0x60] sm:$0xf]
      %v933 = vld [vmem:[%s915 + $0x64] sm:$0xf]
      %v934 = vld [vmem:[%s915 + $0x6c] sm:$0xf]
      %v935 = vld [vmem:[%s915 + $0x70] sm:$0xf]
      %v956 = vunpack.c.l.b16 %v916
      %v957 = vunpack.c.l.b16 %v917
      %v958 = vunpack.c.l.b16 %v918
      %v959 = vunpack.c.l.b16 %v919
      %v960 = vunpack.c.l.b16 %v920
      %v961 = vunpack.c.l.b16 %v921
      %v962 = vunpack.c.l.b16 %v922
      %v963 = vunpack.c.l.b16 %v923
      %v964 = vunpack.c.l.b16 %v924
      %v965 = vunpack.c.l.b16 %v925
      %v966 = vunpack.c.l.b16 %v926
      %v967 = vunpack.c.l.b16 %v927
      %v968 = vunpack.c.l.b16 %v928
      %v969 = vunpack.c.l.b16 %v929
      %v970 = vunpack.c.l.b16 %v930
      %v971 = vunpack.c.l.b16 %v931
      %v972 = vunpack.c.l.b16 %v932
      %v973 = vunpack.c.l.b16 %v933
      %v974 = vunpack.c.l.b16 %v934
      %v975 = vunpack.c.l.b16 %v935
      %v976 = vpack.c.b16 %v957, %v956
      %v977 = vpack.c.b16 %v959, %v958
      %v978 = vpack.c.b16 %v961, %v960
      %v979 = vpack.c.b16 %v963, %v962
      %v980 = vpack.c.b16 %v965, %v964
      %v981 = vpack.c.b16 %v967, %v966
      %v982 = vpack.c.b16 %v969, %v968
      %v983 = vpack.c.b16 %v971, %v970
      %v984 = vpack.c.b16 %v973, %v972
      %v985 = vpack.c.b16 %v975, %v974
      %996 = vst.msk [vmem:[#allocation3] sm:$0xff] %vm414, %v976
      %997 = vst.msk [vmem:[#allocation3 + $0x18] sm:$0xff] %vm414, %v977
      %998 = vst.msk [vmem:[#allocation3 + $0x30] sm:$0xff] %vm414, %v978
      %999 = vst.msk [vmem:[#allocation3 + $0x48] sm:$0xff] %vm414, %v979
      %1000 = vst.msk [vmem:[#allocation3 + $0x60] sm:$0xff] %vm414, %v980
      %1001 = vst.msk [vmem:[#allocation3 + $0x78] sm:$0xff] %vm414, %v981
      %1002 = vst.msk [vmem:[#allocation3 + $0x90] sm:$0xff] %vm414, %v982
      %1003 = vst.msk [vmem:[#allocation3 + $0xa8] sm:$0xff] %vm414, %v983
      %1004 = vst.msk [vmem:[#allocation3 + $0xc0] sm:$0xff] %vm414, %v984
      %1005 = vst.msk [vmem:[#allocation3 + $0xd8] sm:$0xff] %vm414, %v985
      %v1006 = vld [vmem:[%s915] sm:$0xf]
      %v1007 = vld [vmem:[%s915 + $0x4] sm:$0xf]
      %v1008 = vld [vmem:[%s915 + $0x8] sm:$0x1]
      %v1009 = vld [vmem:[%s915 + $0xc] sm:$0xf]
      %v1010 = vld [vmem:[%s915 + $0x10] sm:$0xf]
      %v1011 = vld [vmem:[%s915 + $0x14] sm:$0x1]
      %v1012 = vld [vmem:[%s915 + $0x18] sm:$0xf]
      %v1013 = vld [vmem:[%s915 + $0x1c] sm:$0xf]
      %v1014 = vld [vmem:[%s915 + $0x20] sm:$0x1]
      %v1015 = vld [vmem:[%s915 + $0x24] sm:$0xf]
      %v1016 = vld [vmem:[%s915 + $0x28] sm:$0xf]
      %v1017 = vld [vmem:[%s915 + $0x2c] sm:$0x1]
      %v1018 = vld [vmem:[%s915 + $0x30] sm:$0xf]
      %v1019 = vld [vmem:[%s915 + $0x34] sm:$0xf]
      %v1020 = vld [vmem:[%s915 + $0x38] sm:$0x1]
      %v1021 = vld [vmem:[%s915 + $0x3c] sm:$0xf]
      %v1022 = vld [vmem:[%s915 + $0x40] sm:$0xf]
      %v1023 = vld [vmem:[%s915 + $0x44] sm:$0x1]
      %v1024 = vld [vmem:[%s915 + $0x48] sm:$0xf]
      %v1025 = vld [vmem:[%s915 + $0x4c] sm:$0xf]
      %v1026 = vld [vmem:[%s915 + $0x50] sm:$0x1]
      %v1027 = vld [vmem:[%s915 + $0x54] sm:$0xf]
      %v1028 = vld [vmem:[%s915 + $0x58] sm:$0xf]
      %v1029 = vld [vmem:[%s915 + $0x5c] sm:$0x1]
      %v1030 = vld [vmem:[%s915 + $0x60] sm:$0xf]
      %v1031 = vld [vmem:[%s915 + $0x64] sm:$0xf]
      %v1032 = vld [vmem:[%s915 + $0x68] sm:$0x1]
      %v1033 = vld [vmem:[%s915 + $0x6c] sm:$0xf]
      %v1034 = vld [vmem:[%s915 + $0x70] sm:$0xf]
      %v1035 = vld [vmem:[%s915 + $0x74] sm:$0x1]
      %v1066 = vunpack.c.l.b16 %v1006
      %v1067 = vunpack.c.l.b16 %v1007
      %v1068 = vunpack.c.l.b16 %v1008
      %v1069 = vunpack.c.l.b16 %v1009
      %v1070 = vunpack.c.l.b16 %v1010
      %v1071 = vunpack.c.l.b16 %v1011
      %v1072 = vunpack.c.l.b16 %v1012
      %v1073 = vunpack.c.l.b16 %v1013
      %v1074 = vunpack.c.l.b16 %v1014
      %v1075 = vunpack.c.l.b16 %v1015
      %v1076 = vunpack.c.l.b16 %v1016
      %v1077 = vunpack.c.l.b16 %v1017
      %v1078 = vunpack.c.l.b16 %v1018
      %v1079 = vunpack.c.l.b16 %v1019
      %v1080 = vunpack.c.l.b16 %v1020
      %v1081 = vunpack.c.l.b16 %v1021
      %v1082 = vunpack.c.l.b16 %v1022
      %v1083 = vunpack.c.l.b16 %v1023
      %v1084 = vunpack.c.l.b16 %v1024
      %v1085 = vunpack.c.l.b16 %v1025
      %v1086 = vunpack.c.l.b16 %v1026
      %v1087 = vunpack.c.l.b16 %v1027
      %v1088 = vunpack.c.l.b16 %v1028
      %v1089 = vunpack.c.l.b16 %v1029
      %v1090 = vunpack.c.l.b16 %v1030
      %v1091 = vunpack.c.l.b16 %v1031
      %v1092 = vunpack.c.l.b16 %v1032
      %v1093 = vunpack.c.l.b16 %v1033
      %v1094 = vunpack.c.l.b16 %v1034
      %v1095 = vunpack.c.l.b16 %v1035
      %v1096 = vpack.c.b16 %v1067, %v1066
      %v1097 = vpack.c.b16 %v1068, %v1068
      %v1098 = vpack.c.b16 %v1070, %v1069
      %v1099 = vpack.c.b16 %v1071, %v1071
      %v1100 = vpack.c.b16 %v1073, %v1072
      %v1101 = vpack.c.b16 %v1074, %v1074
      %v1102 = vpack.c.b16 %v1076, %v1075
      %v1103 = vpack.c.b16 %v1077, %v1077
      %v1104 = vpack.c.b16 %v1079, %v1078
      %v1105 = vpack.c.b16 %v1080, %v1080
      %v1106 = vpack.c.b16 %v1082, %v1081
      %v1107 = vpack.c.b16 %v1083, %v1083
      %v1108 = vpack.c.b16 %v1085, %v1084
      %v1109 = vpack.c.b16 %v1086, %v1086
      %v1110 = vpack.c.b16 %v1088, %v1087
      %v1111 = vpack.c.b16 %v1089, %v1089
      %v1112 = vpack.c.b16 %v1091, %v1090
      %v1113 = vpack.c.b16 %v1092, %v1092
      %v1114 = vpack.c.b16 %v1094, %v1093
      %v1115 = vpack.c.b16 %v1095, %v1095
      %v1117 = vshrl.u32 %v1096, 16
      %v1119 = vshll.u32 %v1096, 16
      %v1121 = vrot.slane %v1119, 1
      %v1122 = vor.u32 %v1117, %v1121
      %v1124 = vshll.u32 %v1097, 16
      %v1126 = vrot.slane %v1124, 1
      %v1127 = vsel %vm535, %v1122, %v1126
      %v1129 = vshrl.u32 %v1098, 16
      %v1131 = vshll.u32 %v1098, 16
      %v1133 = vrot.slane %v1131, 1
      %v1134 = vor.u32 %v1129, %v1133
      %v1136 = vshll.u32 %v1099, 16
      %v1138 = vrot.slane %v1136, 1
      %v1139 = vsel %vm535, %v1134, %v1138
      %v1141 = vshrl.u32 %v1100, 16
      %v1143 = vshll.u32 %v1100, 16
      %v1145 = vrot.slane %v1143, 1
      %v1146 = vor.u32 %v1141, %v1145
      %v1148 = vshll.u32 %v1101, 16
      %v1150 = vrot.slane %v1148, 1
      %v1151 = vsel %vm535, %v1146, %v1150
      %v1153 = vshrl.u32 %v1102, 16
      %v1155 = vshll.u32 %v1102, 16
      %v1157 = vrot.slane %v1155, 1
      %v1158 = vor.u32 %v1153, %v1157
      %v1160 = vshll.u32 %v1103, 16
      %v1162 = vrot.slane %v1160, 1
      %v1163 = vsel %vm535, %v1158, %v1162
      %v1165 = vshrl.u32 %v1104, 16
      %v1167 = vshll.u32 %v1104, 16
      %v1169 = vrot.slane %v1167, 1
      %v1170 = vor.u32 %v1165, %v1169
      %v1172 = vshll.u32 %v1105, 16
      %v1174 = vrot.slane %v1172, 1
      %v1175 = vsel %vm535, %v1170, %v1174
      %v1177 = vshrl.u32 %v1106, 16
      %v1179 = vshll.u32 %v1106, 16
      %v1181 = vrot.slane %v1179, 1
      %v1182 = vor.u32 %v1177, %v1181
      %v1184 = vshll.u32 %v1107, 16
      %v1186 = vrot.slane %v1184, 1
      %v1187 = vsel %vm535, %v1182, %v1186
      %v1189 = vshrl.u32 %v1108, 16
      %v1191 = vshll.u32 %v1108, 16
      %v1193 = vrot.slane %v1191, 1
      %v1194 = vor.u32 %v1189, %v1193
      %v1196 = vshll.u32 %v1109, 16
      %v1198 = vrot.slane %v1196, 1
      %v1199 = vsel %vm535, %v1194, %v1198
      %v1201 = vshrl.u32 %v1110, 16
      %v1203 = vshll.u32 %v1110, 16
      %v1205 = vrot.slane %v1203, 1
      %v1206 = vor.u32 %v1201, %v1205
      %v1208 = vshll.u32 %v1111, 16
      %v1210 = vrot.slane %v1208, 1
      %v1211 = vsel %vm535, %v1206, %v1210
      %v1213 = vshrl.u32 %v1112, 16
      %v1215 = vshll.u32 %v1112, 16
      %v1217 = vrot.slane %v1215, 1
      %v1218 = vor.u32 %v1213, %v1217
      %v1220 = vshll.u32 %v1113, 16
      %v1222 = vrot.slane %v1220, 1
      %v1223 = vsel %vm535, %v1218, %v1222
      %v1225 = vshrl.u32 %v1114, 16
      %v1227 = vshll.u32 %v1114, 16
      %v1229 = vrot.slane %v1227, 1
      %v1230 = vor.u32 %v1225, %v1229
      %v1232 = vshll.u32 %v1115, 16
      %v1234 = vrot.slane %v1232, 1
      %v1235 = vsel %vm535, %v1230, %v1234
      %1246 = vst.msk [vmem:[#allocation3 + $0x8] sm:$0xff] %vm414, %v1127
      %1247 = vst.msk [vmem:[#allocation3 + $0x20] sm:$0xff] %vm414, %v1139
      %1248 = vst.msk [vmem:[#allocation3 + $0x38] sm:$0xff] %vm414, %v1151
      %1249 = vst.msk [vmem:[#allocation3 + $0x50] sm:$0xff] %vm414, %v1163
      %1250 = vst.msk [vmem:[#allocation3 + $0x68] sm:$0xff] %vm414, %v1175
      %1251 = vst.msk [vmem:[#allocation3 + $0x80] sm:$0xff] %vm414, %v1187
      %1252 = vst.msk [vmem:[#allocation3 + $0x98] sm:$0xff] %vm414, %v1199
      %1253 = vst.msk [vmem:[#allocation3 + $0xb0] sm:$0xff] %vm414, %v1211
      %1254 = vst.msk [vmem:[#allocation3 + $0xc8] sm:$0xff] %vm414, %v1223
      %1255 = vst.msk [vmem:[#allocation3 + $0xe0] sm:$0xff] %vm414, %v1235
      %v1256 = vld [vmem:[%s915] sm:$0xe]
      %v1257 = vld [vmem:[%s915 + $0x4] sm:$0xf]
      %v1258 = vld [vmem:[%s915 + $0x8] sm:$0x1]
      %v1259 = vld [vmem:[%s915 + $0xc] sm:$0xe]
      %v1260 = vld [vmem:[%s915 + $0x10] sm:$0xf]
      %v1261 = vld [vmem:[%s915 + $0x14] sm:$0x1]
      %v1262 = vld [vmem:[%s915 + $0x18] sm:$0xe]
      %v1263 = vld [vmem:[%s915 + $0x1c] sm:$0xf]
      %v1264 = vld [vmem:[%s915 + $0x20] sm:$0x1]
      %v1265 = vld [vmem:[%s915 + $0x24] sm:$0xe]
      %v1266 = vld [vmem:[%s915 + $0x28] sm:$0xf]
      %v1267 = vld [vmem:[%s915 + $0x2c] sm:$0x1]
      %v1268 = vld [vmem:[%s915 + $0x30] sm:$0xe]
      %v1269 = vld [vmem:[%s915 + $0x34] sm:$0xf]
      %v1270 = vld [vmem:[%s915 + $0x38] sm:$0x1]
      %v1271 = vld [vmem:[%s915 + $0x3c] sm:$0xe]
      %v1272 = vld [vmem:[%s915 + $0x40] sm:$0xf]
      %v1273 = vld [vmem:[%s915 + $0x44] sm:$0x1]
      %v1274 = vld [vmem:[%s915 + $0x48] sm:$0xe]
      %v1275 = vld [vmem:[%s915 + $0x4c] sm:$0xf]
      %v1276 = vld [vmem:[%s915 + $0x50] sm:$0x1]
      %v1277 = vld [vmem:[%s915 + $0x54] sm:$0xe]
      %v1278 = vld [vmem:[%s915 + $0x58] sm:$0xf]
      %v1279 = vld [vmem:[%s915 + $0x5c] sm:$0x1]
      %v1280 = vld [vmem:[%s915 + $0x60] sm:$0xe]
      %v1281 = vld [vmem:[%s915 + $0x64] sm:$0xf]
      %v1282 = vld [vmem:[%s915 + $0x68] sm:$0x1]
      %v1283 = vld [vmem:[%s915 + $0x6c] sm:$0xe]
      %v1284 = vld [vmem:[%s915 + $0x70] sm:$0xf]
      %v1285 = vld [vmem:[%s915 + $0x74] sm:$0x1]
      %v1316 = vunpack.c.l.b16 %v1256
      %v1317 = vunpack.c.l.b16 %v1257
      %v1318 = vunpack.c.l.b16 %v1258
      %v1319 = vunpack.c.l.b16 %v1259
      %v1320 = vunpack.c.l.b16 %v1260
      %v1321 = vunpack.c.l.b16 %v1261
      %v1322 = vunpack.c.l.b16 %v1262
      %v1323 = vunpack.c.l.b16 %v1263
      %v1324 = vunpack.c.l.b16 %v1264
      %v1325 = vunpack.c.l.b16 %v1265
      %v1326 = vunpack.c.l.b16 %v1266
      %v1327 = vunpack.c.l.b16 %v1267
      %v1328 = vunpack.c.l.b16 %v1268
      %v1329 = vunpack.c.l.b16 %v1269
      %v1330 = vunpack.c.l.b16 %v1270
      %v1331 = vunpack.c.l.b16 %v1271
      %v1332 = vunpack.c.l.b16 %v1272
      %v1333 = vunpack.c.l.b16 %v1273
      %v1334 = vunpack.c.l.b16 %v1274
      %v1335 = vunpack.c.l.b16 %v1275
      %v1336 = vunpack.c.l.b16 %v1276
      %v1337 = vunpack.c.l.b16 %v1277
      %v1338 = vunpack.c.l.b16 %v1278
      %v1339 = vunpack.c.l.b16 %v1279
      %v1340 = vunpack.c.l.b16 %v1280
      %v1341 = vunpack.c.l.b16 %v1281
      %v1342 = vunpack.c.l.b16 %v1282
      %v1343 = vunpack.c.l.b16 %v1283
      %v1344 = vunpack.c.l.b16 %v1284
      %v1345 = vunpack.c.l.b16 %v1285
      %v1346 = vpack.c.b16 %v1317, %v1316
      %v1347 = vpack.c.b16 %v1318, %v1318
      %v1348 = vpack.c.b16 %v1320, %v1319
      %v1349 = vpack.c.b16 %v1321, %v1321
      %v1350 = vpack.c.b16 %v1323, %v1322
      %v1351 = vpack.c.b16 %v1324, %v1324
      %v1352 = vpack.c.b16 %v1326, %v1325
      %v1353 = vpack.c.b16 %v1327, %v1327
      %v1354 = vpack.c.b16 %v1329, %v1328
      %v1355 = vpack.c.b16 %v1330, %v1330
      %v1356 = vpack.c.b16 %v1332, %v1331
      %v1357 = vpack.c.b16 %v1333, %v1333
      %v1358 = vpack.c.b16 %v1335, %v1334
      %v1359 = vpack.c.b16 %v1336, %v1336
      %v1360 = vpack.c.b16 %v1338, %v1337
      %v1361 = vpack.c.b16 %v1339, %v1339
      %v1362 = vpack.c.b16 %v1341, %v1340
      %v1363 = vpack.c.b16 %v1342, %v1342
      %v1364 = vpack.c.b16 %v1344, %v1343
      %v1365 = vpack.c.b16 %v1345, %v1345
      %v1366 = vrot.slane %v1346, 1
      %v1367 = vrot.slane %v1347, 1
      %v1368 = vsel %vm786, %v1366, %v1367
      %v1369 = vrot.slane %v1348, 1
      %v1370 = vrot.slane %v1349, 1
      %v1371 = vsel %vm786, %v1369, %v1370
      %v1372 = vrot.slane %v1350, 1
      %v1373 = vrot.slane %v1351, 1
      %v1374 = vsel %vm786, %v1372, %v1373
      %v1375 = vrot.slane %v1352, 1
      %v1376 = vrot.slane %v1353, 1
      %v1377 = vsel %vm786, %v1375, %v1376
      %v1378 = vrot.slane %v1354, 1
      %v1379 = vrot.slane %v1355, 1
      %v1380 = vsel %vm786, %v1378, %v1379
      %v1381 = vrot.slane %v1356, 1
      %v1382 = vrot.slane %v1357, 1
      %v1383 = vsel %vm786, %v1381, %v1382
      %v1384 = vrot.slane %v1358, 1
      %v1385 = vrot.slane %v1359, 1
      %v1386 = vsel %vm786, %v1384, %v1385
      %v1387 = vrot.slane %v1360, 1
      %v1388 = vrot.slane %v1361, 1
      %v1389 = vsel %vm786, %v1387, %v1388
      %v1390 = vrot.slane %v1362, 1
      %v1391 = vrot.slane %v1363, 1
      %v1392 = vsel %vm786, %v1390, %v1391
      %v1393 = vrot.slane %v1364, 1
      %v1394 = vrot.slane %v1365, 1
      %v1395 = vsel %vm786, %v1393, %v1394
      %1406 = vst.msk [vmem:[#allocation3 + $0x10] sm:$0xff] %vm414, %v1368
      %1407 = vst.msk [vmem:[#allocation3 + $0x28] sm:$0xff] %vm414, %v1371
      %1408 = vst.msk [vmem:[#allocation3 + $0x40] sm:$0xff] %vm414, %v1374
      %1409 = vst.msk [vmem:[#allocation3 + $0x58] sm:$0xff] %vm414, %v1377
      %1410 = vst.msk [vmem:[#allocation3 + $0x70] sm:$0xff] %vm414, %v1380
      %1411 = vst.msk [vmem:[#allocation3 + $0x88] sm:$0xff] %vm414, %v1383
      %1412 = vst.msk [vmem:[#allocation3 + $0xa0] sm:$0xff] %vm414, %v1386
      %1413 = vst.msk [vmem:[#allocation3 + $0xb8] sm:$0xff] %vm414, %v1389
      %1414 = vst.msk [vmem:[#allocation3 + $0xd0] sm:$0xff] %vm414, %v1392
      %1415 = vst.msk [vmem:[#allocation3 + $0xe8] sm:$0xff] %vm414, %v1395
      %v1416 = vld [vmem:[#allocation3] sm:$0xff]
      %v1417 = vld [vmem:[#allocation3 + $0x8] sm:$0xff]
      %v1418 = vld [vmem:[#allocation3 + $0x10] sm:$0xff]
      %v1419 = vld [vmem:[#allocation3 + $0x18] sm:$0xff]
      %v1420 = vld [vmem:[#allocation3 + $0x20] sm:$0xff]
      %v1421 = vld [vmem:[#allocation3 + $0x28] sm:$0xff]
      %v1422 = vld [vmem:[#allocation3 + $0x30] sm:$0xff]
      %v1423 = vld [vmem:[#allocation3 + $0x38] sm:$0xff]
      %v1424 = vld [vmem:[#allocation3 + $0x40] sm:$0xff]
      %v1425 = vld [vmem:[#allocation3 + $0x48] sm:$0xff]
      %v1426 = vld [vmem:[#allocation3 + $0x50] sm:$0xff]
      %v1427 = vld [vmem:[#allocation3 + $0x58] sm:$0xff]
      %v1428 = vld [vmem:[#allocation3 + $0x60] sm:$0xff]
      %v1429 = vld [vmem:[#allocation3 + $0x68] sm:$0xff]
      %v1430 = vld [vmem:[#allocation3 + $0x70] sm:$0xff]
      %v1431 = vld [vmem:[#allocation3 + $0x78] sm:$0xff]
      %v1432 = vld [vmem:[#allocation3 + $0x80] sm:$0xff]
      %v1433 = vld [vmem:[#allocation3 + $0x88] sm:$0xff]
      %v1434 = vld [vmem:[#allocation3 + $0x90] sm:$0xff]
      %v1435 = vld [vmem:[#allocation3 + $0x98] sm:$0xff]
      %v1436 = vld [vmem:[#allocation3 + $0xa0] sm:$0xff]
      %v1437 = vld [vmem:[#allocation3 + $0xa8] sm:$0xff]
      %v1438 = vld [vmem:[#allocation3 + $0xb0] sm:$0xff]
      %v1439 = vld [vmem:[#allocation3 + $0xb8] sm:$0xff]
      %v1440 = vld [vmem:[#allocation3 + $0xc0] sm:$0xff]
      %v1441 = vld [vmem:[#allocation3 + $0xc8] sm:$0xff]
      %v1442 = vld [vmem:[#allocation3 + $0xd0] sm:$0xff]
      %v1443 = vld [vmem:[#allocation3 + $0xd8] sm:$0xff]
      %v1444 = vld [vmem:[#allocation3 + $0xe0] sm:$0xff]
      %v1445 = vld [vmem:[#allocation3 + $0xe8] sm:$0xff]
      %v1446 = vld [vmem:[%s2 + $0xc0] sm:$0xf]
      %v1447 = vld [vmem:[%s2 + $0xc4] sm:$0xf]
      %v1448 = vld [vmem:[%s2 + $0xc8] sm:$0xf]
      %v1449 = vld [vmem:[%s2 + $0xcc] sm:$0xf]
      %v1450 = vld [vmem:[%s2 + $0xd0] sm:$0xf]
      %v1451 = vld [vmem:[%s2 + $0xd4] sm:$0xf]
      %v1452 = vld [vmem:[%s2 + $0xd8] sm:$0xf]
      %v1453 = vld [vmem:[%s2 + $0xdc] sm:$0xf]
      %v1454 = vld [vmem:[%s2 + $0xe0] sm:$0xf]
      %v1455 = vld [vmem:[%s2 + $0xe4] sm:$0xf]
      %v1456 = vld [vmem:[%s2 + $0xe8] sm:$0xf]
      %v1457 = vld [vmem:[%s2 + $0xec] sm:$0xf]
      %v1458 = vld [vmem:[%s2 + $0xf0] sm:$0xf]
      %v1459 = vld [vmem:[%s2 + $0xf4] sm:$0xf]
      %v1460 = vld [vmem:[%s2 + $0xf8] sm:$0xf]
      %v1461 = vld [vmem:[%s2 + $0xfc] sm:$0xf]
      %v1462 = vld [vmem:[%s2 + $0x100] sm:$0xf]
      %v1463 = vld [vmem:[%s2 + $0x104] sm:$0xf]
      %v1464 = vld [vmem:[%s2 + $0x108] sm:$0xf]
      %v1465 = vld [vmem:[%s2 + $0x10c] sm:$0xf]
      %v1466 = vld [vmem:[%s2 + $0x110] sm:$0xf]
      %v1467 = vld [vmem:[%s2 + $0x114] sm:$0xf]
      %v1468 = vld [vmem:[%s2 + $0x118] sm:$0xf]
      %v1469 = vld [vmem:[%s2 + $0x11c] sm:$0xf]
      %v1470 = vld [vmem:[%s2 + $0x120] sm:$0xf]
      %v1471 = vld [vmem:[%s2 + $0x124] sm:$0xf]
      %v1472 = vld [vmem:[%s2 + $0x128] sm:$0xf]
      %v1473 = vld [vmem:[%s2 + $0x12c] sm:$0xf]
      %v1474 = vld [vmem:[%s2 + $0x130] sm:$0xf]
      %v1475 = vld [vmem:[%s2 + $0x134] sm:$0xf]
      %v1476 = vld [vmem:[%s2 + $0x138] sm:$0xf]
      %v1477 = vld [vmem:[%s2 + $0x13c] sm:$0xf]
      %v1478 = vld [vmem:[%s2 + $0x140] sm:$0xf]
      %v1479 = vld [vmem:[%s2 + $0x144] sm:$0xf]
      %v1480 = vld [vmem:[%s2 + $0x148] sm:$0xf]
      %v1481 = vld [vmem:[%s2 + $0x14c] sm:$0xf]
      %v1482 = vld [vmem:[%s2 + $0x150] sm:$0xf]
      %v1483 = vld [vmem:[%s2 + $0x154] sm:$0xf]
      %v1484 = vld [vmem:[%s2 + $0x158] sm:$0xf]
      %v1485 = vld [vmem:[%s2 + $0x15c] sm:$0xf]
      %v1486 = vld [vmem:[%s2 + $0x160] sm:$0xf]
      %v1487 = vld [vmem:[%s2 + $0x164] sm:$0xf]
      %v1488 = vld [vmem:[%s2 + $0x168] sm:$0xf]
      %v1489 = vld [vmem:[%s2 + $0x16c] sm:$0xf]
      %v1490 = vld [vmem:[%s2 + $0x170] sm:$0xf]
      %v1491 = vld [vmem:[%s2 + $0x174] sm:$0xf]
      %v1492 = vld [vmem:[%s2 + $0x178] sm:$0xf]
      %v1493 = vld [vmem:[%s2 + $0x17c] sm:$0xf]
      %v1542 = vunpack.c.l.b16 %v1446
      %v1543 = vunpack.c.l.b16 %v1447
      %v1544 = vunpack.c.l.b16 %v1448
      %v1545 = vunpack.c.l.b16 %v1449
      %v1546 = vunpack.c.l.b16 %v1450
      %v1547 = vunpack.c.l.b16 %v1451
      %v1548 = vunpack.c.l.b16 %v1452
      %v1549 = vunpack.c.l.b16 %v1453
      %v1550 = vunpack.c.l.b16 %v1454
      %v1551 = vunpack.c.l.b16 %v1455
      %v1552 = vunpack.c.l.b16 %v1456
      %v1553 = vunpack.c.l.b16 %v1457
      %v1554 = vunpack.c.l.b16 %v1458
      %v1555 = vunpack.c.l.b16 %v1459
      %v1556 = vunpack.c.l.b16 %v1460
      %v1557 = vunpack.c.l.b16 %v1461
      %v1558 = vunpack.c.l.b16 %v1462
      %v1559 = vunpack.c.l.b16 %v1463
      %v1560 = vunpack.c.l.b16 %v1464
      %v1561 = vunpack.c.l.b16 %v1465
      %v1562 = vunpack.c.l.b16 %v1466
      %v1563 = vunpack.c.l.b16 %v1467
      %v1564 = vunpack.c.l.b16 %v1468
      %v1565 = vunpack.c.l.b16 %v1469
      %v1566 = vunpack.c.l.b16 %v1470
      %v1567 = vunpack.c.l.b16 %v1471
      %v1568 = vunpack.c.l.b16 %v1472
      %v1569 = vunpack.c.l.b16 %v1473
      %v1570 = vunpack.c.l.b16 %v1474
      %v1571 = vunpack.c.l.b16 %v1475
      %v1572 = vunpack.c.l.b16 %v1476
      %v1573 = vunpack.c.l.b16 %v1477
      %v1574 = vunpack.c.l.b16 %v1478
      %v1575 = vunpack.c.l.b16 %v1479
      %v1576 = vunpack.c.l.b16 %v1480
      %v1577 = vunpack.c.l.b16 %v1481
      %v1578 = vunpack.c.l.b16 %v1482
      %v1579 = vunpack.c.l.b16 %v1483
      %v1580 = vunpack.c.l.b16 %v1484
      %v1581 = vunpack.c.l.b16 %v1485
      %v1582 = vunpack.c.l.b16 %v1486
      %v1583 = vunpack.c.l.b16 %v1487
      %v1584 = vunpack.c.l.b16 %v1488
      %v1585 = vunpack.c.l.b16 %v1489
      %v1586 = vunpack.c.l.b16 %v1490
      %v1587 = vunpack.c.l.b16 %v1491
      %v1588 = vunpack.c.l.b16 %v1492
      %v1589 = vunpack.c.l.b16 %v1493
      %v1590 = vpack.c.b16 %v1543, %v1542
      %v1591 = vpack.c.b16 %v1545, %v1544
      %v1592 = vpack.c.b16 %v1547, %v1546
      %v1593 = vpack.c.b16 %v1549, %v1548
      %v1594 = vpack.c.b16 %v1551, %v1550
      %v1595 = vpack.c.b16 %v1553, %v1552
      %v1596 = vpack.c.b16 %v1555, %v1554
      %v1597 = vpack.c.b16 %v1557, %v1556
      %v1598 = vpack.c.b16 %v1559, %v1558
      %v1599 = vpack.c.b16 %v1561, %v1560
      %v1600 = vpack.c.b16 %v1563, %v1562
      %v1601 = vpack.c.b16 %v1565, %v1564
      %v1602 = vpack.c.b16 %v1567, %v1566
      %v1603 = vpack.c.b16 %v1569, %v1568
      %v1604 = vpack.c.b16 %v1571, %v1570
      %v1605 = vpack.c.b16 %v1573, %v1572
      %v1606 = vpack.c.b16 %v1575, %v1574
      %v1607 = vpack.c.b16 %v1577, %v1576
      %v1608 = vpack.c.b16 %v1579, %v1578
      %v1609 = vpack.c.b16 %v1581, %v1580
      %v1610 = vpack.c.b16 %v1583, %v1582
      %v1611 = vpack.c.b16 %v1585, %v1584
      %v1612 = vpack.c.b16 %v1587, %v1586
      %v1613 = vpack.c.b16 %v1589, %v1588
      %1638 = vmatprep.subr.bf16.mxu0 0
      %1639 = vmatpush1.bf16.msra.mxu0 %v1590
      %1640 = vmatprep.subr.bf16.mxu0 0
      %1641 = vmatpush1.bf16.msra.mxu0 %v1591
      %1642 = vmatprep.subr.bf16.mxu0 0
      %1643 = vmatpush1.bf16.msra.mxu0 %v1592
      %1644 = vmatprep.subr.bf16.mxu0 0
      %1645 = vmatpush1.bf16.msra.mxu0 %v1593
      %1646 = vmatprep.subr.bf16.mxu0 0
      %1647 = vmatpush1.bf16.msra.mxu0 %v1594
      %1648 = vmatprep.subr.bf16.mxu0 0
      %1649 = vmatpush1.bf16.msra.mxu0 %v1595
      %1650 = vmatprep.subr.bf16.mxu0 0
      %1651 = vmatpush1.bf16.msra.mxu0 %v1596
      %1652 = vmatprep.subr.bf16.mxu0 0
      %1653 = vmatpush1.bf16.msra.mxu0 %v1597
      %1654 = vmatprep.subr.bf16.mxu0 0
      %1655 = vmatpush1.bf16.msra.mxu0 %v1598
      %1656 = vmatprep.subr.bf16.mxu0 0
      %1657 = vmatpush1.bf16.msra.mxu0 %v1599
      %1658 = vmatprep.subr.bf16.mxu0 0
      %1659 = vmatpush1.bf16.msra.mxu0 %v1600
      %1660 = vmatprep.subr.bf16.mxu0 0
      %1661 = vmatpush1.bf16.msra.mxu0 %v1601
      %1662 = vmatprep.subr.bf16.mxu0 0
      %1663 = vmatpush1.bf16.msra.mxu0 %v1602
      %1664 = vmatprep.subr.bf16.mxu0 0
      %1665 = vmatpush1.bf16.msra.mxu0 %v1603
      %1666 = vmatprep.subr.bf16.mxu0 0
      %1667 = vmatpush1.bf16.msra.mxu0 %v1604
      %1668 = vmatprep.subr.bf16.mxu0 0
      %1669 = vmatpush1.bf16.msra.mxu0 %v1605
      %1670 = vmatprep.mubr.bf16.mxu0 %v1417
      %1671 = vmatmul.mubr.bf16.gmra.mrb[0].mxu0 %v1416
      %v1672 = vpop.f32.mrb[0].mxu0
      %v1673 = vadd.f32 0.0, %v1672
      %v1674 = vpop.f32.mrb[0].mxu0
      %v1675 = vpop.f32.mrb[0].mxu0
      %v1676 = vadd.f32 0.0, %v1675
      %v1677 = vpop.f32.mrb[0].mxu0
      %1678 = vmatprep.mubr.bf16.mxu0 %v1420
      %1679 = vmatmul.mubr.bf16.gmra.mrb[0].mxu0 %v1419
      %v1680 = vpop.f32.mrb[0].mxu0
      %v1681 = vadd.f32 0.0, %v1680
      %v1682 = vpop.f32.mrb[0].mxu0
      %v1683 = vpop.f32.mrb[0].mxu0
      %v1684 = vadd.f32 0.0, %v1683
      %v1685 = vpop.f32.mrb[0].mxu0
      %1686 = vmatprep.mubr.bf16.mxu0 %v1423
      %1687 = vmatmul.mubr.bf16.gmra.mrb[0].mxu0 %v1422
      %v1688 = vpop.f32.mrb[0].mxu0
      %v1689 = vadd.f32 0.0, %v1688
      %v1690 = vpop.f32.mrb[0].mxu0
      %v1691 = vpop.f32.mrb[0].mxu0
      %v1692 = vadd.f32 0.0, %v1691
      %v1693 = vpop.f32.mrb[0].mxu0
      %1694 = vmatprep.mubr.bf16.mxu0 %v1426
      %1695 = vmatmul.mubr.bf16.gmra.mrb[0].mxu0 %v1425
      %v1696 = vpop.f32.mrb[0].mxu0
      %v1697 = vadd.f32 0.0, %v1696
      %v1698 = vpop.f32.mrb[0].mxu0
      %v1699 = vpop.f32.mrb[0].mxu0
      %v1700 = vadd.f32 0.0, %v1699
      %v1701 = vpop.f32.mrb[0].mxu0
      %1702 = vmatprep.mubr.bf16.mxu0 %v1429
      %1703 = vmatmul.mubr.bf16.gmra.mrb[0].mxu0 %v1428
      %v1704 = vpop.f32.mrb[0].mxu0
      %v1705 = vadd.f32 0.0, %v1704
      %v1706 = vpop.f32.mrb[0].mxu0
      %v1707 = vpop.f32.mrb[0].mxu0
      %v1708 = vadd.f32 0.0, %v1707
      %v1709 = vpop.f32.mrb[0].mxu0
      %1710 = vmatprep.mubr.bf16.mxu0 %v1432
      %1711 = vmatmul.mubr.bf16.gmra.mrb[0].mxu0 %v1431
      %v1712 = vpop.f32.mrb[0].mxu0
      %v1713 = vadd.f32 0.0, %v1712
      %v1714 = vpop.f32.mrb[0].mxu0
      %v1715 = vpop.f32.mrb[0].mxu0
      %v1716 = vadd.f32 0.0, %v1715
      %v1717 = vpop.f32.mrb[0].mxu0
      %1718 = vmatprep.mubr.bf16.mxu0 %v1435
      %1719 = vmatmul.mubr.bf16.gmra.mrb[0].mxu0 %v1434
      %v1720 = vpop.f32.mrb[0].mxu0
      %v1721 = vadd.f32 0.0, %v1720
      %v1722 = vpop.f32.mrb[0].mxu0
      %v1723 = vpop.f32.mrb[0].mxu0
      %v1724 = vadd.f32 0.0, %v1723
      %v1725 = vpop.f32.mrb[0].mxu0
      %1726 = vmatprep.mubr.bf16.mxu0 %v1438
      %1727 = vmatmul.mubr.bf16.gmra.mrb[0].mxu0 %v1437
      %v1728 = vpop.f32.mrb[0].mxu0
      %v1729 = vadd.f32 0.0, %v1728
      %v1730 = vpop.f32.mrb[0].mxu0
      %v1731 = vpop.f32.mrb[0].mxu0
      %v1732 = vadd.f32 0.0, %v1731
      %v1733 = vpop.f32.mrb[0].mxu0
      %1734 = vmatprep.mubr.bf16.mxu0 %v1441
      %1735 = vmatmul.mubr.bf16.gmra.mrb[0].mxu0 %v1440
      %v1736 = vpop.f32.mrb[0].mxu0
      %v1737 = vadd.f32 0.0, %v1736
      %v1738 = vpop.f32.mrb[0].mxu0
      %v1739 = vpop.f32.mrb[0].mxu0
      %v1740 = vadd.f32 0.0, %v1739
      %v1741 = vpop.f32.mrb[0].mxu0
      %1742 = vmatprep.mubr.bf16.mxu0 %v1444
      %1743 = vmatmul.mubr.bf16.gmra.mrb[0].mxu0 %v1443
      %v1744 = vpop.f32.mrb[0].mxu0
      %v1745 = vadd.f32 0.0, %v1744
      %v1746 = vpop.f32.mrb[0].mxu0
      %v1747 = vpop.f32.mrb[0].mxu0
      %v1748 = vadd.f32 0.0, %v1747
      %v1749 = vpop.f32.mrb[0].mxu0
      %1750 = vdwg.mxu0
      %1751 = vmatprep.subr.bf16.mxu0 0
      %1752 = vmatpush1.bf16.msra.mxu0 %v1606
      %1753 = vmatprep.subr.bf16.mxu0 0
      %1754 = vmatpush1.bf16.msra.mxu0 %v1607
      %1755 = vmatprep.subr.bf16.mxu0 0
      %1756 = vmatpush1.bf16.msra.mxu0 %v1608
      %1757 = vmatprep.subr.bf16.mxu0 0
      %1758 = vmatpush1.bf16.msra.mxu0 %v1609
      %1759 = vmatprep.subr.bf16.mxu0 0
      %1760 = vmatpush1.bf16.msra.mxu0 %v1610
      %1761 = vmatprep.subr.bf16.mxu0 0
      %1762 = vmatpush1.bf16.msra.mxu0 %v1611
      %1763 = vmatprep.subr.bf16.mxu0 0
      %1764 = vmatpush1.bf16.msra.mxu0 %v1612
      %1765 = vmatprep.subr.bf16.mxu0 0
      %1766 = vmatpush1.bf16.msra.mxu0 %v1613
      %1767 = vmatprep.subr.bf16.mxu0 0
      %1768 = vmatpush1.bf16.msra.mxu0 0
      %1769 = vmatprep.subr.bf16.mxu0 0
      %1770 = vmatpush1.bf16.msra.mxu0 0
      %1771 = vmatprep.subr.bf16.mxu0 0
      %1772 = vmatpush1.bf16.msra.mxu0 0
      %1773 = vmatprep.subr.bf16.mxu0 0
      %1774 = vmatpush1.bf16.msra.mxu0 0
      %1775 = vmatprep.subr.bf16.mxu0 0
      %1776 = vmatpush1.bf16.msra.mxu0 0
      %1777 = vmatprep.subr.bf16.mxu0 0
      %1778 = vmatpush1.bf16.msra.mxu0 0
      %1779 = vmatprep.subr.bf16.mxu0 0
      %1780 = vmatpush1.bf16.msra.mxu0 0
      %1781 = vmatprep.subr.bf16.mxu0 0
      %1782 = vmatpush1.bf16.msra.mxu0 0
      %1783 = vmatprep.mubr.bf16.mxu0 0
      %1784 = vmatmul.mubr.bf16.gmra.mrb[0].mxu0 %v1418
      %v1785 = vpop.f32.mrb[0].mxu0
      %v1786 = vadd.f32 %v1673, %v1785
      %v1787 = vpop.f32.mrb[0].mxu0
      %v1788 = vpop.f32.mrb[0].mxu0
      %v1789 = vadd.f32 %v1676, %v1788
      %v1790 = vpop.f32.mrb[0].mxu0
      %1791 = vmatprep.mubr.bf16.mxu0 0
      %1792 = vmatmul.mubr.bf16.gmra.mrb[0].mxu0 %v1421
      %v1793 = vpop.f32.mrb[0].mxu0
      %v1794 = vadd.f32 %v1681, %v1793
      %v1795 = vpop.f32.mrb[0].mxu0
      %v1796 = vpop.f32.mrb[0].mxu0
      %v1797 = vadd.f32 %v1684, %v1796
      %v1798 = vpop.f32.mrb[0].mxu0
      %1799 = vmatprep.mubr.bf16.mxu0 0
      %1800 = vmatmul.mubr.bf16.gmra.mrb[0].mxu0 %v1424
      %v1801 = vpop.f32.mrb[0].mxu0
      %v1802 = vadd.f32 %v1689, %v1801
      %v1803 = vpop.f32.mrb[0].mxu0
      %v1804 = vpop.f32.mrb[0].mxu0
      %v1805 = vadd.f32 %v1692, %v1804
      %v1806 = vpop.f32.mrb[0].mxu0
      %1807 = vmatprep.mubr.bf16.mxu0 0
      %1808 = vmatmul.mubr.bf16.gmra.mrb[0].mxu0 %v1427
      %v1809 = vpop.f32.mrb[0].mxu0
      %v1810 = vadd.f32 %v1697, %v1809
      %v1811 = vpop.f32.mrb[0].mxu0
      %v1812 = vpop.f32.mrb[0].mxu0
      %v1813 = vadd.f32 %v1700, %v1812
      %v1814 = vpop.f32.mrb[0].mxu0
      %1815 = vmatprep.mubr.bf16.mxu0 0
      %1816 = vmatmul.mubr.bf16.gmra.mrb[0].mxu0 %v1430
      %v1817 = vpop.f32.mrb[0].mxu0
      %v1818 = vadd.f32 %v1705, %v1817
      %v1819 = vpop.f32.mrb[0].mxu0
      %v1820 = vpop.f32.mrb[0].mxu0
      %v1821 = vadd.f32 %v1708, %v1820
      %v1822 = vpop.f32.mrb[0].mxu0
      %1823 = vmatprep.mubr.bf16.mxu0 0
      %1824 = vmatmul.mubr.bf16.gmra.mrb[0].mxu0 %v1433
      %v1825 = vpop.f32.mrb[0].mxu0
      %v1826 = vadd.f32 %v1713, %v1825
      %v1827 = vpop.f32.mrb[0].mxu0
      %v1828 = vpop.f32.mrb[0].mxu0
      %v1829 = vadd.f32 %v1716, %v1828
      %v1830 = vpop.f32.mrb[0].mxu0
      %1831 = vmatprep.mubr.bf16.mxu0 0
      %1832 = vmatmul.mubr.bf16.gmra.mrb[0].mxu0 %v1436
      %v1833 = vpop.f32.mrb[0].mxu0
      %v1834 = vadd.f32 %v1721, %v1833
      %v1835 = vpop.f32.mrb[0].mxu0
      %v1836 = vpop.f32.mrb[0].mxu0
      %v1837 = vadd.f32 %v1724, %v1836
      %v1838 = vpop.f32.mrb[0].mxu0
      %1839 = vmatprep.mubr.bf16.mxu0 0
      %1840 = vmatmul.mubr.bf16.gmra.mrb[0].mxu0 %v1439
      %v1841 = vpop.f32.mrb[0].mxu0
      %v1842 = vadd.f32 %v1729, %v1841
      %v1843 = vpop.f32.mrb[0].mxu0
      %v1844 = vpop.f32.mrb[0].mxu0
      %v1845 = vadd.f32 %v1732, %v1844
      %v1846 = vpop.f32.mrb[0].mxu0
      %1847 = vmatprep.mubr.bf16.mxu0 0
      %1848 = vmatmul.mubr.bf16.gmra.mrb[0].mxu0 %v1442
      %v1849 = vpop.f32.mrb[0].mxu0
      %v1850 = vadd.f32 %v1737, %v1849
      %v1851 = vpop.f32.mrb[0].mxu0
      %v1852 = vpop.f32.mrb[0].mxu0
      %v1853 = vadd.f32 %v1740, %v1852
      %v1854 = vpop.f32.mrb[0].mxu0
      %1855 = vmatprep.mubr.bf16.mxu0 0
      %1856 = vmatmul.mubr.bf16.gmra.mrb[0].mxu0 %v1445
      %v1857 = vpop.f32.mrb[0].mxu0
      %v1858 = vadd.f32 %v1745, %v1857
      %v1859 = vpop.f32.mrb[0].mxu0
      %v1860 = vpop.f32.mrb[0].mxu0
      %v1861 = vadd.f32 %v1748, %v1860
      %v1862 = vpop.f32.mrb[0].mxu0
      %1863 = vdwg.mxu0
      %v1912 = vunpack.c.l.b16 %v867
      %v1913 = vunpack.c.l.b16 %v868
      %v1914 = vunpack.c.l.b16 %v869
      %v1915 = vunpack.c.l.b16 %v870
      %v1916 = vunpack.c.l.b16 %v871
      %v1917 = vunpack.c.l.b16 %v872
      %v1918 = vunpack.c.l.b16 %v873
      %v1919 = vunpack.c.l.b16 %v874
      %v1920 = vunpack.c.l.b16 %v875
      %v1921 = vunpack.c.l.b16 %v876
      %v1922 = vunpack.c.l.b16 %v877
      %v1923 = vunpack.c.l.b16 %v878
      %v1924 = vunpack.c.l.b16 %v879
      %v1925 = vunpack.c.l.b16 %v880
      %v1926 = vunpack.c.l.b16 %v881
      %v1927 = vunpack.c.l.b16 %v882
      %v1928 = vunpack.c.l.b16 %v883
      %v1929 = vunpack.c.l.b16 %v884
      %v1930 = vunpack.c.l.b16 %v885
      %v1931 = vunpack.c.l.b16 %v886
      %v1932 = vunpack.c.l.b16 %v887
      %v1933 = vunpack.c.l.b16 %v888
      %v1934 = vunpack.c.l.b16 %v889
      %v1935 = vunpack.c.l.b16 %v890
      %v1936 = vunpack.c.l.b16 %v891
      %v1937 = vunpack.c.l.b16 %v892
      %v1938 = vunpack.c.l.b16 %v893
      %v1939 = vunpack.c.l.b16 %v894
      %v1940 = vunpack.c.l.b16 %v895
      %v1941 = vunpack.c.l.b16 %v896
      %v1942 = vunpack.c.l.b16 %v897
      %v1943 = vunpack.c.l.b16 %v898
      %v1944 = vunpack.c.l.b16 %v899
      %v1945 = vunpack.c.l.b16 %v900
      %v1946 = vunpack.c.l.b16 %v901
      %v1947 = vunpack.c.l.b16 %v902
      %v1948 = vunpack.c.l.b16 %v903
      %v1949 = vunpack.c.l.b16 %v904
      %v1950 = vunpack.c.l.b16 %v905
      %v1951 = vunpack.c.l.b16 %v906
      %v1952 = vunpack.c.l.b16 %v907
      %v1953 = vunpack.c.l.b16 %v908
      %v1954 = vunpack.c.l.b16 %v909
      %v1955 = vunpack.c.l.b16 %v910
      %v1956 = vunpack.c.l.b16 %v911
      %v1957 = vunpack.c.l.b16 %v912
      %v1958 = vunpack.c.l.b16 %v913
      %v1959 = vunpack.c.l.b16 %v914
      %v1960 = vpack.c.b16 %v1913, %v1912
      %v1961 = vpack.c.b16 %v1915, %v1914
      %v1962 = vpack.c.b16 %v1917, %v1916
      %v1963 = vpack.c.b16 %v1919, %v1918
      %v1964 = vpack.c.b16 %v1921, %v1920
      %v1965 = vpack.c.b16 %v1923, %v1922
      %v1966 = vpack.c.b16 %v1925, %v1924
      %v1967 = vpack.c.b16 %v1927, %v1926
      %v1968 = vpack.c.b16 %v1929, %v1928
      %v1969 = vpack.c.b16 %v1931, %v1930
      %v1970 = vpack.c.b16 %v1933, %v1932
      %v1971 = vpack.c.b16 %v1935, %v1934
      %v1972 = vpack.c.b16 %v1937, %v1936
      %v1973 = vpack.c.b16 %v1939, %v1938
      %v1974 = vpack.c.b16 %v1941, %v1940
      %v1975 = vpack.c.b16 %v1943, %v1942
      %v1976 = vpack.c.b16 %v1945, %v1944
      %v1977 = vpack.c.b16 %v1947, %v1946
      %v1978 = vpack.c.b16 %v1949, %v1948
      %v1979 = vpack.c.b16 %v1951, %v1950
      %v1980 = vpack.c.b16 %v1953, %v1952
      %v1981 = vpack.c.b16 %v1955, %v1954
      %v1982 = vpack.c.b16 %v1957, %v1956
      %v1983 = vpack.c.b16 %v1959, %v1958
      %2008 = vmatprep.subr.bf16.mxu0 0
      %2009 = vmatpush1.bf16.msra.mxu0 %v1960
      %2010 = vmatprep.subr.bf16.mxu0 0
      %2011 = vmatpush1.bf16.msra.mxu0 %v1961
      %2012 = vmatprep.subr.bf16.mxu0 0
      %2013 = vmatpush1.bf16.msra.mxu0 %v1962
      %2014 = vmatprep.subr.bf16.mxu0 0
      %2015 = vmatpush1.bf16.msra.mxu0 %v1963
      %2016 = vmatprep.subr.bf16.mxu0 0
      %2017 = vmatpush1.bf16.msra.mxu0 %v1964
      %2018 = vmatprep.subr.bf16.mxu0 0
      %2019 = vmatpush1.bf16.msra.mxu0 %v1965
      %2020 = vmatprep.subr.bf16.mxu0 0
      %2021 = vmatpush1.bf16.msra.mxu0 %v1966
      %2022 = vmatprep.subr.bf16.mxu0 0
      %2023 = vmatpush1.bf16.msra.mxu0 %v1967
      %2024 = vmatprep.subr.bf16.mxu0 0
      %2025 = vmatpush1.bf16.msra.mxu0 %v1968
      %2026 = vmatprep.subr.bf16.mxu0 0
      %2027 = vmatpush1.bf16.msra.mxu0 %v1969
      %2028 = vmatprep.subr.bf16.mxu0 0
      %2029 = vmatpush1.bf16.msra.mxu0 %v1970
      %2030 = vmatprep.subr.bf16.mxu0 0
      %2031 = vmatpush1.bf16.msra.mxu0 %v1971
      %2032 = vmatprep.subr.bf16.mxu0 0
      %2033 = vmatpush1.bf16.msra.mxu0 %v1972
      %2034 = vmatprep.subr.bf16.mxu0 0
      %2035 = vmatpush1.bf16.msra.mxu0 %v1973
      %2036 = vmatprep.subr.bf16.mxu0 0
      %2037 = vmatpush1.bf16.msra.mxu0 %v1974
      %2038 = vmatprep.subr.bf16.mxu0 0
      %2039 = vmatpush1.bf16.msra.mxu0 %v1975
      %2040 = vmatprep.mubr.bf16.mxu0 %v838
      %2041 = vmatmul.mubr.bf16.gmra.mrb[0].mxu0 %v837
      %v2042 = vpop.f32.mrb[0].mxu0
      %v2043 = vadd.f32 %v1786, %v2042
      %v2044 = vpop.f32.mrb[0].mxu0
      %v2045 = vpop.f32.mrb[0].mxu0
      %v2046 = vadd.f32 %v1789, %v2045
      %v2047 = vpop.f32.mrb[0].mxu0
      %2048 = vmatprep.mubr.bf16.mxu0 %v841
      %2049 = vmatmul.mubr.bf16.gmra.mrb[0].mxu0 %v840
      %v2050 = vpop.f32.mrb[0].mxu0
      %v2051 = vadd.f32 %v1794, %v2050
      %v2052 = vpop.f32.mrb[0].mxu0
      %v2053 = vpop.f32.mrb[0].mxu0
      %v2054 = vadd.f32 %v1797, %v2053
      %v2055 = vpop.f32.mrb[0].mxu0
      %2056 = vmatprep.mubr.bf16.mxu0 %v844
      %2057 = vmatmul.mubr.bf16.gmra.mrb[0].mxu0 %v843
      %v2058 = vpop.f32.mrb[0].mxu0
      %v2059 = vadd.f32 %v1802, %v2058
      %v2060 = vpop.f32.mrb[0].mxu0
      %v2061 = vpop.f32.mrb[0].mxu0
      %v2062 = vadd.f32 %v1805, %v2061
      %v2063 = vpop.f32.mrb[0].mxu0
      %2064 = vmatprep.mubr.bf16.mxu0 %v847
      %2065 = vmatmul.mubr.bf16.gmra.mrb[0].mxu0 %v846
      %v2066 = vpop.f32.mrb[0].mxu0
      %v2067 = vadd.f32 %v1810, %v2066
      %v2068 = vpop.f32.mrb[0].mxu0
      %v2069 = vpop.f32.mrb[0].mxu0
      %v2070 = vadd.f32 %v1813, %v2069
      %v2071 = vpop.f32.mrb[0].mxu0
      %2072 = vmatprep.mubr.bf16.mxu0 %v850
      %2073 = vmatmul.mubr.bf16.gmra.mrb[0].mxu0 %v849
      %v2074 = vpop.f32.mrb[0].mxu0
      %v2075 = vadd.f32 %v1818, %v2074
      %v2076 = vpop.f32.mrb[0].mxu0
      %v2077 = vpop.f32.mrb[0].mxu0
      %v2078 = vadd.f32 %v1821, %v2077
      %v2079 = vpop.f32.mrb[0].mxu0
      %2080 = vmatprep.mubr.bf16.mxu0 %v853
      %2081 = vmatmul.mubr.bf16.gmra.mrb[0].mxu0 %v852
      %v2082 = vpop.f32.mrb[0].mxu0
      %v2083 = vadd.f32 %v1826, %v2082
      %v2084 = vpop.f32.mrb[0].mxu0
      %v2085 = vpop.f32.mrb[0].mxu0
      %v2086 = vadd.f32 %v1829, %v2085
      %v2087 = vpop.f32.mrb[0].mxu0
      %2088 = vmatprep.mubr.bf16.mxu0 %v856
      %2089 = vmatmul.mubr.bf16.gmra.mrb[0].mxu0 %v855
      %v2090 = vpop.f32.mrb[0].mxu0
      %v2091 = vadd.f32 %v1834, %v2090
      %v2092 = vpop.f32.mrb[0].mxu0
      %v2093 = vpop.f32.mrb[0].mxu0
      %v2094 = vadd.f32 %v1837, %v2093
      %v2095 = vpop.f32.mrb[0].mxu0
      %2096 = vmatprep.mubr.bf16.mxu0 %v859
      %2097 = vmatmul.mubr.bf16.gmra.mrb[0].mxu0 %v858
      %v2098 = vpop.f32.mrb[0].mxu0
      %v2099 = vadd.f32 %v1842, %v2098
      %v2100 = vpop.f32.mrb[0].mxu0
      %v2101 = vpop.f32.mrb[0].mxu0
      %v2102 = vadd.f32 %v1845, %v2101
      %v2103 = vpop.f32.mrb[0].mxu0
      %2104 = vmatprep.mubr.bf16.mxu0 %v862
      %2105 = vmatmul.mubr.bf16.gmra.mrb[0].mxu0 %v861
      %v2106 = vpop.f32.mrb[0].mxu0
      %v2107 = vadd.f32 %v1850, %v2106
      %v2108 = vpop.f32.mrb[0].mxu0
      %v2109 = vpop.f32.mrb[0].mxu0
      %v2110 = vadd.f32 %v1853, %v2109
      %v2111 = vpop.f32.mrb[0].mxu0
      %2112 = vmatprep.mubr.bf16.mxu0 %v865
      %2113 = vmatmul.mubr.bf16.gmra.mrb[0].mxu0 %v864
      %v2114 = vpop.f32.mrb[0].mxu0
      %v2115 = vadd.f32 %v1858, %v2114
      %v2116 = vpop.f32.mrb[0].mxu0
      %v2117 = vpop.f32.mrb[0].mxu0
      %v2118 = vadd.f32 %v1861, %v2117
      %v2119 = vpop.f32.mrb[0].mxu0
      %2120 = vdwg.mxu0
      %2121 = vmatprep.subr.bf16.mxu0 0
      %2122 = vmatpush1.bf16.msra.mxu0 %v1976
      %2123 = vmatprep.subr.bf16.mxu0 0
      %2124 = vmatpush1.bf16.msra.mxu0 %v1977
      %2125 = vmatprep.subr.bf16.mxu0 0
      %2126 = vmatpush1.bf16.msra.mxu0 %v1978
      %2127 = vmatprep.subr.bf16.mxu0 0
      %2128 = vmatpush1.bf16.msra.mxu0 %v1979
      %2129 = vmatprep.subr.bf16.mxu0 0
      %2130 = vmatpush1.bf16.msra.mxu0 %v1980
      %2131 = vmatprep.subr.bf16.mxu0 0
      %2132 = vmatpush1.bf16.msra.mxu0 %v1981
      %2133 = vmatprep.subr.bf16.mxu0 0
      %2134 = vmatpush1.bf16.msra.mxu0 %v1982
      %2135 = vmatprep.subr.bf16.mxu0 0
      %2136 = vmatpush1.bf16.msra.mxu0 %v1983
      %2137 = vmatprep.subr.bf16.mxu0 0
      %2138 = vmatpush1.bf16.msra.mxu0 0
      %2139 = vmatprep.subr.bf16.mxu0 0
      %2140 = vmatpush1.bf16.msra.mxu0 0
      %2141 = vmatprep.subr.bf16.mxu0 0
      %2142 = vmatpush1.bf16.msra.mxu0 0
      %2143 = vmatprep.subr.bf16.mxu0 0
      %2144 = vmatpush1.bf16.msra.mxu0 0
      %2145 = vmatprep.subr.bf16.mxu0 0
      %2146 = vmatpush1.bf16.msra.mxu0 0
      %2147 = vmatprep.subr.bf16.mxu0 0
      %2148 = vmatpush1.bf16.msra.mxu0 0
      %2149 = vmatprep.subr.bf16.mxu0 0
      %2150 = vmatpush1.bf16.msra.mxu0 0
      %2151 = vmatprep.subr.bf16.mxu0 0
      %2152 = vmatpush1.bf16.msra.mxu0 0
      %2153 = vmatprep.mubr.bf16.mxu0 0
      %2154 = vmatmul.mubr.bf16.gmra.mrb[0].mxu0 %v839
      %v2155 = vpop.f32.mrb[0].mxu0
      %v2156 = vadd.f32 %v2043, %v2155
      %v2157 = vpop.f32.mrb[0].mxu0
      %v2158 = vpop.f32.mrb[0].mxu0
      %v2159 = vadd.f32 %v2046, %v2158
      %v2160 = vpop.f32.mrb[0].mxu0
      %2161 = vmatprep.mubr.bf16.mxu0 0
      %2162 = vmatmul.mubr.bf16.gmra.mrb[0].mxu0 %v842
      %v2163 = vpop.f32.mrb[0].mxu0
      %v2164 = vadd.f32 %v2051, %v2163
      %v2165 = vpop.f32.mrb[0].mxu0
      %v2166 = vpop.f32.mrb[0].mxu0
      %v2167 = vadd.f32 %v2054, %v2166
      %v2168 = vpop.f32.mrb[0].mxu0
      %2169 = vmatprep.mubr.bf16.mxu0 0
      %2170 = vmatmul.mubr.bf16.gmra.mrb[0].mxu0 %v845
      %v2171 = vpop.f32.mrb[0].mxu0
      %v2172 = vadd.f32 %v2059, %v2171
      %v2173 = vpop.f32.mrb[0].mxu0
      %v2174 = vpop.f32.mrb[0].mxu0
      %v2175 = vadd.f32 %v2062, %v2174
      %v2176 = vpop.f32.mrb[0].mxu0
      %2177 = vmatprep.mubr.bf16.mxu0 0
      %2178 = vmatmul.mubr.bf16.gmra.mrb[0].mxu0 %v848
      %v2179 = vpop.f32.mrb[0].mxu0
      %v2180 = vadd.f32 %v2067, %v2179
      %v2181 = vpop.f32.mrb[0].mxu0
      %v2182 = vpop.f32.mrb[0].mxu0
      %v2183 = vadd.f32 %v2070, %v2182
      %v2184 = vpop.f32.mrb[0].mxu0
      %2185 = vmatprep.mubr.bf16.mxu0 0
      %2186 = vmatmul.mubr.bf16.gmra.mrb[0].mxu0 %v851
      %v2187 = vpop.f32.mrb[0].mxu0
      %v2188 = vadd.f32 %v2075, %v2187
      %v2189 = vpop.f32.mrb[0].mxu0
      %v2190 = vpop.f32.mrb[0].mxu0
      %v2191 = vadd.f32 %v2078, %v2190
      %v2192 = vpop.f32.mrb[0].mxu0
      %2193 = vmatprep.mubr.bf16.mxu0 0
      %2194 = vmatmul.mubr.bf16.gmra.mrb[0].mxu0 %v854
      %v2195 = vpop.f32.mrb[0].mxu0
      %v2196 = vadd.f32 %v2083, %v2195
      %v2197 = vpop.f32.mrb[0].mxu0
      %v2198 = vpop.f32.mrb[0].mxu0
      %v2199 = vadd.f32 %v2086, %v2198
      %v2200 = vpop.f32.mrb[0].mxu0
      %2201 = vmatprep.mubr.bf16.mxu0 0
      %2202 = vmatmul.mubr.bf16.gmra.mrb[0].mxu0 %v857
      %v2203 = vpop.f32.mrb[0].mxu0
      %v2204 = vadd.f32 %v2091, %v2203
      %v2205 = vpop.f32.mrb[0].mxu0
      %v2206 = vpop.f32.mrb[0].mxu0
      %v2207 = vadd.f32 %v2094, %v2206
      %v2208 = vpop.f32.mrb[0].mxu0
      %2209 = vmatprep.mubr.bf16.mxu0 0
      %2210 = vmatmul.mubr.bf16.gmra.mrb[0].mxu0 %v860
      %v2211 = vpop.f32.mrb[0].mxu0
      %v2212 = vadd.f32 %v2099, %v2211
      %v2213 = vpop.f32.mrb[0].mxu0
      %v2214 = vpop.f32.mrb[0].mxu0
      %v2215 = vadd.f32 %v2102, %v2214
      %v2216 = vpop.f32.mrb[0].mxu0
      %2217 = vmatprep.mubr.bf16.mxu0 0
      %2218 = vmatmul.mubr.bf16.gmra.mrb[0].mxu0 %v863
      %v2219 = vpop.f32.mrb[0].mxu0
      %v2220 = vadd.f32 %v2107, %v2219
      %v2221 = vpop.f32.mrb[0].mxu0
      %v2222 = vpop.f32.mrb[0].mxu0
      %v2223 = vadd.f32 %v2110, %v2222
      %v2224 = vpop.f32.mrb[0].mxu0
      %2225 = vmatprep.mubr.bf16.mxu0 0
      %2226 = vmatmul.mubr.bf16.gmra.mrb[0].mxu0 %v866
      %v2227 = vpop.f32.mrb[0].mxu0
      %v2228 = vadd.f32 %v2115, %v2227
      %v2229 = vpop.f32.mrb[0].mxu0
      %v2230 = vpop.f32.mrb[0].mxu0
      %v2231 = vadd.f32 %v2118, %v2230
      %v2232 = vpop.f32.mrb[0].mxu0
      %2233 = vdwg.mxu0
      %s2234 = scalar_lea.vmem %s280, 24
      %v2235 = vld [vmem:[%s2234] sm:$0xf]
      %v2236 = vld [vmem:[%s2234 + $0x4] sm:$0xf]
      %v2237 = vld [vmem:[%s2234 + $0xc] sm:$0xf]
      %v2238 = vld [vmem:[%s2234 + $0x10] sm:$0xf]
      %v2239 = vld [vmem:[%s2234 + $0x18] sm:$0xf]
      %v2240 = vld [vmem:[%s2234 + $0x1c] sm:$0xf]
      %v2241 = vld [vmem:[%s2234 + $0x24] sm:$0xf]
      %v2242 = vld [vmem:[%s2234 + $0x28] sm:$0xf]
      %v2243 = vld [vmem:[%s2234 + $0x30] sm:$0xf]
      %v2244 = vld [vmem:[%s2234 + $0x34] sm:$0xf]
      %v2245 = vld [vmem:[%s2234 + $0x3c] sm:$0xf]
      %v2246 = vld [vmem:[%s2234 + $0x40] sm:$0xf]
      %v2247 = vld [vmem:[%s2234 + $0x48] sm:$0xf]
      %v2248 = vld [vmem:[%s2234 + $0x4c] sm:$0xf]
      %v2249 = vld [vmem:[%s2234 + $0x54] sm:$0xf]
      %v2250 = vld [vmem:[%s2234 + $0x58] sm:$0xf]
      %v2251 = vld [vmem:[%s2234 + $0x60] sm:$0xf]
      %v2252 = vld [vmem:[%s2234 + $0x64] sm:$0xf]
      %v2253 = vld [vmem:[%s2234 + $0x6c] sm:$0xf]
      %v2254 = vld [vmem:[%s2234 + $0x70] sm:$0xf]
      %v2275 = vunpack.c.l.b16 %v2235
      %v2276 = vunpack.c.l.b16 %v2236
      %v2277 = vunpack.c.l.b16 %v2237
      %v2278 = vunpack.c.l.b16 %v2238
      %v2279 = vunpack.c.l.b16 %v2239
      %v2280 = vunpack.c.l.b16 %v2240
      %v2281 = vunpack.c.l.b16 %v2241
      %v2282 = vunpack.c.l.b16 %v2242
      %v2283 = vunpack.c.l.b16 %v2243
      %v2284 = vunpack.c.l.b16 %v2244
      %v2285 = vunpack.c.l.b16 %v2245
      %v2286 = vunpack.c.l.b16 %v2246
      %v2287 = vunpack.c.l.b16 %v2247
      %v2288 = vunpack.c.l.b16 %v2248
      %v2289 = vunpack.c.l.b16 %v2249
      %v2290 = vunpack.c.l.b16 %v2250
      %v2291 = vunpack.c.l.b16 %v2251
      %v2292 = vunpack.c.l.b16 %v2252
      %v2293 = vunpack.c.l.b16 %v2253
      %v2294 = vunpack.c.l.b16 %v2254
      %v2295 = vpack.c.b16 %v2276, %v2275
      %v2296 = vpack.c.b16 %v2278, %v2277
      %v2297 = vpack.c.b16 %v2280, %v2279
      %v2298 = vpack.c.b16 %v2282, %v2281
      %v2299 = vpack.c.b16 %v2284, %v2283
      %v2300 = vpack.c.b16 %v2286, %v2285
      %v2301 = vpack.c.b16 %v2288, %v2287
      %v2302 = vpack.c.b16 %v2290, %v2289
      %v2303 = vpack.c.b16 %v2292, %v2291
      %v2304 = vpack.c.b16 %v2294, %v2293
      %2315 = vst.msk [vmem:[#allocation3] sm:$0xff] %vm414, %v2295
      %2316 = vst.msk [vmem:[#allocation3 + $0x18] sm:$0xff] %vm414, %v2296
      %2317 = vst.msk [vmem:[#allocation3 + $0x30] sm:$0xff] %vm414, %v2297
      %2318 = vst.msk [vmem:[#allocation3 + $0x48] sm:$0xff] %vm414, %v2298
      %2319 = vst.msk [vmem:[#allocation3 + $0x60] sm:$0xff] %vm414, %v2299
      %2320 = vst.msk [vmem:[#allocation3 + $0x78] sm:$0xff] %vm414, %v2300
      %2321 = vst.msk [vmem:[#allocation3 + $0x90] sm:$0xff] %vm414, %v2301
      %2322 = vst.msk [vmem:[#allocation3 + $0xa8] sm:$0xff] %vm414, %v2302
      %2323 = vst.msk [vmem:[#allocation3 + $0xc0] sm:$0xff] %vm414, %v2303
      %2324 = vst.msk [vmem:[#allocation3 + $0xd8] sm:$0xff] %vm414, %v2304
      %v2325 = vld [vmem:[%s2234] sm:$0xf]
      %v2326 = vld [vmem:[%s2234 + $0x4] sm:$0xf]
      %v2327 = vld [vmem:[%s2234 + $0x8] sm:$0x1]
      %v2328 = vld [vmem:[%s2234 + $0xc] sm:$0xf]
      %v2329 = vld [vmem:[%s2234 + $0x10] sm:$0xf]
      %v2330 = vld [vmem:[%s2234 + $0x14] sm:$0x1]
      %v2331 = vld [vmem:[%s2234 + $0x18] sm:$0xf]
      %v2332 = vld [vmem:[%s2234 + $0x1c] sm:$0xf]
      %v2333 = vld [vmem:[%s2234 + $0x20] sm:$0x1]
      %v2334 = vld [vmem:[%s2234 + $0x24] sm:$0xf]
      %v2335 = vld [vmem:[%s2234 + $0x28] sm:$0xf]
      %v2336 = vld [vmem:[%s2234 + $0x2c] sm:$0x1]
      %v2337 = vld [vmem:[%s2234 + $0x30] sm:$0xf]
      %v2338 = vld [vmem:[%s2234 + $0x34] sm:$0xf]
      %v2339 = vld [vmem:[%s2234 + $0x38] sm:$0x1]
      %v2340 = vld [vmem:[%s2234 + $0x3c] sm:$0xf]
      %v2341 = vld [vmem:[%s2234 + $0x40] sm:$0xf]
      %v2342 = vld [vmem:[%s2234 + $0x44] sm:$0x1]
      %v2343 = vld [vmem:[%s2234 + $0x48] sm:$0xf]
      %v2344 = vld [vmem:[%s2234 + $0x4c] sm:$0xf]
      %v2345 = vld [vmem:[%s2234 + $0x50] sm:$0x1]
      %v2346 = vld [vmem:[%s2234 + $0x54] sm:$0xf]
      %v2347 = vld [vmem:[%s2234 + $0x58] sm:$0xf]
      %v2348 = vld [vmem:[%s2234 + $0x5c] sm:$0x1]
      %v2349 = vld [vmem:[%s2234 + $0x60] sm:$0xf]
      %v2350 = vld [vmem:[%s2234 + $0x64] sm:$0xf]
      %v2351 = vld [vmem:[%s2234 + $0x68] sm:$0x1]
      %v2352 = vld [vmem:[%s2234 + $0x6c] sm:$0xf]
      %v2353 = vld [vmem:[%s2234 + $0x70] sm:$0xf]
      %v2354 = vld [vmem:[%s2234 + $0x74] sm:$0x1]
      %v2385 = vunpack.c.l.b16 %v2325
      %v2386 = vunpack.c.l.b16 %v2326
      %v2387 = vunpack.c.l.b16 %v2327
      %v2388 = vunpack.c.l.b16 %v2328
      %v2389 = vunpack.c.l.b16 %v2329
      %v2390 = vunpack.c.l.b16 %v2330
      %v2391 = vunpack.c.l.b16 %v2331
      %v2392 = vunpack.c.l.b16 %v2332
      %v2393 = vunpack.c.l.b16 %v2333
      %v2394 = vunpack.c.l.b16 %v2334
      %v2395 = vunpack.c.l.b16 %v2335
      %v2396 = vunpack.c.l.b16 %v2336
      %v2397 = vunpack.c.l.b16 %v2337
      %v2398 = vunpack.c.l.b16 %v2338
      %v2399 = vunpack.c.l.b16 %v2339
      %v2400 = vunpack.c.l.b16 %v2340
      %v2401 = vunpack.c.l.b16 %v2341
      %v2402 = vunpack.c.l.b16 %v2342
      %v2403 = vunpack.c.l.b16 %v2343
      %v2404 = vunpack.c.l.b16 %v2344
      %v2405 = vunpack.c.l.b16 %v2345
      %v2406 = vunpack.c.l.b16 %v2346
      %v2407 = vunpack.c.l.b16 %v2347
      %v2408 = vunpack.c.l.b16 %v2348
      %v2409 = vunpack.c.l.b16 %v2349
      %v2410 = vunpack.c.l.b16 %v2350
      %v2411 = vunpack.c.l.b16 %v2351
      %v2412 = vunpack.c.l.b16 %v2352
      %v2413 = vunpack.c.l.b16 %v2353
      %v2414 = vunpack.c.l.b16 %v2354
      %v2415 = vpack.c.b16 %v2386, %v2385
      %v2416 = vpack.c.b16 %v2387, %v2387
      %v2417 = vpack.c.b16 %v2389, %v2388
      %v2418 = vpack.c.b16 %v2390, %v2390
      %v2419 = vpack.c.b16 %v2392, %v2391
      %v2420 = vpack.c.b16 %v2393, %v2393
      %v2421 = vpack.c.b16 %v2395, %v2394
      %v2422 = vpack.c.b16 %v2396, %v2396
      %v2423 = vpack.c.b16 %v2398, %v2397
      %v2424 = vpack.c.b16 %v2399, %v2399
      %v2425 = vpack.c.b16 %v2401, %v2400
      %v2426 = vpack.c.b16 %v2402, %v2402
      %v2427 = vpack.c.b16 %v2404, %v2403
      %v2428 = vpack.c.b16 %v2405, %v2405
      %v2429 = vpack.c.b16 %v2407, %v2406
      %v2430 = vpack.c.b16 %v2408, %v2408
      %v2431 = vpack.c.b16 %v2410, %v2409
      %v2432 = vpack.c.b16 %v2411, %v2411
      %v2433 = vpack.c.b16 %v2413, %v2412
      %v2434 = vpack.c.b16 %v2414, %v2414
      %v2436 = vshrl.u32 %v2415, 16
      %v2438 = vshll.u32 %v2415, 16
      %v2440 = vrot.slane %v2438, 1
      %v2441 = vor.u32 %v2436, %v2440
      %v2443 = vshll.u32 %v2416, 16
      %v2445 = vrot.slane %v2443, 1
      %v2446 = vsel %vm535, %v2441, %v2445
      %v2448 = vshrl.u32 %v2417, 16
      %v2450 = vshll.u32 %v2417, 16
      %v2452 = vrot.slane %v2450, 1
      %v2453 = vor.u32 %v2448, %v2452
      %v2455 = vshll.u32 %v2418, 16
      %v2457 = vrot.slane %v2455, 1
      %v2458 = vsel %vm535, %v2453, %v2457
      %v2460 = vshrl.u32 %v2419, 16
      %v2462 = vshll.u32 %v2419, 16
      %v2464 = vrot.slane %v2462, 1
      %v2465 = vor.u32 %v2460, %v2464
      %v2467 = vshll.u32 %v2420, 16
      %v2469 = vrot.slane %v2467, 1
      %v2470 = vsel %vm535, %v2465, %v2469
      %v2472 = vshrl.u32 %v2421, 16
      %v2474 = vshll.u32 %v2421, 16
      %v2476 = vrot.slane %v2474, 1
      %v2477 = vor.u32 %v2472, %v2476
      %v2479 = vshll.u32 %v2422, 16
      %v2481 = vrot.slane %v2479, 1
      %v2482 = vsel %vm535, %v2477, %v2481
      %v2484 = vshrl.u32 %v2423, 16
      %v2486 = vshll.u32 %v2423, 16
      %v2488 = vrot.slane %v2486, 1
      %v2489 = vor.u32 %v2484, %v2488
      %v2491 = vshll.u32 %v2424, 16
      %v2493 = vrot.slane %v2491, 1
      %v2494 = vsel %vm535, %v2489, %v2493
      %v2496 = vshrl.u32 %v2425, 16
      %v2498 = vshll.u32 %v2425, 16
      %v2500 = vrot.slane %v2498, 1
      %v2501 = vor.u32 %v2496, %v2500
      %v2503 = vshll.u32 %v2426, 16
      %v2505 = vrot.slane %v2503, 1
      %v2506 = vsel %vm535, %v2501, %v2505
      %v2508 = vshrl.u32 %v2427, 16
      %v2510 = vshll.u32 %v2427, 16
      %v2512 = vrot.slane %v2510, 1
      %v2513 = vor.u32 %v2508, %v2512
      %v2515 = vshll.u32 %v2428, 16
      %v2517 = vrot.slane %v2515, 1
      %v2518 = vsel %vm535, %v2513, %v2517
      %v2520 = vshrl.u32 %v2429, 16
      %v2522 = vshll.u32 %v2429, 16
      %v2524 = vrot.slane %v2522, 1
      %v2525 = vor.u32 %v2520, %v2524
      %v2527 = vshll.u32 %v2430, 16
      %v2529 = vrot.slane %v2527, 1
      %v2530 = vsel %vm535, %v2525, %v2529
      %v2532 = vshrl.u32 %v2431, 16
      %v2534 = vshll.u32 %v2431, 16
      %v2536 = vrot.slane %v2534, 1
      %v2537 = vor.u32 %v2532, %v2536
      %v2539 = vshll.u32 %v2432, 16
      %v2541 = vrot.slane %v2539, 1
      %v2542 = vsel %vm535, %v2537, %v2541
      %v2544 = vshrl.u32 %v2433, 16
      %v2546 = vshll.u32 %v2433, 16
      %v2548 = vrot.slane %v2546, 1
      %v2549 = vor.u32 %v2544, %v2548
      %v2551 = vshll.u32 %v2434, 16
      %v2553 = vrot.slane %v2551, 1
      %v2554 = vsel %vm535, %v2549, %v2553
      %2565 = vst.msk [vmem:[#allocation3 + $0x8] sm:$0xff] %vm414, %v2446
      %2566 = vst.msk [vmem:[#allocation3 + $0x20] sm:$0xff] %vm414, %v2458
      %2567 = vst.msk [vmem:[#allocation3 + $0x38] sm:$0xff] %vm414, %v2470
      %2568 = vst.msk [vmem:[#allocation3 + $0x50] sm:$0xff] %vm414, %v2482
      %2569 = vst.msk [vmem:[#allocation3 + $0x68] sm:$0xff] %vm414, %v2494
      %2570 = vst.msk [vmem:[#allocation3 + $0x80] sm:$0xff] %vm414, %v2506
      %2571 = vst.msk [vmem:[#allocation3 + $0x98] sm:$0xff] %vm414, %v2518
      %2572 = vst.msk [vmem:[#allocation3 + $0xb0] sm:$0xff] %vm414, %v2530
      %2573 = vst.msk [vmem:[#allocation3 + $0xc8] sm:$0xff] %vm414, %v2542
      %2574 = vst.msk [vmem:[#allocation3 + $0xe0] sm:$0xff] %vm414, %v2554
      %v2575 = vld [vmem:[%s2234] sm:$0xe]
      %v2576 = vld [vmem:[%s2234 + $0x4] sm:$0xf]
      %v2577 = vld [vmem:[%s2234 + $0x8] sm:$0x1]
      %v2578 = vld [vmem:[%s2234 + $0xc] sm:$0xe]
      %v2579 = vld [vmem:[%s2234 + $0x10] sm:$0xf]
      %v2580 = vld [vmem:[%s2234 + $0x14] sm:$0x1]
      %v2581 = vld [vmem:[%s2234 + $0x18] sm:$0xe]
      %v2582 = vld [vmem:[%s2234 + $0x1c] sm:$0xf]
      %v2583 = vld [vmem:[%s2234 + $0x20] sm:$0x1]
      %v2584 = vld [vmem:[%s2234 + $0x24] sm:$0xe]
      %v2585 = vld [vmem:[%s2234 + $0x28] sm:$0xf]
      %v2586 = vld [vmem:[%s2234 + $0x2c] sm:$0x1]
      %v2587 = vld [vmem:[%s2234 + $0x30] sm:$0xe]
      %v2588 = vld [vmem:[%s2234 + $0x34] sm:$0xf]
      %v2589 = vld [vmem:[%s2234 + $0x38] sm:$0x1]
      %v2590 = vld [vmem:[%s2234 + $0x3c] sm:$0xe]
      %v2591 = vld [vmem:[%s2234 + $0x40] sm:$0xf]
      %v2592 = vld [vmem:[%s2234 + $0x44] sm:$0x1]
      %v2593 = vld [vmem:[%s2234 + $0x48] sm:$0xe]
      %v2594 = vld [vmem:[%s2234 + $0x4c] sm:$0xf]
      %v2595 = vld [vmem:[%s2234 + $0x50] sm:$0x1]
      %v2596 = vld [vmem:[%s2234 + $0x54] sm:$0xe]
      %v2597 = vld [vmem:[%s2234 + $0x58] sm:$0xf]
      %v2598 = vld [vmem:[%s2234 + $0x5c] sm:$0x1]
      %v2599 = vld [vmem:[%s2234 + $0x60] sm:$0xe]
      %v2600 = vld [vmem:[%s2234 + $0x64] sm:$0xf]
      %v2601 = vld [vmem:[%s2234 + $0x68] sm:$0x1]
      %v2602 = vld [vmem:[%s2234 + $0x6c] sm:$0xe]
      %v2603 = vld [vmem:[%s2234 + $0x70] sm:$0xf]
      %v2604 = vld [vmem:[%s2234 + $0x74] sm:$0x1]
      %v2635 = vunpack.c.l.b16 %v2575
      %v2636 = vunpack.c.l.b16 %v2576
      %v2637 = vunpack.c.l.b16 %v2577
      %v2638 = vunpack.c.l.b16 %v2578
      %v2639 = vunpack.c.l.b16 %v2579
      %v2640 = vunpack.c.l.b16 %v2580
      %v2641 = vunpack.c.l.b16 %v2581
      %v2642 = vunpack.c.l.b16 %v2582
      %v2643 = vunpack.c.l.b16 %v2583
      %v2644 = vunpack.c.l.b16 %v2584
      %v2645 = vunpack.c.l.b16 %v2585
      %v2646 = vunpack.c.l.b16 %v2586
      %v2647 = vunpack.c.l.b16 %v2587
      %v2648 = vunpack.c.l.b16 %v2588
      %v2649 = vunpack.c.l.b16 %v2589
      %v2650 = vunpack.c.l.b16 %v2590
      %v2651 = vunpack.c.l.b16 %v2591
      %v2652 = vunpack.c.l.b16 %v2592
      %v2653 = vunpack.c.l.b16 %v2593
      %v2654 = vunpack.c.l.b16 %v2594
      %v2655 = vunpack.c.l.b16 %v2595
      %v2656 = vunpack.c.l.b16 %v2596
      %v2657 = vunpack.c.l.b16 %v2597
      %v2658 = vunpack.c.l.b16 %v2598
      %v2659 = vunpack.c.l.b16 %v2599
      %v2660 = vunpack.c.l.b16 %v2600
      %v2661 = vunpack.c.l.b16 %v2601
      %v2662 = vunpack.c.l.b16 %v2602
      %v2663 = vunpack.c.l.b16 %v2603
      %v2664 = vunpack.c.l.b16 %v2604
      %v2665 = vpack.c.b16 %v2636, %v2635
      %v2666 = vpack.c.b16 %v2637, %v2637
      %v2667 = vpack.c.b16 %v2639, %v2638
      %v2668 = vpack.c.b16 %v2640, %v2640
      %v2669 = vpack.c.b16 %v2642, %v2641
      %v2670 = vpack.c.b16 %v2643, %v2643
      %v2671 = vpack.c.b16 %v2645, %v2644
      %v2672 = vpack.c.b16 %v2646, %v2646
      %v2673 = vpack.c.b16 %v2648, %v2647
      %v2674 = vpack.c.b16 %v2649, %v2649
      %v2675 = vpack.c.b16 %v2651, %v2650
      %v2676 = vpack.c.b16 %v2652, %v2652
      %v2677 = vpack.c.b16 %v2654, %v2653
      %v2678 = vpack.c.b16 %v2655, %v2655
      %v2679 = vpack.c.b16 %v2657, %v2656
      %v2680 = vpack.c.b16 %v2658, %v2658
      %v2681 = vpack.c.b16 %v2660, %v2659
      %v2682 = vpack.c.b16 %v2661, %v2661
      %v2683 = vpack.c.b16 %v2663, %v2662
      %v2684 = vpack.c.b16 %v2664, %v2664
      %v2685 = vrot.slane %v2665, 1
      %v2686 = vrot.slane %v2666, 1
      %v2687 = vsel %vm786, %v2685, %v2686
      %v2688 = vrot.slane %v2667, 1
      %v2689 = vrot.slane %v2668, 1
      %v2690 = vsel %vm786, %v2688, %v2689
      %v2691 = vrot.slane %v2669, 1
      %v2692 = vrot.slane %v2670, 1
      %v2693 = vsel %vm786, %v2691, %v2692
      %v2694 = vrot.slane %v2671, 1
      %v2695 = vrot.slane %v2672, 1
      %v2696 = vsel %vm786, %v2694, %v2695
      %v2697 = vrot.slane %v2673, 1
      %v2698 = vrot.slane %v2674, 1
      %v2699 = vsel %vm786, %v2697, %v2698
      %v2700 = vrot.slane %v2675, 1
      %v2701 = vrot.slane %v2676, 1
      %v2702 = vsel %vm786, %v2700, %v2701
      %v2703 = vrot.slane %v2677, 1
      %v2704 = vrot.slane %v2678, 1
      %v2705 = vsel %vm786, %v2703, %v2704
      %v2706 = vrot.slane %v2679, 1
      %v2707 = vrot.slane %v2680, 1
      %v2708 = vsel %vm786, %v2706, %v2707
      %v2709 = vrot.slane %v2681, 1
      %v2710 = vrot.slane %v2682, 1
      %v2711 = vsel %vm786, %v2709, %v2710
      %v2712 = vrot.slane %v2683, 1
      %v2713 = vrot.slane %v2684, 1
      %v2714 = vsel %vm786, %v2712, %v2713
      %2725 = vst.msk [vmem:[#allocation3 + $0x10] sm:$0xff] %vm414, %v2687
      %2726 = vst.msk [vmem:[#allocation3 + $0x28] sm:$0xff] %vm414, %v2690
      %2727 = vst.msk [vmem:[#allocation3 + $0x40] sm:$0xff] %vm414, %v2693
      %2728 = vst.msk [vmem:[#allocation3 + $0x58] sm:$0xff] %vm414, %v2696
      %2729 = vst.msk [vmem:[#allocation3 + $0x70] sm:$0xff] %vm414, %v2699
      %2730 = vst.msk [vmem:[#allocation3 + $0x88] sm:$0xff] %vm414, %v2702
      %2731 = vst.msk [vmem:[#allocation3 + $0xa0] sm:$0xff] %vm414, %v2705
      %2732 = vst.msk [vmem:[#allocation3 + $0xb8] sm:$0xff] %vm414, %v2708
      %2733 = vst.msk [vmem:[#allocation3 + $0xd0] sm:$0xff] %vm414, %v2711
      %2734 = vst.msk [vmem:[#allocation3 + $0xe8] sm:$0xff] %vm414, %v2714
      %v2735 = vld [vmem:[#allocation3] sm:$0xff]
      %v2736 = vld [vmem:[#allocation3 + $0x8] sm:$0xff]
      %v2737 = vld [vmem:[#allocation3 + $0x10] sm:$0xff]
      %v2738 = vld [vmem:[#allocation3 + $0x18] sm:$0xff]
      %v2739 = vld [vmem:[#allocation3 + $0x20] sm:$0xff]
      %v2740 = vld [vmem:[#allocation3 + $0x28] sm:$0xff]
      %v2741 = vld [vmem:[#allocation3 + $0x30] sm:$0xff]
      %v2742 = vld [vmem:[#allocation3 + $0x38] sm:$0xff]
      %v2743 = vld [vmem:[#allocation3 + $0x40] sm:$0xff]
      %v2744 = vld [vmem:[#allocation3 + $0x48] sm:$0xff]
      %v2745 = vld [vmem:[#allocation3 + $0x50] sm:$0xff]
      %v2746 = vld [vmem:[#allocation3 + $0x58] sm:$0xff]
      %v2747 = vld [vmem:[#allocation3 + $0x60] sm:$0xff]
      %v2748 = vld [vmem:[#allocation3 + $0x68] sm:$0xff]
      %v2749 = vld [vmem:[#allocation3 + $0x70] sm:$0xff]
      %v2750 = vld [vmem:[#allocation3 + $0x78] sm:$0xff]
      %v2751 = vld [vmem:[#allocation3 + $0x80] sm:$0xff]
      %v2752 = vld [vmem:[#allocation3 + $0x88] sm:$0xff]
      %v2753 = vld [vmem:[#allocation3 + $0x90] sm:$0xff]
      %v2754 = vld [vmem:[#allocation3 + $0x98] sm:$0xff]
      %v2755 = vld [vmem:[#allocation3 + $0xa0] sm:$0xff]
      %v2756 = vld [vmem:[#allocation3 + $0xa8] sm:$0xff]
      %v2757 = vld [vmem:[#allocation3 + $0xb0] sm:$0xff]
      %v2758 = vld [vmem:[#allocation3 + $0xb8] sm:$0xff]
      %v2759 = vld [vmem:[#allocation3 + $0xc0] sm:$0xff]
      %v2760 = vld [vmem:[#allocation3 + $0xc8] sm:$0xff]
      %v2761 = vld [vmem:[#allocation3 + $0xd0] sm:$0xff]
      %v2762 = vld [vmem:[#allocation3 + $0xd8] sm:$0xff]
      %v2763 = vld [vmem:[#allocation3 + $0xe0] sm:$0xff]
      %v2764 = vld [vmem:[#allocation3 + $0xe8] sm:$0xff]
      %v2765 = vld [vmem:[%s2 + $0x180] sm:$0xf]
      %v2766 = vld [vmem:[%s2 + $0x184] sm:$0xf]
      %v2767 = vld [vmem:[%s2 + $0x188] sm:$0xf]
      %v2768 = vld [vmem:[%s2 + $0x18c] sm:$0xf]
      %v2769 = vld [vmem:[%s2 + $0x190] sm:$0xf]
      %v2770 = vld [vmem:[%s2 + $0x194] sm:$0xf]
      %v2771 = vld [vmem:[%s2 + $0x198] sm:$0xf]
      %v2772 = vld [vmem:[%s2 + $0x19c] sm:$0xf]
      %v2773 = vld [vmem:[%s2 + $0x1a0] sm:$0xf]
      %v2774 = vld [vmem:[%s2 + $0x1a4] sm:$0xf]
      %v2775 = vld [vmem:[%s2 + $0x1a8] sm:$0xf]
      %v2776 = vld [vmem:[%s2 + $0x1ac] sm:$0xf]
      %v2777 = vld [vmem:[%s2 + $0x1b0] sm:$0xf]
      %v2778 = vld [vmem:[%s2 + $0x1b4] sm:$0xf]
      %v2779 = vld [vmem:[%s2 + $0x1b8] sm:$0xf]
      %v2780 = vld [vmem:[%s2 + $0x1bc] sm:$0xf]
      %v2781 = vld [vmem:[%s2 + $0x1c0] sm:$0xf]
      %v2782 = vld [vmem:[%s2 + $0x1c4] sm:$0xf]
      %v2783 = vld [vmem:[%s2 + $0x1c8] sm:$0xf]
      %v2784 = vld [vmem:[%s2 + $0x1cc] sm:$0xf]
      %v2785 = vld [vmem:[%s2 + $0x1d0] sm:$0xf]
      %v2786 = vld [vmem:[%s2 + $0x1d4] sm:$0xf]
      %v2787 = vld [vmem:[%s2 + $0x1d8] sm:$0xf]
      %v2788 = vld [vmem:[%s2 + $0x1dc] sm:$0xf]
      %v2789 = vld [vmem:[%s2 + $0x1e0] sm:$0xf]
      %v2790 = vld [vmem:[%s2 + $0x1e4] sm:$0xf]
      %v2791 = vld [vmem:[%s2 + $0x1e8] sm:$0xf]
      %v2792 = vld [vmem:[%s2 + $0x1ec] sm:$0xf]
      %v2793 = vld [vmem:[%s2 + $0x1f0] sm:$0xf]
      %v2794 = vld [vmem:[%s2 + $0x1f4] sm:$0xf]
      %v2795 = vld [vmem:[%s2 + $0x1f8] sm:$0xf]
      %v2796 = vld [vmem:[%s2 + $0x1fc] sm:$0xf]
      %v2797 = vld [vmem:[%s2 + $0x200] sm:$0xf]
      %v2798 = vld [vmem:[%s2 + $0x204] sm:$0xf]
      %v2799 = vld [vmem:[%s2 + $0x208] sm:$0xf]
      %v2800 = vld [vmem:[%s2 + $0x20c] sm:$0xf]
      %v2801 = vld [vmem:[%s2 + $0x210] sm:$0xf]
      %v2802 = vld [vmem:[%s2 + $0x214] sm:$0xf]
      %v2803 = vld [vmem:[%s2 + $0x218] sm:$0xf]
      %v2804 = vld [vmem:[%s2 + $0x21c] sm:$0xf]
      %v2805 = vld [vmem:[%s2 + $0x220] sm:$0xf]
      %v2806 = vld [vmem:[%s2 + $0x224] sm:$0xf]
      %v2807 = vld [vmem:[%s2 + $0x228] sm:$0xf]
      %v2808 = vld [vmem:[%s2 + $0x22c] sm:$0xf]
      %v2809 = vld [vmem:[%s2 + $0x230] sm:$0xf]
      %v2810 = vld [vmem:[%s2 + $0x234] sm:$0xf]
      %v2811 = vld [vmem:[%s2 + $0x238] sm:$0xf]
      %v2812 = vld [vmem:[%s2 + $0x23c] sm:$0xf]
      %v2861 = vunpack.c.l.b16 %v2765
      %v2862 = vunpack.c.l.b16 %v2766
      %v2863 = vunpack.c.l.b16 %v2767
      %v2864 = vunpack.c.l.b16 %v2768
      %v2865 = vunpack.c.l.b16 %v2769
      %v2866 = vunpack.c.l.b16 %v2770
      %v2867 = vunpack.c.l.b16 %v2771
      %v2868 = vunpack.c.l.b16 %v2772
      %v2869 = vunpack.c.l.b16 %v2773
      %v2870 = vunpack.c.l.b16 %v2774
      %v2871 = vunpack.c.l.b16 %v2775
      %v2872 = vunpack.c.l.b16 %v2776
      %v2873 = vunpack.c.l.b16 %v2777
      %v2874 = vunpack.c.l.b16 %v2778
      %v2875 = vunpack.c.l.b16 %v2779
      %v2876 = vunpack.c.l.b16 %v2780
      %v2877 = vunpack.c.l.b16 %v2781
      %v2878 = vunpack.c.l.b16 %v2782
      %v2879 = vunpack.c.l.b16 %v2783
      %v2880 = vunpack.c.l.b16 %v2784
      %v2881 = vunpack.c.l.b16 %v2785
      %v2882 = vunpack.c.l.b16 %v2786
      %v2883 = vunpack.c.l.b16 %v2787
      %v2884 = vunpack.c.l.b16 %v2788
      %v2885 = vunpack.c.l.b16 %v2789
      %v2886 = vunpack.c.l.b16 %v2790
      %v2887 = vunpack.c.l.b16 %v2791
      %v2888 = vunpack.c.l.b16 %v2792
      %v2889 = vunpack.c.l.b16 %v2793
      %v2890 = vunpack.c.l.b16 %v2794
      %v2891 = vunpack.c.l.b16 %v2795
      %v2892 = vunpack.c.l.b16 %v2796
      %v2893 = vunpack.c.l.b16 %v2797
      %v2894 = vunpack.c.l.b16 %v2798
      %v2895 = vunpack.c.l.b16 %v2799
      %v2896 = vunpack.c.l.b16 %v2800
      %v2897 = vunpack.c.l.b16 %v2801
      %v2898 = vunpack.c.l.b16 %v2802
      %v2899 = vunpack.c.l.b16 %v2803
      %v2900 = vunpack.c.l.b16 %v2804
      %v2901 = vunpack.c.l.b16 %v2805
      %v2902 = vunpack.c.l.b16 %v2806
      %v2903 = vunpack.c.l.b16 %v2807
      %v2904 = vunpack.c.l.b16 %v2808
      %v2905 = vunpack.c.l.b16 %v2809
      %v2906 = vunpack.c.l.b16 %v2810
      %v2907 = vunpack.c.l.b16 %v2811
      %v2908 = vunpack.c.l.b16 %v2812
      %v2909 = vpack.c.b16 %v2862, %v2861
      %v2910 = vpack.c.b16 %v2864, %v2863
      %v2911 = vpack.c.b16 %v2866, %v2865
      %v2912 = vpack.c.b16 %v2868, %v2867
      %v2913 = vpack.c.b16 %v2870, %v2869
      %v2914 = vpack.c.b16 %v2872, %v2871
      %v2915 = vpack.c.b16 %v2874, %v2873
      %v2916 = vpack.c.b16 %v2876, %v2875
      %v2917 = vpack.c.b16 %v2878, %v2877
      %v2918 = vpack.c.b16 %v2880, %v2879
      %v2919 = vpack.c.b16 %v2882, %v2881
      %v2920 = vpack.c.b16 %v2884, %v2883
      %v2921 = vpack.c.b16 %v2886, %v2885
      %v2922 = vpack.c.b16 %v2888, %v2887
      %v2923 = vpack.c.b16 %v2890, %v2889
      %v2924 = vpack.c.b16 %v2892, %v2891
      %v2925 = vpack.c.b16 %v2894, %v2893
      %v2926 = vpack.c.b16 %v2896, %v2895
      %v2927 = vpack.c.b16 %v2898, %v2897
      %v2928 = vpack.c.b16 %v2900, %v2899
      %v2929 = vpack.c.b16 %v2902, %v2901
      %v2930 = vpack.c.b16 %v2904, %v2903
      %v2931 = vpack.c.b16 %v2906, %v2905
      %v2932 = vpack.c.b16 %v2908, %v2907
      %2957 = vmatprep.subr.bf16.mxu0 0
      %2958 = vmatpush1.bf16.msra.mxu0 %v2909
      %2959 = vmatprep.subr.bf16.mxu0 0
      %2960 = vmatpush1.bf16.msra.mxu0 %v2910
      %2961 = vmatprep.subr.bf16.mxu0 0
      %2962 = vmatpush1.bf16.msra.mxu0 %v2911
      %2963 = vmatprep.subr.bf16.mxu0 0
      %2964 = vmatpush1.bf16.msra.mxu0 %v2912
      %2965 = vmatprep.subr.bf16.mxu0 0
      %2966 = vmatpush1.bf16.msra.mxu0 %v2913
      %2967 = vmatprep.subr.bf16.mxu0 0
      %2968 = vmatpush1.bf16.msra.mxu0 %v2914
      %2969 = vmatprep.subr.bf16.mxu0 0
      %2970 = vmatpush1.bf16.msra.mxu0 %v2915
      %2971 = vmatprep.subr.bf16.mxu0 0
      %2972 = vmatpush1.bf16.msra.mxu0 %v2916
      %2973 = vmatprep.subr.bf16.mxu0 0
      %2974 = vmatpush1.bf16.msra.mxu0 %v2917
      %2975 = vmatprep.subr.bf16.mxu0 0
      %2976 = vmatpush1.bf16.msra.mxu0 %v2918
      %2977 = vmatprep.subr.bf16.mxu0 0
      %2978 = vmatpush1.bf16.msra.mxu0 %v2919
      %2979 = vmatprep.subr.bf16.mxu0 0
      %2980 = vmatpush1.bf16.msra.mxu0 %v2920
      %2981 = vmatprep.subr.bf16.mxu0 0
      %2982 = vmatpush1.bf16.msra.mxu0 %v2921
      %2983 = vmatprep.subr.bf16.mxu0 0
      %2984 = vmatpush1.bf16.msra.mxu0 %v2922
      %2985 = vmatprep.subr.bf16.mxu0 0
      %2986 = vmatpush1.bf16.msra.mxu0 %v2923
      %2987 = vmatprep.subr.bf16.mxu0 0
      %2988 = vmatpush1.bf16.msra.mxu0 %v2924
      %2989 = vmatprep.mubr.bf16.mxu0 %v2736
      %2990 = vmatmul.mubr.bf16.gmra.mrb[0].mxu0 %v2735
      %v2991 = vpop.f32.mrb[0].mxu0
      %v2992 = vadd.f32 0.0, %v2991
      %v2993 = vpop.f32.mrb[0].mxu0
      %v2994 = vpop.f32.mrb[0].mxu0
      %v2995 = vadd.f32 0.0, %v2994
      %v2996 = vpop.f32.mrb[0].mxu0
      %2997 = vmatprep.mubr.bf16.mxu0 %v2739
      %2998 = vmatmul.mubr.bf16.gmra.mrb[0].mxu0 %v2738
      %v2999 = vpop.f32.mrb[0].mxu0
      %v3000 = vadd.f32 0.0, %v2999
      %v3001 = vpop.f32.mrb[0].mxu0
      %v3002 = vpop.f32.mrb[0].mxu0
      %v3003 = vadd.f32 0.0, %v3002
      %v3004 = vpop.f32.mrb[0].mxu0
      %3005 = vmatprep.mubr.bf16.mxu0 %v2742
      %3006 = vmatmul.mubr.bf16.gmra.mrb[0].mxu0 %v2741
      %v3007 = vpop.f32.mrb[0].mxu0
      %v3008 = vadd.f32 0.0, %v3007
      %v3009 = vpop.f32.mrb[0].mxu0
      %v3010 = vpop.f32.mrb[0].mxu0
      %v3011 = vadd.f32 0.0, %v3010
      %v3012 = vpop.f32.mrb[0].mxu0
      %3013 = vmatprep.mubr.bf16.mxu0 %v2745
      %3014 = vmatmul.mubr.bf16.gmra.mrb[0].mxu0 %v2744
      %v3015 = vpop.f32.mrb[0].mxu0
      %v3016 = vadd.f32 0.0, %v3015
      %v3017 = vpop.f32.mrb[0].mxu0
      %v3018 = vpop.f32.mrb[0].mxu0
      %v3019 = vadd.f32 0.0, %v3018
      %v3020 = vpop.f32.mrb[0].mxu0
      %3021 = vmatprep.mubr.bf16.mxu0 %v2748
      %3022 = vmatmul.mubr.bf16.gmra.mrb[0].mxu0 %v2747
      %v3023 = vpop.f32.mrb[0].mxu0
      %v3024 = vadd.f32 0.0, %v3023
      %v3025 = vpop.f32.mrb[0].mxu0
      %v3026 = vpop.f32.mrb[0].mxu0
      %v3027 = vadd.f32 0.0, %v3026
      %v3028 = vpop.f32.mrb[0].mxu0
      %3029 = vmatprep.mubr.bf16.mxu0 %v2751
      %3030 = vmatmul.mubr.bf16.gmra.mrb[0].mxu0 %v2750
      %v3031 = vpop.f32.mrb[0].mxu0
      %v3032 = vadd.f32 0.0, %v3031
      %v3033 = vpop.f32.mrb[0].mxu0
      %v3034 = vpop.f32.mrb[0].mxu0
      %v3035 = vadd.f32 0.0, %v3034
      %v3036 = vpop.f32.mrb[0].mxu0
      %3037 = vmatprep.mubr.bf16.mxu0 %v2754
      %3038 = vmatmul.mubr.bf16.gmra.mrb[0].mxu0 %v2753
      %v3039 = vpop.f32.mrb[0].mxu0
      %v3040 = vadd.f32 0.0, %v3039
      %v3041 = vpop.f32.mrb[0].mxu0
      %v3042 = vpop.f32.mrb[0].mxu0
      %v3043 = vadd.f32 0.0, %v3042
      %v3044 = vpop.f32.mrb[0].mxu0
      %3045 = vmatprep.mubr.bf16.mxu0 %v2757
      %3046 = vmatmul.mubr.bf16.gmra.mrb[0].mxu0 %v2756
      %v3047 = vpop.f32.mrb[0].mxu0
      %v3048 = vadd.f32 0.0, %v3047
      %v3049 = vpop.f32.mrb[0].mxu0
      %v3050 = vpop.f32.mrb[0].mxu0
      %v3051 = vadd.f32 0.0, %v3050
      %v3052 = vpop.f32.mrb[0].mxu0
      %3053 = vmatprep.mubr.bf16.mxu0 %v2760
      %3054 = vmatmul.mubr.bf16.gmra.mrb[0].mxu0 %v2759
      %v3055 = vpop.f32.mrb[0].mxu0
      %v3056 = vadd.f32 0.0, %v3055
      %v3057 = vpop.f32.mrb[0].mxu0
      %v3058 = vpop.f32.mrb[0].mxu0
      %v3059 = vadd.f32 0.0, %v3058
      %v3060 = vpop.f32.mrb[0].mxu0
      %3061 = vmatprep.mubr.bf16.mxu0 %v2763
      %3062 = vmatmul.mubr.bf16.gmra.mrb[0].mxu0 %v2762
      %v3063 = vpop.f32.mrb[0].mxu0
      %v3064 = vadd.f32 0.0, %v3063
      %v3065 = vpop.f32.mrb[0].mxu0
      %v3066 = vpop.f32.mrb[0].mxu0
      %v3067 = vadd.f32 0.0, %v3066
      %v3068 = vpop.f32.mrb[0].mxu0
      %3069 = vdwg.mxu0
      %3070 = vmatprep.subr.bf16.mxu0 0
      %3071 = vmatpush1.bf16.msra.mxu0 %v2925
      %3072 = vmatprep.subr.bf16.mxu0 0
      %3073 = vmatpush1.bf16.msra.mxu0 %v2926
      %3074 = vmatprep.subr.bf16.mxu0 0
      %3075 = vmatpush1.bf16.msra.mxu0 %v2927
      %3076 = vmatprep.subr.bf16.mxu0 0
      %3077 = vmatpush1.bf16.msra.mxu0 %v2928
      %3078 = vmatprep.subr.bf16.mxu0 0
      %3079 = vmatpush1.bf16.msra.mxu0 %v2929
      %3080 = vmatprep.subr.bf16.mxu0 0
      %3081 = vmatpush1.bf16.msra.mxu0 %v2930
      %3082 = vmatprep.subr.bf16.mxu0 0
      %3083 = vmatpush1.bf16.msra.mxu0 %v2931
      %3084 = vmatprep.subr.bf16.mxu0 0
      %3085 = vmatpush1.bf16.msra.mxu0 %v2932
      %3086 = vmatprep.subr.bf16.mxu0 0
      %3087 = vmatpush1.bf16.msra.mxu0 0
      %3088 = vmatprep.subr.bf16.mxu0 0
      %3089 = vmatpush1.bf16.msra.mxu0 0
      %3090 = vmatprep.subr.bf16.mxu0 0
      %3091 = vmatpush1.bf16.msra.mxu0 0
      %3092 = vmatprep.subr.bf16.mxu0 0
      %3093 = vmatpush1.bf16.msra.mxu0 0
      %3094 = vmatprep.subr.bf16.mxu0 0
      %3095 = vmatpush1.bf16.msra.mxu0 0
      %3096 = vmatprep.subr.bf16.mxu0 0
      %3097 = vmatpush1.bf16.msra.mxu0 0
      %3098 = vmatprep.subr.bf16.mxu0 0
      %3099 = vmatpush1.bf16.msra.mxu0 0
      %3100 = vmatprep.subr.bf16.mxu0 0
      %3101 = vmatpush1.bf16.msra.mxu0 0
      %3102 = vmatprep.mubr.bf16.mxu0 0
      %3103 = vmatmul.mubr.bf16.gmra.mrb[0].mxu0 %v2737
      %v3104 = vpop.f32.mrb[0].mxu0
      %v3105 = vadd.f32 %v2992, %v3104
      %v3106 = vpop.f32.mrb[0].mxu0
      %v3107 = vpop.f32.mrb[0].mxu0
      %v3108 = vadd.f32 %v2995, %v3107
      %v3109 = vpop.f32.mrb[0].mxu0
      %3110 = vmatprep.mubr.bf16.mxu0 0
      %3111 = vmatmul.mubr.bf16.gmra.mrb[0].mxu0 %v2740
      %v3112 = vpop.f32.mrb[0].mxu0
      %v3113 = vadd.f32 %v3000, %v3112
      %v3114 = vpop.f32.mrb[0].mxu0
      %v3115 = vpop.f32.mrb[0].mxu0
      %v3116 = vadd.f32 %v3003, %v3115
      %v3117 = vpop.f32.mrb[0].mxu0
      %3118 = vmatprep.mubr.bf16.mxu0 0
      %3119 = vmatmul.mubr.bf16.gmra.mrb[0].mxu0 %v2743
      %v3120 = vpop.f32.mrb[0].mxu0
      %v3121 = vadd.f32 %v3008, %v3120
      %v3122 = vpop.f32.mrb[0].mxu0
      %v3123 = vpop.f32.mrb[0].mxu0
      %v3124 = vadd.f32 %v3011, %v3123
      %v3125 = vpop.f32.mrb[0].mxu0
      %3126 = vmatprep.mubr.bf16.mxu0 0
      %3127 = vmatmul.mubr.bf16.gmra.mrb[0].mxu0 %v2746
      %v3128 = vpop.f32.mrb[0].mxu0
      %v3129 = vadd.f32 %v3016, %v3128
      %v3130 = vpop.f32.mrb[0].mxu0
      %v3131 = vpop.f32.mrb[0].mxu0
      %v3132 = vadd.f32 %v3019, %v3131
      %v3133 = vpop.f32.mrb[0].mxu0
      %3134 = vmatprep.mubr.bf16.mxu0 0
      %3135 = vmatmul.mubr.bf16.gmra.mrb[0].mxu0 %v2749
      %v3136 = vpop.f32.mrb[0].mxu0
      %v3137 = vadd.f32 %v3024, %v3136
      %v3138 = vpop.f32.mrb[0].mxu0
      %v3139 = vpop.f32.mrb[0].mxu0
      %v3140 = vadd.f32 %v3027, %v3139
      %v3141 = vpop.f32.mrb[0].mxu0
      %3142 = vmatprep.mubr.bf16.mxu0 0
      %3143 = vmatmul.mubr.bf16.gmra.mrb[0].mxu0 %v2752
      %v3144 = vpop.f32.mrb[0].mxu0
      %v3145 = vadd.f32 %v3032, %v3144
      %v3146 = vpop.f32.mrb[0].mxu0
      %v3147 = vpop.f32.mrb[0].mxu0
      %v3148 = vadd.f32 %v3035, %v3147
      %v3149 = vpop.f32.mrb[0].mxu0
      %3150 = vmatprep.mubr.bf16.mxu0 0
      %3151 = vmatmul.mubr.bf16.gmra.mrb[0].mxu0 %v2755
      %v3152 = vpop.f32.mrb[0].mxu0
      %v3153 = vadd.f32 %v3040, %v3152
      %v3154 = vpop.f32.mrb[0].mxu0
      %v3155 = vpop.f32.mrb[0].mxu0
      %v3156 = vadd.f32 %v3043, %v3155
      %v3157 = vpop.f32.mrb[0].mxu0
      %3158 = vmatprep.mubr.bf16.mxu0 0
      %3159 = vmatmul.mubr.bf16.gmra.mrb[0].mxu0 %v2758
      %v3160 = vpop.f32.mrb[0].mxu0
      %v3161 = vadd.f32 %v3048, %v3160
      %v3162 = vpop.f32.mrb[0].mxu0
      %v3163 = vpop.f32.mrb[0].mxu0
      %v3164 = vadd.f32 %v3051, %v3163
      %v3165 = vpop.f32.mrb[0].mxu0
      %3166 = vmatprep.mubr.bf16.mxu0 0
      %3167 = vmatmul.mubr.bf16.gmra.mrb[0].mxu0 %v2761
      %v3168 = vpop.f32.mrb[0].mxu0
      %v3169 = vadd.f32 %v3056, %v3168
      %v3170 = vpop.f32.mrb[0].mxu0
      %v3171 = vpop.f32.mrb[0].mxu0
      %v3172 = vadd.f32 %v3059, %v3171
      %v3173 = vpop.f32.mrb[0].mxu0
      %3174 = vmatprep.mubr.bf16.mxu0 0
      %3175 = vmatmul.mubr.bf16.gmra.mrb[0].mxu0 %v2764
      %v3176 = vpop.f32.mrb[0].mxu0
      %v3177 = vadd.f32 %v3064, %v3176
      %v3178 = vpop.f32.mrb[0].mxu0
      %v3179 = vpop.f32.mrb[0].mxu0
      %v3180 = vadd.f32 %v3067, %v3179
      %v3181 = vpop.f32.mrb[0].mxu0
      %3182 = vdwg.mxu0
      %v3183 = vadd.f32 %v2156, %v3105
      %v3184 = vadd.f32 %v2159, %v3108
      %v3185 = vadd.f32 %v2164, %v3113
      %v3186 = vadd.f32 %v2167, %v3116
      %v3187 = vadd.f32 %v2172, %v3121
      %v3188 = vadd.f32 %v2175, %v3124
      %v3189 = vadd.f32 %v2180, %v3129
      %v3190 = vadd.f32 %v2183, %v3132
      %v3191 = vadd.f32 %v2188, %v3137
      %v3192 = vadd.f32 %v2191, %v3140
      %v3193 = vadd.f32 %v2196, %v3145
      %v3194 = vadd.f32 %v2199, %v3148
      %v3195 = vadd.f32 %v2204, %v3153
      %v3196 = vadd.f32 %v2207, %v3156
      %v3197 = vadd.f32 %v2212, %v3161
      %v3198 = vadd.f32 %v2215, %v3164
      %v3199 = vadd.f32 %v2220, %v3169
      %v3200 = vadd.f32 %v2223, %v3172
      %v3201 = vadd.f32 %v2228, %v3177
      %v3202 = vadd.f32 %v2231, %v3180
      %v3203 = vld [vmem:[%s4] sm:$0x1]
      %v3204 = vlaneseq
      %v3205 = vshrl.u32 %v3204, 7
      %v3206 = vsub.s32 0, %v3205
      %v3207 = vrot.slane %v3203, %v3206
      %v3208 = vadd.f32 %v3183, %v3207
      %v3209 = vadd.f32 %v3184, %v3207
      %v3210 = vadd.f32 %v3185, %v3207
      %v3211 = vadd.f32 %v3186, %v3207
      %v3212 = vadd.f32 %v3187, %v3207
      %v3213 = vadd.f32 %v3188, %v3207
      %v3214 = vadd.f32 %v3189, %v3207
      %v3215 = vadd.f32 %v3190, %v3207
      %v3216 = vadd.f32 %v3191, %v3207
      %v3217 = vadd.f32 %v3192, %v3207
      %v3218 = vadd.f32 %v3193, %v3207
      %v3219 = vadd.f32 %v3194, %v3207
      %v3220 = vadd.f32 %v3195, %v3207
      %v3221 = vadd.f32 %v3196, %v3207
      %v3222 = vadd.f32 %v3197, %v3207
      %v3223 = vadd.f32 %v3198, %v3207
      %v3224 = vadd.f32 %v3199, %v3207
      %v3225 = vadd.f32 %v3200, %v3207
      %v3226 = vadd.f32 %v3201, %v3207
      %v3227 = vadd.f32 %v3202, %v3207
      %v3228 = vmax.f32 %v3208, 0.0
      %v3229 = vmax.f32 %v3209, 0.0
      %v3230 = vmax.f32 %v3210, 0.0
      %v3231 = vmax.f32 %v3211, 0.0
      %v3232 = vmax.f32 %v3212, 0.0
      %v3233 = vmax.f32 %v3213, 0.0
      %v3234 = vmax.f32 %v3214, 0.0
      %v3235 = vmax.f32 %v3215, 0.0
      %v3236 = vmax.f32 %v3216, 0.0
      %v3237 = vmax.f32 %v3217, 0.0
      %v3238 = vmax.f32 %v3218, 0.0
      %v3239 = vmax.f32 %v3219, 0.0
      %v3240 = vmax.f32 %v3220, 0.0
      %v3241 = vmax.f32 %v3221, 0.0
      %v3242 = vmax.f32 %v3222, 0.0
      %v3243 = vmax.f32 %v3223, 0.0
      %v3244 = vmax.f32 %v3224, 0.0
      %v3245 = vmax.f32 %v3225, 0.0
      %v3246 = vmax.f32 %v3226, 0.0
      %v3247 = vmax.f32 %v3227, 0.0
      %v3248 = vpack.c.bf16 %v3229, %v3228
      %v3249 = vpack.c.bf16 %v3231, %v3230
      %v3250 = vpack.c.bf16 %v3233, %v3232
      %v3251 = vpack.c.bf16 %v3235, %v3234
      %v3252 = vpack.c.bf16 %v3237, %v3236
      %v3253 = vpack.c.bf16 %v3239, %v3238
      %v3254 = vpack.c.bf16 %v3241, %v3240
      %v3255 = vpack.c.bf16 %v3243, %v3242
      %v3256 = vpack.c.bf16 %v3245, %v3244
      %v3257 = vpack.c.bf16 %v3247, %v3246
      %v3268 = vunpack.c.l.b16 %v3248
      %v3269 = vunpack.c.h.b16 %v3248
      %v3270 = vunpack.c.l.b16 %v3249
      %v3271 = vunpack.c.h.b16 %v3249
      %v3272 = vunpack.c.l.b16 %v3250
      %v3273 = vunpack.c.h.b16 %v3250
      %v3274 = vunpack.c.l.b16 %v3251
      %v3275 = vunpack.c.h.b16 %v3251
      %v3276 = vunpack.c.l.b16 %v3252
      %v3277 = vunpack.c.h.b16 %v3252
      %v3278 = vunpack.c.l.b16 %v3253
      %v3279 = vunpack.c.h.b16 %v3253
      %v3280 = vunpack.c.l.b16 %v3254
      %v3281 = vunpack.c.h.b16 %v3254
      %v3282 = vunpack.c.l.b16 %v3255
      %v3283 = vunpack.c.h.b16 %v3255
      %v3284 = vunpack.c.l.b16 %v3256
      %v3285 = vunpack.c.h.b16 %v3256
      %v3286 = vunpack.c.l.b16 %v3257
      %v3287 = vunpack.c.h.b16 %v3257
      %v3288 = vpack.c.b16 %v3268, %v3268
      %v3289 = vpack.c.b16 %v3269, %v3269
      %v3290 = vpack.c.b16 %v3270, %v3270
      %v3291 = vpack.c.b16 %v3271, %v3271
      %v3292 = vpack.c.b16 %v3272, %v3272
      %v3293 = vpack.c.b16 %v3273, %v3273
      %v3294 = vpack.c.b16 %v3274, %v3274
      %v3295 = vpack.c.b16 %v3275, %v3275
      %v3296 = vpack.c.b16 %v3276, %v3276
      %v3297 = vpack.c.b16 %v3277, %v3277
      %v3298 = vpack.c.b16 %v3278, %v3278
      %v3299 = vpack.c.b16 %v3279, %v3279
      %v3300 = vpack.c.b16 %v3280, %v3280
      %v3301 = vpack.c.b16 %v3281, %v3281
      %v3302 = vpack.c.b16 %v3282, %v3282
      %v3303 = vpack.c.b16 %v3283, %v3283
      %v3304 = vpack.c.b16 %v3284, %v3284
      %v3305 = vpack.c.b16 %v3285, %v3285
      %v3306 = vpack.c.b16 %v3286, %v3286
      %v3307 = vpack.c.b16 %v3287, %v3287
      %vm3308 = vsmask.f32 256
      %vm3309 = vsmask.f32 4368
      %vm3310 = vmor %vm3308, %vm3309
      %v3312 = vshrl.u32 %v3288, 16
      %v3314 = vrot.slane %v3312, 7
      %v3315 = vshll.u32 %v3288, 16
      %v3317 = vor.u32 %v3314, %v3315
      %v3318 = vrot.slane %v3314, 4
      %v3320 = vshrl.u32 %v3289, 16
      %v3322 = vrot.slane %v3320, 7
      %v3323 = vshll.u32 %v3289, 16
      %v3325 = vor.u32 %v3322, %v3323
      %v3326 = vsel %vm3310, %v3318, %v3325
      %v3327 = vrot.slane %v3322, 4
      %v3329 = vshrl.u32 %v3290, 16
      %v3331 = vrot.slane %v3329, 7
      %v3332 = vshll.u32 %v3290, 16
      %v3334 = vor.u32 %v3331, %v3332
      %v3335 = vrot.slane %v3331, 4
      %v3337 = vshrl.u32 %v3291, 16
      %v3339 = vrot.slane %v3337, 7
      %v3340 = vshll.u32 %v3291, 16
      %v3342 = vor.u32 %v3339, %v3340
      %v3343 = vsel %vm3310, %v3335, %v3342
      %v3344 = vrot.slane %v3339, 4
      %v3346 = vshrl.u32 %v3292, 16
      %v3348 = vrot.slane %v3346, 7
      %v3349 = vshll.u32 %v3292, 16
      %v3351 = vor.u32 %v3348, %v3349
      %v3352 = vrot.slane %v3348, 4
      %v3354 = vshrl.u32 %v3293, 16
      %v3356 = vrot.slane %v3354, 7
      %v3357 = vshll.u32 %v3293, 16
      %v3359 = vor.u32 %v3356, %v3357
      %v3360 = vsel %vm3310, %v3352, %v3359
      %v3361 = vrot.slane %v3356, 4
      %v3363 = vshrl.u32 %v3294, 16
      %v3365 = vrot.slane %v3363, 7
      %v3366 = vshll.u32 %v3294, 16
      %v3368 = vor.u32 %v3365, %v3366
      %v3369 = vrot.slane %v3365, 4
      %v3371 = vshrl.u32 %v3295, 16
      %v3373 = vrot.slane %v3371, 7
      %v3374 = vshll.u32 %v3295, 16
      %v3376 = vor.u32 %v3373, %v3374
      %v3377 = vsel %vm3310, %v3369, %v3376
      %v3378 = vrot.slane %v3373, 4
      %v3380 = vshrl.u32 %v3296, 16
      %v3382 = vrot.slane %v3380, 7
      %v3383 = vshll.u32 %v3296, 16
      %v3385 = vor.u32 %v3382, %v3383
      %v3386 = vrot.slane %v3382, 4
      %v3388 = vshrl.u32 %v3297, 16
      %v3390 = vrot.slane %v3388, 7
      %v3391 = vshll.u32 %v3297, 16
      %v3393 = vor.u32 %v3390, %v3391
      %v3394 = vsel %vm3310, %v3386, %v3393
      %v3395 = vrot.slane %v3390, 4
      %v3397 = vshrl.u32 %v3298, 16
      %v3399 = vrot.slane %v3397, 7
      %v3400 = vshll.u32 %v3298, 16
      %v3402 = vor.u32 %v3399, %v3400
      %v3403 = vrot.slane %v3399, 4
      %v3405 = vshrl.u32 %v3299, 16
      %v3407 = vrot.slane %v3405, 7
      %v3408 = vshll.u32 %v3299, 16
      %v3410 = vor.u32 %v3407, %v3408
      %v3411 = vsel %vm3310, %v3403, %v3410
      %v3412 = vrot.slane %v3407, 4
      %v3414 = vshrl.u32 %v3300, 16
      %v3416 = vrot.slane %v3414, 7
      %v3417 = vshll.u32 %v3300, 16
      %v3419 = vor.u32 %v3416, %v3417
      %v3420 = vrot.slane %v3416, 4
      %v3422 = vshrl.u32 %v3301, 16
      %v3424 = vrot.slane %v3422, 7
      %v3425 = vshll.u32 %v3301, 16
      %v3427 = vor.u32 %v3424, %v3425
      %v3428 = vsel %vm3310, %v3420, %v3427
      %v3429 = vrot.slane %v3424, 4
      %v3431 = vshrl.u32 %v3302, 16
      %v3433 = vrot.slane %v3431, 7
      %v3434 = vshll.u32 %v3302, 16
      %v3436 = vor.u32 %v3433, %v3434
      %v3437 = vrot.slane %v3433, 4
      %v3439 = vshrl.u32 %v3303, 16
      %v3441 = vrot.slane %v3439, 7
      %v3442 = vshll.u32 %v3303, 16
      %v3444 = vor.u32 %v3441, %v3442
      %v3445 = vsel %vm3310, %v3437, %v3444
      %v3446 = vrot.slane %v3441, 4
      %v3448 = vshrl.u32 %v3304, 16
      %v3450 = vrot.slane %v3448, 7
      %v3451 = vshll.u32 %v3304, 16
      %v3453 = vor.u32 %v3450, %v3451
      %v3454 = vrot.slane %v3450, 4
      %v3456 = vshrl.u32 %v3305, 16
      %v3458 = vrot.slane %v3456, 7
      %v3459 = vshll.u32 %v3305, 16
      %v3461 = vor.u32 %v3458, %v3459
      %v3462 = vsel %vm3310, %v3454, %v3461
      %v3463 = vrot.slane %v3458, 4
      %v3465 = vshrl.u32 %v3306, 16
      %v3467 = vrot.slane %v3465, 7
      %v3468 = vshll.u32 %v3306, 16
      %v3470 = vor.u32 %v3467, %v3468
      %v3471 = vrot.slane %v3467, 4
      %v3473 = vshrl.u32 %v3307, 16
      %v3475 = vrot.slane %v3473, 7
      %v3476 = vshll.u32 %v3307, 16
      %v3478 = vor.u32 %v3475, %v3476
      %v3479 = vsel %vm3310, %v3471, %v3478
      %v3480 = vrot.slane %v3475, 4
      %vm3511 = vcmask 27648
      %vm3512 = vsmask.f32 7938
      %vm3513 = vmand %vm3511, %vm3512
      %v3514 = vld [vmem:[#allocation2] sm:$0xf]
      %v3515 = vsel %vm3513, %v3317, %v3514
      %3516 = vst [vmem:[#allocation2] sm:$0xf] %v3515
      %vm3517 = vcmask 27648
      %3518 = vst.msk [vmem:[#allocation2 + $0x4] sm:$0xf] %vm3517, %v3326
      %vm3519 = vcmask 24576
      %vm3520 = vmand %vm3519, %vm3308
      %v3521 = vld [vmem:[#allocation2 + $0x8] sm:$0x1]
      %v3522 = vsel %vm3520, %v3327, %v3521
      %3523 = vst [vmem:[#allocation2 + $0x8] sm:$0x1] %v3522
      %v3524 = vld [vmem:[#allocation2 + $0xc] sm:$0xf]
      %v3525 = vsel %vm3513, %v3334, %v3524
      %3526 = vst [vmem:[#allocation2 + $0xc] sm:$0xf] %v3525
      %3527 = vst.msk [vmem:[#allocation2 + $0x10] sm:$0xf] %vm3517, %v3343
      %v3528 = vld [vmem:[#allocation2 + $0x14] sm:$0x1]
      %v3529 = vsel %vm3520, %v3344, %v3528
      %3530 = vst [vmem:[#allocation2 + $0x14] sm:$0x1] %v3529
      %v3531 = vld [vmem:[#allocation2 + $0x18] sm:$0xf]
      %v3532 = vsel %vm3513, %v3351, %v3531
      %3533 = vst [vmem:[#allocation2 + $0x18] sm:$0xf] %v3532
      %3534 = vst.msk [vmem:[#allocation2 + $0x1c] sm:$0xf] %vm3517, %v3360
      %v3535 = vld [vmem:[#allocation2 + $0x20] sm:$0x1]
      %v3536 = vsel %vm3520, %v3361, %v3535
      %3537 = vst [vmem:[#allocation2 + $0x20] sm:$0x1] %v3536
      %v3538 = vld [vmem:[#allocation2 + $0x24] sm:$0xf]
      %v3539 = vsel %vm3513, %v3368, %v3538
      %3540 = vst [vmem:[#allocation2 + $0x24] sm:$0xf] %v3539
      %3541 = vst.msk [vmem:[#allocation2 + $0x28] sm:$0xf] %vm3517, %v3377
      %v3542 = vld [vmem:[#allocation2 + $0x2c] sm:$0x1]
      %v3543 = vsel %vm3520, %v3378, %v3542
      %3544 = vst [vmem:[#allocation2 + $0x2c] sm:$0x1] %v3543
      %v3545 = vld [vmem:[#allocation2 + $0x30] sm:$0xf]
      %v3546 = vsel %vm3513, %v3385, %v3545
      %3547 = vst [vmem:[#allocation2 + $0x30] sm:$0xf] %v3546
      %3548 = vst.msk [vmem:[#allocation2 + $0x34] sm:$0xf] %vm3517, %v3394
      %v3549 = vld [vmem:[#allocation2 + $0x38] sm:$0x1]
      %v3550 = vsel %vm3520, %v3395, %v3549
      %3551 = vst [vmem:[#allocation2 + $0x38] sm:$0x1] %v3550
      %v3552 = vld [vmem:[#allocation2 + $0x3c] sm:$0xf]
      %v3553 = vsel %vm3513, %v3402, %v3552
      %3554 = vst [vmem:[#allocation2 + $0x3c] sm:$0xf] %v3553
      %3555 = vst.msk [vmem:[#allocation2 + $0x40] sm:$0xf] %vm3517, %v3411
      %v3556 = vld [vmem:[#allocation2 + $0x44] sm:$0x1]
      %v3557 = vsel %vm3520, %v3412, %v3556
      %3558 = vst [vmem:[#allocation2 + $0x44] sm:$0x1] %v3557
      %v3559 = vld [vmem:[#allocation2 + $0x48] sm:$0xf]
      %v3560 = vsel %vm3513, %v3419, %v3559
      %3561 = vst [vmem:[#allocation2 + $0x48] sm:$0xf] %v3560
      %3562 = vst.msk [vmem:[#allocation2 + $0x4c] sm:$0xf] %vm3517, %v3428
      %v3563 = vld [vmem:[#allocation2 + $0x50] sm:$0x1]
      %v3564 = vsel %vm3520, %v3429, %v3563
      %3565 = vst [vmem:[#allocation2 + $0x50] sm:$0x1] %v3564
      %v3566 = vld [vmem:[#allocation2 + $0x54] sm:$0xf]
      %v3567 = vsel %vm3513, %v3436, %v3566
      %3568 = vst [vmem:[#allocation2 + $0x54] sm:$0xf] %v3567
      %3569 = vst.msk [vmem:[#allocation2 + $0x58] sm:$0xf] %vm3517, %v3445
      %v3570 = vld [vmem:[#allocation2 + $0x5c] sm:$0x1]
      %v3571 = vsel %vm3520, %v3446, %v3570
      %3572 = vst [vmem:[#allocation2 + $0x5c] sm:$0x1] %v3571
      %v3573 = vld [vmem:[#allocation2 + $0x60] sm:$0xf]
      %v3574 = vsel %vm3513, %v3453, %v3573
      %3575 = vst [vmem:[#allocation2 + $0x60] sm:$0xf] %v3574
      %3576 = vst.msk [vmem:[#allocation2 + $0x64] sm:$0xf] %vm3517, %v3462
      %v3577 = vld [vmem:[#allocation2 + $0x68] sm:$0x1]
      %v3578 = vsel %vm3520, %v3463, %v3577
      %3579 = vst [vmem:[#allocation2 + $0x68] sm:$0x1] %v3578
      %v3580 = vld [vmem:[#allocation2 + $0x6c] sm:$0xf]
      %v3581 = vsel %vm3513, %v3470, %v3580
      %3582 = vst [vmem:[#allocation2 + $0x6c] sm:$0xf] %v3581
      %3583 = vst.msk [vmem:[#allocation2 + $0x70] sm:$0xf] %vm3517, %v3479
      %v3584 = vld [vmem:[#allocation2 + $0x74] sm:$0x1]
      %v3585 = vsel %vm3520, %v3480, %v3584
      %3586 = vst [vmem:[#allocation2 + $0x74] sm:$0x1] %v3585
      %v3587 = vld [vmem:[#allocation2] sm:$0x1]
      %v3588 = vsel %vm3520, 0, %v3587
      %3589 = vst [vmem:[#allocation2] sm:$0x1] %v3588
      %v3590 = vld [vmem:[#allocation2 + $0xc] sm:$0x1]
      %v3591 = vsel %vm3520, 0, %v3590
      %3592 = vst [vmem:[#allocation2 + $0xc] sm:$0x1] %v3591
      %v3593 = vld [vmem:[#allocation2 + $0x18] sm:$0x1]
      %v3594 = vsel %vm3520, 0, %v3593
      %3595 = vst [vmem:[#allocation2 + $0x18] sm:$0x1] %v3594
      %v3596 = vld [vmem:[#allocation2 + $0x24] sm:$0x1]
      %v3597 = vsel %vm3520, 0, %v3596
      %3598 = vst [vmem:[#allocation2 + $0x24] sm:$0x1] %v3597
      %v3599 = vld [vmem:[#allocation2 + $0x30] sm:$0x1]
      %v3600 = vsel %vm3520, 0, %v3599
      %3601 = vst [vmem:[#allocation2 + $0x30] sm:$0x1] %v3600
      %v3602 = vld [vmem:[#allocation2 + $0x3c] sm:$0x1]
      %v3603 = vsel %vm3520, 0, %v3602
      %3604 = vst [vmem:[#allocation2 + $0x3c] sm:$0x1] %v3603
      %v3605 = vld [vmem:[#allocation2 + $0x48] sm:$0x1]
      %v3606 = vsel %vm3520, 0, %v3605
      %3607 = vst [vmem:[#allocation2 + $0x48] sm:$0x1] %v3606
      %v3608 = vld [vmem:[#allocation2 + $0x54] sm:$0x1]
      %v3609 = vsel %vm3520, 0, %v3608
      %3610 = vst [vmem:[#allocation2 + $0x54] sm:$0x1] %v3609
      %v3611 = vld [vmem:[#allocation2 + $0x60] sm:$0x1]
      %v3612 = vsel %vm3520, 0, %v3611
      %3613 = vst [vmem:[#allocation2 + $0x60] sm:$0x1] %v3612
      %v3614 = vld [vmem:[#allocation2 + $0x6c] sm:$0x1]
      %v3615 = vsel %vm3520, 0, %v3614
      %3616 = vst [vmem:[#allocation2 + $0x6c] sm:$0x1] %v3615
      %vm3617 = vmand %vm3519, %vm3512
      %v3618 = vld [vmem:[#allocation2 + $0x8] sm:$0x1]
      %v3619 = vsel %vm3617, 0, %v3618
      %3620 = vst [vmem:[#allocation2 + $0x8] sm:$0x1] %v3619
      %v3621 = vld [vmem:[#allocation2 + $0x14] sm:$0x1]
      %v3622 = vsel %vm3617, 0, %v3621
      %3623 = vst [vmem:[#allocation2 + $0x14] sm:$0x1] %v3622
      %v3624 = vld [vmem:[#allocation2 + $0x20] sm:$0x1]
      %v3625 = vsel %vm3617, 0, %v3624
      %3626 = vst [vmem:[#allocation2 + $0x20] sm:$0x1] %v3625
      %v3627 = vld [vmem:[#allocation2 + $0x2c] sm:$0x1]
      %v3628 = vsel %vm3617, 0, %v3627
      %3629 = vst [vmem:[#allocation2 + $0x2c] sm:$0x1] %v3628
      %v3630 = vld [vmem:[#allocation2 + $0x38] sm:$0x1]
      %v3631 = vsel %vm3617, 0, %v3630
      %3632 = vst [vmem:[#allocation2 + $0x38] sm:$0x1] %v3631
      %v3633 = vld [vmem:[#allocation2 + $0x44] sm:$0x1]
      %v3634 = vsel %vm3617, 0, %v3633
      %3635 = vst [vmem:[#allocation2 + $0x44] sm:$0x1] %v3634
      %v3636 = vld [vmem:[#allocation2 + $0x50] sm:$0x1]
      %v3637 = vsel %vm3617, 0, %v3636
      %3638 = vst [vmem:[#allocation2 + $0x50] sm:$0x1] %v3637
      %v3639 = vld [vmem:[#allocation2 + $0x5c] sm:$0x1]
      %v3640 = vsel %vm3617, 0, %v3639
      %3641 = vst [vmem:[#allocation2 + $0x5c] sm:$0x1] %v3640
      %v3642 = vld [vmem:[#allocation2 + $0x68] sm:$0x1]
      %v3643 = vsel %vm3617, 0, %v3642
      %3644 = vst [vmem:[#allocation2 + $0x68] sm:$0x1] %v3643
      %v3645 = vld [vmem:[#allocation2 + $0x74] sm:$0x1]
      %v3646 = vsel %vm3617, 0, %v3645
      %3647 = vst [vmem:[#allocation2 + $0x74] sm:$0x1] %v3646
      %p3648 = scmp.eq.s32.totalorder %s21, 0
      // Predicated region
      $region41: #{tpu_custom_call.1} parent=39 // pred_check
        %p3649 = pneg %p3648
      $region42: #{tpu_custom_call.1} parent=39 // pred_check_branch
        %3651 = sbr.rel (%p3649) target = $region44
      $region43: #{tpu_custom_call.1} parent=39 // pred_region
        %3652 = vst.msk [vmem:[#allocation2] sm:$0xf] %vm3517, 0
        %3653 = vst.msk [vmem:[#allocation2 + $0x4] sm:$0xf] %vm3517, 0
        %vm3654 = vcmask 24576
        %3655 = vst.msk [vmem:[#allocation2 + $0x8] sm:$0x1] %vm3654, 0
      $region44: #{tpu_custom_call.1} parent=39 // pred_fallthru
        _
      %p3656 = scmp.eq.s32.totalorder %s21, 1
      // Predicated region
      $region45: #{tpu_custom_call.1} parent=39 // pred_check
        %p3657 = pneg %p3656
      $region46: #{tpu_custom_call.1} parent=39 // pred_check_branch
        %3659 = sbr.rel (%p3657) target = $region48
      $region47: #{tpu_custom_call.1} parent=39 // pred_region
        %s3660 = scalar_lea.vmem [#allocation2], 108
        %3661 = vst.msk [vmem:[%s3660] sm:$0xf] %vm3517, 0
        %3662 = vst.msk [vmem:[%s3660 + $0x4] sm:$0xf] %vm3517, 0
        %vm3663 = vcmask 24576
        %3664 = vst.msk [vmem:[%s3660 + $0x8] sm:$0x1] %vm3663, 0
      $region48: #{tpu_custom_call.1} parent=39 // pred_fallthru
        _
      %v3665 = vld [vmem:[#allocation2] sm:$0xf]
      %v3666 = vld [vmem:[#allocation2 + $0x4] sm:$0xf]
      %v3667 = vld [vmem:[#allocation2 + $0xc] sm:$0xf]
      %v3668 = vld [vmem:[#allocation2 + $0x10] sm:$0xf]
      %v3669 = vld [vmem:[#allocation2 + $0x18] sm:$0xf]
      %v3670 = vld [vmem:[#allocation2 + $0x1c] sm:$0xf]
      %v3671 = vld [vmem:[#allocation2 + $0x24] sm:$0xf]
      %v3672 = vld [vmem:[#allocation2 + $0x28] sm:$0xf]
      %v3673 = vld [vmem:[#allocation2 + $0x30] sm:$0xf]
      %v3674 = vld [vmem:[#allocation2 + $0x34] sm:$0xf]
      %v3675 = vld [vmem:[#allocation2 + $0x3c] sm:$0xf]
      %v3676 = vld [vmem:[#allocation2 + $0x40] sm:$0xf]
      %v3677 = vld [vmem:[#allocation2 + $0x48] sm:$0xf]
      %v3678 = vld [vmem:[#allocation2 + $0x4c] sm:$0xf]
      %v3679 = vld [vmem:[#allocation2 + $0x54] sm:$0xf]
      %v3680 = vld [vmem:[#allocation2 + $0x58] sm:$0xf]
      %v3697 = vunpack.c.l.b16 %v3665
      %v3698 = vunpack.c.l.b16 %v3666
      %v3699 = vunpack.c.l.b16 %v3667
      %v3700 = vunpack.c.l.b16 %v3668
      %v3701 = vunpack.c.l.b16 %v3669
      %v3702 = vunpack.c.l.b16 %v3670
      %v3703 = vunpack.c.l.b16 %v3671
      %v3704 = vunpack.c.l.b16 %v3672
      %v3705 = vunpack.c.l.b16 %v3673
      %v3706 = vunpack.c.l.b16 %v3674
      %v3707 = vunpack.c.l.b16 %v3675
      %v3708 = vunpack.c.l.b16 %v3676
      %v3709 = vunpack.c.l.b16 %v3677
      %v3710 = vunpack.c.l.b16 %v3678
      %v3711 = vunpack.c.l.b16 %v3679
      %v3712 = vunpack.c.l.b16 %v3680
      %v3713 = vpack.c.b16 %v3698, %v3697
      %v3714 = vpack.c.b16 %v3700, %v3699
      %v3715 = vpack.c.b16 %v3702, %v3701
      %v3716 = vpack.c.b16 %v3704, %v3703
      %v3717 = vpack.c.b16 %v3706, %v3705
      %v3718 = vpack.c.b16 %v3708, %v3707
      %v3719 = vpack.c.b16 %v3710, %v3709
      %v3720 = vpack.c.b16 %v3712, %v3711
      %3729 = vst.msk [vmem:[#allocation3] sm:$0xff] %vm414, %v3713
      %3730 = vst.msk [vmem:[#allocation3 + $0x18] sm:$0xff] %vm414, %v3714
      %3731 = vst.msk [vmem:[#allocation3 + $0x30] sm:$0xff] %vm414, %v3715
      %3732 = vst.msk [vmem:[#allocation3 + $0x48] sm:$0xff] %vm414, %v3716
      %3733 = vst.msk [vmem:[#allocation3 + $0x60] sm:$0xff] %vm414, %v3717
      %3734 = vst.msk [vmem:[#allocation3 + $0x78] sm:$0xff] %vm414, %v3718
      %3735 = vst.msk [vmem:[#allocation3 + $0x90] sm:$0xff] %vm414, %v3719
      %3736 = vst.msk [vmem:[#allocation3 + $0xa8] sm:$0xff] %vm414, %v3720
      %v3737 = vld [vmem:[#allocation2] sm:$0xf]
      %v3738 = vld [vmem:[#allocation2 + $0x4] sm:$0xf]
      %v3739 = vld [vmem:[#allocation2 + $0x8] sm:$0x1]
      %v3740 = vld [vmem:[#allocation2 + $0xc] sm:$0xf]
      %v3741 = vld [vmem:[#allocation2 + $0x10] sm:$0xf]
      %v3742 = vld [vmem:[#allocation2 + $0x14] sm:$0x1]
      %v3743 = vld [vmem:[#allocation2 + $0x18] sm:$0xf]
      %v3744 = vld [vmem:[#allocation2 + $0x1c] sm:$0xf]
      %v3745 = vld [vmem:[#allocation2 + $0x20] sm:$0x1]
      %v3746 = vld [vmem:[#allocation2 + $0x24] sm:$0xf]
      %v3747 = vld [vmem:[#allocation2 + $0x28] sm:$0xf]
      %v3748 = vld [vmem:[#allocation2 + $0x2c] sm:$0x1]
      %v3749 = vld [vmem:[#allocation2 + $0x30] sm:$0xf]
      %v3750 = vld [vmem:[#allocation2 + $0x34] sm:$0xf]
      %v3751 = vld [vmem:[#allocation2 + $0x38] sm:$0x1]
      %v3752 = vld [vmem:[#allocation2 + $0x3c] sm:$0xf]
      %v3753 = vld [vmem:[#allocation2 + $0x40] sm:$0xf]
      %v3754 = vld [vmem:[#allocation2 + $0x44] sm:$0x1]
      %v3755 = vld [vmem:[#allocation2 + $0x48] sm:$0xf]
      %v3756 = vld [vmem:[#allocation2 + $0x4c] sm:$0xf]
      %v3757 = vld [vmem:[#allocation2 + $0x50] sm:$0x1]
      %v3758 = vld [vmem:[#allocation2 + $0x54] sm:$0xf]
      %v3759 = vld [vmem:[#allocation2 + $0x58] sm:$0xf]
      %v3760 = vld [vmem:[#allocation2 + $0x5c] sm:$0x1]
      %v3785 = vunpack.c.l.b16 %v3737
      %v3786 = vunpack.c.l.b16 %v3738
      %v3787 = vunpack.c.l.b16 %v3739
      %v3788 = vunpack.c.l.b16 %v3740
      %v3789 = vunpack.c.l.b16 %v3741
      %v3790 = vunpack.c.l.b16 %v3742
      %v3791 = vunpack.c.l.b16 %v3743
      %v3792 = vunpack.c.l.b16 %v3744
      %v3793 = vunpack.c.l.b16 %v3745
      %v3794 = vunpack.c.l.b16 %v3746
      %v3795 = vunpack.c.l.b16 %v3747
      %v3796 = vunpack.c.l.b16 %v3748
      %v3797 = vunpack.c.l.b16 %v3749
      %v3798 = vunpack.c.l.b16 %v3750
      %v3799 = vunpack.c.l.b16 %v3751
      %v3800 = vunpack.c.l.b16 %v3752
      %v3801 = vunpack.c.l.b16 %v3753
      %v3802 = vunpack.c.l.b16 %v3754
      %v3803 = vunpack.c.l.b16 %v3755
      %v3804 = vunpack.c.l.b16 %v3756
      %v3805 = vunpack.c.l.b16 %v3757
      %v3806 = vunpack.c.l.b16 %v3758
      %v3807 = vunpack.c.l.b16 %v3759
      %v3808 = vunpack.c.l.b16 %v3760
      %v3809 = vpack.c.b16 %v3786, %v3785
      %v3810 = vpack.c.b16 %v3787, %v3787
      %v3811 = vpack.c.b16 %v3789, %v3788
      %v3812 = vpack.c.b16 %v3790, %v3790
      %v3813 = vpack.c.b16 %v3792, %v3791
      %v3814 = vpack.c.b16 %v3793, %v3793
      %v3815 = vpack.c.b16 %v3795, %v3794
      %v3816 = vpack.c.b16 %v3796, %v3796
      %v3817 = vpack.c.b16 %v3798, %v3797
      %v3818 = vpack.c.b16 %v3799, %v3799
      %v3819 = vpack.c.b16 %v3801, %v3800
      %v3820 = vpack.c.b16 %v3802, %v3802
      %v3821 = vpack.c.b16 %v3804, %v3803
      %v3822 = vpack.c.b16 %v3805, %v3805
      %v3823 = vpack.c.b16 %v3807, %v3806
      %v3824 = vpack.c.b16 %v3808, %v3808
      %v3826 = vshrl.u32 %v3809, 16
      %v3828 = vshll.u32 %v3809, 16
      %v3830 = vrot.slane %v3828, 1
      %v3831 = vor.u32 %v3826, %v3830
      %v3833 = vshll.u32 %v3810, 16
      %v3835 = vrot.slane %v3833, 1
      %v3836 = vsel %vm535, %v3831, %v3835
      %v3838 = vshrl.u32 %v3811, 16
      %v3840 = vshll.u32 %v3811, 16
      %v3842 = vrot.slane %v3840, 1
      %v3843 = vor.u32 %v3838, %v3842
      %v3845 = vshll.u32 %v3812, 16
      %v3847 = vrot.slane %v3845, 1
      %v3848 = vsel %vm535, %v3843, %v3847
      %v3850 = vshrl.u32 %v3813, 16
      %v3852 = vshll.u32 %v3813, 16
      %v3854 = vrot.slane %v3852, 1
      %v3855 = vor.u32 %v3850, %v3854
      %v3857 = vshll.u32 %v3814, 16
      %v3859 = vrot.slane %v3857, 1
      %v3860 = vsel %vm535, %v3855, %v3859
      %v3862 = vshrl.u32 %v3815, 16
      %v3864 = vshll.u32 %v3815, 16
      %v3866 = vrot.slane %v3864, 1
      %v3867 = vor.u32 %v3862, %v3866
      %v3869 = vshll.u32 %v3816, 16
      %v3871 = vrot.slane %v3869, 1
      %v3872 = vsel %vm535, %v3867, %v3871
      %v3874 = vshrl.u32 %v3817, 16
      %v3876 = vshll.u32 %v3817, 16
      %v3878 = vrot.slane %v3876, 1
      %v3879 = vor.u32 %v3874, %v3878
      %v3881 = vshll.u32 %v3818, 16
      %v3883 = vrot.slane %v3881, 1
      %v3884 = vsel %vm535, %v3879, %v3883
      %v3886 = vshrl.u32 %v3819, 16
      %v3888 = vshll.u32 %v3819, 16
      %v3890 = vrot.slane %v3888, 1
      %v3891 = vor.u32 %v3886, %v3890
      %v3893 = vshll.u32 %v3820, 16
      %v3895 = vrot.slane %v3893, 1
      %v3896 = vsel %vm535, %v3891, %v3895
      %v3898 = vshrl.u32 %v3821, 16
      %v3900 = vshll.u32 %v3821, 16
      %v3902 = vrot.slane %v3900, 1
      %v3903 = vor.u32 %v3898, %v3902
      %v3905 = vshll.u32 %v3822, 16
      %v3907 = vrot.slane %v3905, 1
      %v3908 = vsel %vm535, %v3903, %v3907
      %v3910 = vshrl.u32 %v3823, 16
      %v3912 = vshll.u32 %v3823, 16
      %v3914 = vrot.slane %v3912, 1
      %v3915 = vor.u32 %v3910, %v3914
      %v3917 = vshll.u32 %v3824, 16
      %v3919 = vrot.slane %v3917, 1
      %v3920 = vsel %vm535, %v3915, %v3919
      %3929 = vst.msk [vmem:[#allocation3 + $0x8] sm:$0xff] %vm414, %v3836
      %3930 = vst.msk [vmem:[#allocation3 + $0x20] sm:$0xff] %vm414, %v3848
      %3931 = vst.msk [vmem:[#allocation3 + $0x38] sm:$0xff] %vm414, %v3860
      %3932 = vst.msk [vmem:[#allocation3 + $0x50] sm:$0xff] %vm414, %v3872
      %3933 = vst.msk [vmem:[#allocation3 + $0x68] sm:$0xff] %vm414, %v3884
      %3934 = vst.msk [vmem:[#allocation3 + $0x80] sm:$0xff] %vm414, %v3896
      %3935 = vst.msk [vmem:[#allocation3 + $0x98] sm:$0xff] %vm414, %v3908
      %3936 = vst.msk [vmem:[#allocation3 + $0xb0] sm:$0xff] %vm414, %v3920
      %v3937 = vld [vmem:[#allocation2] sm:$0xe]
      %v3938 = vld [vmem:[#allocation2 + $0x4] sm:$0xf]
      %v3939 = vld [vmem:[#allocation2 + $0x8] sm:$0x1]
      %v3940 = vld [vmem:[#allocation2 + $0xc] sm:$0xe]
      %v3941 = vld [vmem:[#allocation2 + $0x10] sm:$0xf]
      %v3942 = vld [vmem:[#allocation2 + $0x14] sm:$0x1]
      %v3943 = vld [vmem:[#allocation2 + $0x18] sm:$0xe]
      %v3944 = vld [vmem:[#allocation2 + $0x1c] sm:$0xf]
      %v3945 = vld [vmem:[#allocation2 + $0x20] sm:$0x1]
      %v3946 = vld [vmem:[#allocation2 + $0x24] sm:$0xe]
      %v3947 = vld [vmem:[#allocation2 + $0x28] sm:$0xf]
      %v3948 = vld [vmem:[#allocation2 + $0x2c] sm:$0x1]
      %v3949 = vld [vmem:[#allocation2 + $0x30] sm:$0xe]
      %v3950 = vld [vmem:[#allocation2 + $0x34] sm:$0xf]
      %v3951 = vld [vmem:[#allocation2 + $0x38] sm:$0x1]
      %v3952 = vld [vmem:[#allocation2 + $0x3c] sm:$0xe]
      %v3953 = vld [vmem:[#allocation2 + $0x40] sm:$0xf]
      %v3954 = vld [vmem:[#allocation2 + $0x44] sm:$0x1]
      %v3955 = vld [vmem:[#allocation2 + $0x48] sm:$0xe]
      %v3956 = vld [vmem:[#allocation2 + $0x4c] sm:$0xf]
      %v3957 = vld [vmem:[#allocation2 + $0x50] sm:$0x1]
      %v3958 = vld [vmem:[#allocation2 + $0x54] sm:$0xe]
      %v3959 = vld [vmem:[#allocation2 + $0x58] sm:$0xf]
      %v3960 = vld [vmem:[#allocation2 + $0x5c] sm:$0x1]
      %v3985 = vunpack.c.l.b16 %v3937
      %v3986 = vunpack.c.l.b16 %v3938
      %v3987 = vunpack.c.l.b16 %v3939
      %v3988 = vunpack.c.l.b16 %v3940
      %v3989 = vunpack.c.l.b16 %v3941
      %v3990 = vunpack.c.l.b16 %v3942
      %v3991 = vunpack.c.l.b16 %v3943
      %v3992 = vunpack.c.l.b16 %v3944
      %v3993 = vunpack.c.l.b16 %v3945
      %v3994 = vunpack.c.l.b16 %v3946
      %v3995 = vunpack.c.l.b16 %v3947
      %v3996 = vunpack.c.l.b16 %v3948
      %v3997 = vunpack.c.l.b16 %v3949
      %v3998 = vunpack.c.l.b16 %v3950
      %v3999 = vunpack.c.l.b16 %v3951
      %v4000 = vunpack.c.l.b16 %v3952
      %v4001 = vunpack.c.l.b16 %v3953
      %v4002 = vunpack.c.l.b16 %v3954
      %v4003 = vunpack.c.l.b16 %v3955
      %v4004 = vunpack.c.l.b16 %v3956
      %v4005 = vunpack.c.l.b16 %v3957
      %v4006 = vunpack.c.l.b16 %v3958
      %v4007 = vunpack.c.l.b16 %v3959
      %v4008 = vunpack.c.l.b16 %v3960
      %v4009 = vpack.c.b16 %v3986, %v3985
      %v4010 = vpack.c.b16 %v3987, %v3987
      %v4011 = vpack.c.b16 %v3989, %v3988
      %v4012 = vpack.c.b16 %v3990, %v3990
      %v4013 = vpack.c.b16 %v3992, %v3991
      %v4014 = vpack.c.b16 %v3993, %v3993
      %v4015 = vpack.c.b16 %v3995, %v3994
      %v4016 = vpack.c.b16 %v3996, %v3996
      %v4017 = vpack.c.b16 %v3998, %v3997
      %v4018 = vpack.c.b16 %v3999, %v3999
      %v4019 = vpack.c.b16 %v4001, %v4000
      %v4020 = vpack.c.b16 %v4002, %v4002
      %v4021 = vpack.c.b16 %v4004, %v4003
      %v4022 = vpack.c.b16 %v4005, %v4005
      %v4023 = vpack.c.b16 %v4007, %v4006
      %v4024 = vpack.c.b16 %v4008, %v4008
      %v4025 = vrot.slane %v4009, 1
      %v4026 = vrot.slane %v4010, 1
      %v4027 = vsel %vm786, %v4025, %v4026
      %v4028 = vrot.slane %v4011, 1
      %v4029 = vrot.slane %v4012, 1
      %v4030 = vsel %vm786, %v4028, %v4029
      %v4031 = vrot.slane %v4013, 1
      %v4032 = vrot.slane %v4014, 1
      %v4033 = vsel %vm786, %v4031, %v4032
      %v4034 = vrot.slane %v4015, 1
      %v4035 = vrot.slane %v4016, 1
      %v4036 = vsel %vm786, %v4034, %v4035
      %v4037 = vrot.slane %v4017, 1
      %v4038 = vrot.slane %v4018, 1
      %v4039 = vsel %vm786, %v4037, %v4038
      %v4040 = vrot.slane %v4019, 1
      %v4041 = vrot.slane %v4020, 1
      %v4042 = vsel %vm786, %v4040, %v4041
      %v4043 = vrot.slane %v4021, 1
      %v4044 = vrot.slane %v4022, 1
      %v4045 = vsel %vm786, %v4043, %v4044
      %v4046 = vrot.slane %v4023, 1
      %v4047 = vrot.slane %v4024, 1
      %v4048 = vsel %vm786, %v4046, %v4047
      %4057 = vst.msk [vmem:[#allocation3 + $0x10] sm:$0xff] %vm414, %v4027
      %4058 = vst.msk [vmem:[#allocation3 + $0x28] sm:$0xff] %vm414, %v4030
      %4059 = vst.msk [vmem:[#allocation3 + $0x40] sm:$0xff] %vm414, %v4033
      %4060 = vst.msk [vmem:[#allocation3 + $0x58] sm:$0xff] %vm414, %v4036
      %4061 = vst.msk [vmem:[#allocation3 + $0x70] sm:$0xff] %vm414, %v4039
      %4062 = vst.msk [vmem:[#allocation3 + $0x88] sm:$0xff] %vm414, %v4042
      %4063 = vst.msk [vmem:[#allocation3 + $0xa0] sm:$0xff] %vm414, %v4045
      %4064 = vst.msk [vmem:[#allocation3 + $0xb8] sm:$0xff] %vm414, %v4048
      %v4065 = vld [vmem:[#allocation3] sm:$0xff]
      %v4066 = vld [vmem:[#allocation3 + $0x8] sm:$0xff]
      %v4067 = vld [vmem:[#allocation3 + $0x10] sm:$0xff]
      %v4068 = vld [vmem:[#allocation3 + $0x18] sm:$0xff]
      %v4069 = vld [vmem:[#allocation3 + $0x20] sm:$0xff]
      %v4070 = vld [vmem:[#allocation3 + $0x28] sm:$0xff]
      %v4071 = vld [vmem:[#allocation3 + $0x30] sm:$0xff]
      %v4072 = vld [vmem:[#allocation3 + $0x38] sm:$0xff]
      %v4073 = vld [vmem:[#allocation3 + $0x40] sm:$0xff]
      %v4074 = vld [vmem:[#allocation3 + $0x48] sm:$0xff]
      %v4075 = vld [vmem:[#allocation3 + $0x50] sm:$0xff]
      %v4076 = vld [vmem:[#allocation3 + $0x58] sm:$0xff]
      %v4077 = vld [vmem:[#allocation3 + $0x60] sm:$0xff]
      %v4078 = vld [vmem:[#allocation3 + $0x68] sm:$0xff]
      %v4079 = vld [vmem:[#allocation3 + $0x70] sm:$0xff]
      %v4080 = vld [vmem:[#allocation3 + $0x78] sm:$0xff]
      %v4081 = vld [vmem:[#allocation3 + $0x80] sm:$0xff]
      %v4082 = vld [vmem:[#allocation3 + $0x88] sm:$0xff]
      %v4083 = vld [vmem:[#allocation3 + $0x90] sm:$0xff]
      %v4084 = vld [vmem:[#allocation3 + $0x98] sm:$0xff]
      %v4085 = vld [vmem:[#allocation3 + $0xa0] sm:$0xff]
      %v4086 = vld [vmem:[#allocation3 + $0xa8] sm:$0xff]
      %v4087 = vld [vmem:[#allocation3 + $0xb0] sm:$0xff]
      %v4088 = vld [vmem:[#allocation3 + $0xb8] sm:$0xff]
      %v4089 = vld [vmem:[%s3] sm:$0xf]
      %v4090 = vld [vmem:[%s3 + $0x4] sm:$0xf]
      %v4091 = vld [vmem:[%s3 + $0x8] sm:$0xf]
      %v4092 = vld [vmem:[%s3 + $0xc] sm:$0xf]
      %v4093 = vld [vmem:[%s3 + $0x10] sm:$0xf]
      %v4094 = vld [vmem:[%s3 + $0x14] sm:$0xf]
      %v4095 = vld [vmem:[%s3 + $0x18] sm:$0xf]
      %v4096 = vld [vmem:[%s3 + $0x1c] sm:$0xf]
      %v4097 = vld [vmem:[%s3 + $0x20] sm:$0xf]
      %v4098 = vld [vmem:[%s3 + $0x24] sm:$0xf]
      %v4099 = vld [vmem:[%s3 + $0x28] sm:$0xf]
      %v4100 = vld [vmem:[%s3 + $0x2c] sm:$0xf]
      %v4101 = vld [vmem:[%s3 + $0x30] sm:$0xf]
      %v4102 = vld [vmem:[%s3 + $0x34] sm:$0xf]
      %v4103 = vld [vmem:[%s3 + $0x38] sm:$0xf]
      %v4104 = vld [vmem:[%s3 + $0x3c] sm:$0xf]
      %v4105 = vld [vmem:[%s3 + $0x40] sm:$0xf]
      %v4106 = vld [vmem:[%s3 + $0x44] sm:$0xf]
      %v4107 = vld [vmem:[%s3 + $0x48] sm:$0xf]
      %v4108 = vld [vmem:[%s3 + $0x4c] sm:$0xf]
      %v4109 = vld [vmem:[%s3 + $0x50] sm:$0xf]
      %v4110 = vld [vmem:[%s3 + $0x54] sm:$0xf]
      %v4111 = vld [vmem:[%s3 + $0x58] sm:$0xf]
      %v4112 = vld [vmem:[%s3 + $0x5c] sm:$0xf]
      %v4113 = vld [vmem:[%s3 + $0x60] sm:$0xf]
      %v4114 = vld [vmem:[%s3 + $0x64] sm:$0xf]
      %v4115 = vld [vmem:[%s3 + $0x68] sm:$0xf]
      %v4116 = vld [vmem:[%s3 + $0x6c] sm:$0xf]
      %v4117 = vld [vmem:[%s3 + $0x70] sm:$0xf]
      %v4118 = vld [vmem:[%s3 + $0x74] sm:$0xf]
      %v4119 = vld [vmem:[%s3 + $0x78] sm:$0xf]
      %v4120 = vld [vmem:[%s3 + $0x7c] sm:$0xf]
      %v4121 = vld [vmem:[%s3 + $0x80] sm:$0xf]
      %v4122 = vld [vmem:[%s3 + $0x84] sm:$0xf]
      %v4123 = vld [vmem:[%s3 + $0x88] sm:$0xf]
      %v4124 = vld [vmem:[%s3 + $0x8c] sm:$0xf]
      %v4125 = vld [vmem:[%s3 + $0x90] sm:$0xf]
      %v4126 = vld [vmem:[%s3 + $0x94] sm:$0xf]
      %v4127 = vld [vmem:[%s3 + $0x98] sm:$0xf]
      %v4128 = vld [vmem:[%s3 + $0x9c] sm:$0xf]
      %v4129 = vld [vmem:[%s3 + $0xa0] sm:$0xf]
      %v4130 = vld [vmem:[%s3 + $0xa4] sm:$0xf]
      %v4131 = vld [vmem:[%s3 + $0xa8] sm:$0xf]
      %v4132 = vld [vmem:[%s3 + $0xac] sm:$0xf]
      %v4133 = vld [vmem:[%s3 + $0xb0] sm:$0xf]
      %v4134 = vld [vmem:[%s3 + $0xb4] sm:$0xf]
      %v4135 = vld [vmem:[%s3 + $0xb8] sm:$0xf]
      %v4136 = vld [vmem:[%s3 + $0xbc] sm:$0xf]
      %s4137 = scalar_lea.vmem [#allocation2], 12
      %v4138 = vld [vmem:[%s4137] sm:$0xf]
      %v4139 = vld [vmem:[%s4137 + $0x4] sm:$0xf]
      %v4140 = vld [vmem:[%s4137 + $0xc] sm:$0xf]
      %v4141 = vld [vmem:[%s4137 + $0x10] sm:$0xf]
      %v4142 = vld [vmem:[%s4137 + $0x18] sm:$0xf]
      %v4143 = vld [vmem:[%s4137 + $0x1c] sm:$0xf]
      %v4144 = vld [vmem:[%s4137 + $0x24] sm:$0xf]
      %v4145 = vld [vmem:[%s4137 + $0x28] sm:$0xf]
      %v4146 = vld [vmem:[%s4137 + $0x30] sm:$0xf]
      %v4147 = vld [vmem:[%s4137 + $0x34] sm:$0xf]
      %v4148 = vld [vmem:[%s4137 + $0x3c] sm:$0xf]
      %v4149 = vld [vmem:[%s4137 + $0x40] sm:$0xf]
      %v4150 = vld [vmem:[%s4137 + $0x48] sm:$0xf]
      %v4151 = vld [vmem:[%s4137 + $0x4c] sm:$0xf]
      %v4152 = vld [vmem:[%s4137 + $0x54] sm:$0xf]
      %v4153 = vld [vmem:[%s4137 + $0x58] sm:$0xf]
      %v4170 = vunpack.c.l.b16 %v4138
      %v4171 = vunpack.c.l.b16 %v4139
      %v4172 = vunpack.c.l.b16 %v4140
      %v4173 = vunpack.c.l.b16 %v4141
      %v4174 = vunpack.c.l.b16 %v4142
      %v4175 = vunpack.c.l.b16 %v4143
      %v4176 = vunpack.c.l.b16 %v4144
      %v4177 = vunpack.c.l.b16 %v4145
      %v4178 = vunpack.c.l.b16 %v4146
      %v4179 = vunpack.c.l.b16 %v4147
      %v4180 = vunpack.c.l.b16 %v4148
      %v4181 = vunpack.c.l.b16 %v4149
      %v4182 = vunpack.c.l.b16 %v4150
      %v4183 = vunpack.c.l.b16 %v4151
      %v4184 = vunpack.c.l.b16 %v4152
      %v4185 = vunpack.c.l.b16 %v4153
      %v4186 = vpack.c.b16 %v4171, %v4170
      %v4187 = vpack.c.b16 %v4173, %v4172
      %v4188 = vpack.c.b16 %v4175, %v4174
      %v4189 = vpack.c.b16 %v4177, %v4176
      %v4190 = vpack.c.b16 %v4179, %v4178
      %v4191 = vpack.c.b16 %v4181, %v4180
      %v4192 = vpack.c.b16 %v4183, %v4182
      %v4193 = vpack.c.b16 %v4185, %v4184
      %4202 = vst.msk [vmem:[#allocation3] sm:$0xff] %vm414, %v4186
      %4203 = vst.msk [vmem:[#allocation3 + $0x18] sm:$0xff] %vm414, %v4187
      %4204 = vst.msk [vmem:[#allocation3 + $0x30] sm:$0xff] %vm414, %v4188
      %4205 = vst.msk [vmem:[#allocation3 + $0x48] sm:$0xff] %vm414, %v4189
      %4206 = vst.msk [vmem:[#allocation3 + $0x60] sm:$0xff] %vm414, %v4190
      %4207 = vst.msk [vmem:[#allocation3 + $0x78] sm:$0xff] %vm414, %v4191
      %4208 = vst.msk [vmem:[#allocation3 + $0x90] sm:$0xff] %vm414, %v4192
      %4209 = vst.msk [vmem:[#allocation3 + $0xa8] sm:$0xff] %vm414, %v4193
      %v4210 = vld [vmem:[%s4137] sm:$0xf]
      %v4211 = vld [vmem:[%s4137 + $0x4] sm:$0xf]
      %v4212 = vld [vmem:[%s4137 + $0x8] sm:$0x1]
      %v4213 = vld [vmem:[%s4137 + $0xc] sm:$0xf]
      %v4214 = vld [vmem:[%s4137 + $0x10] sm:$0xf]
      %v4215 = vld [vmem:[%s4137 + $0x14] sm:$0x1]
      %v4216 = vld [vmem:[%s4137 + $0x18] sm:$0xf]
      %v4217 = vld [vmem:[%s4137 + $0x1c] sm:$0xf]
      %v4218 = vld [vmem:[%s4137 + $0x20] sm:$0x1]
      %v4219 = vld [vmem:[%s4137 + $0x24] sm:$0xf]
      %v4220 = vld [vmem:[%s4137 + $0x28] sm:$0xf]
      %v4221 = vld [vmem:[%s4137 + $0x2c] sm:$0x1]
      %v4222 = vld [vmem:[%s4137 + $0x30] sm:$0xf]
      %v4223 = vld [vmem:[%s4137 + $0x34] sm:$0xf]
      %v4224 = vld [vmem:[%s4137 + $0x38] sm:$0x1]
      %v4225 = vld [vmem:[%s4137 + $0x3c] sm:$0xf]
      %v4226 = vld [vmem:[%s4137 + $0x40] sm:$0xf]
      %v4227 = vld [vmem:[%s4137 + $0x44] sm:$0x1]
      %v4228 = vld [vmem:[%s4137 + $0x48] sm:$0xf]
      %v4229 = vld [vmem:[%s4137 + $0x4c] sm:$0xf]
      %v4230 = vld [vmem:[%s4137 + $0x50] sm:$0x1]
      %v4231 = vld [vmem:[%s4137 + $0x54] sm:$0xf]
      %v4232 = vld [vmem:[%s4137 + $0x58] sm:$0xf]
      %v4233 = vld [vmem:[%s4137 + $0x5c] sm:$0x1]
      %v4258 = vunpack.c.l.b16 %v4210
      %v4259 = vunpack.c.l.b16 %v4211
      %v4260 = vunpack.c.l.b16 %v4212
      %v4261 = vunpack.c.l.b16 %v4213
      %v4262 = vunpack.c.l.b16 %v4214
      %v4263 = vunpack.c.l.b16 %v4215
      %v4264 = vunpack.c.l.b16 %v4216
      %v4265 = vunpack.c.l.b16 %v4217
      %v4266 = vunpack.c.l.b16 %v4218
      %v4267 = vunpack.c.l.b16 %v4219
      %v4268 = vunpack.c.l.b16 %v4220
      %v4269 = vunpack.c.l.b16 %v4221
      %v4270 = vunpack.c.l.b16 %v4222
      %v4271 = vunpack.c.l.b16 %v4223
      %v4272 = vunpack.c.l.b16 %v4224
      %v4273 = vunpack.c.l.b16 %v4225
      %v4274 = vunpack.c.l.b16 %v4226
      %v4275 = vunpack.c.l.b16 %v4227
      %v4276 = vunpack.c.l.b16 %v4228
      %v4277 = vunpack.c.l.b16 %v4229
      %v4278 = vunpack.c.l.b16 %v4230
      %v4279 = vunpack.c.l.b16 %v4231
      %v4280 = vunpack.c.l.b16 %v4232
      %v4281 = vunpack.c.l.b16 %v4233
      %v4282 = vpack.c.b16 %v4259, %v4258
      %v4283 = vpack.c.b16 %v4260, %v4260
      %v4284 = vpack.c.b16 %v4262, %v4261
      %v4285 = vpack.c.b16 %v4263, %v4263
      %v4286 = vpack.c.b16 %v4265, %v4264
      %v4287 = vpack.c.b16 %v4266, %v4266
      %v4288 = vpack.c.b16 %v4268, %v4267
      %v4289 = vpack.c.b16 %v4269, %v4269
      %v4290 = vpack.c.b16 %v4271, %v4270
      %v4291 = vpack.c.b16 %v4272, %v4272
      %v4292 = vpack.c.b16 %v4274, %v4273
      %v4293 = vpack.c.b16 %v4275, %v4275
      %v4294 = vpack.c.b16 %v4277, %v4276
      %v4295 = vpack.c.b16 %v4278, %v4278
      %v4296 = vpack.c.b16 %v4280, %v4279
      %v4297 = vpack.c.b16 %v4281, %v4281
      %v4299 = vshrl.u32 %v4282, 16
      %v4301 = vshll.u32 %v4282, 16
      %v4303 = vrot.slane %v4301, 1
      %v4304 = vor.u32 %v4299, %v4303
      %v4306 = vshll.u32 %v4283, 16
      %v4308 = vrot.slane %v4306, 1
      %v4309 = vsel %vm535, %v4304, %v4308
      %v4311 = vshrl.u32 %v4284, 16
      %v4313 = vshll.u32 %v4284, 16
      %v4315 = vrot.slane %v4313, 1
      %v4316 = vor.u32 %v4311, %v4315
      %v4318 = vshll.u32 %v4285, 16
      %v4320 = vrot.slane %v4318, 1
      %v4321 = vsel %vm535, %v4316, %v4320
      %v4323 = vshrl.u32 %v4286, 16
      %v4325 = vshll.u32 %v4286, 16
      %v4327 = vrot.slane %v4325, 1
      %v4328 = vor.u32 %v4323, %v4327
      %v4330 = vshll.u32 %v4287, 16
      %v4332 = vrot.slane %v4330, 1
      %v4333 = vsel %vm535, %v4328, %v4332
      %v4335 = vshrl.u32 %v4288, 16
      %v4337 = vshll.u32 %v4288, 16
      %v4339 = vrot.slane %v4337, 1
      %v4340 = vor.u32 %v4335, %v4339
      %v4342 = vshll.u32 %v4289, 16
      %v4344 = vrot.slane %v4342, 1
      %v4345 = vsel %vm535, %v4340, %v4344
      %v4347 = vshrl.u32 %v4290, 16
      %v4349 = vshll.u32 %v4290, 16
      %v4351 = vrot.slane %v4349, 1
      %v4352 = vor.u32 %v4347, %v4351
      %v4354 = vshll.u32 %v4291, 16
      %v4356 = vrot.slane %v4354, 1
      %v4357 = vsel %vm535, %v4352, %v4356
      %v4359 = vshrl.u32 %v4292, 16
      %v4361 = vshll.u32 %v4292, 16
      %v4363 = vrot.slane %v4361, 1
      %v4364 = vor.u32 %v4359, %v4363
      %v4366 = vshll.u32 %v4293, 16
      %v4368 = vrot.slane %v4366, 1
      %v4369 = vsel %vm535, %v4364, %v4368
      %v4371 = vshrl.u32 %v4294, 16
      %v4373 = vshll.u32 %v4294, 16
      %v4375 = vrot.slane %v4373, 1
      %v4376 = vor.u32 %v4371, %v4375
      %v4378 = vshll.u32 %v4295, 16
      %v4380 = vrot.slane %v4378, 1
      %v4381 = vsel %vm535, %v4376, %v4380
      %v4383 = vshrl.u32 %v4296, 16
      %v4385 = vshll.u32 %v4296, 16
      %v4387 = vrot.slane %v4385, 1
      %v4388 = vor.u32 %v4383, %v4387
      %v4390 = vshll.u32 %v4297, 16
      %v4392 = vrot.slane %v4390, 1
      %v4393 = vsel %vm535, %v4388, %v4392
      %4402 = vst.msk [vmem:[#allocation3 + $0x8] sm:$0xff] %vm414, %v4309
      %4403 = vst.msk [vmem:[#allocation3 + $0x20] sm:$0xff] %vm414, %v4321
      %4404 = vst.msk [vmem:[#allocation3 + $0x38] sm:$0xff] %vm414, %v4333
      %4405 = vst.msk [vmem:[#allocation3 + $0x50] sm:$0xff] %vm414, %v4345
      %4406 = vst.msk [vmem:[#allocation3 + $0x68] sm:$0xff] %vm414, %v4357
      %4407 = vst.msk [vmem:[#allocation3 + $0x80] sm:$0xff] %vm414, %v4369
      %4408 = vst.msk [vmem:[#allocation3 + $0x98] sm:$0xff] %vm414, %v4381
      %4409 = vst.msk [vmem:[#allocation3 + $0xb0] sm:$0xff] %vm414, %v4393
      %v4410 = vld [vmem:[%s4137] sm:$0xe]
      %v4411 = vld [vmem:[%s4137 + $0x4] sm:$0xf]
      %v4412 = vld [vmem:[%s4137 + $0x8] sm:$0x1]
      %v4413 = vld [vmem:[%s4137 + $0xc] sm:$0xe]
      %v4414 = vld [vmem:[%s4137 + $0x10] sm:$0xf]
      %v4415 = vld [vmem:[%s4137 + $0x14] sm:$0x1]
      %v4416 = vld [vmem:[%s4137 + $0x18] sm:$0xe]
      %v4417 = vld [vmem:[%s4137 + $0x1c] sm:$0xf]
      %v4418 = vld [vmem:[%s4137 + $0x20] sm:$0x1]
      %v4419 = vld [vmem:[%s4137 + $0x24] sm:$0xe]
      %v4420 = vld [vmem:[%s4137 + $0x28] sm:$0xf]
      %v4421 = vld [vmem:[%s4137 + $0x2c] sm:$0x1]
      %v4422 = vld [vmem:[%s4137 + $0x30] sm:$0xe]
      %v4423 = vld [vmem:[%s4137 + $0x34] sm:$0xf]
      %v4424 = vld [vmem:[%s4137 + $0x38] sm:$0x1]
      %v4425 = vld [vmem:[%s4137 + $0x3c] sm:$0xe]
      %v4426 = vld [vmem:[%s4137 + $0x40] sm:$0xf]
      %v4427 = vld [vmem:[%s4137 + $0x44] sm:$0x1]
      %v4428 = vld [vmem:[%s4137 + $0x48] sm:$0xe]
      %v4429 = vld [vmem:[%s4137 + $0x4c] sm:$0xf]
      %v4430 = vld [vmem:[%s4137 + $0x50] sm:$0x1]
      %v4431 = vld [vmem:[%s4137 + $0x54] sm:$0xe]
      %v4432 = vld [vmem:[%s4137 + $0x58] sm:$0xf]
      %v4433 = vld [vmem:[%s4137 + $0x5c] sm:$0x1]
      %v4458 = vunpack.c.l.b16 %v4410
      %v4459 = vunpack.c.l.b16 %v4411
      %v4460 = vunpack.c.l.b16 %v4412
      %v4461 = vunpack.c.l.b16 %v4413
      %v4462 = vunpack.c.l.b16 %v4414
      %v4463 = vunpack.c.l.b16 %v4415
      %v4464 = vunpack.c.l.b16 %v4416
      %v4465 = vunpack.c.l.b16 %v4417
      %v4466 = vunpack.c.l.b16 %v4418
      %v4467 = vunpack.c.l.b16 %v4419
      %v4468 = vunpack.c.l.b16 %v4420
      %v4469 = vunpack.c.l.b16 %v4421
      %v4470 = vunpack.c.l.b16 %v4422
      %v4471 = vunpack.c.l.b16 %v4423
      %v4472 = vunpack.c.l.b16 %v4424
      %v4473 = vunpack.c.l.b16 %v4425
      %v4474 = vunpack.c.l.b16 %v4426
      %v4475 = vunpack.c.l.b16 %v4427
      %v4476 = vunpack.c.l.b16 %v4428
      %v4477 = vunpack.c.l.b16 %v4429
      %v4478 = vunpack.c.l.b16 %v4430
      %v4479 = vunpack.c.l.b16 %v4431
      %v4480 = vunpack.c.l.b16 %v4432
      %v4481 = vunpack.c.l.b16 %v4433
      %v4482 = vpack.c.b16 %v4459, %v4458
      %v4483 = vpack.c.b16 %v4460, %v4460
      %v4484 = vpack.c.b16 %v4462, %v4461
      %v4485 = vpack.c.b16 %v4463, %v4463
      %v4486 = vpack.c.b16 %v4465, %v4464
      %v4487 = vpack.c.b16 %v4466, %v4466
      %v4488 = vpack.c.b16 %v4468, %v4467
      %v4489 = vpack.c.b16 %v4469, %v4469
      %v4490 = vpack.c.b16 %v4471, %v4470
      %v4491 = vpack.c.b16 %v4472, %v4472
      %v4492 = vpack.c.b16 %v4474, %v4473
      %v4493 = vpack.c.b16 %v4475, %v4475
      %v4494 = vpack.c.b16 %v4477, %v4476
      %v4495 = vpack.c.b16 %v4478, %v4478
      %v4496 = vpack.c.b16 %v4480, %v4479
      %v4497 = vpack.c.b16 %v4481, %v4481
      %v4498 = vrot.slane %v4482, 1
      %v4499 = vrot.slane %v4483, 1
      %v4500 = vsel %vm786, %v4498, %v4499
      %v4501 = vrot.slane %v4484, 1
      %v4502 = vrot.slane %v4485, 1
      %v4503 = vsel %vm786, %v4501, %v4502
      %v4504 = vrot.slane %v4486, 1
      %v4505 = vrot.slane %v4487, 1
      %v4506 = vsel %vm786, %v4504, %v4505
      %v4507 = vrot.slane %v4488, 1
      %v4508 = vrot.slane %v4489, 1
      %v4509 = vsel %vm786, %v4507, %v4508
      %v4510 = vrot.slane %v4490, 1
      %v4511 = vrot.slane %v4491, 1
      %v4512 = vsel %vm786, %v4510, %v4511
      %v4513 = vrot.slane %v4492, 1
      %v4514 = vrot.slane %v4493, 1
      %v4515 = vsel %vm786, %v4513, %v4514
      %v4516 = vrot.slane %v4494, 1
      %v4517 = vrot.slane %v4495, 1
      %v4518 = vsel %vm786, %v4516, %v4517
      %v4519 = vrot.slane %v4496, 1
      %v4520 = vrot.slane %v4497, 1
      %v4521 = vsel %vm786, %v4519, %v4520
      %4530 = vst.msk [vmem:[#allocation3 + $0x10] sm:$0xff] %vm414, %v4500
      %4531 = vst.msk [vmem:[#allocation3 + $0x28] sm:$0xff] %vm414, %v4503
      %4532 = vst.msk [vmem:[#allocation3 + $0x40] sm:$0xff] %vm414, %v4506
      %4533 = vst.msk [vmem:[#allocation3 + $0x58] sm:$0xff] %vm414, %v4509
      %4534 = vst.msk [vmem:[#allocation3 + $0x70] sm:$0xff] %vm414, %v4512
      %4535 = vst.msk [vmem:[#allocation3 + $0x88] sm:$0xff] %vm414, %v4515
      %4536 = vst.msk [vmem:[#allocation3 + $0xa0] sm:$0xff] %vm414, %v4518
      %4537 = vst.msk [vmem:[#allocation3 + $0xb8] sm:$0xff] %vm414, %v4521
      %v4538 = vld [vmem:[#allocation3] sm:$0xff]
      %v4539 = vld [vmem:[#allocation3 + $0x8] sm:$0xff]
      %v4540 = vld [vmem:[#allocation3 + $0x10] sm:$0xff]
      %v4541 = vld [vmem:[#allocation3 + $0x18] sm:$0xff]
      %v4542 = vld [vmem:[#allocation3 + $0x20] sm:$0xff]
      %v4543 = vld [vmem:[#allocation3 + $0x28] sm:$0xff]
      %v4544 = vld [vmem:[#allocation3 + $0x30] sm:$0xff]
      %v4545 = vld [vmem:[#allocation3 + $0x38] sm:$0xff]
      %v4546 = vld [vmem:[#allocation3 + $0x40] sm:$0xff]
      %v4547 = vld [vmem:[#allocation3 + $0x48] sm:$0xff]
      %v4548 = vld [vmem:[#allocation3 + $0x50] sm:$0xff]
      %v4549 = vld [vmem:[#allocation3 + $0x58] sm:$0xff]
      %v4550 = vld [vmem:[#allocation3 + $0x60] sm:$0xff]
      %v4551 = vld [vmem:[#allocation3 + $0x68] sm:$0xff]
      %v4552 = vld [vmem:[#allocation3 + $0x70] sm:$0xff]
      %v4553 = vld [vmem:[#allocation3 + $0x78] sm:$0xff]
      %v4554 = vld [vmem:[#allocation3 + $0x80] sm:$0xff]
      %v4555 = vld [vmem:[#allocation3 + $0x88] sm:$0xff]
      %v4556 = vld [vmem:[#allocation3 + $0x90] sm:$0xff]
      %v4557 = vld [vmem:[#allocation3 + $0x98] sm:$0xff]
      %v4558 = vld [vmem:[#allocation3 + $0xa0] sm:$0xff]
      %v4559 = vld [vmem:[#allocation3 + $0xa8] sm:$0xff]
      %v4560 = vld [vmem:[#allocation3 + $0xb0] sm:$0xff]
      %v4561 = vld [vmem:[#allocation3 + $0xb8] sm:$0xff]
      %v4562 = vld [vmem:[%s3 + $0xc0] sm:$0xf]
      %v4563 = vld [vmem:[%s3 + $0xc4] sm:$0xf]
      %v4564 = vld [vmem:[%s3 + $0xc8] sm:$0xf]
      %v4565 = vld [vmem:[%s3 + $0xcc] sm:$0xf]
      %v4566 = vld [vmem:[%s3 + $0xd0] sm:$0xf]
      %v4567 = vld [vmem:[%s3 + $0xd4] sm:$0xf]
      %v4568 = vld [vmem:[%s3 + $0xd8] sm:$0xf]
      %v4569 = vld [vmem:[%s3 + $0xdc] sm:$0xf]
      %v4570 = vld [vmem:[%s3 + $0xe0] sm:$0xf]
      %v4571 = vld [vmem:[%s3 + $0xe4] sm:$0xf]
      %v4572 = vld [vmem:[%s3 + $0xe8] sm:$0xf]
      %v4573 = vld [vmem:[%s3 + $0xec] sm:$0xf]
      %v4574 = vld [vmem:[%s3 + $0xf0] sm:$0xf]
      %v4575 = vld [vmem:[%s3 + $0xf4] sm:$0xf]
      %v4576 = vld [vmem:[%s3 + $0xf8] sm:$0xf]
      %v4577 = vld [vmem:[%s3 + $0xfc] sm:$0xf]
      %v4578 = vld [vmem:[%s3 + $0x100] sm:$0xf]
      %v4579 = vld [vmem:[%s3 + $0x104] sm:$0xf]
      %v4580 = vld [vmem:[%s3 + $0x108] sm:$0xf]
      %v4581 = vld [vmem:[%s3 + $0x10c] sm:$0xf]
      %v4582 = vld [vmem:[%s3 + $0x110] sm:$0xf]
      %v4583 = vld [vmem:[%s3 + $0x114] sm:$0xf]
      %v4584 = vld [vmem:[%s3 + $0x118] sm:$0xf]
      %v4585 = vld [vmem:[%s3 + $0x11c] sm:$0xf]
      %v4586 = vld [vmem:[%s3 + $0x120] sm:$0xf]
      %v4587 = vld [vmem:[%s3 + $0x124] sm:$0xf]
      %v4588 = vld [vmem:[%s3 + $0x128] sm:$0xf]
      %v4589 = vld [vmem:[%s3 + $0x12c] sm:$0xf]
      %v4590 = vld [vmem:[%s3 + $0x130] sm:$0xf]
      %v4591 = vld [vmem:[%s3 + $0x134] sm:$0xf]
      %v4592 = vld [vmem:[%s3 + $0x138] sm:$0xf]
      %v4593 = vld [vmem:[%s3 + $0x13c] sm:$0xf]
      %v4594 = vld [vmem:[%s3 + $0x140] sm:$0xf]
      %v4595 = vld [vmem:[%s3 + $0x144] sm:$0xf]
      %v4596 = vld [vmem:[%s3 + $0x148] sm:$0xf]
      %v4597 = vld [vmem:[%s3 + $0x14c] sm:$0xf]
      %v4598 = vld [vmem:[%s3 + $0x150] sm:$0xf]
      %v4599 = vld [vmem:[%s3 + $0x154] sm:$0xf]
      %v4600 = vld [vmem:[%s3 + $0x158] sm:$0xf]
      %v4601 = vld [vmem:[%s3 + $0x15c] sm:$0xf]
      %v4602 = vld [vmem:[%s3 + $0x160] sm:$0xf]
      %v4603 = vld [vmem:[%s3 + $0x164] sm:$0xf]
      %v4604 = vld [vmem:[%s3 + $0x168] sm:$0xf]
      %v4605 = vld [vmem:[%s3 + $0x16c] sm:$0xf]
      %v4606 = vld [vmem:[%s3 + $0x170] sm:$0xf]
      %v4607 = vld [vmem:[%s3 + $0x174] sm:$0xf]
      %v4608 = vld [vmem:[%s3 + $0x178] sm:$0xf]
      %v4609 = vld [vmem:[%s3 + $0x17c] sm:$0xf]
      %v4658 = vunpack.c.l.b16 %v4562
      %v4659 = vunpack.c.l.b16 %v4563
      %v4660 = vunpack.c.l.b16 %v4564
      %v4661 = vunpack.c.l.b16 %v4565
      %v4662 = vunpack.c.l.b16 %v4566
      %v4663 = vunpack.c.l.b16 %v4567
      %v4664 = vunpack.c.l.b16 %v4568
      %v4665 = vunpack.c.l.b16 %v4569
      %v4666 = vunpack.c.l.b16 %v4570
      %v4667 = vunpack.c.l.b16 %v4571
      %v4668 = vunpack.c.l.b16 %v4572
      %v4669 = vunpack.c.l.b16 %v4573
      %v4670 = vunpack.c.l.b16 %v4574
      %v4671 = vunpack.c.l.b16 %v4575
      %v4672 = vunpack.c.l.b16 %v4576
      %v4673 = vunpack.c.l.b16 %v4577
      %v4674 = vunpack.c.l.b16 %v4578
      %v4675 = vunpack.c.l.b16 %v4579
      %v4676 = vunpack.c.l.b16 %v4580
      %v4677 = vunpack.c.l.b16 %v4581
      %v4678 = vunpack.c.l.b16 %v4582
      %v4679 = vunpack.c.l.b16 %v4583
      %v4680 = vunpack.c.l.b16 %v4584
      %v4681 = vunpack.c.l.b16 %v4585
      %v4682 = vunpack.c.l.b16 %v4586
      %v4683 = vunpack.c.l.b16 %v4587
      %v4684 = vunpack.c.l.b16 %v4588
      %v4685 = vunpack.c.l.b16 %v4589
      %v4686 = vunpack.c.l.b16 %v4590
      %v4687 = vunpack.c.l.b16 %v4591
      %v4688 = vunpack.c.l.b16 %v4592
      %v4689 = vunpack.c.l.b16 %v4593
      %v4690 = vunpack.c.l.b16 %v4594
      %v4691 = vunpack.c.l.b16 %v4595
      %v4692 = vunpack.c.l.b16 %v4596
      %v4693 = vunpack.c.l.b16 %v4597
      %v4694 = vunpack.c.l.b16 %v4598
      %v4695 = vunpack.c.l.b16 %v4599
      %v4696 = vunpack.c.l.b16 %v4600
      %v4697 = vunpack.c.l.b16 %v4601
      %v4698 = vunpack.c.l.b16 %v4602
      %v4699 = vunpack.c.l.b16 %v4603
      %v4700 = vunpack.c.l.b16 %v4604
      %v4701 = vunpack.c.l.b16 %v4605
      %v4702 = vunpack.c.l.b16 %v4606
      %v4703 = vunpack.c.l.b16 %v4607
      %v4704 = vunpack.c.l.b16 %v4608
      %v4705 = vunpack.c.l.b16 %v4609
      %v4706 = vpack.c.b16 %v4659, %v4658
      %v4707 = vpack.c.b16 %v4661, %v4660
      %v4708 = vpack.c.b16 %v4663, %v4662
      %v4709 = vpack.c.b16 %v4665, %v4664
      %v4710 = vpack.c.b16 %v4667, %v4666
      %v4711 = vpack.c.b16 %v4669, %v4668
      %v4712 = vpack.c.b16 %v4671, %v4670
      %v4713 = vpack.c.b16 %v4673, %v4672
      %v4714 = vpack.c.b16 %v4675, %v4674
      %v4715 = vpack.c.b16 %v4677, %v4676
      %v4716 = vpack.c.b16 %v4679, %v4678
      %v4717 = vpack.c.b16 %v4681, %v4680
      %v4718 = vpack.c.b16 %v4683, %v4682
      %v4719 = vpack.c.b16 %v4685, %v4684
      %v4720 = vpack.c.b16 %v4687, %v4686
      %v4721 = vpack.c.b16 %v4689, %v4688
      %v4722 = vpack.c.b16 %v4691, %v4690
      %v4723 = vpack.c.b16 %v4693, %v4692
      %v4724 = vpack.c.b16 %v4695, %v4694
      %v4725 = vpack.c.b16 %v4697, %v4696
      %v4726 = vpack.c.b16 %v4699, %v4698
      %v4727 = vpack.c.b16 %v4701, %v4700
      %v4728 = vpack.c.b16 %v4703, %v4702
      %v4729 = vpack.c.b16 %v4705, %v4704
      %4754 = vmatprep.subr.bf16.mxu0 0
      %4755 = vmatpush1.bf16.msra.mxu0 %v4706
      %4756 = vmatprep.subr.bf16.mxu0 0
      %4757 = vmatpush1.bf16.msra.mxu0 %v4707
      %4758 = vmatprep.subr.bf16.mxu0 0
      %4759 = vmatpush1.bf16.msra.mxu0 %v4708
      %4760 = vmatprep.subr.bf16.mxu0 0
      %4761 = vmatpush1.bf16.msra.mxu0 %v4709
      %4762 = vmatprep.subr.bf16.mxu0 0
      %4763 = vmatpush1.bf16.msra.mxu0 %v4710
      %4764 = vmatprep.subr.bf16.mxu0 0
      %4765 = vmatpush1.bf16.msra.mxu0 %v4711
      %4766 = vmatprep.subr.bf16.mxu0 0
      %4767 = vmatpush1.bf16.msra.mxu0 %v4712
      %4768 = vmatprep.subr.bf16.mxu0 0
      %4769 = vmatpush1.bf16.msra.mxu0 %v4713
      %4770 = vmatprep.subr.bf16.mxu0 0
      %4771 = vmatpush1.bf16.msra.mxu0 %v4714
      %4772 = vmatprep.subr.bf16.mxu0 0
      %4773 = vmatpush1.bf16.msra.mxu0 %v4715
      %4774 = vmatprep.subr.bf16.mxu0 0
      %4775 = vmatpush1.bf16.msra.mxu0 %v4716
      %4776 = vmatprep.subr.bf16.mxu0 0
      %4777 = vmatpush1.bf16.msra.mxu0 %v4717
      %4778 = vmatprep.subr.bf16.mxu0 0
      %4779 = vmatpush1.bf16.msra.mxu0 %v4718
      %4780 = vmatprep.subr.bf16.mxu0 0
      %4781 = vmatpush1.bf16.msra.mxu0 %v4719
      %4782 = vmatprep.subr.bf16.mxu0 0
      %4783 = vmatpush1.bf16.msra.mxu0 %v4720
      %4784 = vmatprep.subr.bf16.mxu0 0
      %4785 = vmatpush1.bf16.msra.mxu0 %v4721
      %4786 = vmatprep.mubr.bf16.mxu0 %v4539
      %4787 = vmatmul.mubr.bf16.gmra.mrb[0].mxu0 %v4538
      %v4788 = vpop.f32.mrb[0].mxu0
      %v4789 = vadd.f32 0.0, %v4788
      %v4790 = vpop.f32.mrb[0].mxu0
      %v4791 = vpop.f32.mrb[0].mxu0
      %v4792 = vadd.f32 0.0, %v4791
      %v4793 = vpop.f32.mrb[0].mxu0
      %4794 = vmatprep.mubr.bf16.mxu0 %v4542
      %4795 = vmatmul.mubr.bf16.gmra.mrb[0].mxu0 %v4541
      %v4796 = vpop.f32.mrb[0].mxu0
      %v4797 = vadd.f32 0.0, %v4796
      %v4798 = vpop.f32.mrb[0].mxu0
      %v4799 = vpop.f32.mrb[0].mxu0
      %v4800 = vadd.f32 0.0, %v4799
      %v4801 = vpop.f32.mrb[0].mxu0
      %4802 = vmatprep.mubr.bf16.mxu0 %v4545
      %4803 = vmatmul.mubr.bf16.gmra.mrb[0].mxu0 %v4544
      %v4804 = vpop.f32.mrb[0].mxu0
      %v4805 = vadd.f32 0.0, %v4804
      %v4806 = vpop.f32.mrb[0].mxu0
      %v4807 = vpop.f32.mrb[0].mxu0
      %v4808 = vadd.f32 0.0, %v4807
      %v4809 = vpop.f32.mrb[0].mxu0
      %4810 = vmatprep.mubr.bf16.mxu0 %v4548
      %4811 = vmatmul.mubr.bf16.gmra.mrb[0].mxu0 %v4547
      %v4812 = vpop.f32.mrb[0].mxu0
      %v4813 = vadd.f32 0.0, %v4812
      %v4814 = vpop.f32.mrb[0].mxu0
      %v4815 = vpop.f32.mrb[0].mxu0
      %v4816 = vadd.f32 0.0, %v4815
      %v4817 = vpop.f32.mrb[0].mxu0
      %4818 = vmatprep.mubr.bf16.mxu0 %v4551
      %4819 = vmatmul.mubr.bf16.gmra.mrb[0].mxu0 %v4550
      %v4820 = vpop.f32.mrb[0].mxu0
      %v4821 = vadd.f32 0.0, %v4820
      %v4822 = vpop.f32.mrb[0].mxu0
      %v4823 = vpop.f32.mrb[0].mxu0
      %v4824 = vadd.f32 0.0, %v4823
      %v4825 = vpop.f32.mrb[0].mxu0
      %4826 = vmatprep.mubr.bf16.mxu0 %v4554
      %4827 = vmatmul.mubr.bf16.gmra.mrb[0].mxu0 %v4553
      %v4828 = vpop.f32.mrb[0].mxu0
      %v4829 = vadd.f32 0.0, %v4828
      %v4830 = vpop.f32.mrb[0].mxu0
      %v4831 = vpop.f32.mrb[0].mxu0
      %v4832 = vadd.f32 0.0, %v4831
      %v4833 = vpop.f32.mrb[0].mxu0
      %4834 = vmatprep.mubr.bf16.mxu0 %v4557
      %4835 = vmatmul.mubr.bf16.gmra.mrb[0].mxu0 %v4556
      %v4836 = vpop.f32.mrb[0].mxu0
      %v4837 = vadd.f32 0.0, %v4836
      %v4838 = vpop.f32.mrb[0].mxu0
      %v4839 = vpop.f32.mrb[0].mxu0
      %v4840 = vadd.f32 0.0, %v4839
      %v4841 = vpop.f32.mrb[0].mxu0
      %4842 = vmatprep.mubr.bf16.mxu0 %v4560
      %4843 = vmatmul.mubr.bf16.gmra.mrb[0].mxu0 %v4559
      %v4844 = vpop.f32.mrb[0].mxu0
      %v4845 = vadd.f32 0.0, %v4844
      %v4846 = vpop.f32.mrb[0].mxu0
      %v4847 = vpop.f32.mrb[0].mxu0
      %v4848 = vadd.f32 0.0, %v4847
      %v4849 = vpop.f32.mrb[0].mxu0
      %4850 = vdwg.mxu0
      %4851 = vmatprep.subr.bf16.mxu0 0
      %4852 = vmatpush1.bf16.msra.mxu0 %v4722
      %4853 = vmatprep.subr.bf16.mxu0 0
      %4854 = vmatpush1.bf16.msra.mxu0 %v4723
      %4855 = vmatprep.subr.bf16.mxu0 0
      %4856 = vmatpush1.bf16.msra.mxu0 %v4724
      %4857 = vmatprep.subr.bf16.mxu0 0
      %4858 = vmatpush1.bf16.msra.mxu0 %v4725
      %4859 = vmatprep.subr.bf16.mxu0 0
      %4860 = vmatpush1.bf16.msra.mxu0 %v4726
      %4861 = vmatprep.subr.bf16.mxu0 0
      %4862 = vmatpush1.bf16.msra.mxu0 %v4727
      %4863 = vmatprep.subr.bf16.mxu0 0
      %4864 = vmatpush1.bf16.msra.mxu0 %v4728
      %4865 = vmatprep.subr.bf16.mxu0 0
      %4866 = vmatpush1.bf16.msra.mxu0 %v4729
      %4867 = vmatprep.subr.bf16.mxu0 0
      %4868 = vmatpush1.bf16.msra.mxu0 0
      %4869 = vmatprep.subr.bf16.mxu0 0
      %4870 = vmatpush1.bf16.msra.mxu0 0
      %4871 = vmatprep.subr.bf16.mxu0 0
      %4872 = vmatpush1.bf16.msra.mxu0 0
      %4873 = vmatprep.subr.bf16.mxu0 0
      %4874 = vmatpush1.bf16.msra.mxu0 0
      %4875 = vmatprep.subr.bf16.mxu0 0
      %4876 = vmatpush1.bf16.msra.mxu0 0
      %4877 = vmatprep.subr.bf16.mxu0 0
      %4878 = vmatpush1.bf16.msra.mxu0 0
      %4879 = vmatprep.subr.bf16.mxu0 0
      %4880 = vmatpush1.bf16.msra.mxu0 0
      %4881 = vmatprep.subr.bf16.mxu0 0
      %4882 = vmatpush1.bf16.msra.mxu0 0
      %4883 = vmatprep.mubr.bf16.mxu0 0
      %4884 = vmatmul.mubr.bf16.gmra.mrb[0].mxu0 %v4540
      %v4885 = vpop.f32.mrb[0].mxu0
      %v4886 = vadd.f32 %v4789, %v4885
      %v4887 = vpop.f32.mrb[0].mxu0
      %v4888 = vpop.f32.mrb[0].mxu0
      %v4889 = vadd.f32 %v4792, %v4888
      %v4890 = vpop.f32.mrb[0].mxu0
      %4891 = vmatprep.mubr.bf16.mxu0 0
      %4892 = vmatmul.mubr.bf16.gmra.mrb[0].mxu0 %v4543
      %v4893 = vpop.f32.mrb[0].mxu0
      %v4894 = vadd.f32 %v4797, %v4893
      %v4895 = vpop.f32.mrb[0].mxu0
      %v4896 = vpop.f32.mrb[0].mxu0
      %v4897 = vadd.f32 %v4800, %v4896
      %v4898 = vpop.f32.mrb[0].mxu0
      %4899 = vmatprep.mubr.bf16.mxu0 0
      %4900 = vmatmul.mubr.bf16.gmra.mrb[0].mxu0 %v4546
      %v4901 = vpop.f32.mrb[0].mxu0
      %v4902 = vadd.f32 %v4805, %v4901
      %v4903 = vpop.f32.mrb[0].mxu0
      %v4904 = vpop.f32.mrb[0].mxu0
      %v4905 = vadd.f32 %v4808, %v4904
      %v4906 = vpop.f32.mrb[0].mxu0
      %4907 = vmatprep.mubr.bf16.mxu0 0
      %4908 = vmatmul.mubr.bf16.gmra.mrb[0].mxu0 %v4549
      %v4909 = vpop.f32.mrb[0].mxu0
      %v4910 = vadd.f32 %v4813, %v4909
      %v4911 = vpop.f32.mrb[0].mxu0
      %v4912 = vpop.f32.mrb[0].mxu0
      %v4913 = vadd.f32 %v4816, %v4912
      %v4914 = vpop.f32.mrb[0].mxu0
      %4915 = vmatprep.mubr.bf16.mxu0 0
      %4916 = vmatmul.mubr.bf16.gmra.mrb[0].mxu0 %v4552
      %v4917 = vpop.f32.mrb[0].mxu0
      %v4918 = vadd.f32 %v4821, %v4917
      %v4919 = vpop.f32.mrb[0].mxu0
      %v4920 = vpop.f32.mrb[0].mxu0
      %v4921 = vadd.f32 %v4824, %v4920
      %v4922 = vpop.f32.mrb[0].mxu0
      %4923 = vmatprep.mubr.bf16.mxu0 0
      %4924 = vmatmul.mubr.bf16.gmra.mrb[0].mxu0 %v4555
      %v4925 = vpop.f32.mrb[0].mxu0
      %v4926 = vadd.f32 %v4829, %v4925
      %v4927 = vpop.f32.mrb[0].mxu0
      %v4928 = vpop.f32.mrb[0].mxu0
      %v4929 = vadd.f32 %v4832, %v4928
      %v4930 = vpop.f32.mrb[0].mxu0
      %4931 = vmatprep.mubr.bf16.mxu0 0
      %4932 = vmatmul.mubr.bf16.gmra.mrb[0].mxu0 %v4558
      %v4933 = vpop.f32.mrb[0].mxu0
      %v4934 = vadd.f32 %v4837, %v4933
      %v4935 = vpop.f32.mrb[0].mxu0
      %v4936 = vpop.f32.mrb[0].mxu0
      %v4937 = vadd.f32 %v4840, %v4936
      %v4938 = vpop.f32.mrb[0].mxu0
      %4939 = vmatprep.mubr.bf16.mxu0 0
      %4940 = vmatmul.mubr.bf16.gmra.mrb[0].mxu0 %v4561
      %v4941 = vpop.f32.mrb[0].mxu0
      %v4942 = vadd.f32 %v4845, %v4941
      %v4943 = vpop.f32.mrb[0].mxu0
      %v4944 = vpop.f32.mrb[0].mxu0
      %v4945 = vadd.f32 %v4848, %v4944
      %v4946 = vpop.f32.mrb[0].mxu0
      %4947 = vdwg.mxu0
      %v4996 = vunpack.c.l.b16 %v4089
      %v4997 = vunpack.c.l.b16 %v4090
      %v4998 = vunpack.c.l.b16 %v4091
      %v4999 = vunpack.c.l.b16 %v4092
      %v5000 = vunpack.c.l.b16 %v4093
      %v5001 = vunpack.c.l.b16 %v4094
      %v5002 = vunpack.c.l.b16 %v4095
      %v5003 = vunpack.c.l.b16 %v4096
      %v5004 = vunpack.c.l.b16 %v4097
      %v5005 = vunpack.c.l.b16 %v4098
      %v5006 = vunpack.c.l.b16 %v4099
      %v5007 = vunpack.c.l.b16 %v4100
      %v5008 = vunpack.c.l.b16 %v4101
      %v5009 = vunpack.c.l.b16 %v4102
      %v5010 = vunpack.c.l.b16 %v4103
      %v5011 = vunpack.c.l.b16 %v4104
      %v5012 = vunpack.c.l.b16 %v4105
      %v5013 = vunpack.c.l.b16 %v4106
      %v5014 = vunpack.c.l.b16 %v4107
      %v5015 = vunpack.c.l.b16 %v4108
      %v5016 = vunpack.c.l.b16 %v4109
      %v5017 = vunpack.c.l.b16 %v4110
      %v5018 = vunpack.c.l.b16 %v4111
      %v5019 = vunpack.c.l.b16 %v4112
      %v5020 = vunpack.c.l.b16 %v4113
      %v5021 = vunpack.c.l.b16 %v4114
      %v5022 = vunpack.c.l.b16 %v4115
      %v5023 = vunpack.c.l.b16 %v4116
      %v5024 = vunpack.c.l.b16 %v4117
      %v5025 = vunpack.c.l.b16 %v4118
      %v5026 = vunpack.c.l.b16 %v4119
      %v5027 = vunpack.c.l.b16 %v4120
      %v5028 = vunpack.c.l.b16 %v4121
      %v5029 = vunpack.c.l.b16 %v4122
      %v5030 = vunpack.c.l.b16 %v4123
      %v5031 = vunpack.c.l.b16 %v4124
      %v5032 = vunpack.c.l.b16 %v4125
      %v5033 = vunpack.c.l.b16 %v4126
      %v5034 = vunpack.c.l.b16 %v4127
      %v5035 = vunpack.c.l.b16 %v4128
      %v5036 = vunpack.c.l.b16 %v4129
      %v5037 = vunpack.c.l.b16 %v4130
      %v5038 = vunpack.c.l.b16 %v4131
      %v5039 = vunpack.c.l.b16 %v4132
      %v5040 = vunpack.c.l.b16 %v4133
      %v5041 = vunpack.c.l.b16 %v4134
      %v5042 = vunpack.c.l.b16 %v4135
      %v5043 = vunpack.c.l.b16 %v4136
      %v5044 = vpack.c.b16 %v4997, %v4996
      %v5045 = vpack.c.b16 %v4999, %v4998
      %v5046 = vpack.c.b16 %v5001, %v5000
      %v5047 = vpack.c.b16 %v5003, %v5002
      %v5048 = vpack.c.b16 %v5005, %v5004
      %v5049 = vpack.c.b16 %v5007, %v5006
      %v5050 = vpack.c.b16 %v5009, %v5008
      %v5051 = vpack.c.b16 %v5011, %v5010
      %v5052 = vpack.c.b16 %v5013, %v5012
      %v5053 = vpack.c.b16 %v5015, %v5014
      %v5054 = vpack.c.b16 %v5017, %v5016
      %v5055 = vpack.c.b16 %v5019, %v5018
      %v5056 = vpack.c.b16 %v5021, %v5020
      %v5057 = vpack.c.b16 %v5023, %v5022
      %v5058 = vpack.c.b16 %v5025, %v5024
      %v5059 = vpack.c.b16 %v5027, %v5026
      %v5060 = vpack.c.b16 %v5029, %v5028
      %v5061 = vpack.c.b16 %v5031, %v5030
      %v5062 = vpack.c.b16 %v5033, %v5032
      %v5063 = vpack.c.b16 %v5035, %v5034
      %v5064 = vpack.c.b16 %v5037, %v5036
      %v5065 = vpack.c.b16 %v5039, %v5038
      %v5066 = vpack.c.b16 %v5041, %v5040
      %v5067 = vpack.c.b16 %v5043, %v5042
      %5092 = vmatprep.subr.bf16.mxu0 0
      %5093 = vmatpush1.bf16.msra.mxu0 %v5044
      %5094 = vmatprep.subr.bf16.mxu0 0
      %5095 = vmatpush1.bf16.msra.mxu0 %v5045
      %5096 = vmatprep.subr.bf16.mxu0 0
      %5097 = vmatpush1.bf16.msra.mxu0 %v5046
      %5098 = vmatprep.subr.bf16.mxu0 0
      %5099 = vmatpush1.bf16.msra.mxu0 %v5047
      %5100 = vmatprep.subr.bf16.mxu0 0
      %5101 = vmatpush1.bf16.msra.mxu0 %v5048
      %5102 = vmatprep.subr.bf16.mxu0 0
      %5103 = vmatpush1.bf16.msra.mxu0 %v5049
      %5104 = vmatprep.subr.bf16.mxu0 0
      %5105 = vmatpush1.bf16.msra.mxu0 %v5050
      %5106 = vmatprep.subr.bf16.mxu0 0
      %5107 = vmatpush1.bf16.msra.mxu0 %v5051
      %5108 = vmatprep.subr.bf16.mxu0 0
      %5109 = vmatpush1.bf16.msra.mxu0 %v5052
      %5110 = vmatprep.subr.bf16.mxu0 0
      %5111 = vmatpush1.bf16.msra.mxu0 %v5053
      %5112 = vmatprep.subr.bf16.mxu0 0
      %5113 = vmatpush1.bf16.msra.mxu0 %v5054
      %5114 = vmatprep.subr.bf16.mxu0 0
      %5115 = vmatpush1.bf16.msra.mxu0 %v5055
      %5116 = vmatprep.subr.bf16.mxu0 0
      %5117 = vmatpush1.bf16.msra.mxu0 %v5056
      %5118 = vmatprep.subr.bf16.mxu0 0
      %5119 = vmatpush1.bf16.msra.mxu0 %v5057
      %5120 = vmatprep.subr.bf16.mxu0 0
      %5121 = vmatpush1.bf16.msra.mxu0 %v5058
      %5122 = vmatprep.subr.bf16.mxu0 0
      %5123 = vmatpush1.bf16.msra.mxu0 %v5059
      %5124 = vmatprep.mubr.bf16.mxu0 %v4066
      %5125 = vmatmul.mubr.bf16.gmra.mrb[0].mxu0 %v4065
      %v5126 = vpop.f32.mrb[0].mxu0
      %v5127 = vadd.f32 %v4886, %v5126
      %v5128 = vpop.f32.mrb[0].mxu0
      %v5129 = vpop.f32.mrb[0].mxu0
      %v5130 = vadd.f32 %v4889, %v5129
      %v5131 = vpop.f32.mrb[0].mxu0
      %5132 = vmatprep.mubr.bf16.mxu0 %v4069
      %5133 = vmatmul.mubr.bf16.gmra.mrb[0].mxu0 %v4068
      %v5134 = vpop.f32.mrb[0].mxu0
      %v5135 = vadd.f32 %v4894, %v5134
      %v5136 = vpop.f32.mrb[0].mxu0
      %v5137 = vpop.f32.mrb[0].mxu0
      %v5138 = vadd.f32 %v4897, %v5137
      %v5139 = vpop.f32.mrb[0].mxu0
      %5140 = vmatprep.mubr.bf16.mxu0 %v4072
      %5141 = vmatmul.mubr.bf16.gmra.mrb[0].mxu0 %v4071
      %v5142 = vpop.f32.mrb[0].mxu0
      %v5143 = vadd.f32 %v4902, %v5142
      %v5144 = vpop.f32.mrb[0].mxu0
      %v5145 = vpop.f32.mrb[0].mxu0
      %v5146 = vadd.f32 %v4905, %v5145
      %v5147 = vpop.f32.mrb[0].mxu0
      %5148 = vmatprep.mubr.bf16.mxu0 %v4075
      %5149 = vmatmul.mubr.bf16.gmra.mrb[0].mxu0 %v4074
      %v5150 = vpop.f32.mrb[0].mxu0
      %v5151 = vadd.f32 %v4910, %v5150
      %v5152 = vpop.f32.mrb[0].mxu0
      %v5153 = vpop.f32.mrb[0].mxu0
      %v5154 = vadd.f32 %v4913, %v5153
      %v5155 = vpop.f32.mrb[0].mxu0
      %5156 = vmatprep.mubr.bf16.mxu0 %v4078
      %5157 = vmatmul.mubr.bf16.gmra.mrb[0].mxu0 %v4077
      %v5158 = vpop.f32.mrb[0].mxu0
      %v5159 = vadd.f32 %v4918, %v5158
      %v5160 = vpop.f32.mrb[0].mxu0
      %v5161 = vpop.f32.mrb[0].mxu0
      %v5162 = vadd.f32 %v4921, %v5161
      %v5163 = vpop.f32.mrb[0].mxu0
      %5164 = vmatprep.mubr.bf16.mxu0 %v4081
      %5165 = vmatmul.mubr.bf16.gmra.mrb[0].mxu0 %v4080
      %v5166 = vpop.f32.mrb[0].mxu0
      %v5167 = vadd.f32 %v4926, %v5166
      %v5168 = vpop.f32.mrb[0].mxu0
      %v5169 = vpop.f32.mrb[0].mxu0
      %v5170 = vadd.f32 %v4929, %v5169
      %v5171 = vpop.f32.mrb[0].mxu0
      %5172 = vmatprep.mubr.bf16.mxu0 %v4084
      %5173 = vmatmul.mubr.bf16.gmra.mrb[0].mxu0 %v4083
      %v5174 = vpop.f32.mrb[0].mxu0
      %v5175 = vadd.f32 %v4934, %v5174
      %v5176 = vpop.f32.mrb[0].mxu0
      %v5177 = vpop.f32.mrb[0].mxu0
      %v5178 = vadd.f32 %v4937, %v5177
      %v5179 = vpop.f32.mrb[0].mxu0
      %5180 = vmatprep.mubr.bf16.mxu0 %v4087
      %5181 = vmatmul.mubr.bf16.gmra.mrb[0].mxu0 %v4086
      %v5182 = vpop.f32.mrb[0].mxu0
      %v5183 = vadd.f32 %v4942, %v5182
      %v5184 = vpop.f32.mrb[0].mxu0
      %v5185 = vpop.f32.mrb[0].mxu0
      %v5186 = vadd.f32 %v4945, %v5185
      %v5187 = vpop.f32.mrb[0].mxu0
      %5188 = vdwg.mxu0
      %5189 = vmatprep.subr.bf16.mxu0 0
      %5190 = vmatpush1.bf16.msra.mxu0 %v5060
      %5191 = vmatprep.subr.bf16.mxu0 0
      %5192 = vmatpush1.bf16.msra.mxu0 %v5061
      %5193 = vmatprep.subr.bf16.mxu0 0
      %5194 = vmatpush1.bf16.msra.mxu0 %v5062
      %5195 = vmatprep.subr.bf16.mxu0 0
      %5196 = vmatpush1.bf16.msra.mxu0 %v5063
      %5197 = vmatprep.subr.bf16.mxu0 0
      %5198 = vmatpush1.bf16.msra.mxu0 %v5064
      %5199 = vmatprep.subr.bf16.mxu0 0
      %5200 = vmatpush1.bf16.msra.mxu0 %v5065
      %5201 = vmatprep.subr.bf16.mxu0 0
      %5202 = vmatpush1.bf16.msra.mxu0 %v5066
      %5203 = vmatprep.subr.bf16.mxu0 0
      %5204 = vmatpush1.bf16.msra.mxu0 %v5067
      %5205 = vmatprep.subr.bf16.mxu0 0
      %5206 = vmatpush1.bf16.msra.mxu0 0
      %5207 = vmatprep.subr.bf16.mxu0 0
      %5208 = vmatpush1.bf16.msra.mxu0 0
      %5209 = vmatprep.subr.bf16.mxu0 0
      %5210 = vmatpush1.bf16.msra.mxu0 0
      %5211 = vmatprep.subr.bf16.mxu0 0
      %5212 = vmatpush1.bf16.msra.mxu0 0
      %5213 = vmatprep.subr.bf16.mxu0 0
      %5214 = vmatpush1.bf16.msra.mxu0 0
      %5215 = vmatprep.subr.bf16.mxu0 0
      %5216 = vmatpush1.bf16.msra.mxu0 0
      %5217 = vmatprep.subr.bf16.mxu0 0
      %5218 = vmatpush1.bf16.msra.mxu0 0
      %5219 = vmatprep.subr.bf16.mxu0 0
      %5220 = vmatpush1.bf16.msra.mxu0 0
      %5221 = vmatprep.mubr.bf16.mxu0 0
      %5222 = vmatmul.mubr.bf16.gmra.mrb[0].mxu0 %v4067
      %v5223 = vpop.f32.mrb[0].mxu0
      %v5224 = vadd.f32 %v5127, %v5223
      %v5225 = vpop.f32.mrb[0].mxu0
      %v5226 = vpop.f32.mrb[0].mxu0
      %v5227 = vadd.f32 %v5130, %v5226
      %v5228 = vpop.f32.mrb[0].mxu0
      %5229 = vmatprep.mubr.bf16.mxu0 0
      %5230 = vmatmul.mubr.bf16.gmra.mrb[0].mxu0 %v4070
      %v5231 = vpop.f32.mrb[0].mxu0
      %v5232 = vadd.f32 %v5135, %v5231
      %v5233 = vpop.f32.mrb[0].mxu0
      %v5234 = vpop.f32.mrb[0].mxu0
      %v5235 = vadd.f32 %v5138, %v5234
      %v5236 = vpop.f32.mrb[0].mxu0
      %5237 = vmatprep.mubr.bf16.mxu0 0
      %5238 = vmatmul.mubr.bf16.gmra.mrb[0].mxu0 %v4073
      %v5239 = vpop.f32.mrb[0].mxu0
      %v5240 = vadd.f32 %v5143, %v5239
      %v5241 = vpop.f32.mrb[0].mxu0
      %v5242 = vpop.f32.mrb[0].mxu0
      %v5243 = vadd.f32 %v5146, %v5242
      %v5244 = vpop.f32.mrb[0].mxu0
      %5245 = vmatprep.mubr.bf16.mxu0 0
      %5246 = vmatmul.mubr.bf16.gmra.mrb[0].mxu0 %v4076
      %v5247 = vpop.f32.mrb[0].mxu0
      %v5248 = vadd.f32 %v5151, %v5247
      %v5249 = vpop.f32.mrb[0].mxu0
      %v5250 = vpop.f32.mrb[0].mxu0
      %v5251 = vadd.f32 %v5154, %v5250
      %v5252 = vpop.f32.mrb[0].mxu0
      %5253 = vmatprep.mubr.bf16.mxu0 0
      %5254 = vmatmul.mubr.bf16.gmra.mrb[0].mxu0 %v4079
      %v5255 = vpop.f32.mrb[0].mxu0
      %v5256 = vadd.f32 %v5159, %v5255
      %v5257 = vpop.f32.mrb[0].mxu0
      %v5258 = vpop.f32.mrb[0].mxu0
      %v5259 = vadd.f32 %v5162, %v5258
      %v5260 = vpop.f32.mrb[0].mxu0
      %5261 = vmatprep.mubr.bf16.mxu0 0
      %5262 = vmatmul.mubr.bf16.gmra.mrb[0].mxu0 %v4082
      %v5263 = vpop.f32.mrb[0].mxu0
      %v5264 = vadd.f32 %v5167, %v5263
      %v5265 = vpop.f32.mrb[0].mxu0
      %v5266 = vpop.f32.mrb[0].mxu0
      %v5267 = vadd.f32 %v5170, %v5266
      %v5268 = vpop.f32.mrb[0].mxu0
      %5269 = vmatprep.mubr.bf16.mxu0 0
      %5270 = vmatmul.mubr.bf16.gmra.mrb[0].mxu0 %v4085
      %v5271 = vpop.f32.mrb[0].mxu0
      %v5272 = vadd.f32 %v5175, %v5271
      %v5273 = vpop.f32.mrb[0].mxu0
      %v5274 = vpop.f32.mrb[0].mxu0
      %v5275 = vadd.f32 %v5178, %v5274
      %v5276 = vpop.f32.mrb[0].mxu0
      %5277 = vmatprep.mubr.bf16.mxu0 0
      %5278 = vmatmul.mubr.bf16.gmra.mrb[0].mxu0 %v4088
      %v5279 = vpop.f32.mrb[0].mxu0
      %v5280 = vadd.f32 %v5183, %v5279
      %v5281 = vpop.f32.mrb[0].mxu0
      %v5282 = vpop.f32.mrb[0].mxu0
      %v5283 = vadd.f32 %v5186, %v5282
      %v5284 = vpop.f32.mrb[0].mxu0
      %5285 = vdwg.mxu0
      %s5286 = scalar_lea.vmem [#allocation2], 24
      %v5287 = vld [vmem:[%s5286] sm:$0xf]
      %v5288 = vld [vmem:[%s5286 + $0x4] sm:$0xf]
      %v5289 = vld [vmem:[%s5286 + $0xc] sm:$0xf]
      %v5290 = vld [vmem:[%s5286 + $0x10] sm:$0xf]
      %v5291 = vld [vmem:[%s5286 + $0x18] sm:$0xf]
      %v5292 = vld [vmem:[%s5286 + $0x1c] sm:$0xf]
      %v5293 = vld [vmem:[%s5286 + $0x24] sm:$0xf]
      %v5294 = vld [vmem:[%s5286 + $0x28] sm:$0xf]
      %v5295 = vld [vmem:[%s5286 + $0x30] sm:$0xf]
      %v5296 = vld [vmem:[%s5286 + $0x34] sm:$0xf]
      %v5297 = vld [vmem:[%s5286 + $0x3c] sm:$0xf]
      %v5298 = vld [vmem:[%s5286 + $0x40] sm:$0xf]
      %v5299 = vld [vmem:[%s5286 + $0x48] sm:$0xf]
      %v5300 = vld [vmem:[%s5286 + $0x4c] sm:$0xf]
      %v5301 = vld [vmem:[%s5286 + $0x54] sm:$0xf]
      %v5302 = vld [vmem:[%s5286 + $0x58] sm:$0xf]
      %v5319 = vunpack.c.l.b16 %v5287
      %v5320 = vunpack.c.l.b16 %v5288
      %v5321 = vunpack.c.l.b16 %v5289
      %v5322 = vunpack.c.l.b16 %v5290
      %v5323 = vunpack.c.l.b16 %v5291
      %v5324 = vunpack.c.l.b16 %v5292
      %v5325 = vunpack.c.l.b16 %v5293
      %v5326 = vunpack.c.l.b16 %v5294
      %v5327 = vunpack.c.l.b16 %v5295
      %v5328 = vunpack.c.l.b16 %v5296
      %v5329 = vunpack.c.l.b16 %v5297
      %v5330 = vunpack.c.l.b16 %v5298
      %v5331 = vunpack.c.l.b16 %v5299
      %v5332 = vunpack.c.l.b16 %v5300
      %v5333 = vunpack.c.l.b16 %v5301
      %v5334 = vunpack.c.l.b16 %v5302
      %v5335 = vpack.c.b16 %v5320, %v5319
      %v5336 = vpack.c.b16 %v5322, %v5321
      %v5337 = vpack.c.b16 %v5324, %v5323
      %v5338 = vpack.c.b16 %v5326, %v5325
      %v5339 = vpack.c.b16 %v5328, %v5327
      %v5340 = vpack.c.b16 %v5330, %v5329
      %v5341 = vpack.c.b16 %v5332, %v5331
      %v5342 = vpack.c.b16 %v5334, %v5333
      %5351 = vst.msk [vmem:[#allocation3] sm:$0xff] %vm414, %v5335
      %5352 = vst.msk [vmem:[#allocation3 + $0x18] sm:$0xff] %vm414, %v5336
      %5353 = vst.msk [vmem:[#allocation3 + $0x30] sm:$0xff] %vm414, %v5337
      %5354 = vst.msk [vmem:[#allocation3 + $0x48] sm:$0xff] %vm414, %v5338
      %5355 = vst.msk [vmem:[#allocation3 + $0x60] sm:$0xff] %vm414, %v5339
      %5356 = vst.msk [vmem:[#allocation3 + $0x78] sm:$0xff] %vm414, %v5340
      %5357 = vst.msk [vmem:[#allocation3 + $0x90] sm:$0xff] %vm414, %v5341
      %5358 = vst.msk [vmem:[#allocation3 + $0xa8] sm:$0xff] %vm414, %v5342
      %v5359 = vld [vmem:[%s5286] sm:$0xf]
      %v5360 = vld [vmem:[%s5286 + $0x4] sm:$0xf]
      %v5361 = vld [vmem:[%s5286 + $0x8] sm:$0x1]
      %v5362 = vld [vmem:[%s5286 + $0xc] sm:$0xf]
      %v5363 = vld [vmem:[%s5286 + $0x10] sm:$0xf]
      %v5364 = vld [vmem:[%s5286 + $0x14] sm:$0x1]
      %v5365 = vld [vmem:[%s5286 + $0x18] sm:$0xf]
      %v5366 = vld [vmem:[%s5286 + $0x1c] sm:$0xf]
      %v5367 = vld [vmem:[%s5286 + $0x20] sm:$0x1]
      %v5368 = vld [vmem:[%s5286 + $0x24] sm:$0xf]
      %v5369 = vld [vmem:[%s5286 + $0x28] sm:$0xf]
      %v5370 = vld [vmem:[%s5286 + $0x2c] sm:$0x1]
      %v5371 = vld [vmem:[%s5286 + $0x30] sm:$0xf]
      %v5372 = vld [vmem:[%s5286 + $0x34] sm:$0xf]
      %v5373 = vld [vmem:[%s5286 + $0x38] sm:$0x1]
      %v5374 = vld [vmem:[%s5286 + $0x3c] sm:$0xf]
      %v5375 = vld [vmem:[%s5286 + $0x40] sm:$0xf]
      %v5376 = vld [vmem:[%s5286 + $0x44] sm:$0x1]
      %v5377 = vld [vmem:[%s5286 + $0x48] sm:$0xf]
      %v5378 = vld [vmem:[%s5286 + $0x4c] sm:$0xf]
      %v5379 = vld [vmem:[%s5286 + $0x50] sm:$0x1]
      %v5380 = vld [vmem:[%s5286 + $0x54] sm:$0xf]
      %v5381 = vld [vmem:[%s5286 + $0x58] sm:$0xf]
      %v5382 = vld [vmem:[%s5286 + $0x5c] sm:$0x1]
      %v5407 = vunpack.c.l.b16 %v5359
      %v5408 = vunpack.c.l.b16 %v5360
      %v5409 = vunpack.c.l.b16 %v5361
      %v5410 = vunpack.c.l.b16 %v5362
      %v5411 = vunpack.c.l.b16 %v5363
      %v5412 = vunpack.c.l.b16 %v5364
      %v5413 = vunpack.c.l.b16 %v5365
      %v5414 = vunpack.c.l.b16 %v5366
      %v5415 = vunpack.c.l.b16 %v5367
      %v5416 = vunpack.c.l.b16 %v5368
      %v5417 = vunpack.c.l.b16 %v5369
      %v5418 = vunpack.c.l.b16 %v5370
      %v5419 = vunpack.c.l.b16 %v5371
      %v5420 = vunpack.c.l.b16 %v5372
      %v5421 = vunpack.c.l.b16 %v5373
      %v5422 = vunpack.c.l.b16 %v5374
      %v5423 = vunpack.c.l.b16 %v5375
      %v5424 = vunpack.c.l.b16 %v5376
      %v5425 = vunpack.c.l.b16 %v5377
      %v5426 = vunpack.c.l.b16 %v5378
      %v5427 = vunpack.c.l.b16 %v5379
      %v5428 = vunpack.c.l.b16 %v5380
      %v5429 = vunpack.c.l.b16 %v5381
      %v5430 = vunpack.c.l.b16 %v5382
      %v5431 = vpack.c.b16 %v5408, %v5407
      %v5432 = vpack.c.b16 %v5409, %v5409
      %v5433 = vpack.c.b16 %v5411, %v5410
      %v5434 = vpack.c.b16 %v5412, %v5412
      %v5435 = vpack.c.b16 %v5414, %v5413
      %v5436 = vpack.c.b16 %v5415, %v5415
      %v5437 = vpack.c.b16 %v5417, %v5416
      %v5438 = vpack.c.b16 %v5418, %v5418
      %v5439 = vpack.c.b16 %v5420, %v5419
      %v5440 = vpack.c.b16 %v5421, %v5421
      %v5441 = vpack.c.b16 %v5423, %v5422
      %v5442 = vpack.c.b16 %v5424, %v5424
      %v5443 = vpack.c.b16 %v5426, %v5425
      %v5444 = vpack.c.b16 %v5427, %v5427
      %v5445 = vpack.c.b16 %v5429, %v5428
      %v5446 = vpack.c.b16 %v5430, %v5430
      %v5448 = vshrl.u32 %v5431, 16
      %v5450 = vshll.u32 %v5431, 16
      %v5452 = vrot.slane %v5450, 1
      %v5453 = vor.u32 %v5448, %v5452
      %v5455 = vshll.u32 %v5432, 16
      %v5457 = vrot.slane %v5455, 1
      %v5458 = vsel %vm535, %v5453, %v5457
      %v5460 = vshrl.u32 %v5433, 16
      %v5462 = vshll.u32 %v5433, 16
      %v5464 = vrot.slane %v5462, 1
      %v5465 = vor.u32 %v5460, %v5464
      %v5467 = vshll.u32 %v5434, 16
      %v5469 = vrot.slane %v5467, 1
      %v5470 = vsel %vm535, %v5465, %v5469
      %v5472 = vshrl.u32 %v5435, 16
      %v5474 = vshll.u32 %v5435, 16
      %v5476 = vrot.slane %v5474, 1
      %v5477 = vor.u32 %v5472, %v5476
      %v5479 = vshll.u32 %v5436, 16
      %v5481 = vrot.slane %v5479, 1
      %v5482 = vsel %vm535, %v5477, %v5481
      %v5484 = vshrl.u32 %v5437, 16
      %v5486 = vshll.u32 %v5437, 16
      %v5488 = vrot.slane %v5486, 1
      %v5489 = vor.u32 %v5484, %v5488
      %v5491 = vshll.u32 %v5438, 16
      %v5493 = vrot.slane %v5491, 1
      %v5494 = vsel %vm535, %v5489, %v5493
      %v5496 = vshrl.u32 %v5439, 16
      %v5498 = vshll.u32 %v5439, 16
      %v5500 = vrot.slane %v5498, 1
      %v5501 = vor.u32 %v5496, %v5500
      %v5503 = vshll.u32 %v5440, 16
      %v5505 = vrot.slane %v5503, 1
      %v5506 = vsel %vm535, %v5501, %v5505
      %v5508 = vshrl.u32 %v5441, 16
      %v5510 = vshll.u32 %v5441, 16
      %v5512 = vrot.slane %v5510, 1
      %v5513 = vor.u32 %v5508, %v5512
      %v5515 = vshll.u32 %v5442, 16
      %v5517 = vrot.slane %v5515, 1
      %v5518 = vsel %vm535, %v5513, %v5517
      %v5520 = vshrl.u32 %v5443, 16
      %v5522 = vshll.u32 %v5443, 16
      %v5524 = vrot.slane %v5522, 1
      %v5525 = vor.u32 %v5520, %v5524
      %v5527 = vshll.u32 %v5444, 16
      %v5529 = vrot.slane %v5527, 1
      %v5530 = vsel %vm535, %v5525, %v5529
      %v5532 = vshrl.u32 %v5445, 16
      %v5534 = vshll.u32 %v5445, 16
      %v5536 = vrot.slane %v5534, 1
      %v5537 = vor.u32 %v5532, %v5536
      %v5539 = vshll.u32 %v5446, 16
      %v5541 = vrot.slane %v5539, 1
      %v5542 = vsel %vm535, %v5537, %v5541
      %5551 = vst.msk [vmem:[#allocation3 + $0x8] sm:$0xff] %vm414, %v5458
      %5552 = vst.msk [vmem:[#allocation3 + $0x20] sm:$0xff] %vm414, %v5470
      %5553 = vst.msk [vmem:[#allocation3 + $0x38] sm:$0xff] %vm414, %v5482
      %5554 = vst.msk [vmem:[#allocation3 + $0x50] sm:$0xff] %vm414, %v5494
      %5555 = vst.msk [vmem:[#allocation3 + $0x68] sm:$0xff] %vm414, %v5506
      %5556 = vst.msk [vmem:[#allocation3 + $0x80] sm:$0xff] %vm414, %v5518
      %5557 = vst.msk [vmem:[#allocation3 + $0x98] sm:$0xff] %vm414, %v5530
      %5558 = vst.msk [vmem:[#allocation3 + $0xb0] sm:$0xff] %vm414, %v5542
      %v5559 = vld [vmem:[%s5286] sm:$0xe]
      %v5560 = vld [vmem:[%s5286 + $0x4] sm:$0xf]
      %v5561 = vld [vmem:[%s5286 + $0x8] sm:$0x1]
      %v5562 = vld [vmem:[%s5286 + $0xc] sm:$0xe]
      %v5563 = vld [vmem:[%s5286 + $0x10] sm:$0xf]
      %v5564 = vld [vmem:[%s5286 + $0x14] sm:$0x1]
      %v5565 = vld [vmem:[%s5286 + $0x18] sm:$0xe]
      %v5566 = vld [vmem:[%s5286 + $0x1c] sm:$0xf]
      %v5567 = vld [vmem:[%s5286 + $0x20] sm:$0x1]
      %v5568 = vld [vmem:[%s5286 + $0x24] sm:$0xe]
      %v5569 = vld [vmem:[%s5286 + $0x28] sm:$0xf]
      %v5570 = vld [vmem:[%s5286 + $0x2c] sm:$0x1]
      %v5571 = vld [vmem:[%s5286 + $0x30] sm:$0xe]
      %v5572 = vld [vmem:[%s5286 + $0x34] sm:$0xf]
      %v5573 = vld [vmem:[%s5286 + $0x38] sm:$0x1]
      %v5574 = vld [vmem:[%s5286 + $0x3c] sm:$0xe]
      %v5575 = vld [vmem:[%s5286 + $0x40] sm:$0xf]
      %v5576 = vld [vmem:[%s5286 + $0x44] sm:$0x1]
      %v5577 = vld [vmem:[%s5286 + $0x48] sm:$0xe]
      %v5578 = vld [vmem:[%s5286 + $0x4c] sm:$0xf]
      %v5579 = vld [vmem:[%s5286 + $0x50] sm:$0x1]
      %v5580 = vld [vmem:[%s5286 + $0x54] sm:$0xe]
      %v5581 = vld [vmem:[%s5286 + $0x58] sm:$0xf]
      %v5582 = vld [vmem:[%s5286 + $0x5c] sm:$0x1]
      %v5607 = vunpack.c.l.b16 %v5559
      %v5608 = vunpack.c.l.b16 %v5560
      %v5609 = vunpack.c.l.b16 %v5561
      %v5610 = vunpack.c.l.b16 %v5562
      %v5611 = vunpack.c.l.b16 %v5563
      %v5612 = vunpack.c.l.b16 %v5564
      %v5613 = vunpack.c.l.b16 %v5565
      %v5614 = vunpack.c.l.b16 %v5566
      %v5615 = vunpack.c.l.b16 %v5567
      %v5616 = vunpack.c.l.b16 %v5568
      %v5617 = vunpack.c.l.b16 %v5569
      %v5618 = vunpack.c.l.b16 %v5570
      %v5619 = vunpack.c.l.b16 %v5571
      %v5620 = vunpack.c.l.b16 %v5572
      %v5621 = vunpack.c.l.b16 %v5573
      %v5622 = vunpack.c.l.b16 %v5574
      %v5623 = vunpack.c.l.b16 %v5575
      %v5624 = vunpack.c.l.b16 %v5576
      %v5625 = vunpack.c.l.b16 %v5577
      %v5626 = vunpack.c.l.b16 %v5578
      %v5627 = vunpack.c.l.b16 %v5579
      %v5628 = vunpack.c.l.b16 %v5580
      %v5629 = vunpack.c.l.b16 %v5581
      %v5630 = vunpack.c.l.b16 %v5582
      %v5631 = vpack.c.b16 %v5608, %v5607
      %v5632 = vpack.c.b16 %v5609, %v5609
      %v5633 = vpack.c.b16 %v5611, %v5610
      %v5634 = vpack.c.b16 %v5612, %v5612
      %v5635 = vpack.c.b16 %v5614, %v5613
      %v5636 = vpack.c.b16 %v5615, %v5615
      %v5637 = vpack.c.b16 %v5617, %v5616
      %v5638 = vpack.c.b16 %v5618, %v5618
      %v5639 = vpack.c.b16 %v5620, %v5619
      %v5640 = vpack.c.b16 %v5621, %v5621
      %v5641 = vpack.c.b16 %v5623, %v5622
      %v5642 = vpack.c.b16 %v5624, %v5624
      %v5643 = vpack.c.b16 %v5626, %v5625
      %v5644 = vpack.c.b16 %v5627, %v5627
      %v5645 = vpack.c.b16 %v5629, %v5628
      %v5646 = vpack.c.b16 %v5630, %v5630
      %v5647 = vrot.slane %v5631, 1
      %v5648 = vrot.slane %v5632, 1
      %v5649 = vsel %vm786, %v5647, %v5648
      %v5650 = vrot.slane %v5633, 1
      %v5651 = vrot.slane %v5634, 1
      %v5652 = vsel %vm786, %v5650, %v5651
      %v5653 = vrot.slane %v5635, 1
      %v5654 = vrot.slane %v5636, 1
      %v5655 = vsel %vm786, %v5653, %v5654
      %v5656 = vrot.slane %v5637, 1
      %v5657 = vrot.slane %v5638, 1
      %v5658 = vsel %vm786, %v5656, %v5657
      %v5659 = vrot.slane %v5639, 1
      %v5660 = vrot.slane %v5640, 1
      %v5661 = vsel %vm786, %v5659, %v5660
      %v5662 = vrot.slane %v5641, 1
      %v5663 = vrot.slane %v5642, 1
      %v5664 = vsel %vm786, %v5662, %v5663
      %v5665 = vrot.slane %v5643, 1
      %v5666 = vrot.slane %v5644, 1
      %v5667 = vsel %vm786, %v5665, %v5666
      %v5668 = vrot.slane %v5645, 1
      %v5669 = vrot.slane %v5646, 1
      %v5670 = vsel %vm786, %v5668, %v5669
      %5679 = vst.msk [vmem:[#allocation3 + $0x10] sm:$0xff] %vm414, %v5649
      %5680 = vst.msk [vmem:[#allocation3 + $0x28] sm:$0xff] %vm414, %v5652
      %5681 = vst.msk [vmem:[#allocation3 + $0x40] sm:$0xff] %vm414, %v5655
      %5682 = vst.msk [vmem:[#allocation3 + $0x58] sm:$0xff] %vm414, %v5658
      %5683 = vst.msk [vmem:[#allocation3 + $0x70] sm:$0xff] %vm414, %v5661
      %5684 = vst.msk [vmem:[#allocation3 + $0x88] sm:$0xff] %vm414, %v5664
      %5685 = vst.msk [vmem:[#allocation3 + $0xa0] sm:$0xff] %vm414, %v5667
      %5686 = vst.msk [vmem:[#allocation3 + $0xb8] sm:$0xff] %vm414, %v5670
      %v5687 = vld [vmem:[#allocation3] sm:$0xff]
      %v5688 = vld [vmem:[#allocation3 + $0x8] sm:$0xff]
      %v5689 = vld [vmem:[#allocation3 + $0x10] sm:$0xff]
      %v5690 = vld [vmem:[#allocation3 + $0x18] sm:$0xff]
      %v5691 = vld [vmem:[#allocation3 + $0x20] sm:$0xff]
      %v5692 = vld [vmem:[#allocation3 + $0x28] sm:$0xff]
      %v5693 = vld [vmem:[#allocation3 + $0x30] sm:$0xff]
      %v5694 = vld [vmem:[#allocation3 + $0x38] sm:$0xff]
      %v5695 = vld [vmem:[#allocation3 + $0x40] sm:$0xff]
      %v5696 = vld [vmem:[#allocation3 + $0x48] sm:$0xff]
      %v5697 = vld [vmem:[#allocation3 + $0x50] sm:$0xff]
      %v5698 = vld [vmem:[#allocation3 + $0x58] sm:$0xff]
      %v5699 = vld [vmem:[#allocation3 + $0x60] sm:$0xff]
      %v5700 = vld [vmem:[#allocation3 + $0x68] sm:$0xff]
      %v5701 = vld [vmem:[#allocation3 + $0x70] sm:$0xff]
      %v5702 = vld [vmem:[#allocation3 + $0x78] sm:$0xff]
      %v5703 = vld [vmem:[#allocation3 + $0x80] sm:$0xff]
      %v5704 = vld [vmem:[#allocation3 + $0x88] sm:$0xff]
      %v5705 = vld [vmem:[#allocation3 + $0x90] sm:$0xff]
      %v5706 = vld [vmem:[#allocation3 + $0x98] sm:$0xff]
      %v5707 = vld [vmem:[#allocation3 + $0xa0] sm:$0xff]
      %v5708 = vld [vmem:[#allocation3 + $0xa8] sm:$0xff]
      %v5709 = vld [vmem:[#allocation3 + $0xb0] sm:$0xff]
      %v5710 = vld [vmem:[#allocation3 + $0xb8] sm:$0xff]
      %v5711 = vld [vmem:[%s3 + $0x180] sm:$0xf]
      %v5712 = vld [vmem:[%s3 + $0x184] sm:$0xf]
      %v5713 = vld [vmem:[%s3 + $0x188] sm:$0xf]
      %v5714 = vld [vmem:[%s3 + $0x18c] sm:$0xf]
      %v5715 = vld [vmem:[%s3 + $0x190] sm:$0xf]
      %v5716 = vld [vmem:[%s3 + $0x194] sm:$0xf]
      %v5717 = vld [vmem:[%s3 + $0x198] sm:$0xf]
      %v5718 = vld [vmem:[%s3 + $0x19c] sm:$0xf]
      %v5719 = vld [vmem:[%s3 + $0x1a0] sm:$0xf]
      %v5720 = vld [vmem:[%s3 + $0x1a4] sm:$0xf]
      %v5721 = vld [vmem:[%s3 + $0x1a8] sm:$0xf]
      %v5722 = vld [vmem:[%s3 + $0x1ac] sm:$0xf]
      %v5723 = vld [vmem:[%s3 + $0x1b0] sm:$0xf]
      %v5724 = vld [vmem:[%s3 + $0x1b4] sm:$0xf]
      %v5725 = vld [vmem:[%s3 + $0x1b8] sm:$0xf]
      %v5726 = vld [vmem:[%s3 + $0x1bc] sm:$0xf]
      %v5727 = vld [vmem:[%s3 + $0x1c0] sm:$0xf]
      %v5728 = vld [vmem:[%s3 + $0x1c4] sm:$0xf]
      %v5729 = vld [vmem:[%s3 + $0x1c8] sm:$0xf]
      %v5730 = vld [vmem:[%s3 + $0x1cc] sm:$0xf]
      %v5731 = vld [vmem:[%s3 + $0x1d0] sm:$0xf]
      %v5732 = vld [vmem:[%s3 + $0x1d4] sm:$0xf]
      %v5733 = vld [vmem:[%s3 + $0x1d8] sm:$0xf]
      %v5734 = vld [vmem:[%s3 + $0x1dc] sm:$0xf]
      %v5735 = vld [vmem:[%s3 + $0x1e0] sm:$0xf]
      %v5736 = vld [vmem:[%s3 + $0x1e4] sm:$0xf]
      %v5737 = vld [vmem:[%s3 + $0x1e8] sm:$0xf]
      %v5738 = vld [vmem:[%s3 + $0x1ec] sm:$0xf]
      %v5739 = vld [vmem:[%s3 + $0x1f0] sm:$0xf]
      %v5740 = vld [vmem:[%s3 + $0x1f4] sm:$0xf]
      %v5741 = vld [vmem:[%s3 + $0x1f8] sm:$0xf]
      %v5742 = vld [vmem:[%s3 + $0x1fc] sm:$0xf]
      %v5743 = vld [vmem:[%s3 + $0x200] sm:$0xf]
      %v5744 = vld [vmem:[%s3 + $0x204] sm:$0xf]
      %v5745 = vld [vmem:[%s3 + $0x208] sm:$0xf]
      %v5746 = vld [vmem:[%s3 + $0x20c] sm:$0xf]
      %v5747 = vld [vmem:[%s3 + $0x210] sm:$0xf]
      %v5748 = vld [vmem:[%s3 + $0x214] sm:$0xf]
      %v5749 = vld [vmem:[%s3 + $0x218] sm:$0xf]
      %v5750 = vld [vmem:[%s3 + $0x21c] sm:$0xf]
      %v5751 = vld [vmem:[%s3 + $0x220] sm:$0xf]
      %v5752 = vld [vmem:[%s3 + $0x224] sm:$0xf]
      %v5753 = vld [vmem:[%s3 + $0x228] sm:$0xf]
      %v5754 = vld [vmem:[%s3 + $0x22c] sm:$0xf]
      %v5755 = vld [vmem:[%s3 + $0x230] sm:$0xf]
      %v5756 = vld [vmem:[%s3 + $0x234] sm:$0xf]
      %v5757 = vld [vmem:[%s3 + $0x238] sm:$0xf]
      %v5758 = vld [vmem:[%s3 + $0x23c] sm:$0xf]
      %v5807 = vunpack.c.l.b16 %v5711
      %v5808 = vunpack.c.l.b16 %v5712
      %v5809 = vunpack.c.l.b16 %v5713
      %v5810 = vunpack.c.l.b16 %v5714
      %v5811 = vunpack.c.l.b16 %v5715
      %v5812 = vunpack.c.l.b16 %v5716
      %v5813 = vunpack.c.l.b16 %v5717
      %v5814 = vunpack.c.l.b16 %v5718
      %v5815 = vunpack.c.l.b16 %v5719
      %v5816 = vunpack.c.l.b16 %v5720
      %v5817 = vunpack.c.l.b16 %v5721
      %v5818 = vunpack.c.l.b16 %v5722
      %v5819 = vunpack.c.l.b16 %v5723
      %v5820 = vunpack.c.l.b16 %v5724
      %v5821 = vunpack.c.l.b16 %v5725
      %v5822 = vunpack.c.l.b16 %v5726
      %v5823 = vunpack.c.l.b16 %v5727
      %v5824 = vunpack.c.l.b16 %v5728
      %v5825 = vunpack.c.l.b16 %v5729
      %v5826 = vunpack.c.l.b16 %v5730
      %v5827 = vunpack.c.l.b16 %v5731
      %v5828 = vunpack.c.l.b16 %v5732
      %v5829 = vunpack.c.l.b16 %v5733
      %v5830 = vunpack.c.l.b16 %v5734
      %v5831 = vunpack.c.l.b16 %v5735
      %v5832 = vunpack.c.l.b16 %v5736
      %v5833 = vunpack.c.l.b16 %v5737
      %v5834 = vunpack.c.l.b16 %v5738
      %v5835 = vunpack.c.l.b16 %v5739
      %v5836 = vunpack.c.l.b16 %v5740
      %v5837 = vunpack.c.l.b16 %v5741
      %v5838 = vunpack.c.l.b16 %v5742
      %v5839 = vunpack.c.l.b16 %v5743
      %v5840 = vunpack.c.l.b16 %v5744
      %v5841 = vunpack.c.l.b16 %v5745
      %v5842 = vunpack.c.l.b16 %v5746
      %v5843 = vunpack.c.l.b16 %v5747
      %v5844 = vunpack.c.l.b16 %v5748
      %v5845 = vunpack.c.l.b16 %v5749
      %v5846 = vunpack.c.l.b16 %v5750
      %v5847 = vunpack.c.l.b16 %v5751
      %v5848 = vunpack.c.l.b16 %v5752
      %v5849 = vunpack.c.l.b16 %v5753
      %v5850 = vunpack.c.l.b16 %v5754
      %v5851 = vunpack.c.l.b16 %v5755
      %v5852 = vunpack.c.l.b16 %v5756
      %v5853 = vunpack.c.l.b16 %v5757
      %v5854 = vunpack.c.l.b16 %v5758
      %v5855 = vpack.c.b16 %v5808, %v5807
      %v5856 = vpack.c.b16 %v5810, %v5809
      %v5857 = vpack.c.b16 %v5812, %v5811
      %v5858 = vpack.c.b16 %v5814, %v5813
      %v5859 = vpack.c.b16 %v5816, %v5815
      %v5860 = vpack.c.b16 %v5818, %v5817
      %v5861 = vpack.c.b16 %v5820, %v5819
      %v5862 = vpack.c.b16 %v5822, %v5821
      %v5863 = vpack.c.b16 %v5824, %v5823
      %v5864 = vpack.c.b16 %v5826, %v5825
      %v5865 = vpack.c.b16 %v5828, %v5827
      %v5866 = vpack.c.b16 %v5830, %v5829
      %v5867 = vpack.c.b16 %v5832, %v5831
      %v5868 = vpack.c.b16 %v5834, %v5833
      %v5869 = vpack.c.b16 %v5836, %v5835
      %v5870 = vpack.c.b16 %v5838, %v5837
      %v5871 = vpack.c.b16 %v5840, %v5839
      %v5872 = vpack.c.b16 %v5842, %v5841
      %v5873 = vpack.c.b16 %v5844, %v5843
      %v5874 = vpack.c.b16 %v5846, %v5845
      %v5875 = vpack.c.b16 %v5848, %v5847
      %v5876 = vpack.c.b16 %v5850, %v5849
      %v5877 = vpack.c.b16 %v5852, %v5851
      %v5878 = vpack.c.b16 %v5854, %v5853
      %5903 = vmatprep.subr.bf16.mxu0 0
      %5904 = vmatpush1.bf16.msra.mxu0 %v5855
      %5905 = vmatprep.subr.bf16.mxu0 0
      %5906 = vmatpush1.bf16.msra.mxu0 %v5856
      %5907 = vmatprep.subr.bf16.mxu0 0
      %5908 = vmatpush1.bf16.msra.mxu0 %v5857
      %5909 = vmatprep.subr.bf16.mxu0 0
      %5910 = vmatpush1.bf16.msra.mxu0 %v5858
      %5911 = vmatprep.subr.bf16.mxu0 0
      %5912 = vmatpush1.bf16.msra.mxu0 %v5859
      %5913 = vmatprep.subr.bf16.mxu0 0
      %5914 = vmatpush1.bf16.msra.mxu0 %v5860
      %5915 = vmatprep.subr.bf16.mxu0 0
      %5916 = vmatpush1.bf16.msra.mxu0 %v5861
      %5917 = vmatprep.subr.bf16.mxu0 0
      %5918 = vmatpush1.bf16.msra.mxu0 %v5862
      %5919 = vmatprep.subr.bf16.mxu0 0
      %5920 = vmatpush1.bf16.msra.mxu0 %v5863
      %5921 = vmatprep.subr.bf16.mxu0 0
      %5922 = vmatpush1.bf16.msra.mxu0 %v5864
      %5923 = vmatprep.subr.bf16.mxu0 0
      %5924 = vmatpush1.bf16.msra.mxu0 %v5865
      %5925 = vmatprep.subr.bf16.mxu0 0
      %5926 = vmatpush1.bf16.msra.mxu0 %v5866
      %5927 = vmatprep.subr.bf16.mxu0 0
      %5928 = vmatpush1.bf16.msra.mxu0 %v5867
      %5929 = vmatprep.subr.bf16.mxu0 0
      %5930 = vmatpush1.bf16.msra.mxu0 %v5868
      %5931 = vmatprep.subr.bf16.mxu0 0
      %5932 = vmatpush1.bf16.msra.mxu0 %v5869
      %5933 = vmatprep.subr.bf16.mxu0 0
      %5934 = vmatpush1.bf16.msra.mxu0 %v5870
      %5935 = vmatprep.mubr.bf16.mxu0 %v5688
      %5936 = vmatmul.mubr.bf16.gmra.mrb[0].mxu0 %v5687
      %v5937 = vpop.f32.mrb[0].mxu0
      %v5938 = vadd.f32 0.0, %v5937
      %v5939 = vpop.f32.mrb[0].mxu0
      %v5940 = vpop.f32.mrb[0].mxu0
      %v5941 = vadd.f32 0.0, %v5940
      %v5942 = vpop.f32.mrb[0].mxu0
      %5943 = vmatprep.mubr.bf16.mxu0 %v5691
      %5944 = vmatmul.mubr.bf16.gmra.mrb[0].mxu0 %v5690
      %v5945 = vpop.f32.mrb[0].mxu0
      %v5946 = vadd.f32 0.0, %v5945
      %v5947 = vpop.f32.mrb[0].mxu0
      %v5948 = vpop.f32.mrb[0].mxu0
      %v5949 = vadd.f32 0.0, %v5948
      %v5950 = vpop.f32.mrb[0].mxu0
      %5951 = vmatprep.mubr.bf16.mxu0 %v5694
      %5952 = vmatmul.mubr.bf16.gmra.mrb[0].mxu0 %v5693
      %v5953 = vpop.f32.mrb[0].mxu0
      %v5954 = vadd.f32 0.0, %v5953
      %v5955 = vpop.f32.mrb[0].mxu0
      %v5956 = vpop.f32.mrb[0].mxu0
      %v5957 = vadd.f32 0.0, %v5956
      %v5958 = vpop.f32.mrb[0].mxu0
      %5959 = vmatprep.mubr.bf16.mxu0 %v5697
      %5960 = vmatmul.mubr.bf16.gmra.mrb[0].mxu0 %v5696
      %v5961 = vpop.f32.mrb[0].mxu0
      %v5962 = vadd.f32 0.0, %v5961
      %v5963 = vpop.f32.mrb[0].mxu0
      %v5964 = vpop.f32.mrb[0].mxu0
      %v5965 = vadd.f32 0.0, %v5964
      %v5966 = vpop.f32.mrb[0].mxu0
      %5967 = vmatprep.mubr.bf16.mxu0 %v5700
      %5968 = vmatmul.mubr.bf16.gmra.mrb[0].mxu0 %v5699
      %v5969 = vpop.f32.mrb[0].mxu0
      %v5970 = vadd.f32 0.0, %v5969
      %v5971 = vpop.f32.mrb[0].mxu0
      %v5972 = vpop.f32.mrb[0].mxu0
      %v5973 = vadd.f32 0.0, %v5972
      %v5974 = vpop.f32.mrb[0].mxu0
      %5975 = vmatprep.mubr.bf16.mxu0 %v5703
      %5976 = vmatmul.mubr.bf16.gmra.mrb[0].mxu0 %v5702
      %v5977 = vpop.f32.mrb[0].mxu0
      %v5978 = vadd.f32 0.0, %v5977
      %v5979 = vpop.f32.mrb[0].mxu0
      %v5980 = vpop.f32.mrb[0].mxu0
      %v5981 = vadd.f32 0.0, %v5980
      %v5982 = vpop.f32.mrb[0].mxu0
      %5983 = vmatprep.mubr.bf16.mxu0 %v5706
      %5984 = vmatmul.mubr.bf16.gmra.mrb[0].mxu0 %v5705
      %v5985 = vpop.f32.mrb[0].mxu0
      %v5986 = vadd.f32 0.0, %v5985
      %v5987 = vpop.f32.mrb[0].mxu0
      %v5988 = vpop.f32.mrb[0].mxu0
      %v5989 = vadd.f32 0.0, %v5988
      %v5990 = vpop.f32.mrb[0].mxu0
      %5991 = vmatprep.mubr.bf16.mxu0 %v5709
      %5992 = vmatmul.mubr.bf16.gmra.mrb[0].mxu0 %v5708
      %v5993 = vpop.f32.mrb[0].mxu0
      %v5994 = vadd.f32 0.0, %v5993
      %v5995 = vpop.f32.mrb[0].mxu0
      %v5996 = vpop.f32.mrb[0].mxu0
      %v5997 = vadd.f32 0.0, %v5996
      %v5998 = vpop.f32.mrb[0].mxu0
      %5999 = vdwg.mxu0
      %6000 = vmatprep.subr.bf16.mxu0 0
      %6001 = vmatpush1.bf16.msra.mxu0 %v5871
      %6002 = vmatprep.subr.bf16.mxu0 0
      %6003 = vmatpush1.bf16.msra.mxu0 %v5872
      %6004 = vmatprep.subr.bf16.mxu0 0
      %6005 = vmatpush1.bf16.msra.mxu0 %v5873
      %6006 = vmatprep.subr.bf16.mxu0 0
      %6007 = vmatpush1.bf16.msra.mxu0 %v5874
      %6008 = vmatprep.subr.bf16.mxu0 0
      %6009 = vmatpush1.bf16.msra.mxu0 %v5875
      %6010 = vmatprep.subr.bf16.mxu0 0
      %6011 = vmatpush1.bf16.msra.mxu0 %v5876
      %6012 = vmatprep.subr.bf16.mxu0 0
      %6013 = vmatpush1.bf16.msra.mxu0 %v5877
      %6014 = vmatprep.subr.bf16.mxu0 0
      %6015 = vmatpush1.bf16.msra.mxu0 %v5878
      %6016 = vmatprep.subr.bf16.mxu0 0
      %6017 = vmatpush1.bf16.msra.mxu0 0
      %6018 = vmatprep.subr.bf16.mxu0 0
      %6019 = vmatpush1.bf16.msra.mxu0 0
      %6020 = vmatprep.subr.bf16.mxu0 0
      %6021 = vmatpush1.bf16.msra.mxu0 0
      %6022 = vmatprep.subr.bf16.mxu0 0
      %6023 = vmatpush1.bf16.msra.mxu0 0
      %6024 = vmatprep.subr.bf16.mxu0 0
      %6025 = vmatpush1.bf16.msra.mxu0 0
      %6026 = vmatprep.subr.bf16.mxu0 0
      %6027 = vmatpush1.bf16.msra.mxu0 0
      %6028 = vmatprep.subr.bf16.mxu0 0
      %6029 = vmatpush1.bf16.msra.mxu0 0
      %6030 = vmatprep.subr.bf16.mxu0 0
      %6031 = vmatpush1.bf16.msra.mxu0 0
      %6032 = vmatprep.mubr.bf16.mxu0 0
      %6033 = vmatmul.mubr.bf16.gmra.mrb[0].mxu0 %v5689
      %v6034 = vpop.f32.mrb[0].mxu0
      %v6035 = vadd.f32 %v5938, %v6034
      %v6036 = vpop.f32.mrb[0].mxu0
      %v6037 = vpop.f32.mrb[0].mxu0
      %v6038 = vadd.f32 %v5941, %v6037
      %v6039 = vpop.f32.mrb[0].mxu0
      %6040 = vmatprep.mubr.bf16.mxu0 0
      %6041 = vmatmul.mubr.bf16.gmra.mrb[0].mxu0 %v5692
      %v6042 = vpop.f32.mrb[0].mxu0
      %v6043 = vadd.f32 %v5946, %v6042
      %v6044 = vpop.f32.mrb[0].mxu0
      %v6045 = vpop.f32.mrb[0].mxu0
      %v6046 = vadd.f32 %v5949, %v6045
      %v6047 = vpop.f32.mrb[0].mxu0
      %6048 = vmatprep.mubr.bf16.mxu0 0
      %6049 = vmatmul.mubr.bf16.gmra.mrb[0].mxu0 %v5695
      %v6050 = vpop.f32.mrb[0].mxu0
      %v6051 = vadd.f32 %v5954, %v6050
      %v6052 = vpop.f32.mrb[0].mxu0
      %v6053 = vpop.f32.mrb[0].mxu0
      %v6054 = vadd.f32 %v5957, %v6053
      %v6055 = vpop.f32.mrb[0].mxu0
      %6056 = vmatprep.mubr.bf16.mxu0 0
      %6057 = vmatmul.mubr.bf16.gmra.mrb[0].mxu0 %v5698
      %v6058 = vpop.f32.mrb[0].mxu0
      %v6059 = vadd.f32 %v5962, %v6058
      %v6060 = vpop.f32.mrb[0].mxu0
      %v6061 = vpop.f32.mrb[0].mxu0
      %v6062 = vadd.f32 %v5965, %v6061
      %v6063 = vpop.f32.mrb[0].mxu0
      %6064 = vmatprep.mubr.bf16.mxu0 0
      %6065 = vmatmul.mubr.bf16.gmra.mrb[0].mxu0 %v5701
      %v6066 = vpop.f32.mrb[0].mxu0
      %v6067 = vadd.f32 %v5970, %v6066
      %v6068 = vpop.f32.mrb[0].mxu0
      %v6069 = vpop.f32.mrb[0].mxu0
      %v6070 = vadd.f32 %v5973, %v6069
      %v6071 = vpop.f32.mrb[0].mxu0
      %6072 = vmatprep.mubr.bf16.mxu0 0
      %6073 = vmatmul.mubr.bf16.gmra.mrb[0].mxu0 %v5704
      %v6074 = vpop.f32.mrb[0].mxu0
      %v6075 = vadd.f32 %v5978, %v6074
      %v6076 = vpop.f32.mrb[0].mxu0
      %v6077 = vpop.f32.mrb[0].mxu0
      %v6078 = vadd.f32 %v5981, %v6077
      %v6079 = vpop.f32.mrb[0].mxu0
      %6080 = vmatprep.mubr.bf16.mxu0 0
      %6081 = vmatmul.mubr.bf16.gmra.mrb[0].mxu0 %v5707
      %v6082 = vpop.f32.mrb[0].mxu0
      %v6083 = vadd.f32 %v5986, %v6082
      %v6084 = vpop.f32.mrb[0].mxu0
      %v6085 = vpop.f32.mrb[0].mxu0
      %v6086 = vadd.f32 %v5989, %v6085
      %v6087 = vpop.f32.mrb[0].mxu0
      %6088 = vmatprep.mubr.bf16.mxu0 0
      %6089 = vmatmul.mubr.bf16.gmra.mrb[0].mxu0 %v5710
      %v6090 = vpop.f32.mrb[0].mxu0
      %v6091 = vadd.f32 %v5994, %v6090
      %v6092 = vpop.f32.mrb[0].mxu0
      %v6093 = vpop.f32.mrb[0].mxu0
      %v6094 = vadd.f32 %v5997, %v6093
      %v6095 = vpop.f32.mrb[0].mxu0
      %6096 = vdwg.mxu0
      %v6097 = vadd.f32 %v5224, %v6035
      %v6098 = vadd.f32 %v5227, %v6038
      %v6099 = vadd.f32 %v5232, %v6043
      %v6100 = vadd.f32 %v5235, %v6046
      %v6101 = vadd.f32 %v5240, %v6051
      %v6102 = vadd.f32 %v5243, %v6054
      %v6103 = vadd.f32 %v5248, %v6059
      %v6104 = vadd.f32 %v5251, %v6062
      %v6105 = vadd.f32 %v5256, %v6067
      %v6106 = vadd.f32 %v5259, %v6070
      %v6107 = vadd.f32 %v5264, %v6075
      %v6108 = vadd.f32 %v5267, %v6078
      %v6109 = vadd.f32 %v5272, %v6083
      %v6110 = vadd.f32 %v5275, %v6086
      %v6111 = vadd.f32 %v5280, %v6091
      %v6112 = vadd.f32 %v5283, %v6094
      %v6113 = vld [vmem:[%s4 + $0x1] sm:$0x1]
      %v6114 = vlaneseq
      %v6115 = vshrl.u32 %v6114, 7
      %v6116 = vsub.s32 0, %v6115
      %v6117 = vrot.slane %v6113, %v6116
      %v6118 = vadd.f32 %v6097, %v6117
      %v6119 = vadd.f32 %v6098, %v6117
      %v6120 = vadd.f32 %v6099, %v6117
      %v6121 = vadd.f32 %v6100, %v6117
      %v6122 = vadd.f32 %v6101, %v6117
      %v6123 = vadd.f32 %v6102, %v6117
      %v6124 = vadd.f32 %v6103, %v6117
      %v6125 = vadd.f32 %v6104, %v6117
      %v6126 = vadd.f32 %v6105, %v6117
      %v6127 = vadd.f32 %v6106, %v6117
      %v6128 = vadd.f32 %v6107, %v6117
      %v6129 = vadd.f32 %v6108, %v6117
      %v6130 = vadd.f32 %v6109, %v6117
      %v6131 = vadd.f32 %v6110, %v6117
      %v6132 = vadd.f32 %v6111, %v6117
      %v6133 = vadd.f32 %v6112, %v6117
      %v6134 = vld [vmem:[%s290] sm:$0xff]
      %v6135 = vld [vmem:[%s290 + $0x8] sm:$0xff]
      %v6136 = vld [vmem:[%s290 + $0x10] sm:$0xff]
      %v6137 = vld [vmem:[%s290 + $0x18] sm:$0xff]
      %v6138 = vld [vmem:[%s290 + $0x20] sm:$0xff]
      %v6139 = vld [vmem:[%s290 + $0x28] sm:$0xff]
      %v6140 = vld [vmem:[%s290 + $0x30] sm:$0xff]
      %v6141 = vld [vmem:[%s290 + $0x38] sm:$0xff]
      %v6142 = vld [vmem:[%s290 + $0x40] sm:$0xff]
      %v6143 = vld [vmem:[%s290 + $0x48] sm:$0xff]
      %v6144 = vld [vmem:[%s290 + $0x50] sm:$0xff]
      %v6145 = vld [vmem:[%s290 + $0x58] sm:$0xff]
      %v6146 = vld [vmem:[%s290 + $0x60] sm:$0xff]
      %v6147 = vld [vmem:[%s290 + $0x68] sm:$0xff]
      %v6148 = vld [vmem:[%s290 + $0x70] sm:$0xff]
      %v6149 = vld [vmem:[%s290 + $0x78] sm:$0xff]
      %v6150 = vadd.f32 %v6118, %v6134
      %v6151 = vadd.f32 %v6119, %v6135
      %v6152 = vadd.f32 %v6120, %v6136
      %v6153 = vadd.f32 %v6121, %v6137
      %v6154 = vadd.f32 %v6122, %v6138
      %v6155 = vadd.f32 %v6123, %v6139
      %v6156 = vadd.f32 %v6124, %v6140
      %v6157 = vadd.f32 %v6125, %v6141
      %v6158 = vadd.f32 %v6126, %v6142
      %v6159 = vadd.f32 %v6127, %v6143
      %v6160 = vadd.f32 %v6128, %v6144
      %v6161 = vadd.f32 %v6129, %v6145
      %v6162 = vadd.f32 %v6130, %v6146
      %v6163 = vadd.f32 %v6131, %v6147
      %v6164 = vadd.f32 %v6132, %v6148
      %v6165 = vadd.f32 %v6133, %v6149
      %6166 = vst.msk [vmem:[%s301] sm:$0xff] %vm414, %v6150
      %6167 = vst.msk [vmem:[%s301 + $0x8] sm:$0xff] %vm414, %v6151
      %6168 = vst.msk [vmem:[%s301 + $0x10] sm:$0xff] %vm414, %v6152
      %6169 = vst.msk [vmem:[%s301 + $0x18] sm:$0xff] %vm414, %v6153
      %6170 = vst.msk [vmem:[%s301 + $0x20] sm:$0xff] %vm414, %v6154
      %6171 = vst.msk [vmem:[%s301 + $0x28] sm:$0xff] %vm414, %v6155
      %6172 = vst.msk [vmem:[%s301 + $0x30] sm:$0xff] %vm414, %v6156
      %6173 = vst.msk [vmem:[%s301 + $0x38] sm:$0xff] %vm414, %v6157
      %6174 = vst.msk [vmem:[%s301 + $0x40] sm:$0xff] %vm414, %v6158
      %6175 = vst.msk [vmem:[%s301 + $0x48] sm:$0xff] %vm414, %v6159
      %6176 = vst.msk [vmem:[%s301 + $0x50] sm:$0xff] %vm414, %v6160
      %6177 = vst.msk [vmem:[%s301 + $0x58] sm:$0xff] %vm414, %v6161
      %6178 = vst.msk [vmem:[%s301 + $0x60] sm:$0xff] %vm414, %v6162
      %6179 = vst.msk [vmem:[%s301 + $0x68] sm:$0xff] %vm414, %v6163
      %6180 = vst.msk [vmem:[%s301 + $0x70] sm:$0xff] %vm414, %v6164
      %6181 = vst.msk [vmem:[%s301 + $0x78] sm:$0xff] %vm414, %v6165
      %s6182 = smul.u32 8, %s21
      %p6183 = scmp.lt.s32.totalorder %s20, 1
      %s6184 = scalar_select %p6183, %s20, 1
      %p6185 = scmp.lt.s32.totalorder %s6182, 15
      %s6186 = scalar_select %p6185, %s6182, 15
      %s6187 = smul.addr %s6186, 2
      %s6188 = smul.addr %s6184, 32
      %s6189 = sadd.s32 %s6187, %s6188
      %s6190 = smul.addr %s6189, 8
      %s6191 = scalar_lea.vmem %s5, %s6190
      // Predicated region
      $region49: #{tpu_custom_call.1} parent=39 // pred_check
        %p6192 = pneg %p167
      $region50: #{tpu_custom_call.1} parent=39 // pred_check_branch
        %6194 = sbr.rel (%p6192) target = $region52
      $region51: #{tpu_custom_call.1} parent=39 // pred_region
        %s6195 = smul.u32 8, %s21
      $region52: #{tpu_custom_call.1} parent=39 // pred_fallthru
        _
    $region40: #{tpu_custom_call.1} parent=5 // pred_fallthru
      _
    %p6196 = scmp.le.s32.totalorder 2, %s11
    // Predicated region
    $region53: #{tpu_custom_call.1} parent=5 // pred_check
      %p6197 = pneg %p6196
    $region54: #{tpu_custom_call.1} parent=5 // pred_check_branch
      %6199 = sbr.rel (%p6197) target = $region56
    $region55: #{tpu_custom_call.1} parent=5 // pred_region
      %s6200 = ssub.s32 %s11, 2
      // Predicated region
      $region57: #{tpu_custom_call.1} parent=55 // pred_check
        %p6201 = pneg %p173
      $region58: #{tpu_custom_call.1} parent=55 // pred_check_branch
        %6203 = sbr.rel (%p6201) target = $region60
      $region59: #{tpu_custom_call.1} parent=55 // pred_region
        %s6204 = smul.u32 8, %s23
        %p6205 = scmp.lt.s32.totalorder %s22, 1
        %s6206 = scalar_select %p6205, %s22, 1
        %p6207 = scmp.lt.s32.totalorder %s6204, 15
        %s6208 = scalar_select %p6207, %s6204, 15
        %s6209 = smul.addr %s6208, 2
        %s6210 = smul.addr %s6206, 32
        %s6211 = sadd.s32 %s6209, %s6210
        %s6212 = smul.addr %s6211, 8
        %s6213 = scalar_lea.vmem %s5, %s6212
      $region60: #{tpu_custom_call.1} parent=55 // pred_fallthru
        _
    $region56: #{tpu_custom_call.1} parent=5 // pred_fallthru
      _
  $region6: #{tpu_custom_call.1} parent=0 // loop_footer
    %s15 = sadd.s32 1, %s11
  $region7: #{tpu_custom_call.1} parent=0 // loop_footer_branch
    %10 = sbr.rel target = $region3
  $region8: #{tpu_custom_call.1} parent=0 // loop_exit
    _

</llo_original>
